<compile_context>
chip_gen: v7x
topology: tpu7x:2x2x1
jax: 0.10.0
libtpu: 0.0.40
codegen_flags: <defaults>
</compile_context>

<pallas_src>
import functools

import jax
import jax.numpy as jnp
from jax.experimental import pallas as pl
from jax.experimental.pallas import tpu as pltpu


def _greedy_decode_kernel(enc_h_ref, enc_c_ref, emb_gates_ref, w_hh_t_ref,
                          b_gates_ref, w_out_t_ref, b_out_ref, out_ref, *,
                          max_length, start_idx, hidden, vocab, unroll):
    B = enc_h_ref.shape[0]
    H, V, L = hidden, vocab, max_length
    cdt = emb_gates_ref.dtype                     # MXU compute dtype (bf16)

    h0 = enc_h_ref[...]                           # (B, H) f32 state
    c0 = enc_c_ref[...]                           # (B, H) f32 state
    # Hoisted out of the step loop: broadcasts + iotas (JAX does not CSE them).
    b_gates = jnp.broadcast_to(b_gates_ref[...], (B, 4 * H))   # f32 (b_ih+b_hh)
    b_out = jnp.broadcast_to(b_out_ref[...], (B, V))           # f32
    iota_v = jax.lax.broadcasted_iota(jnp.int32, (B, V), 1)
    iota_l = jax.lax.broadcasted_iota(jnp.int32, (B, L), 1)

    word0 = jnp.full((B, 1), start_idx, dtype=jnp.int32)
    toks0 = jnp.zeros((B, L), dtype=jnp.int32)

    def step_fn(step, carry):
        h, c, word, toks = carry
        # Recurrence contribution: depends only on h (produced by the previous
        # step's gate math, *before* its projection/argmax). Keeping this dot
        # separate from the embedding dot (no runtime concat) lets the
        # scheduler overlap it with the previous step's projection + argmax.
        # MXU operand streamed straight from the VMEM ref (no hoisted value).
        hh = jnp.dot(h.astype(cdt), w_hh_t_ref[...],
                     preferred_element_type=jnp.float32)        # (B, 4H) f32
        # Embedding-side contribution against the offline-fused emb @ w_ih.T
        # table; the one-hot is built directly in the compute dtype. This is
        # the only op serialized behind the previous argmax.
        onehot = (iota_v == word).astype(cdt)                   # (B, V) cdt
        xg = jnp.dot(onehot, emb_gates_ref[...],
                     preferred_element_type=jnp.float32)        # (B, 4H) f32
        gates = hh + xg + b_gates
        # LSTM cell (PyTorch gate order i, f, g, o); lane-aligned slices,
        # all nonlinearities / state math in f32.
        i_g = jax.nn.sigmoid(gates[:, 0:H])
        f_g = jax.nn.sigmoid(gates[:, H:2 * H])
        g_g = jnp.tanh(gates[:, 2 * H:3 * H])
        o_g = jax.nn.sigmoid(gates[:, 3 * H:4 * H])
        c = f_g * c + i_g * g_g
        h = o_g * jnp.tanh(c)
        # Vocab projection + greedy argmax (first-max = torch.argmax).
        logits = jnp.dot(h.astype(cdt), w_out_t_ref[...],
                         preferred_element_type=jnp.float32) + b_out
        mx = jnp.max(logits, axis=1, keepdims=True)
        word = jnp.min(jnp.where(logits == mx, iota_v, V),
                       axis=1, keepdims=True).astype(jnp.int32)  # (B, 1)
        # Degenerate all-NaN row would yield word == V (out of range, all-zero
        # one-hot next step); clamp into vocab range instead of failing silently.
        word = jnp.minimum(word, V - 1)
        # Accumulate the token column in registers (no per-step masked stores).
        toks = jnp.where(iota_l == step, word, toks)
        return h, c, word, toks

    _, _, _, toks = jax.lax.fori_loop(0, L, step_fn, (h0, c0, word0, toks0),
                                      unroll=unroll)
    out_ref[...] = toks                           # single (B, L) int32 store


def _prepare_params(params, compute_dtype):
    """Offline algebraic fusion shared by the kernel wrapper and the reference.

    emb_gates = emb @ w_ih.T (f32, highest precision), cast to `compute_dtype`
    as an MXU operand; w_hh.T and w_out.T likewise. Biases stay f32."""
    four_h = params["w_ih"].shape[0]
    V = params["emb"].shape[0]
    emb_gates = jnp.dot(params["emb"], params["w_ih"].T,
                        preferred_element_type=jnp.float32,
                        precision=jax.lax.Precision.HIGHEST)       # (V, 4H) f32
    emb_gates = emb_gates.astype(compute_dtype)                    # (V, 4H)
    w_hh_t = params["w_hh"].T.astype(compute_dtype)                # (H, 4H)
    b_gates = (params["b_ih"] + params["b_hh"]).reshape(1, four_h)
    b_gates = b_gates.astype(jnp.float32)
    w_out_t = params["w_out"].T.astype(compute_dtype)              # (H, V)
    b_out = params["b_out"].reshape(1, V).astype(jnp.float32)
    return emb_gates, w_hh_t, b_gates, w_out_t, b_out


def decoder_greedy_infer(enc_h_n, enc_c_n, params, max_length, start_idx, *,
                         compute_dtype=jnp.bfloat16, unroll=None):
    """enc_h_n / enc_c_n: (num_direction*num_layers=1, batch, hidden) float32.

    Returns (batch, max_length) int32 greedy token ids (the PyTorch module's
    `decoder_output.int()`; token ids are integral so the cast is lossless).

    NOTE: per-step cost is nearly flat in batch (fixed MXU/EUP/XLU latencies
    dominate at small B); callers should pad/pack requests toward B ~ 64-128
    for near-free throughput.
    """
    B, H = enc_h_n.shape[1], enc_h_n.shape[2]
    V = params["emb"].shape[0]
    emb_gates, w_hh_t, b_gates, w_out_t, b_out = _prepare_params(
        params, compute_dtype)

    if unroll is None:
        # Short fixed trip count: full unroll (LLO visibility across steps);
        # long decodes: partial unroll to bound code size.
        unroll = True if max_length <= 32 else 8

    operands = (enc_h_n[0].astype(jnp.float32), enc_c_n[0].astype(jnp.float32),
                emb_gates, w_hh_t, b_gates, w_out_t, b_out)
    operand_bytes = sum(int(x.size) * x.dtype.itemsize for x in operands)

    # Generation-aware VMEM budget: operands + fixed headroom, capped at 3/4 of
    # the physical VMEM of whatever chip we are actually compiling for.
    try:
        info = pltpu.get_tpu_info()
        vmem_cap = int(getattr(info, "vmem_capacity_bytes", 64 * 1024 * 1024))
    except Exception:  # pragma: no cover - conservative fallback
        vmem_cap = 64 * 1024 * 1024
    headroom = 8 * 1024 * 1024          # compiler scratch / output / spills
    vmem_limit = min(int(0.75 * vmem_cap), operand_bytes + headroom)
    vmem_limit = int(max(vmem_limit, 16 * 1024 * 1024))

    vmem = pl.BlockSpec(memory_space=pltpu.MemorySpace.VMEM)
    kernel = functools.partial(_greedy_decode_kernel, max_length=max_length,
                               start_idx=start_idx, hidden=H, vocab=V,
                               unroll=unroll)
    return pl.pallas_call(
        kernel,
        out_shape=jax.ShapeDtypeStruct((B, max_length), jnp.int32),
        in_specs=[vmem] * len(operands),
        out_specs=vmem,
        compiler_params=pltpu.CompilerParams(vmem_limit_bytes=vmem_limit),
    )(*operands)


# ---------------------------------------------------------------------------
# Pure-JAX references (validation)
# ---------------------------------------------------------------------------

def _lstm_step(h, c, gate_x_f32, w_hh_t, b_gates, w_out_t, b_out, compute_dtype):
    H = h.shape[1]
    gates = (gate_x_f32
             + jnp.dot(h.astype(compute_dtype), w_hh_t,
                       preferred_element_type=jnp.float32)
             + b_gates)
    i_g = jax.nn.sigmoid(gates[:, :H])
    f_g = jax.nn.sigmoid(gates[:, H:2 * H])
    g_g = jnp.tanh(gates[:, 2 * H:3 * H])
    o_g = jax.nn.sigmoid(gates[:, 3 * H:])
    c = f_g * c + i_g * g_g
    h = o_g * jnp.tanh(c)
    logits = jnp.dot(h.astype(compute_dtype), w_out_t,
                     preferred_element_type=jnp.float32) + b_out
    return h, c, logits


def _reference(enc_h_n, enc_c_n, params, max_length, start_idx,
               compute_dtype=jnp.bfloat16):
    """Replica of the PyTorch greedy forward (embedding -> LSTMCell -> linear ->
    argmax, greedy feedback), numerics-matched to the kernel: same fused gate
    table and the same compute_dtype on MXU operands with f32 accumulation."""
    emb_gates, w_hh_t, b_gates, w_out_t, b_out = _prepare_params(
        params, compute_dtype)
    h, c = enc_h_n[0], enc_c_n[0]
    B = h.shape[0]
    word = jnp.full((B,), start_idx, dtype=jnp.int32)
    cols = []
    for _ in range(max_length):
        gate_x = emb_gates[word].astype(jnp.float32)
        h, c, logits = _lstm_step(h, c, gate_x, w_hh_t, b_gates, w_out_t,
                                  b_out, compute_dtype)
        word = jnp.argmax(logits, axis=1).astype(jnp.int32)
        cols.append(word)
    return jnp.stack(cols, axis=1).astype(jnp.int32)


def _teacher_forced_logits(tokens, enc_h_n, enc_c_n, params, start_idx,
                           compute_dtype=jnp.bfloat16):
    """Replay the decoder feeding the kernel's own previous tokens; returns the
    reference logits at every step, shape (B, L, V)."""
    emb_gates, w_hh_t, b_gates, w_out_t, b_out = _prepare_params(
        params, compute_dtype)
    h, c = enc_h_n[0], enc_c_n[0]
    B, L = tokens.shape
    word = jnp.full((B,), start_idx, dtype=jnp.int32)
    outs = []
    for step in range(L):
        gate_x = emb_gates[word].astype(jnp.float32)
        h, c, logits = _lstm_step(h, c, gate_x, w_hh_t, b_gates, w_out_t,
                                  b_out, compute_dtype)
        outs.append(logits)
        word = tokens[:, step]            # teacher-force with the kernel token
    return jnp.stack(outs, axis=1)


if __name__ == "__main__":
    # Hardware-aligned small shapes: batch=8 (sublane), hidden=embed=vocab=128
    # (lane) so gate slices / projection are whole-vreg, MXU-friendly tiles.
    B, H, E, V = 8, 128, 128, 128
    max_length, start_idx = 16, 1
    compute_dtype = jnp.bfloat16

    key = jax.random.PRNGKey(0)
    ks = jax.random.split(key, 9)
    params = {
        "emb":   jax.random.normal(ks[0], (V, E), jnp.float32) * 0.5,
        "w_ih":  jax.random.normal(ks[1], (4 * H, E), jnp.float32) * 0.3,
        "w_hh":  jax.random.normal(ks[2], (4 * H, H), jnp.float32) * 0.3,
        "b_ih":  jax.random.normal(ks[3], (4 * H,), jnp.float32) * 0.1,
        "b_hh":  jax.random.normal(ks[4], (4 * H,), jnp.float32) * 0.1,
        "w_out": jax.random.normal(ks[5], (V, H), jnp.float32) * 0.3,
        "b_out": jax.random.normal(ks[6], (V,), jnp.float32) * 0.1,
    }
    enc_h_n = jax.random.normal(ks[7], (1, B, H), jnp.float32)
    enc_c_n = jax.random.normal(ks[8], (1, B, H), jnp.float32)

    out = decoder_greedy_infer(enc_h_n, enc_c_n, params, max_length, start_idx,
                               compute_dtype=compute_dtype)
    out = jax.block_until_ready(out)
    assert out.shape == (B, max_length) and out.dtype == jnp.int32
    assert bool(jnp.all((out >= 0) & (out < V)))

    # (1) Numerics-matched greedy reference — token parity usually expected
    # (one-hot @ bf16 table with f32 accumulation == gather), but not asserted
    # alone because greedy feedback amplifies rounding-level argmax ties.
    ref = _reference(enc_h_n, enc_c_n, params, max_length, start_idx,
                     compute_dtype=compute_dtype)
    exact = bool(jnp.array_equal(out, ref))

    # (2) Tolerance-aware fallback: teacher-force the reference with the
    # kernel's own tokens and require each kernel token to be within a small
    # margin of the reference argmax — robust to tie flips in a chained greedy
    # decode while still rejecting any real math error (O(1) logit errors).
    logits = _teacher_forced_logits(out, enc_h_n, enc_c_n, params, start_idx,
                                    compute_dtype=compute_dtype)
    chosen = jnp.take_along_axis(logits, out[..., None], axis=-1)[..., 0]
    near_argmax = bool(jnp.all(chosen >= jnp.max(logits, axis=-1) - 5e-2))

    assert exact or near_argmax, (out, ref)
    print("KERNEL_OK")
</pallas_src>

<mosaic_0001>
module attributes {stable_mosaic.version = 11 : i64} {
  func.func @_greedy_decode_kernel(%arg0: memref<8x128xf32, #tpu.memory_space<vmem>>, %arg1: memref<8x128xf32, #tpu.memory_space<vmem>>, %arg2: memref<128x512xbf16, #tpu.memory_space<vmem>>, %arg3: memref<128x512xbf16, #tpu.memory_space<vmem>>, %arg4: memref<1x512xf32, #tpu.memory_space<vmem>>, %arg5: memref<128x128xbf16, #tpu.memory_space<vmem>>, %arg6: memref<1x128xf32, #tpu.memory_space<vmem>>, %arg7: memref<8x16xi32, #tpu.memory_space<vmem>>) attributes {dimension_semantics = [], scalar_prefetch = 0 : i64, scratch_operands = 0 : i64, tpu.core_type = #tpu.core_type<tc>} {
    %c0 = arith.constant 0 : index
    %c0_0 = arith.constant 0 : index
    %0 = vector.load %arg0[%c0, %c0_0] : memref<8x128xf32, #tpu.memory_space<vmem>>, vector<8x128xf32>
    %c0_1 = arith.constant 0 : index
    %c0_2 = arith.constant 0 : index
    %1 = vector.load %arg1[%c0_1, %c0_2] : memref<8x128xf32, #tpu.memory_space<vmem>>, vector<8x128xf32>
    %c0_3 = arith.constant 0 : index
    %c0_4 = arith.constant 0 : index
    %2 = vector.load %arg4[%c0_3, %c0_4] : memref<1x512xf32, #tpu.memory_space<vmem>>, vector<1x512xf32>
    %3 = vector.shape_cast %2 : vector<1x512xf32> to vector<1x512xf32>
    %4 = vector.broadcast %3 : vector<1x512xf32> to vector<8x512xf32>
    %c0_5 = arith.constant 0 : index
    %c0_6 = arith.constant 0 : index
    %5 = vector.load %arg6[%c0_5, %c0_6] : memref<1x128xf32, #tpu.memory_space<vmem>>, vector<1x128xf32>
    %6 = vector.shape_cast %5 : vector<1x128xf32> to vector<1x128xf32>
    %7 = vector.broadcast %6 : vector<1x128xf32> to vector<8x128xf32>
    %8 = tpu.iota {dimensions = array<i32: 1>} : vector<8x128xi32>
    %9 = tpu.iota {dimensions = array<i32: 1>} : vector<8x16xi32>
    %c1_i32 = arith.constant 1 : i32
    %10 = vector.broadcast %c1_i32 : i32 to vector<8x1xi32>
    %c0_i32 = arith.constant 0 : i32
    %11 = vector.broadcast %c0_i32 : i32 to vector<8x16xi32>
    %c0_i32_7 = arith.constant 0 : i32
    %12 = arith.truncf %0 : vector<8x128xf32> to vector<8x128xbf16>
    %c0_8 = arith.constant 0 : index
    %c0_9 = arith.constant 0 : index
    %13 = vector.load %arg3[%c0_8, %c0_9] : memref<128x512xbf16, #tpu.memory_space<vmem>>, vector<128x512xbf16>
    %cst = arith.constant dense<0.000000e+00> : vector<8x512xf32>
    %14 = tpu.matmul %12, %13, %cst {dimension_numbers = #tpu.dot_dimension_numbers<[1], [0], [0], [1], [0, 0, 1, 1], [], []>} : vector<8x128xbf16>, vector<128x512xbf16>, vector<8x512xf32> -> vector<8x512xf32>
    %15 = vector.broadcast %10 : vector<8x1xi32> to vector<8x128xi32>
    %16 = arith.cmpi eq, %8, %15 : vector<8x128xi32>
    %17 = arith.extui %16 : vector<8x128xi1> to vector<8x128xi32>
    %18 = arith.sitofp %17 : vector<8x128xi32> to vector<8x128xf32>
    %19 = arith.truncf %18 : vector<8x128xf32> to vector<8x128xbf16>
    %c0_10 = arith.constant 0 : index
    %c0_11 = arith.constant 0 : index
    %20 = vector.load %arg2[%c0_10, %c0_11] : memref<128x512xbf16, #tpu.memory_space<vmem>>, vector<128x512xbf16>
    %cst_12 = arith.constant dense<0.000000e+00> : vector<8x512xf32>
    %21 = tpu.matmul %19, %20, %cst_12 {dimension_numbers = #tpu.dot_dimension_numbers<[1], [0], [0], [1], [0, 0, 1, 1], [], []>} : vector<8x128xbf16>, vector<128x512xbf16>, vector<8x512xf32> -> vector<8x512xf32>
    %22 = arith.addf %14, %21 : vector<8x512xf32>
    %23 = arith.addf %22, %4 : vector<8x512xf32>
    %24 = vector.extract_strided_slice %23 {offsets = [0, 0], sizes = [8, 128], strides = [1, 1]} : vector<8x512xf32> to vector<8x128xf32>
    %25 = arith.negf %24 : vector<8x128xf32>
    %26 = math.exp %25 : vector<8x128xf32>
    %cst_13 = arith.constant 1.000000e+00 : f32
    %27 = vector.broadcast %cst_13 : f32 to vector<8x128xf32>
    %28 = arith.addf %27, %26 : vector<8x128xf32>
    %29 = arith.divf %27, %28 : vector<8x128xf32>
    %30 = vector.extract_strided_slice %23 {offsets = [0, 128], sizes = [8, 128], strides = [1, 1]} : vector<8x512xf32> to vector<8x128xf32>
    %31 = arith.negf %30 : vector<8x128xf32>
    %32 = math.exp %31 : vector<8x128xf32>
    %cst_14 = arith.constant 1.000000e+00 : f32
    %33 = vector.broadcast %cst_14 : f32 to vector<8x128xf32>
    %34 = arith.addf %33, %32 : vector<8x128xf32>
    %35 = arith.divf %33, %34 : vector<8x128xf32>
    %36 = vector.extract_strided_slice %23 {offsets = [0, 256], sizes = [8, 128], strides = [1, 1]} : vector<8x512xf32> to vector<8x128xf32>
    %37 = math.tanh %36 : vector<8x128xf32>
    %38 = vector.extract_strided_slice %23 {offsets = [0, 384], sizes = [8, 128], strides = [1, 1]} : vector<8x512xf32> to vector<8x128xf32>
    %39 = arith.negf %38 : vector<8x128xf32>
    %40 = math.exp %39 : vector<8x128xf32>
    %cst_15 = arith.constant 1.000000e+00 : f32
    %41 = vector.broadcast %cst_15 : f32 to vector<8x128xf32>
    %42 = arith.addf %41, %40 : vector<8x128xf32>
    %43 = arith.divf %41, %42 : vector<8x128xf32>
    %44 = arith.mulf %35, %1 : vector<8x128xf32>
    %45 = arith.mulf %29, %37 : vector<8x128xf32>
    %46 = arith.addf %44, %45 : vector<8x128xf32>
    %47 = math.tanh %46 : vector<8x128xf32>
    %48 = arith.mulf %43, %47 : vector<8x128xf32>
    %49 = arith.truncf %48 : vector<8x128xf32> to vector<8x128xbf16>
    %c0_16 = arith.constant 0 : index
    %c0_17 = arith.constant 0 : index
    %50 = vector.load %arg5[%c0_16, %c0_17] : memref<128x128xbf16, #tpu.memory_space<vmem>>, vector<128x128xbf16>
    %cst_18 = arith.constant dense<0.000000e+00> : vector<8x128xf32>
    %51 = tpu.matmul %49, %50, %cst_18 {dimension_numbers = #tpu.dot_dimension_numbers<[1], [0], [0], [1], [0, 0, 1, 1], [], []>} : vector<8x128xbf16>, vector<128x128xbf16>, vector<8x128xf32> -> vector<8x128xf32>
    %52 = arith.addf %51, %7 : vector<8x128xf32>
    %cst_19 = arith.constant dense<0xFF800000> : vector<8xf32>
    %53 = vector.multi_reduction <maximumf>, %52, %cst_19 [1] : vector<8x128xf32> to vector<8xf32>
    %54 = vector.shape_cast %53 : vector<8xf32> to vector<8x1xf32>
    %55 = vector.broadcast %54 : vector<8x1xf32> to vector<8x128xf32>
    %56 = arith.cmpf oeq, %52, %55 : vector<8x128xf32>
    %c128_i32 = arith.constant 128 : i32
    %57 = vector.broadcast %c128_i32 : i32 to vector<8x128xi32>
    %58 = arith.select %56, %8, %57 : vector<8x128xi1>, vector<8x128xi32>
    %cst_20 = arith.constant dense<2147483647> : vector<8xi32>
    %59 = vector.multi_reduction <minsi>, %58, %cst_20 [1] : vector<8x128xi32> to vector<8xi32>
    %60 = vector.shape_cast %59 : vector<8xi32> to vector<8x1xi32>
    %c127_i32 = arith.constant 127 : i32
    %61 = vector.broadcast %c127_i32 : i32 to vector<8x1xi32>
    %62 = arith.minsi %60, %61 : vector<8x1xi32>
    %63 = vector.broadcast %c0_i32_7 : i32 to vector<8x16xi32>
    %64 = arith.cmpi eq, %9, %63 : vector<8x16xi32>
    %65 = vector.shape_cast %62 : vector<8x1xi32> to vector<8x1xi32>
    %66 = vector.broadcast %65 : vector<8x1xi32> to vector<8x16xi32>
    %67 = arith.select %64, %66, %11 : vector<8x16xi1>, vector<8x16xi32>
    %c1_i32_21 = arith.constant 1 : i32
    %68 = arith.truncf %48 : vector<8x128xf32> to vector<8x128xbf16>
    %c0_22 = arith.constant 0 : index
    %c0_23 = arith.constant 0 : index
    %69 = vector.load %arg3[%c0_22, %c0_23] : memref<128x512xbf16, #tpu.memory_space<vmem>>, vector<128x512xbf16>
    %cst_24 = arith.constant dense<0.000000e+00> : vector<8x512xf32>
    %70 = tpu.matmul %68, %69, %cst_24 {dimension_numbers = #tpu.dot_dimension_numbers<[1], [0], [0], [1], [0, 0, 1, 1], [], []>} : vector<8x128xbf16>, vector<128x512xbf16>, vector<8x512xf32> -> vector<8x512xf32>
    %71 = vector.broadcast %62 : vector<8x1xi32> to vector<8x128xi32>
    %72 = arith.cmpi eq, %8, %71 : vector<8x128xi32>
    %73 = arith.extui %72 : vector<8x128xi1> to vector<8x128xi32>
    %74 = arith.sitofp %73 : vector<8x128xi32> to vector<8x128xf32>
    %75 = arith.truncf %74 : vector<8x128xf32> to vector<8x128xbf16>
    %c0_25 = arith.constant 0 : index
    %c0_26 = arith.constant 0 : index
    %76 = vector.load %arg2[%c0_25, %c0_26] : memref<128x512xbf16, #tpu.memory_space<vmem>>, vector<128x512xbf16>
    %cst_27 = arith.constant dense<0.000000e+00> : vector<8x512xf32>
    %77 = tpu.matmul %75, %76, %cst_27 {dimension_numbers = #tpu.dot_dimension_numbers<[1], [0], [0], [1], [0, 0, 1, 1], [], []>} : vector<8x128xbf16>, vector<128x512xbf16>, vector<8x512xf32> -> vector<8x512xf32>
    %78 = arith.addf %70, %77 : vector<8x512xf32>
    %79 = arith.addf %78, %4 : vector<8x512xf32>
    %80 = vector.extract_strided_slice %79 {offsets = [0, 0], sizes = [8, 128], strides = [1, 1]} : vector<8x512xf32> to vector<8x128xf32>
    %81 = arith.negf %80 : vector<8x128xf32>
    %82 = math.exp %81 : vector<8x128xf32>
    %cst_28 = arith.constant 1.000000e+00 : f32
    %83 = vector.broadcast %cst_28 : f32 to vector<8x128xf32>
    %84 = arith.addf %83, %82 : vector<8x128xf32>
    %85 = arith.divf %83, %84 : vector<8x128xf32>
    %86 = vector.extract_strided_slice %79 {offsets = [0, 128], sizes = [8, 128], strides = [1, 1]} : vector<8x512xf32> to vector<8x128xf32>
    %87 = arith.negf %86 : vector<8x128xf32>
    %88 = math.exp %87 : vector<8x128xf32>
    %cst_29 = arith.constant 1.000000e+00 : f32
    %89 = vector.broadcast %cst_29 : f32 to vector<8x128xf32>
    %90 = arith.addf %89, %88 : vector<8x128xf32>
    %91 = arith.divf %89, %90 : vector<8x128xf32>
    %92 = vector.extract_strided_slice %79 {offsets = [0, 256], sizes = [8, 128], strides = [1, 1]} : vector<8x512xf32> to vector<8x128xf32>
    %93 = math.tanh %92 : vector<8x128xf32>
    %94 = vector.extract_strided_slice %79 {offsets = [0, 384], sizes = [8, 128], strides = [1, 1]} : vector<8x512xf32> to vector<8x128xf32>
    %95 = arith.negf %94 : vector<8x128xf32>
    %96 = math.exp %95 : vector<8x128xf32>
    %cst_30 = arith.constant 1.000000e+00 : f32
    %97 = vector.broadcast %cst_30 : f32 to vector<8x128xf32>
    %98 = arith.addf %97, %96 : vector<8x128xf32>
    %99 = arith.divf %97, %98 : vector<8x128xf32>
    %100 = arith.mulf %91, %46 : vector<8x128xf32>
    %101 = arith.mulf %85, %93 : vector<8x128xf32>
    %102 = arith.addf %100, %101 : vector<8x128xf32>
    %103 = math.tanh %102 : vector<8x128xf32>
    %104 = arith.mulf %99, %103 : vector<8x128xf32>
    %105 = arith.truncf %104 : vector<8x128xf32> to vector<8x128xbf16>
    %c0_31 = arith.constant 0 : index
    %c0_32 = arith.constant 0 : index
    %106 = vector.load %arg5[%c0_31, %c0_32] : memref<128x128xbf16, #tpu.memory_space<vmem>>, vector<128x128xbf16>
    %cst_33 = arith.constant dense<0.000000e+00> : vector<8x128xf32>
    %107 = tpu.matmul %105, %106, %cst_33 {dimension_numbers = #tpu.dot_dimension_numbers<[1], [0], [0], [1], [0, 0, 1, 1], [], []>} : vector<8x128xbf16>, vector<128x128xbf16>, vector<8x128xf32> -> vector<8x128xf32>
    %108 = arith.addf %107, %7 : vector<8x128xf32>
    %cst_34 = arith.constant dense<0xFF800000> : vector<8xf32>
    %109 = vector.multi_reduction <maximumf>, %108, %cst_34 [1] : vector<8x128xf32> to vector<8xf32>
    %110 = vector.shape_cast %109 : vector<8xf32> to vector<8x1xf32>
    %111 = vector.broadcast %110 : vector<8x1xf32> to vector<8x128xf32>
    %112 = arith.cmpf oeq, %108, %111 : vector<8x128xf32>
    %c128_i32_35 = arith.constant 128 : i32
    %113 = vector.broadcast %c128_i32_35 : i32 to vector<8x128xi32>
    %114 = arith.select %112, %8, %113 : vector<8x128xi1>, vector<8x128xi32>
    %cst_36 = arith.constant dense<2147483647> : vector<8xi32>
    %115 = vector.multi_reduction <minsi>, %114, %cst_36 [1] : vector<8x128xi32> to vector<8xi32>
    %116 = vector.shape_cast %115 : vector<8xi32> to vector<8x1xi32>
    %c127_i32_37 = arith.constant 127 : i32
    %117 = vector.broadcast %c127_i32_37 : i32 to vector<8x1xi32>
    %118 = arith.minsi %116, %117 : vector<8x1xi32>
    %119 = vector.broadcast %c1_i32_21 : i32 to vector<8x16xi32>
    %120 = arith.cmpi eq, %9, %119 : vector<8x16xi32>
    %121 = vector.shape_cast %118 : vector<8x1xi32> to vector<8x1xi32>
    %122 = vector.broadcast %121 : vector<8x1xi32> to vector<8x16xi32>
    %123 = arith.select %120, %122, %67 : vector<8x16xi1>, vector<8x16xi32>
    %c2_i32 = arith.constant 2 : i32
    %124 = arith.truncf %104 : vector<8x128xf32> to vector<8x128xbf16>
    %c0_38 = arith.constant 0 : index
    %c0_39 = arith.constant 0 : index
    %125 = vector.load %arg3[%c0_38, %c0_39] : memref<128x512xbf16, #tpu.memory_space<vmem>>, vector<128x512xbf16>
    %cst_40 = arith.constant dense<0.000000e+00> : vector<8x512xf32>
    %126 = tpu.matmul %124, %125, %cst_40 {dimension_numbers = #tpu.dot_dimension_numbers<[1], [0], [0], [1], [0, 0, 1, 1], [], []>} : vector<8x128xbf16>, vector<128x512xbf16>, vector<8x512xf32> -> vector<8x512xf32>
    %127 = vector.broadcast %118 : vector<8x1xi32> to vector<8x128xi32>
    %128 = arith.cmpi eq, %8, %127 : vector<8x128xi32>
    %129 = arith.extui %128 : vector<8x128xi1> to vector<8x128xi32>
    %130 = arith.sitofp %129 : vector<8x128xi32> to vector<8x128xf32>
    %131 = arith.truncf %130 : vector<8x128xf32> to vector<8x128xbf16>
    %c0_41 = arith.constant 0 : index
    %c0_42 = arith.constant 0 : index
    %132 = vector.load %arg2[%c0_41, %c0_42] : memref<128x512xbf16, #tpu.memory_space<vmem>>, vector<128x512xbf16>
    %cst_43 = arith.constant dense<0.000000e+00> : vector<8x512xf32>
    %133 = tpu.matmul %131, %132, %cst_43 {dimension_numbers = #tpu.dot_dimension_numbers<[1], [0], [0], [1], [0, 0, 1, 1], [], []>} : vector<8x128xbf16>, vector<128x512xbf16>, vector<8x512xf32> -> vector<8x512xf32>
    %134 = arith.addf %126, %133 : vector<8x512xf32>
    %135 = arith.addf %134, %4 : vector<8x512xf32>
    %136 = vector.extract_strided_slice %135 {offsets = [0, 0], sizes = [8, 128], strides = [1, 1]} : vector<8x512xf32> to vector<8x128xf32>
    %137 = arith.negf %136 : vector<8x128xf32>
    %138 = math.exp %137 : vector<8x128xf32>
    %cst_44 = arith.constant 1.000000e+00 : f32
    %139 = vector.broadcast %cst_44 : f32 to vector<8x128xf32>
    %140 = arith.addf %139, %138 : vector<8x128xf32>
    %141 = arith.divf %139, %140 : vector<8x128xf32>
    %142 = vector.extract_strided_slice %135 {offsets = [0, 128], sizes = [8, 128], strides = [1, 1]} : vector<8x512xf32> to vector<8x128xf32>
    %143 = arith.negf %142 : vector<8x128xf32>
    %144 = math.exp %143 : vector<8x128xf32>
    %cst_45 = arith.constant 1.000000e+00 : f32
    %145 = vector.broadcast %cst_45 : f32 to vector<8x128xf32>
    %146 = arith.addf %145, %144 : vector<8x128xf32>
    %147 = arith.divf %145, %146 : vector<8x128xf32>
    %148 = vector.extract_strided_slice %135 {offsets = [0, 256], sizes = [8, 128], strides = [1, 1]} : vector<8x512xf32> to vector<8x128xf32>
    %149 = math.tanh %148 : vector<8x128xf32>
    %150 = vector.extract_strided_slice %135 {offsets = [0, 384], sizes = [8, 128], strides = [1, 1]} : vector<8x512xf32> to vector<8x128xf32>
    %151 = arith.negf %150 : vector<8x128xf32>
    %152 = math.exp %151 : vector<8x128xf32>
    %cst_46 = arith.constant 1.000000e+00 : f32
    %153 = vector.broadcast %cst_46 : f32 to vector<8x128xf32>
    %154 = arith.addf %153, %152 : vector<8x128xf32>
    %155 = arith.divf %153, %154 : vector<8x128xf32>
    %156 = arith.mulf %147, %102 : vector<8x128xf32>
    %157 = arith.mulf %141, %149 : vector<8x128xf32>
    %158 = arith.addf %156, %157 : vector<8x128xf32>
    %159 = math.tanh %158 : vector<8x128xf32>
    %160 = arith.mulf %155, %159 : vector<8x128xf32>
    %161 = arith.truncf %160 : vector<8x128xf32> to vector<8x128xbf16>
    %c0_47 = arith.constant 0 : index
    %c0_48 = arith.constant 0 : index
    %162 = vector.load %arg5[%c0_47, %c0_48] : memref<128x128xbf16, #tpu.memory_space<vmem>>, vector<128x128xbf16>
    %cst_49 = arith.constant dense<0.000000e+00> : vector<8x128xf32>
    %163 = tpu.matmul %161, %162, %cst_49 {dimension_numbers = #tpu.dot_dimension_numbers<[1], [0], [0], [1], [0, 0, 1, 1], [], []>} : vector<8x128xbf16>, vector<128x128xbf16>, vector<8x128xf32> -> vector<8x128xf32>
    %164 = arith.addf %163, %7 : vector<8x128xf32>
    %cst_50 = arith.constant dense<0xFF800000> : vector<8xf32>
    %165 = vector.multi_reduction <maximumf>, %164, %cst_50 [1] : vector<8x128xf32> to vector<8xf32>
    %166 = vector.shape_cast %165 : vector<8xf32> to vector<8x1xf32>
    %167 = vector.broadcast %166 : vector<8x1xf32> to vector<8x128xf32>
    %168 = arith.cmpf oeq, %164, %167 : vector<8x128xf32>
    %c128_i32_51 = arith.constant 128 : i32
    %169 = vector.broadcast %c128_i32_51 : i32 to vector<8x128xi32>
    %170 = arith.select %168, %8, %169 : vector<8x128xi1>, vector<8x128xi32>
    %cst_52 = arith.constant dense<2147483647> : vector<8xi32>
    %171 = vector.multi_reduction <minsi>, %170, %cst_52 [1] : vector<8x128xi32> to vector<8xi32>
    %172 = vector.shape_cast %171 : vector<8xi32> to vector<8x1xi32>
    %c127_i32_53 = arith.constant 127 : i32
    %173 = vector.broadcast %c127_i32_53 : i32 to vector<8x1xi32>
    %174 = arith.minsi %172, %173 : vector<8x1xi32>
    %175 = vector.broadcast %c2_i32 : i32 to vector<8x16xi32>
    %176 = arith.cmpi eq, %9, %175 : vector<8x16xi32>
    %177 = vector.shape_cast %174 : vector<8x1xi32> to vector<8x1xi32>
    %178 = vector.broadcast %177 : vector<8x1xi32> to vector<8x16xi32>
    %179 = arith.select %176, %178, %123 : vector<8x16xi1>, vector<8x16xi32>
    %c3_i32 = arith.constant 3 : i32
    %180 = arith.truncf %160 : vector<8x128xf32> to vector<8x128xbf16>
    %c0_54 = arith.constant 0 : index
    %c0_55 = arith.constant 0 : index
    %181 = vector.load %arg3[%c0_54, %c0_55] : memref<128x512xbf16, #tpu.memory_space<vmem>>, vector<128x512xbf16>
    %cst_56 = arith.constant dense<0.000000e+00> : vector<8x512xf32>
    %182 = tpu.matmul %180, %181, %cst_56 {dimension_numbers = #tpu.dot_dimension_numbers<[1], [0], [0], [1], [0, 0, 1, 1], [], []>} : vector<8x128xbf16>, vector<128x512xbf16>, vector<8x512xf32> -> vector<8x512xf32>
    %183 = vector.broadcast %174 : vector<8x1xi32> to vector<8x128xi32>
    %184 = arith.cmpi eq, %8, %183 : vector<8x128xi32>
    %185 = arith.extui %184 : vector<8x128xi1> to vector<8x128xi32>
    %186 = arith.sitofp %185 : vector<8x128xi32> to vector<8x128xf32>
    %187 = arith.truncf %186 : vector<8x128xf32> to vector<8x128xbf16>
    %c0_57 = arith.constant 0 : index
    %c0_58 = arith.constant 0 : index
    %188 = vector.load %arg2[%c0_57, %c0_58] : memref<128x512xbf16, #tpu.memory_space<vmem>>, vector<128x512xbf16>
    %cst_59 = arith.constant dense<0.000000e+00> : vector<8x512xf32>
    %189 = tpu.matmul %187, %188, %cst_59 {dimension_numbers = #tpu.dot_dimension_numbers<[1], [0], [0], [1], [0, 0, 1, 1], [], []>} : vector<8x128xbf16>, vector<128x512xbf16>, vector<8x512xf32> -> vector<8x512xf32>
    %190 = arith.addf %182, %189 : vector<8x512xf32>
    %191 = arith.addf %190, %4 : vector<8x512xf32>
    %192 = vector.extract_strided_slice %191 {offsets = [0, 0], sizes = [8, 128], strides = [1, 1]} : vector<8x512xf32> to vector<8x128xf32>
    %193 = arith.negf %192 : vector<8x128xf32>
    %194 = math.exp %193 : vector<8x128xf32>
    %cst_60 = arith.constant 1.000000e+00 : f32
    %195 = vector.broadcast %cst_60 : f32 to vector<8x128xf32>
    %196 = arith.addf %195, %194 : vector<8x128xf32>
    %197 = arith.divf %195, %196 : vector<8x128xf32>
    %198 = vector.extract_strided_slice %191 {offsets = [0, 128], sizes = [8, 128], strides = [1, 1]} : vector<8x512xf32> to vector<8x128xf32>
    %199 = arith.negf %198 : vector<8x128xf32>
    %200 = math.exp %199 : vector<8x128xf32>
    %cst_61 = arith.constant 1.000000e+00 : f32
    %201 = vector.broadcast %cst_61 : f32 to vector<8x128xf32>
    %202 = arith.addf %201, %200 : vector<8x128xf32>
    %203 = arith.divf %201, %202 : vector<8x128xf32>
    %204 = vector.extract_strided_slice %191 {offsets = [0, 256], sizes = [8, 128], strides = [1, 1]} : vector<8x512xf32> to vector<8x128xf32>
    %205 = math.tanh %204 : vector<8x128xf32>
    %206 = vector.extract_strided_slice %191 {offsets = [0, 384], sizes = [8, 128], strides = [1, 1]} : vector<8x512xf32> to vector<8x128xf32>
    %207 = arith.negf %206 : vector<8x128xf32>
    %208 = math.exp %207 : vector<8x128xf32>
    %cst_62 = arith.constant 1.000000e+00 : f32
    %209 = vector.broadcast %cst_62 : f32 to vector<8x128xf32>
    %210 = arith.addf %209, %208 : vector<8x128xf32>
    %211 = arith.divf %209, %210 : vector<8x128xf32>
    %212 = arith.mulf %203, %158 : vector<8x128xf32>
    %213 = arith.mulf %197, %205 : vector<8x128xf32>
    %214 = arith.addf %212, %213 : vector<8x128xf32>
    %215 = math.tanh %214 : vector<8x128xf32>
    %216 = arith.mulf %211, %215 : vector<8x128xf32>
    %217 = arith.truncf %216 : vector<8x128xf32> to vector<8x128xbf16>
    %c0_63 = arith.constant 0 : index
    %c0_64 = arith.constant 0 : index
    %218 = vector.load %arg5[%c0_63, %c0_64] : memref<128x128xbf16, #tpu.memory_space<vmem>>, vector<128x128xbf16>
    %cst_65 = arith.constant dense<0.000000e+00> : vector<8x128xf32>
    %219 = tpu.matmul %217, %218, %cst_65 {dimension_numbers = #tpu.dot_dimension_numbers<[1], [0], [0], [1], [0, 0, 1, 1], [], []>} : vector<8x128xbf16>, vector<128x128xbf16>, vector<8x128xf32> -> vector<8x128xf32>
    %220 = arith.addf %219, %7 : vector<8x128xf32>
    %cst_66 = arith.constant dense<0xFF800000> : vector<8xf32>
    %221 = vector.multi_reduction <maximumf>, %220, %cst_66 [1] : vector<8x128xf32> to vector<8xf32>
    %222 = vector.shape_cast %221 : vector<8xf32> to vector<8x1xf32>
    %223 = vector.broadcast %222 : vector<8x1xf32> to vector<8x128xf32>
    %224 = arith.cmpf oeq, %220, %223 : vector<8x128xf32>
    %c128_i32_67 = arith.constant 128 : i32
    %225 = vector.broadcast %c128_i32_67 : i32 to vector<8x128xi32>
    %226 = arith.select %224, %8, %225 : vector<8x128xi1>, vector<8x128xi32>
    %cst_68 = arith.constant dense<2147483647> : vector<8xi32>
    %227 = vector.multi_reduction <minsi>, %226, %cst_68 [1] : vector<8x128xi32> to vector<8xi32>
    %228 = vector.shape_cast %227 : vector<8xi32> to vector<8x1xi32>
    %c127_i32_69 = arith.constant 127 : i32
    %229 = vector.broadcast %c127_i32_69 : i32 to vector<8x1xi32>
    %230 = arith.minsi %228, %229 : vector<8x1xi32>
    %231 = vector.broadcast %c3_i32 : i32 to vector<8x16xi32>
    %232 = arith.cmpi eq, %9, %231 : vector<8x16xi32>
    %233 = vector.shape_cast %230 : vector<8x1xi32> to vector<8x1xi32>
    %234 = vector.broadcast %233 : vector<8x1xi32> to vector<8x16xi32>
    %235 = arith.select %232, %234, %179 : vector<8x16xi1>, vector<8x16xi32>
    %c4_i32 = arith.constant 4 : i32
    %236 = arith.truncf %216 : vector<8x128xf32> to vector<8x128xbf16>
    %c0_70 = arith.constant 0 : index
    %c0_71 = arith.constant 0 : index
    %237 = vector.load %arg3[%c0_70, %c0_71] : memref<128x512xbf16, #tpu.memory_space<vmem>>, vector<128x512xbf16>
    %cst_72 = arith.constant dense<0.000000e+00> : vector<8x512xf32>
    %238 = tpu.matmul %236, %237, %cst_72 {dimension_numbers = #tpu.dot_dimension_numbers<[1], [0], [0], [1], [0, 0, 1, 1], [], []>} : vector<8x128xbf16>, vector<128x512xbf16>, vector<8x512xf32> -> vector<8x512xf32>
    %239 = vector.broadcast %230 : vector<8x1xi32> to vector<8x128xi32>
    %240 = arith.cmpi eq, %8, %239 : vector<8x128xi32>
    %241 = arith.extui %240 : vector<8x128xi1> to vector<8x128xi32>
    %242 = arith.sitofp %241 : vector<8x128xi32> to vector<8x128xf32>
    %243 = arith.truncf %242 : vector<8x128xf32> to vector<8x128xbf16>
    %c0_73 = arith.constant 0 : index
    %c0_74 = arith.constant 0 : index
    %244 = vector.load %arg2[%c0_73, %c0_74] : memref<128x512xbf16, #tpu.memory_space<vmem>>, vector<128x512xbf16>
    %cst_75 = arith.constant dense<0.000000e+00> : vector<8x512xf32>
    %245 = tpu.matmul %243, %244, %cst_75 {dimension_numbers = #tpu.dot_dimension_numbers<[1], [0], [0], [1], [0, 0, 1, 1], [], []>} : vector<8x128xbf16>, vector<128x512xbf16>, vector<8x512xf32> -> vector<8x512xf32>
    %246 = arith.addf %238, %245 : vector<8x512xf32>
    %247 = arith.addf %246, %4 : vector<8x512xf32>
    %248 = vector.extract_strided_slice %247 {offsets = [0, 0], sizes = [8, 128], strides = [1, 1]} : vector<8x512xf32> to vector<8x128xf32>
    %249 = arith.negf %248 : vector<8x128xf32>
    %250 = math.exp %249 : vector<8x128xf32>
    %cst_76 = arith.constant 1.000000e+00 : f32
    %251 = vector.broadcast %cst_76 : f32 to vector<8x128xf32>
    %252 = arith.addf %251, %250 : vector<8x128xf32>
    %253 = arith.divf %251, %252 : vector<8x128xf32>
    %254 = vector.extract_strided_slice %247 {offsets = [0, 128], sizes = [8, 128], strides = [1, 1]} : vector<8x512xf32> to vector<8x128xf32>
    %255 = arith.negf %254 : vector<8x128xf32>
    %256 = math.exp %255 : vector<8x128xf32>
    %cst_77 = arith.constant 1.000000e+00 : f32
    %257 = vector.broadcast %cst_77 : f32 to vector<8x128xf32>
    %258 = arith.addf %257, %256 : vector<8x128xf32>
    %259 = arith.divf %257, %258 : vector<8x128xf32>
    %260 = vector.extract_strided_slice %247 {offsets = [0, 256], sizes = [8, 128], strides = [1, 1]} : vector<8x512xf32> to vector<8x128xf32>
    %261 = math.tanh %260 : vector<8x128xf32>
    %262 = vector.extract_strided_slice %247 {offsets = [0, 384], sizes = [8, 128], strides = [1, 1]} : vector<8x512xf32> to vector<8x128xf32>
    %263 = arith.negf %262 : vector<8x128xf32>
    %264 = math.exp %263 : vector<8x128xf32>
    %cst_78 = arith.constant 1.000000e+00 : f32
    %265 = vector.broadcast %cst_78 : f32 to vector<8x128xf32>
    %266 = arith.addf %265, %264 : vector<8x128xf32>
    %267 = arith.divf %265, %266 : vector<8x128xf32>
    %268 = arith.mulf %259, %214 : vector<8x128xf32>
    %269 = arith.mulf %253, %261 : vector<8x128xf32>
    %270 = arith.addf %268, %269 : vector<8x128xf32>
    %271 = math.tanh %270 : vector<8x128xf32>
    %272 = arith.mulf %267, %271 : vector<8x128xf32>
    %273 = arith.truncf %272 : vector<8x128xf32> to vector<8x128xbf16>
    %c0_79 = arith.constant 0 : index
    %c0_80 = arith.constant 0 : index
    %274 = vector.load %arg5[%c0_79, %c0_80] : memref<128x128xbf16, #tpu.memory_space<vmem>>, vector<128x128xbf16>
    %cst_81 = arith.constant dense<0.000000e+00> : vector<8x128xf32>
    %275 = tpu.matmul %273, %274, %cst_81 {dimension_numbers = #tpu.dot_dimension_numbers<[1], [0], [0], [1], [0, 0, 1, 1], [], []>} : vector<8x128xbf16>, vector<128x128xbf16>, vector<8x128xf32> -> vector<8x128xf32>
    %276 = arith.addf %275, %7 : vector<8x128xf32>
    %cst_82 = arith.constant dense<0xFF800000> : vector<8xf32>
    %277 = vector.multi_reduction <maximumf>, %276, %cst_82 [1] : vector<8x128xf32> to vector<8xf32>
    %278 = vector.shape_cast %277 : vector<8xf32> to vector<8x1xf32>
    %279 = vector.broadcast %278 : vector<8x1xf32> to vector<8x128xf32>
    %280 = arith.cmpf oeq, %276, %279 : vector<8x128xf32>
    %c128_i32_83 = arith.constant 128 : i32
    %281 = vector.broadcast %c128_i32_83 : i32 to vector<8x128xi32>
    %282 = arith.select %280, %8, %281 : vector<8x128xi1>, vector<8x128xi32>
    %cst_84 = arith.constant dense<2147483647> : vector<8xi32>
    %283 = vector.multi_reduction <minsi>, %282, %cst_84 [1] : vector<8x128xi32> to vector<8xi32>
    %284 = vector.shape_cast %283 : vector<8xi32> to vector<8x1xi32>
    %c127_i32_85 = arith.constant 127 : i32
    %285 = vector.broadcast %c127_i32_85 : i32 to vector<8x1xi32>
    %286 = arith.minsi %284, %285 : vector<8x1xi32>
    %287 = vector.broadcast %c4_i32 : i32 to vector<8x16xi32>
    %288 = arith.cmpi eq, %9, %287 : vector<8x16xi32>
    %289 = vector.shape_cast %286 : vector<8x1xi32> to vector<8x1xi32>
    %290 = vector.broadcast %289 : vector<8x1xi32> to vector<8x16xi32>
    %291 = arith.select %288, %290, %235 : vector<8x16xi1>, vector<8x16xi32>
    %c5_i32 = arith.constant 5 : i32
    %292 = arith.truncf %272 : vector<8x128xf32> to vector<8x128xbf16>
    %c0_86 = arith.constant 0 : index
    %c0_87 = arith.constant 0 : index
    %293 = vector.load %arg3[%c0_86, %c0_87] : memref<128x512xbf16, #tpu.memory_space<vmem>>, vector<128x512xbf16>
    %cst_88 = arith.constant dense<0.000000e+00> : vector<8x512xf32>
    %294 = tpu.matmul %292, %293, %cst_88 {dimension_numbers = #tpu.dot_dimension_numbers<[1], [0], [0], [1], [0, 0, 1, 1], [], []>} : vector<8x128xbf16>, vector<128x512xbf16>, vector<8x512xf32> -> vector<8x512xf32>
    %295 = vector.broadcast %286 : vector<8x1xi32> to vector<8x128xi32>
    %296 = arith.cmpi eq, %8, %295 : vector<8x128xi32>
    %297 = arith.extui %296 : vector<8x128xi1> to vector<8x128xi32>
    %298 = arith.sitofp %297 : vector<8x128xi32> to vector<8x128xf32>
    %299 = arith.truncf %298 : vector<8x128xf32> to vector<8x128xbf16>
    %c0_89 = arith.constant 0 : index
    %c0_90 = arith.constant 0 : index
    %300 = vector.load %arg2[%c0_89, %c0_90] : memref<128x512xbf16, #tpu.memory_space<vmem>>, vector<128x512xbf16>
    %cst_91 = arith.constant dense<0.000000e+00> : vector<8x512xf32>
    %301 = tpu.matmul %299, %300, %cst_91 {dimension_numbers = #tpu.dot_dimension_numbers<[1], [0], [0], [1], [0, 0, 1, 1], [], []>} : vector<8x128xbf16>, vector<128x512xbf16>, vector<8x512xf32> -> vector<8x512xf32>
    %302 = arith.addf %294, %301 : vector<8x512xf32>
    %303 = arith.addf %302, %4 : vector<8x512xf32>
    %304 = vector.extract_strided_slice %303 {offsets = [0, 0], sizes = [8, 128], strides = [1, 1]} : vector<8x512xf32> to vector<8x128xf32>
    %305 = arith.negf %304 : vector<8x128xf32>
    %306 = math.exp %305 : vector<8x128xf32>
    %cst_92 = arith.constant 1.000000e+00 : f32
    %307 = vector.broadcast %cst_92 : f32 to vector<8x128xf32>
    %308 = arith.addf %307, %306 : vector<8x128xf32>
    %309 = arith.divf %307, %308 : vector<8x128xf32>
    %310 = vector.extract_strided_slice %303 {offsets = [0, 128], sizes = [8, 128], strides = [1, 1]} : vector<8x512xf32> to vector<8x128xf32>
    %311 = arith.negf %310 : vector<8x128xf32>
    %312 = math.exp %311 : vector<8x128xf32>
    %cst_93 = arith.constant 1.000000e+00 : f32
    %313 = vector.broadcast %cst_93 : f32 to vector<8x128xf32>
    %314 = arith.addf %313, %312 : vector<8x128xf32>
    %315 = arith.divf %313, %314 : vector<8x128xf32>
    %316 = vector.extract_strided_slice %303 {offsets = [0, 256], sizes = [8, 128], strides = [1, 1]} : vector<8x512xf32> to vector<8x128xf32>
    %317 = math.tanh %316 : vector<8x128xf32>
    %318 = vector.extract_strided_slice %303 {offsets = [0, 384], sizes = [8, 128], strides = [1, 1]} : vector<8x512xf32> to vector<8x128xf32>
    %319 = arith.negf %318 : vector<8x128xf32>
    %320 = math.exp %319 : vector<8x128xf32>
    %cst_94 = arith.constant 1.000000e+00 : f32
    %321 = vector.broadcast %cst_94 : f32 to vector<8x128xf32>
    %322 = arith.addf %321, %320 : vector<8x128xf32>
    %323 = arith.divf %321, %322 : vector<8x128xf32>
    %324 = arith.mulf %315, %270 : vector<8x128xf32>
    %325 = arith.mulf %309, %317 : vector<8x128xf32>
    %326 = arith.addf %324, %325 : vector<8x128xf32>
    %327 = math.tanh %326 : vector<8x128xf32>
    %328 = arith.mulf %323, %327 : vector<8x128xf32>
    %329 = arith.truncf %328 : vector<8x128xf32> to vector<8x128xbf16>
    %c0_95 = arith.constant 0 : index
    %c0_96 = arith.constant 0 : index
    %330 = vector.load %arg5[%c0_95, %c0_96] : memref<128x128xbf16, #tpu.memory_space<vmem>>, vector<128x128xbf16>
    %cst_97 = arith.constant dense<0.000000e+00> : vector<8x128xf32>
    %331 = tpu.matmul %329, %330, %cst_97 {dimension_numbers = #tpu.dot_dimension_numbers<[1], [0], [0], [1], [0, 0, 1, 1], [], []>} : vector<8x128xbf16>, vector<128x128xbf16>, vector<8x128xf32> -> vector<8x128xf32>
    %332 = arith.addf %331, %7 : vector<8x128xf32>
    %cst_98 = arith.constant dense<0xFF800000> : vector<8xf32>
    %333 = vector.multi_reduction <maximumf>, %332, %cst_98 [1] : vector<8x128xf32> to vector<8xf32>
    %334 = vector.shape_cast %333 : vector<8xf32> to vector<8x1xf32>
    %335 = vector.broadcast %334 : vector<8x1xf32> to vector<8x128xf32>
    %336 = arith.cmpf oeq, %332, %335 : vector<8x128xf32>
    %c128_i32_99 = arith.constant 128 : i32
    %337 = vector.broadcast %c128_i32_99 : i32 to vector<8x128xi32>
    %338 = arith.select %336, %8, %337 : vector<8x128xi1>, vector<8x128xi32>
    %cst_100 = arith.constant dense<2147483647> : vector<8xi32>
    %339 = vector.multi_reduction <minsi>, %338, %cst_100 [1] : vector<8x128xi32> to vector<8xi32>
    %340 = vector.shape_cast %339 : vector<8xi32> to vector<8x1xi32>
    %c127_i32_101 = arith.constant 127 : i32
    %341 = vector.broadcast %c127_i32_101 : i32 to vector<8x1xi32>
    %342 = arith.minsi %340, %341 : vector<8x1xi32>
    %343 = vector.broadcast %c5_i32 : i32 to vector<8x16xi32>
    %344 = arith.cmpi eq, %9, %343 : vector<8x16xi32>
    %345 = vector.shape_cast %342 : vector<8x1xi32> to vector<8x1xi32>
    %346 = vector.broadcast %345 : vector<8x1xi32> to vector<8x16xi32>
    %347 = arith.select %344, %346, %291 : vector<8x16xi1>, vector<8x16xi32>
    %c6_i32 = arith.constant 6 : i32
    %348 = arith.truncf %328 : vector<8x128xf32> to vector<8x128xbf16>
    %c0_102 = arith.constant 0 : index
    %c0_103 = arith.constant 0 : index
    %349 = vector.load %arg3[%c0_102, %c0_103] : memref<128x512xbf16, #tpu.memory_space<vmem>>, vector<128x512xbf16>
    %cst_104 = arith.constant dense<0.000000e+00> : vector<8x512xf32>
    %350 = tpu.matmul %348, %349, %cst_104 {dimension_numbers = #tpu.dot_dimension_numbers<[1], [0], [0], [1], [0, 0, 1, 1], [], []>} : vector<8x128xbf16>, vector<128x512xbf16>, vector<8x512xf32> -> vector<8x512xf32>
    %351 = vector.broadcast %342 : vector<8x1xi32> to vector<8x128xi32>
    %352 = arith.cmpi eq, %8, %351 : vector<8x128xi32>
    %353 = arith.extui %352 : vector<8x128xi1> to vector<8x128xi32>
    %354 = arith.sitofp %353 : vector<8x128xi32> to vector<8x128xf32>
    %355 = arith.truncf %354 : vector<8x128xf32> to vector<8x128xbf16>
    %c0_105 = arith.constant 0 : index
    %c0_106 = arith.constant 0 : index
    %356 = vector.load %arg2[%c0_105, %c0_106] : memref<128x512xbf16, #tpu.memory_space<vmem>>, vector<128x512xbf16>
    %cst_107 = arith.constant dense<0.000000e+00> : vector<8x512xf32>
    %357 = tpu.matmul %355, %356, %cst_107 {dimension_numbers = #tpu.dot_dimension_numbers<[1], [0], [0], [1], [0, 0, 1, 1], [], []>} : vector<8x128xbf16>, vector<128x512xbf16>, vector<8x512xf32> -> vector<8x512xf32>
    %358 = arith.addf %350, %357 : vector<8x512xf32>
    %359 = arith.addf %358, %4 : vector<8x512xf32>
    %360 = vector.extract_strided_slice %359 {offsets = [0, 0], sizes = [8, 128], strides = [1, 1]} : vector<8x512xf32> to vector<8x128xf32>
    %361 = arith.negf %360 : vector<8x128xf32>
    %362 = math.exp %361 : vector<8x128xf32>
    %cst_108 = arith.constant 1.000000e+00 : f32
    %363 = vector.broadcast %cst_108 : f32 to vector<8x128xf32>
    %364 = arith.addf %363, %362 : vector<8x128xf32>
    %365 = arith.divf %363, %364 : vector<8x128xf32>
    %366 = vector.extract_strided_slice %359 {offsets = [0, 128], sizes = [8, 128], strides = [1, 1]} : vector<8x512xf32> to vector<8x128xf32>
    %367 = arith.negf %366 : vector<8x128xf32>
    %368 = math.exp %367 : vector<8x128xf32>
    %cst_109 = arith.constant 1.000000e+00 : f32
    %369 = vector.broadcast %cst_109 : f32 to vector<8x128xf32>
    %370 = arith.addf %369, %368 : vector<8x128xf32>
    %371 = arith.divf %369, %370 : vector<8x128xf32>
    %372 = vector.extract_strided_slice %359 {offsets = [0, 256], sizes = [8, 128], strides = [1, 1]} : vector<8x512xf32> to vector<8x128xf32>
    %373 = math.tanh %372 : vector<8x128xf32>
    %374 = vector.extract_strided_slice %359 {offsets = [0, 384], sizes = [8, 128], strides = [1, 1]} : vector<8x512xf32> to vector<8x128xf32>
    %375 = arith.negf %374 : vector<8x128xf32>
    %376 = math.exp %375 : vector<8x128xf32>
    %cst_110 = arith.constant 1.000000e+00 : f32
    %377 = vector.broadcast %cst_110 : f32 to vector<8x128xf32>
    %378 = arith.addf %377, %376 : vector<8x128xf32>
    %379 = arith.divf %377, %378 : vector<8x128xf32>
    %380 = arith.mulf %371, %326 : vector<8x128xf32>
    %381 = arith.mulf %365, %373 : vector<8x128xf32>
    %382 = arith.addf %380, %381 : vector<8x128xf32>
    %383 = math.tanh %382 : vector<8x128xf32>
    %384 = arith.mulf %379, %383 : vector<8x128xf32>
    %385 = arith.truncf %384 : vector<8x128xf32> to vector<8x128xbf16>
    %c0_111 = arith.constant 0 : index
    %c0_112 = arith.constant 0 : index
    %386 = vector.load %arg5[%c0_111, %c0_112] : memref<128x128xbf16, #tpu.memory_space<vmem>>, vector<128x128xbf16>
    %cst_113 = arith.constant dense<0.000000e+00> : vector<8x128xf32>
    %387 = tpu.matmul %385, %386, %cst_113 {dimension_numbers = #tpu.dot_dimension_numbers<[1], [0], [0], [1], [0, 0, 1, 1], [], []>} : vector<8x128xbf16>, vector<128x128xbf16>, vector<8x128xf32> -> vector<8x128xf32>
    %388 = arith.addf %387, %7 : vector<8x128xf32>
    %cst_114 = arith.constant dense<0xFF800000> : vector<8xf32>
    %389 = vector.multi_reduction <maximumf>, %388, %cst_114 [1] : vector<8x128xf32> to vector<8xf32>
    %390 = vector.shape_cast %389 : vector<8xf32> to vector<8x1xf32>
    %391 = vector.broadcast %390 : vector<8x1xf32> to vector<8x128xf32>
    %392 = arith.cmpf oeq, %388, %391 : vector<8x128xf32>
    %c128_i32_115 = arith.constant 128 : i32
    %393 = vector.broadcast %c128_i32_115 : i32 to vector<8x128xi32>
    %394 = arith.select %392, %8, %393 : vector<8x128xi1>, vector<8x128xi32>
    %cst_116 = arith.constant dense<2147483647> : vector<8xi32>
    %395 = vector.multi_reduction <minsi>, %394, %cst_116 [1] : vector<8x128xi32> to vector<8xi32>
    %396 = vector.shape_cast %395 : vector<8xi32> to vector<8x1xi32>
    %c127_i32_117 = arith.constant 127 : i32
    %397 = vector.broadcast %c127_i32_117 : i32 to vector<8x1xi32>
    %398 = arith.minsi %396, %397 : vector<8x1xi32>
    %399 = vector.broadcast %c6_i32 : i32 to vector<8x16xi32>
    %400 = arith.cmpi eq, %9, %399 : vector<8x16xi32>
    %401 = vector.shape_cast %398 : vector<8x1xi32> to vector<8x1xi32>
    %402 = vector.broadcast %401 : vector<8x1xi32> to vector<8x16xi32>
    %403 = arith.select %400, %402, %347 : vector<8x16xi1>, vector<8x16xi32>
    %c7_i32 = arith.constant 7 : i32
    %404 = arith.truncf %384 : vector<8x128xf32> to vector<8x128xbf16>
    %c0_118 = arith.constant 0 : index
    %c0_119 = arith.constant 0 : index
    %405 = vector.load %arg3[%c0_118, %c0_119] : memref<128x512xbf16, #tpu.memory_space<vmem>>, vector<128x512xbf16>
    %cst_120 = arith.constant dense<0.000000e+00> : vector<8x512xf32>
    %406 = tpu.matmul %404, %405, %cst_120 {dimension_numbers = #tpu.dot_dimension_numbers<[1], [0], [0], [1], [0, 0, 1, 1], [], []>} : vector<8x128xbf16>, vector<128x512xbf16>, vector<8x512xf32> -> vector<8x512xf32>
    %407 = vector.broadcast %398 : vector<8x1xi32> to vector<8x128xi32>
    %408 = arith.cmpi eq, %8, %407 : vector<8x128xi32>
    %409 = arith.extui %408 : vector<8x128xi1> to vector<8x128xi32>
    %410 = arith.sitofp %409 : vector<8x128xi32> to vector<8x128xf32>
    %411 = arith.truncf %410 : vector<8x128xf32> to vector<8x128xbf16>
    %c0_121 = arith.constant 0 : index
    %c0_122 = arith.constant 0 : index
    %412 = vector.load %arg2[%c0_121, %c0_122] : memref<128x512xbf16, #tpu.memory_space<vmem>>, vector<128x512xbf16>
    %cst_123 = arith.constant dense<0.000000e+00> : vector<8x512xf32>
    %413 = tpu.matmul %411, %412, %cst_123 {dimension_numbers = #tpu.dot_dimension_numbers<[1], [0], [0], [1], [0, 0, 1, 1], [], []>} : vector<8x128xbf16>, vector<128x512xbf16>, vector<8x512xf32> -> vector<8x512xf32>
    %414 = arith.addf %406, %413 : vector<8x512xf32>
    %415 = arith.addf %414, %4 : vector<8x512xf32>
    %416 = vector.extract_strided_slice %415 {offsets = [0, 0], sizes = [8, 128], strides = [1, 1]} : vector<8x512xf32> to vector<8x128xf32>
    %417 = arith.negf %416 : vector<8x128xf32>
    %418 = math.exp %417 : vector<8x128xf32>
    %cst_124 = arith.constant 1.000000e+00 : f32
    %419 = vector.broadcast %cst_124 : f32 to vector<8x128xf32>
    %420 = arith.addf %419, %418 : vector<8x128xf32>
    %421 = arith.divf %419, %420 : vector<8x128xf32>
    %422 = vector.extract_strided_slice %415 {offsets = [0, 128], sizes = [8, 128], strides = [1, 1]} : vector<8x512xf32> to vector<8x128xf32>
    %423 = arith.negf %422 : vector<8x128xf32>
    %424 = math.exp %423 : vector<8x128xf32>
    %cst_125 = arith.constant 1.000000e+00 : f32
    %425 = vector.broadcast %cst_125 : f32 to vector<8x128xf32>
    %426 = arith.addf %425, %424 : vector<8x128xf32>
    %427 = arith.divf %425, %426 : vector<8x128xf32>
    %428 = vector.extract_strided_slice %415 {offsets = [0, 256], sizes = [8, 128], strides = [1, 1]} : vector<8x512xf32> to vector<8x128xf32>
    %429 = math.tanh %428 : vector<8x128xf32>
    %430 = vector.extract_strided_slice %415 {offsets = [0, 384], sizes = [8, 128], strides = [1, 1]} : vector<8x512xf32> to vector<8x128xf32>
    %431 = arith.negf %430 : vector<8x128xf32>
    %432 = math.exp %431 : vector<8x128xf32>
    %cst_126 = arith.constant 1.000000e+00 : f32
    %433 = vector.broadcast %cst_126 : f32 to vector<8x128xf32>
    %434 = arith.addf %433, %432 : vector<8x128xf32>
    %435 = arith.divf %433, %434 : vector<8x128xf32>
    %436 = arith.mulf %427, %382 : vector<8x128xf32>
    %437 = arith.mulf %421, %429 : vector<8x128xf32>
    %438 = arith.addf %436, %437 : vector<8x128xf32>
    %439 = math.tanh %438 : vector<8x128xf32>
    %440 = arith.mulf %435, %439 : vector<8x128xf32>
    %441 = arith.truncf %440 : vector<8x128xf32> to vector<8x128xbf16>
    %c0_127 = arith.constant 0 : index
    %c0_128 = arith.constant 0 : index
    %442 = vector.load %arg5[%c0_127, %c0_128] : memref<128x128xbf16, #tpu.memory_space<vmem>>, vector<128x128xbf16>
    %cst_129 = arith.constant dense<0.000000e+00> : vector<8x128xf32>
    %443 = tpu.matmul %441, %442, %cst_129 {dimension_numbers = #tpu.dot_dimension_numbers<[1], [0], [0], [1], [0, 0, 1, 1], [], []>} : vector<8x128xbf16>, vector<128x128xbf16>, vector<8x128xf32> -> vector<8x128xf32>
    %444 = arith.addf %443, %7 : vector<8x128xf32>
    %cst_130 = arith.constant dense<0xFF800000> : vector<8xf32>
    %445 = vector.multi_reduction <maximumf>, %444, %cst_130 [1] : vector<8x128xf32> to vector<8xf32>
    %446 = vector.shape_cast %445 : vector<8xf32> to vector<8x1xf32>
    %447 = vector.broadcast %446 : vector<8x1xf32> to vector<8x128xf32>
    %448 = arith.cmpf oeq, %444, %447 : vector<8x128xf32>
    %c128_i32_131 = arith.constant 128 : i32
    %449 = vector.broadcast %c128_i32_131 : i32 to vector<8x128xi32>
    %450 = arith.select %448, %8, %449 : vector<8x128xi1>, vector<8x128xi32>
    %cst_132 = arith.constant dense<2147483647> : vector<8xi32>
    %451 = vector.multi_reduction <minsi>, %450, %cst_132 [1] : vector<8x128xi32> to vector<8xi32>
    %452 = vector.shape_cast %451 : vector<8xi32> to vector<8x1xi32>
    %c127_i32_133 = arith.constant 127 : i32
    %453 = vector.broadcast %c127_i32_133 : i32 to vector<8x1xi32>
    %454 = arith.minsi %452, %453 : vector<8x1xi32>
    %455 = vector.broadcast %c7_i32 : i32 to vector<8x16xi32>
    %456 = arith.cmpi eq, %9, %455 : vector<8x16xi32>
    %457 = vector.shape_cast %454 : vector<8x1xi32> to vector<8x1xi32>
    %458 = vector.broadcast %457 : vector<8x1xi32> to vector<8x16xi32>
    %459 = arith.select %456, %458, %403 : vector<8x16xi1>, vector<8x16xi32>
    %c8_i32 = arith.constant 8 : i32
    %460 = arith.truncf %440 : vector<8x128xf32> to vector<8x128xbf16>
    %c0_134 = arith.constant 0 : index
    %c0_135 = arith.constant 0 : index
    %461 = vector.load %arg3[%c0_134, %c0_135] : memref<128x512xbf16, #tpu.memory_space<vmem>>, vector<128x512xbf16>
    %cst_136 = arith.constant dense<0.000000e+00> : vector<8x512xf32>
    %462 = tpu.matmul %460, %461, %cst_136 {dimension_numbers = #tpu.dot_dimension_numbers<[1], [0], [0], [1], [0, 0, 1, 1], [], []>} : vector<8x128xbf16>, vector<128x512xbf16>, vector<8x512xf32> -> vector<8x512xf32>
    %463 = vector.broadcast %454 : vector<8x1xi32> to vector<8x128xi32>
    %464 = arith.cmpi eq, %8, %463 : vector<8x128xi32>
    %465 = arith.extui %464 : vector<8x128xi1> to vector<8x128xi32>
    %466 = arith.sitofp %465 : vector<8x128xi32> to vector<8x128xf32>
    %467 = arith.truncf %466 : vector<8x128xf32> to vector<8x128xbf16>
    %c0_137 = arith.constant 0 : index
    %c0_138 = arith.constant 0 : index
    %468 = vector.load %arg2[%c0_137, %c0_138] : memref<128x512xbf16, #tpu.memory_space<vmem>>, vector<128x512xbf16>
    %cst_139 = arith.constant dense<0.000000e+00> : vector<8x512xf32>
    %469 = tpu.matmul %467, %468, %cst_139 {dimension_numbers = #tpu.dot_dimension_numbers<[1], [0], [0], [1], [0, 0, 1, 1], [], []>} : vector<8x128xbf16>, vector<128x512xbf16>, vector<8x512xf32> -> vector<8x512xf32>
    %470 = arith.addf %462, %469 : vector<8x512xf32>
    %471 = arith.addf %470, %4 : vector<8x512xf32>
    %472 = vector.extract_strided_slice %471 {offsets = [0, 0], sizes = [8, 128], strides = [1, 1]} : vector<8x512xf32> to vector<8x128xf32>
    %473 = arith.negf %472 : vector<8x128xf32>
    %474 = math.exp %473 : vector<8x128xf32>
    %cst_140 = arith.constant 1.000000e+00 : f32
    %475 = vector.broadcast %cst_140 : f32 to vector<8x128xf32>
    %476 = arith.addf %475, %474 : vector<8x128xf32>
    %477 = arith.divf %475, %476 : vector<8x128xf32>
    %478 = vector.extract_strided_slice %471 {offsets = [0, 128], sizes = [8, 128], strides = [1, 1]} : vector<8x512xf32> to vector<8x128xf32>
    %479 = arith.negf %478 : vector<8x128xf32>
    %480 = math.exp %479 : vector<8x128xf32>
    %cst_141 = arith.constant 1.000000e+00 : f32
    %481 = vector.broadcast %cst_141 : f32 to vector<8x128xf32>
    %482 = arith.addf %481, %480 : vector<8x128xf32>
    %483 = arith.divf %481, %482 : vector<8x128xf32>
    %484 = vector.extract_strided_slice %471 {offsets = [0, 256], sizes = [8, 128], strides = [1, 1]} : vector<8x512xf32> to vector<8x128xf32>
    %485 = math.tanh %484 : vector<8x128xf32>
    %486 = vector.extract_strided_slice %471 {offsets = [0, 384], sizes = [8, 128], strides = [1, 1]} : vector<8x512xf32> to vector<8x128xf32>
    %487 = arith.negf %486 : vector<8x128xf32>
    %488 = math.exp %487 : vector<8x128xf32>
    %cst_142 = arith.constant 1.000000e+00 : f32
    %489 = vector.broadcast %cst_142 : f32 to vector<8x128xf32>
    %490 = arith.addf %489, %488 : vector<8x128xf32>
    %491 = arith.divf %489, %490 : vector<8x128xf32>
    %492 = arith.mulf %483, %438 : vector<8x128xf32>
    %493 = arith.mulf %477, %485 : vector<8x128xf32>
    %494 = arith.addf %492, %493 : vector<8x128xf32>
    %495 = math.tanh %494 : vector<8x128xf32>
    %496 = arith.mulf %491, %495 : vector<8x128xf32>
    %497 = arith.truncf %496 : vector<8x128xf32> to vector<8x128xbf16>
    %c0_143 = arith.constant 0 : index
    %c0_144 = arith.constant 0 : index
    %498 = vector.load %arg5[%c0_143, %c0_144] : memref<128x128xbf16, #tpu.memory_space<vmem>>, vector<128x128xbf16>
    %cst_145 = arith.constant dense<0.000000e+00> : vector<8x128xf32>
    %499 = tpu.matmul %497, %498, %cst_145 {dimension_numbers = #tpu.dot_dimension_numbers<[1], [0], [0], [1], [0, 0, 1, 1], [], []>} : vector<8x128xbf16>, vector<128x128xbf16>, vector<8x128xf32> -> vector<8x128xf32>
    %500 = arith.addf %499, %7 : vector<8x128xf32>
    %cst_146 = arith.constant dense<0xFF800000> : vector<8xf32>
    %501 = vector.multi_reduction <maximumf>, %500, %cst_146 [1] : vector<8x128xf32> to vector<8xf32>
    %502 = vector.shape_cast %501 : vector<8xf32> to vector<8x1xf32>
    %503 = vector.broadcast %502 : vector<8x1xf32> to vector<8x128xf32>
    %504 = arith.cmpf oeq, %500, %503 : vector<8x128xf32>
    %c128_i32_147 = arith.constant 128 : i32
    %505 = vector.broadcast %c128_i32_147 : i32 to vector<8x128xi32>
    %506 = arith.select %504, %8, %505 : vector<8x128xi1>, vector<8x128xi32>
    %cst_148 = arith.constant dense<2147483647> : vector<8xi32>
    %507 = vector.multi_reduction <minsi>, %506, %cst_148 [1] : vector<8x128xi32> to vector<8xi32>
    %508 = vector.shape_cast %507 : vector<8xi32> to vector<8x1xi32>
    %c127_i32_149 = arith.constant 127 : i32
    %509 = vector.broadcast %c127_i32_149 : i32 to vector<8x1xi32>
    %510 = arith.minsi %508, %509 : vector<8x1xi32>
    %511 = vector.broadcast %c8_i32 : i32 to vector<8x16xi32>
    %512 = arith.cmpi eq, %9, %511 : vector<8x16xi32>
    %513 = vector.shape_cast %510 : vector<8x1xi32> to vector<8x1xi32>
    %514 = vector.broadcast %513 : vector<8x1xi32> to vector<8x16xi32>
    %515 = arith.select %512, %514, %459 : vector<8x16xi1>, vector<8x16xi32>
    %c9_i32 = arith.constant 9 : i32
    %516 = arith.truncf %496 : vector<8x128xf32> to vector<8x128xbf16>
    %c0_150 = arith.constant 0 : index
    %c0_151 = arith.constant 0 : index
    %517 = vector.load %arg3[%c0_150, %c0_151] : memref<128x512xbf16, #tpu.memory_space<vmem>>, vector<128x512xbf16>
    %cst_152 = arith.constant dense<0.000000e+00> : vector<8x512xf32>
    %518 = tpu.matmul %516, %517, %cst_152 {dimension_numbers = #tpu.dot_dimension_numbers<[1], [0], [0], [1], [0, 0, 1, 1], [], []>} : vector<8x128xbf16>, vector<128x512xbf16>, vector<8x512xf32> -> vector<8x512xf32>
    %519 = vector.broadcast %510 : vector<8x1xi32> to vector<8x128xi32>
    %520 = arith.cmpi eq, %8, %519 : vector<8x128xi32>
    %521 = arith.extui %520 : vector<8x128xi1> to vector<8x128xi32>
    %522 = arith.sitofp %521 : vector<8x128xi32> to vector<8x128xf32>
    %523 = arith.truncf %522 : vector<8x128xf32> to vector<8x128xbf16>
    %c0_153 = arith.constant 0 : index
    %c0_154 = arith.constant 0 : index
    %524 = vector.load %arg2[%c0_153, %c0_154] : memref<128x512xbf16, #tpu.memory_space<vmem>>, vector<128x512xbf16>
    %cst_155 = arith.constant dense<0.000000e+00> : vector<8x512xf32>
    %525 = tpu.matmul %523, %524, %cst_155 {dimension_numbers = #tpu.dot_dimension_numbers<[1], [0], [0], [1], [0, 0, 1, 1], [], []>} : vector<8x128xbf16>, vector<128x512xbf16>, vector<8x512xf32> -> vector<8x512xf32>
    %526 = arith.addf %518, %525 : vector<8x512xf32>
    %527 = arith.addf %526, %4 : vector<8x512xf32>
    %528 = vector.extract_strided_slice %527 {offsets = [0, 0], sizes = [8, 128], strides = [1, 1]} : vector<8x512xf32> to vector<8x128xf32>
    %529 = arith.negf %528 : vector<8x128xf32>
    %530 = math.exp %529 : vector<8x128xf32>
    %cst_156 = arith.constant 1.000000e+00 : f32
    %531 = vector.broadcast %cst_156 : f32 to vector<8x128xf32>
    %532 = arith.addf %531, %530 : vector<8x128xf32>
    %533 = arith.divf %531, %532 : vector<8x128xf32>
    %534 = vector.extract_strided_slice %527 {offsets = [0, 128], sizes = [8, 128], strides = [1, 1]} : vector<8x512xf32> to vector<8x128xf32>
    %535 = arith.negf %534 : vector<8x128xf32>
    %536 = math.exp %535 : vector<8x128xf32>
    %cst_157 = arith.constant 1.000000e+00 : f32
    %537 = vector.broadcast %cst_157 : f32 to vector<8x128xf32>
    %538 = arith.addf %537, %536 : vector<8x128xf32>
    %539 = arith.divf %537, %538 : vector<8x128xf32>
    %540 = vector.extract_strided_slice %527 {offsets = [0, 256], sizes = [8, 128], strides = [1, 1]} : vector<8x512xf32> to vector<8x128xf32>
    %541 = math.tanh %540 : vector<8x128xf32>
    %542 = vector.extract_strided_slice %527 {offsets = [0, 384], sizes = [8, 128], strides = [1, 1]} : vector<8x512xf32> to vector<8x128xf32>
    %543 = arith.negf %542 : vector<8x128xf32>
    %544 = math.exp %543 : vector<8x128xf32>
    %cst_158 = arith.constant 1.000000e+00 : f32
    %545 = vector.broadcast %cst_158 : f32 to vector<8x128xf32>
    %546 = arith.addf %545, %544 : vector<8x128xf32>
    %547 = arith.divf %545, %546 : vector<8x128xf32>
    %548 = arith.mulf %539, %494 : vector<8x128xf32>
    %549 = arith.mulf %533, %541 : vector<8x128xf32>
    %550 = arith.addf %548, %549 : vector<8x128xf32>
    %551 = math.tanh %550 : vector<8x128xf32>
    %552 = arith.mulf %547, %551 : vector<8x128xf32>
    %553 = arith.truncf %552 : vector<8x128xf32> to vector<8x128xbf16>
    %c0_159 = arith.constant 0 : index
    %c0_160 = arith.constant 0 : index
    %554 = vector.load %arg5[%c0_159, %c0_160] : memref<128x128xbf16, #tpu.memory_space<vmem>>, vector<128x128xbf16>
    %cst_161 = arith.constant dense<0.000000e+00> : vector<8x128xf32>
    %555 = tpu.matmul %553, %554, %cst_161 {dimension_numbers = #tpu.dot_dimension_numbers<[1], [0], [0], [1], [0, 0, 1, 1], [], []>} : vector<8x128xbf16>, vector<128x128xbf16>, vector<8x128xf32> -> vector<8x128xf32>
    %556 = arith.addf %555, %7 : vector<8x128xf32>
    %cst_162 = arith.constant dense<0xFF800000> : vector<8xf32>
    %557 = vector.multi_reduction <maximumf>, %556, %cst_162 [1] : vector<8x128xf32> to vector<8xf32>
    %558 = vector.shape_cast %557 : vector<8xf32> to vector<8x1xf32>
    %559 = vector.broadcast %558 : vector<8x1xf32> to vector<8x128xf32>
    %560 = arith.cmpf oeq, %556, %559 : vector<8x128xf32>
    %c128_i32_163 = arith.constant 128 : i32
    %561 = vector.broadcast %c128_i32_163 : i32 to vector<8x128xi32>
    %562 = arith.select %560, %8, %561 : vector<8x128xi1>, vector<8x128xi32>
    %cst_164 = arith.constant dense<2147483647> : vector<8xi32>
    %563 = vector.multi_reduction <minsi>, %562, %cst_164 [1] : vector<8x128xi32> to vector<8xi32>
    %564 = vector.shape_cast %563 : vector<8xi32> to vector<8x1xi32>
    %c127_i32_165 = arith.constant 127 : i32
    %565 = vector.broadcast %c127_i32_165 : i32 to vector<8x1xi32>
    %566 = arith.minsi %564, %565 : vector<8x1xi32>
    %567 = vector.broadcast %c9_i32 : i32 to vector<8x16xi32>
    %568 = arith.cmpi eq, %9, %567 : vector<8x16xi32>
    %569 = vector.shape_cast %566 : vector<8x1xi32> to vector<8x1xi32>
    %570 = vector.broadcast %569 : vector<8x1xi32> to vector<8x16xi32>
    %571 = arith.select %568, %570, %515 : vector<8x16xi1>, vector<8x16xi32>
    %c10_i32 = arith.constant 10 : i32
    %572 = arith.truncf %552 : vector<8x128xf32> to vector<8x128xbf16>
    %c0_166 = arith.constant 0 : index
    %c0_167 = arith.constant 0 : index
    %573 = vector.load %arg3[%c0_166, %c0_167] : memref<128x512xbf16, #tpu.memory_space<vmem>>, vector<128x512xbf16>
    %cst_168 = arith.constant dense<0.000000e+00> : vector<8x512xf32>
    %574 = tpu.matmul %572, %573, %cst_168 {dimension_numbers = #tpu.dot_dimension_numbers<[1], [0], [0], [1], [0, 0, 1, 1], [], []>} : vector<8x128xbf16>, vector<128x512xbf16>, vector<8x512xf32> -> vector<8x512xf32>
    %575 = vector.broadcast %566 : vector<8x1xi32> to vector<8x128xi32>
    %576 = arith.cmpi eq, %8, %575 : vector<8x128xi32>
    %577 = arith.extui %576 : vector<8x128xi1> to vector<8x128xi32>
    %578 = arith.sitofp %577 : vector<8x128xi32> to vector<8x128xf32>
    %579 = arith.truncf %578 : vector<8x128xf32> to vector<8x128xbf16>
    %c0_169 = arith.constant 0 : index
    %c0_170 = arith.constant 0 : index
    %580 = vector.load %arg2[%c0_169, %c0_170] : memref<128x512xbf16, #tpu.memory_space<vmem>>, vector<128x512xbf16>
    %cst_171 = arith.constant dense<0.000000e+00> : vector<8x512xf32>
    %581 = tpu.matmul %579, %580, %cst_171 {dimension_numbers = #tpu.dot_dimension_numbers<[1], [0], [0], [1], [0, 0, 1, 1], [], []>} : vector<8x128xbf16>, vector<128x512xbf16>, vector<8x512xf32> -> vector<8x512xf32>
    %582 = arith.addf %574, %581 : vector<8x512xf32>
    %583 = arith.addf %582, %4 : vector<8x512xf32>
    %584 = vector.extract_strided_slice %583 {offsets = [0, 0], sizes = [8, 128], strides = [1, 1]} : vector<8x512xf32> to vector<8x128xf32>
    %585 = arith.negf %584 : vector<8x128xf32>
    %586 = math.exp %585 : vector<8x128xf32>
    %cst_172 = arith.constant 1.000000e+00 : f32
    %587 = vector.broadcast %cst_172 : f32 to vector<8x128xf32>
    %588 = arith.addf %587, %586 : vector<8x128xf32>
    %589 = arith.divf %587, %588 : vector<8x128xf32>
    %590 = vector.extract_strided_slice %583 {offsets = [0, 128], sizes = [8, 128], strides = [1, 1]} : vector<8x512xf32> to vector<8x128xf32>
    %591 = arith.negf %590 : vector<8x128xf32>
    %592 = math.exp %591 : vector<8x128xf32>
    %cst_173 = arith.constant 1.000000e+00 : f32
    %593 = vector.broadcast %cst_173 : f32 to vector<8x128xf32>
    %594 = arith.addf %593, %592 : vector<8x128xf32>
    %595 = arith.divf %593, %594 : vector<8x128xf32>
    %596 = vector.extract_strided_slice %583 {offsets = [0, 256], sizes = [8, 128], strides = [1, 1]} : vector<8x512xf32> to vector<8x128xf32>
    %597 = math.tanh %596 : vector<8x128xf32>
    %598 = vector.extract_strided_slice %583 {offsets = [0, 384], sizes = [8, 128], strides = [1, 1]} : vector<8x512xf32> to vector<8x128xf32>
    %599 = arith.negf %598 : vector<8x128xf32>
    %600 = math.exp %599 : vector<8x128xf32>
    %cst_174 = arith.constant 1.000000e+00 : f32
    %601 = vector.broadcast %cst_174 : f32 to vector<8x128xf32>
    %602 = arith.addf %601, %600 : vector<8x128xf32>
    %603 = arith.divf %601, %602 : vector<8x128xf32>
    %604 = arith.mulf %595, %550 : vector<8x128xf32>
    %605 = arith.mulf %589, %597 : vector<8x128xf32>
    %606 = arith.addf %604, %605 : vector<8x128xf32>
    %607 = math.tanh %606 : vector<8x128xf32>
    %608 = arith.mulf %603, %607 : vector<8x128xf32>
    %609 = arith.truncf %608 : vector<8x128xf32> to vector<8x128xbf16>
    %c0_175 = arith.constant 0 : index
    %c0_176 = arith.constant 0 : index
    %610 = vector.load %arg5[%c0_175, %c0_176] : memref<128x128xbf16, #tpu.memory_space<vmem>>, vector<128x128xbf16>
    %cst_177 = arith.constant dense<0.000000e+00> : vector<8x128xf32>
    %611 = tpu.matmul %609, %610, %cst_177 {dimension_numbers = #tpu.dot_dimension_numbers<[1], [0], [0], [1], [0, 0, 1, 1], [], []>} : vector<8x128xbf16>, vector<128x128xbf16>, vector<8x128xf32> -> vector<8x128xf32>
    %612 = arith.addf %611, %7 : vector<8x128xf32>
    %cst_178 = arith.constant dense<0xFF800000> : vector<8xf32>
    %613 = vector.multi_reduction <maximumf>, %612, %cst_178 [1] : vector<8x128xf32> to vector<8xf32>
    %614 = vector.shape_cast %613 : vector<8xf32> to vector<8x1xf32>
    %615 = vector.broadcast %614 : vector<8x1xf32> to vector<8x128xf32>
    %616 = arith.cmpf oeq, %612, %615 : vector<8x128xf32>
    %c128_i32_179 = arith.constant 128 : i32
    %617 = vector.broadcast %c128_i32_179 : i32 to vector<8x128xi32>
    %618 = arith.select %616, %8, %617 : vector<8x128xi1>, vector<8x128xi32>
    %cst_180 = arith.constant dense<2147483647> : vector<8xi32>
    %619 = vector.multi_reduction <minsi>, %618, %cst_180 [1] : vector<8x128xi32> to vector<8xi32>
    %620 = vector.shape_cast %619 : vector<8xi32> to vector<8x1xi32>
    %c127_i32_181 = arith.constant 127 : i32
    %621 = vector.broadcast %c127_i32_181 : i32 to vector<8x1xi32>
    %622 = arith.minsi %620, %621 : vector<8x1xi32>
    %623 = vector.broadcast %c10_i32 : i32 to vector<8x16xi32>
    %624 = arith.cmpi eq, %9, %623 : vector<8x16xi32>
    %625 = vector.shape_cast %622 : vector<8x1xi32> to vector<8x1xi32>
    %626 = vector.broadcast %625 : vector<8x1xi32> to vector<8x16xi32>
    %627 = arith.select %624, %626, %571 : vector<8x16xi1>, vector<8x16xi32>
    %c11_i32 = arith.constant 11 : i32
    %628 = arith.truncf %608 : vector<8x128xf32> to vector<8x128xbf16>
    %c0_182 = arith.constant 0 : index
    %c0_183 = arith.constant 0 : index
    %629 = vector.load %arg3[%c0_182, %c0_183] : memref<128x512xbf16, #tpu.memory_space<vmem>>, vector<128x512xbf16>
    %cst_184 = arith.constant dense<0.000000e+00> : vector<8x512xf32>
    %630 = tpu.matmul %628, %629, %cst_184 {dimension_numbers = #tpu.dot_dimension_numbers<[1], [0], [0], [1], [0, 0, 1, 1], [], []>} : vector<8x128xbf16>, vector<128x512xbf16>, vector<8x512xf32> -> vector<8x512xf32>
    %631 = vector.broadcast %622 : vector<8x1xi32> to vector<8x128xi32>
    %632 = arith.cmpi eq, %8, %631 : vector<8x128xi32>
    %633 = arith.extui %632 : vector<8x128xi1> to vector<8x128xi32>
    %634 = arith.sitofp %633 : vector<8x128xi32> to vector<8x128xf32>
    %635 = arith.truncf %634 : vector<8x128xf32> to vector<8x128xbf16>
    %c0_185 = arith.constant 0 : index
    %c0_186 = arith.constant 0 : index
    %636 = vector.load %arg2[%c0_185, %c0_186] : memref<128x512xbf16, #tpu.memory_space<vmem>>, vector<128x512xbf16>
    %cst_187 = arith.constant dense<0.000000e+00> : vector<8x512xf32>
    %637 = tpu.matmul %635, %636, %cst_187 {dimension_numbers = #tpu.dot_dimension_numbers<[1], [0], [0], [1], [0, 0, 1, 1], [], []>} : vector<8x128xbf16>, vector<128x512xbf16>, vector<8x512xf32> -> vector<8x512xf32>
    %638 = arith.addf %630, %637 : vector<8x512xf32>
    %639 = arith.addf %638, %4 : vector<8x512xf32>
    %640 = vector.extract_strided_slice %639 {offsets = [0, 0], sizes = [8, 128], strides = [1, 1]} : vector<8x512xf32> to vector<8x128xf32>
    %641 = arith.negf %640 : vector<8x128xf32>
    %642 = math.exp %641 : vector<8x128xf32>
    %cst_188 = arith.constant 1.000000e+00 : f32
    %643 = vector.broadcast %cst_188 : f32 to vector<8x128xf32>
    %644 = arith.addf %643, %642 : vector<8x128xf32>
    %645 = arith.divf %643, %644 : vector<8x128xf32>
    %646 = vector.extract_strided_slice %639 {offsets = [0, 128], sizes = [8, 128], strides = [1, 1]} : vector<8x512xf32> to vector<8x128xf32>
    %647 = arith.negf %646 : vector<8x128xf32>
    %648 = math.exp %647 : vector<8x128xf32>
    %cst_189 = arith.constant 1.000000e+00 : f32
    %649 = vector.broadcast %cst_189 : f32 to vector<8x128xf32>
    %650 = arith.addf %649, %648 : vector<8x128xf32>
    %651 = arith.divf %649, %650 : vector<8x128xf32>
    %652 = vector.extract_strided_slice %639 {offsets = [0, 256], sizes = [8, 128], strides = [1, 1]} : vector<8x512xf32> to vector<8x128xf32>
    %653 = math.tanh %652 : vector<8x128xf32>
    %654 = vector.extract_strided_slice %639 {offsets = [0, 384], sizes = [8, 128], strides = [1, 1]} : vector<8x512xf32> to vector<8x128xf32>
    %655 = arith.negf %654 : vector<8x128xf32>
    %656 = math.exp %655 : vector<8x128xf32>
    %cst_190 = arith.constant 1.000000e+00 : f32
    %657 = vector.broadcast %cst_190 : f32 to vector<8x128xf32>
    %658 = arith.addf %657, %656 : vector<8x128xf32>
    %659 = arith.divf %657, %658 : vector<8x128xf32>
    %660 = arith.mulf %651, %606 : vector<8x128xf32>
    %661 = arith.mulf %645, %653 : vector<8x128xf32>
    %662 = arith.addf %660, %661 : vector<8x128xf32>
    %663 = math.tanh %662 : vector<8x128xf32>
    %664 = arith.mulf %659, %663 : vector<8x128xf32>
    %665 = arith.truncf %664 : vector<8x128xf32> to vector<8x128xbf16>
    %c0_191 = arith.constant 0 : index
    %c0_192 = arith.constant 0 : index
    %666 = vector.load %arg5[%c0_191, %c0_192] : memref<128x128xbf16, #tpu.memory_space<vmem>>, vector<128x128xbf16>
    %cst_193 = arith.constant dense<0.000000e+00> : vector<8x128xf32>
    %667 = tpu.matmul %665, %666, %cst_193 {dimension_numbers = #tpu.dot_dimension_numbers<[1], [0], [0], [1], [0, 0, 1, 1], [], []>} : vector<8x128xbf16>, vector<128x128xbf16>, vector<8x128xf32> -> vector<8x128xf32>
    %668 = arith.addf %667, %7 : vector<8x128xf32>
    %cst_194 = arith.constant dense<0xFF800000> : vector<8xf32>
    %669 = vector.multi_reduction <maximumf>, %668, %cst_194 [1] : vector<8x128xf32> to vector<8xf32>
    %670 = vector.shape_cast %669 : vector<8xf32> to vector<8x1xf32>
    %671 = vector.broadcast %670 : vector<8x1xf32> to vector<8x128xf32>
    %672 = arith.cmpf oeq, %668, %671 : vector<8x128xf32>
    %c128_i32_195 = arith.constant 128 : i32
    %673 = vector.broadcast %c128_i32_195 : i32 to vector<8x128xi32>
    %674 = arith.select %672, %8, %673 : vector<8x128xi1>, vector<8x128xi32>
    %cst_196 = arith.constant dense<2147483647> : vector<8xi32>
    %675 = vector.multi_reduction <minsi>, %674, %cst_196 [1] : vector<8x128xi32> to vector<8xi32>
    %676 = vector.shape_cast %675 : vector<8xi32> to vector<8x1xi32>
    %c127_i32_197 = arith.constant 127 : i32
    %677 = vector.broadcast %c127_i32_197 : i32 to vector<8x1xi32>
    %678 = arith.minsi %676, %677 : vector<8x1xi32>
    %679 = vector.broadcast %c11_i32 : i32 to vector<8x16xi32>
    %680 = arith.cmpi eq, %9, %679 : vector<8x16xi32>
    %681 = vector.shape_cast %678 : vector<8x1xi32> to vector<8x1xi32>
    %682 = vector.broadcast %681 : vector<8x1xi32> to vector<8x16xi32>
    %683 = arith.select %680, %682, %627 : vector<8x16xi1>, vector<8x16xi32>
    %c12_i32 = arith.constant 12 : i32
    %684 = arith.truncf %664 : vector<8x128xf32> to vector<8x128xbf16>
    %c0_198 = arith.constant 0 : index
    %c0_199 = arith.constant 0 : index
    %685 = vector.load %arg3[%c0_198, %c0_199] : memref<128x512xbf16, #tpu.memory_space<vmem>>, vector<128x512xbf16>
    %cst_200 = arith.constant dense<0.000000e+00> : vector<8x512xf32>
    %686 = tpu.matmul %684, %685, %cst_200 {dimension_numbers = #tpu.dot_dimension_numbers<[1], [0], [0], [1], [0, 0, 1, 1], [], []>} : vector<8x128xbf16>, vector<128x512xbf16>, vector<8x512xf32> -> vector<8x512xf32>
    %687 = vector.broadcast %678 : vector<8x1xi32> to vector<8x128xi32>
    %688 = arith.cmpi eq, %8, %687 : vector<8x128xi32>
    %689 = arith.extui %688 : vector<8x128xi1> to vector<8x128xi32>
    %690 = arith.sitofp %689 : vector<8x128xi32> to vector<8x128xf32>
    %691 = arith.truncf %690 : vector<8x128xf32> to vector<8x128xbf16>
    %c0_201 = arith.constant 0 : index
    %c0_202 = arith.constant 0 : index
    %692 = vector.load %arg2[%c0_201, %c0_202] : memref<128x512xbf16, #tpu.memory_space<vmem>>, vector<128x512xbf16>
    %cst_203 = arith.constant dense<0.000000e+00> : vector<8x512xf32>
    %693 = tpu.matmul %691, %692, %cst_203 {dimension_numbers = #tpu.dot_dimension_numbers<[1], [0], [0], [1], [0, 0, 1, 1], [], []>} : vector<8x128xbf16>, vector<128x512xbf16>, vector<8x512xf32> -> vector<8x512xf32>
    %694 = arith.addf %686, %693 : vector<8x512xf32>
    %695 = arith.addf %694, %4 : vector<8x512xf32>
    %696 = vector.extract_strided_slice %695 {offsets = [0, 0], sizes = [8, 128], strides = [1, 1]} : vector<8x512xf32> to vector<8x128xf32>
    %697 = arith.negf %696 : vector<8x128xf32>
    %698 = math.exp %697 : vector<8x128xf32>
    %cst_204 = arith.constant 1.000000e+00 : f32
    %699 = vector.broadcast %cst_204 : f32 to vector<8x128xf32>
    %700 = arith.addf %699, %698 : vector<8x128xf32>
    %701 = arith.divf %699, %700 : vector<8x128xf32>
    %702 = vector.extract_strided_slice %695 {offsets = [0, 128], sizes = [8, 128], strides = [1, 1]} : vector<8x512xf32> to vector<8x128xf32>
    %703 = arith.negf %702 : vector<8x128xf32>
    %704 = math.exp %703 : vector<8x128xf32>
    %cst_205 = arith.constant 1.000000e+00 : f32
    %705 = vector.broadcast %cst_205 : f32 to vector<8x128xf32>
    %706 = arith.addf %705, %704 : vector<8x128xf32>
    %707 = arith.divf %705, %706 : vector<8x128xf32>
    %708 = vector.extract_strided_slice %695 {offsets = [0, 256], sizes = [8, 128], strides = [1, 1]} : vector<8x512xf32> to vector<8x128xf32>
    %709 = math.tanh %708 : vector<8x128xf32>
    %710 = vector.extract_strided_slice %695 {offsets = [0, 384], sizes = [8, 128], strides = [1, 1]} : vector<8x512xf32> to vector<8x128xf32>
    %711 = arith.negf %710 : vector<8x128xf32>
    %712 = math.exp %711 : vector<8x128xf32>
    %cst_206 = arith.constant 1.000000e+00 : f32
    %713 = vector.broadcast %cst_206 : f32 to vector<8x128xf32>
    %714 = arith.addf %713, %712 : vector<8x128xf32>
    %715 = arith.divf %713, %714 : vector<8x128xf32>
    %716 = arith.mulf %707, %662 : vector<8x128xf32>
    %717 = arith.mulf %701, %709 : vector<8x128xf32>
    %718 = arith.addf %716, %717 : vector<8x128xf32>
    %719 = math.tanh %718 : vector<8x128xf32>
    %720 = arith.mulf %715, %719 : vector<8x128xf32>
    %721 = arith.truncf %720 : vector<8x128xf32> to vector<8x128xbf16>
    %c0_207 = arith.constant 0 : index
    %c0_208 = arith.constant 0 : index
    %722 = vector.load %arg5[%c0_207, %c0_208] : memref<128x128xbf16, #tpu.memory_space<vmem>>, vector<128x128xbf16>
    %cst_209 = arith.constant dense<0.000000e+00> : vector<8x128xf32>
    %723 = tpu.matmul %721, %722, %cst_209 {dimension_numbers = #tpu.dot_dimension_numbers<[1], [0], [0], [1], [0, 0, 1, 1], [], []>} : vector<8x128xbf16>, vector<128x128xbf16>, vector<8x128xf32> -> vector<8x128xf32>
    %724 = arith.addf %723, %7 : vector<8x128xf32>
    %cst_210 = arith.constant dense<0xFF800000> : vector<8xf32>
    %725 = vector.multi_reduction <maximumf>, %724, %cst_210 [1] : vector<8x128xf32> to vector<8xf32>
    %726 = vector.shape_cast %725 : vector<8xf32> to vector<8x1xf32>
    %727 = vector.broadcast %726 : vector<8x1xf32> to vector<8x128xf32>
    %728 = arith.cmpf oeq, %724, %727 : vector<8x128xf32>
    %c128_i32_211 = arith.constant 128 : i32
    %729 = vector.broadcast %c128_i32_211 : i32 to vector<8x128xi32>
    %730 = arith.select %728, %8, %729 : vector<8x128xi1>, vector<8x128xi32>
    %cst_212 = arith.constant dense<2147483647> : vector<8xi32>
    %731 = vector.multi_reduction <minsi>, %730, %cst_212 [1] : vector<8x128xi32> to vector<8xi32>
    %732 = vector.shape_cast %731 : vector<8xi32> to vector<8x1xi32>
    %c127_i32_213 = arith.constant 127 : i32
    %733 = vector.broadcast %c127_i32_213 : i32 to vector<8x1xi32>
    %734 = arith.minsi %732, %733 : vector<8x1xi32>
    %735 = vector.broadcast %c12_i32 : i32 to vector<8x16xi32>
    %736 = arith.cmpi eq, %9, %735 : vector<8x16xi32>
    %737 = vector.shape_cast %734 : vector<8x1xi32> to vector<8x1xi32>
    %738 = vector.broadcast %737 : vector<8x1xi32> to vector<8x16xi32>
    %739 = arith.select %736, %738, %683 : vector<8x16xi1>, vector<8x16xi32>
    %c13_i32 = arith.constant 13 : i32
    %740 = arith.truncf %720 : vector<8x128xf32> to vector<8x128xbf16>
    %c0_214 = arith.constant 0 : index
    %c0_215 = arith.constant 0 : index
    %741 = vector.load %arg3[%c0_214, %c0_215] : memref<128x512xbf16, #tpu.memory_space<vmem>>, vector<128x512xbf16>
    %cst_216 = arith.constant dense<0.000000e+00> : vector<8x512xf32>
    %742 = tpu.matmul %740, %741, %cst_216 {dimension_numbers = #tpu.dot_dimension_numbers<[1], [0], [0], [1], [0, 0, 1, 1], [], []>} : vector<8x128xbf16>, vector<128x512xbf16>, vector<8x512xf32> -> vector<8x512xf32>
    %743 = vector.broadcast %734 : vector<8x1xi32> to vector<8x128xi32>
    %744 = arith.cmpi eq, %8, %743 : vector<8x128xi32>
    %745 = arith.extui %744 : vector<8x128xi1> to vector<8x128xi32>
    %746 = arith.sitofp %745 : vector<8x128xi32> to vector<8x128xf32>
    %747 = arith.truncf %746 : vector<8x128xf32> to vector<8x128xbf16>
    %c0_217 = arith.constant 0 : index
    %c0_218 = arith.constant 0 : index
    %748 = vector.load %arg2[%c0_217, %c0_218] : memref<128x512xbf16, #tpu.memory_space<vmem>>, vector<128x512xbf16>
    %cst_219 = arith.constant dense<0.000000e+00> : vector<8x512xf32>
    %749 = tpu.matmul %747, %748, %cst_219 {dimension_numbers = #tpu.dot_dimension_numbers<[1], [0], [0], [1], [0, 0, 1, 1], [], []>} : vector<8x128xbf16>, vector<128x512xbf16>, vector<8x512xf32> -> vector<8x512xf32>
    %750 = arith.addf %742, %749 : vector<8x512xf32>
    %751 = arith.addf %750, %4 : vector<8x512xf32>
    %752 = vector.extract_strided_slice %751 {offsets = [0, 0], sizes = [8, 128], strides = [1, 1]} : vector<8x512xf32> to vector<8x128xf32>
    %753 = arith.negf %752 : vector<8x128xf32>
    %754 = math.exp %753 : vector<8x128xf32>
    %cst_220 = arith.constant 1.000000e+00 : f32
    %755 = vector.broadcast %cst_220 : f32 to vector<8x128xf32>
    %756 = arith.addf %755, %754 : vector<8x128xf32>
    %757 = arith.divf %755, %756 : vector<8x128xf32>
    %758 = vector.extract_strided_slice %751 {offsets = [0, 128], sizes = [8, 128], strides = [1, 1]} : vector<8x512xf32> to vector<8x128xf32>
    %759 = arith.negf %758 : vector<8x128xf32>
    %760 = math.exp %759 : vector<8x128xf32>
    %cst_221 = arith.constant 1.000000e+00 : f32
    %761 = vector.broadcast %cst_221 : f32 to vector<8x128xf32>
    %762 = arith.addf %761, %760 : vector<8x128xf32>
    %763 = arith.divf %761, %762 : vector<8x128xf32>
    %764 = vector.extract_strided_slice %751 {offsets = [0, 256], sizes = [8, 128], strides = [1, 1]} : vector<8x512xf32> to vector<8x128xf32>
    %765 = math.tanh %764 : vector<8x128xf32>
    %766 = vector.extract_strided_slice %751 {offsets = [0, 384], sizes = [8, 128], strides = [1, 1]} : vector<8x512xf32> to vector<8x128xf32>
    %767 = arith.negf %766 : vector<8x128xf32>
    %768 = math.exp %767 : vector<8x128xf32>
    %cst_222 = arith.constant 1.000000e+00 : f32
    %769 = vector.broadcast %cst_222 : f32 to vector<8x128xf32>
    %770 = arith.addf %769, %768 : vector<8x128xf32>
    %771 = arith.divf %769, %770 : vector<8x128xf32>
    %772 = arith.mulf %763, %718 : vector<8x128xf32>
    %773 = arith.mulf %757, %765 : vector<8x128xf32>
    %774 = arith.addf %772, %773 : vector<8x128xf32>
    %775 = math.tanh %774 : vector<8x128xf32>
    %776 = arith.mulf %771, %775 : vector<8x128xf32>
    %777 = arith.truncf %776 : vector<8x128xf32> to vector<8x128xbf16>
    %c0_223 = arith.constant 0 : index
    %c0_224 = arith.constant 0 : index
    %778 = vector.load %arg5[%c0_223, %c0_224] : memref<128x128xbf16, #tpu.memory_space<vmem>>, vector<128x128xbf16>
    %cst_225 = arith.constant dense<0.000000e+00> : vector<8x128xf32>
    %779 = tpu.matmul %777, %778, %cst_225 {dimension_numbers = #tpu.dot_dimension_numbers<[1], [0], [0], [1], [0, 0, 1, 1], [], []>} : vector<8x128xbf16>, vector<128x128xbf16>, vector<8x128xf32> -> vector<8x128xf32>
    %780 = arith.addf %779, %7 : vector<8x128xf32>
    %cst_226 = arith.constant dense<0xFF800000> : vector<8xf32>
    %781 = vector.multi_reduction <maximumf>, %780, %cst_226 [1] : vector<8x128xf32> to vector<8xf32>
    %782 = vector.shape_cast %781 : vector<8xf32> to vector<8x1xf32>
    %783 = vector.broadcast %782 : vector<8x1xf32> to vector<8x128xf32>
    %784 = arith.cmpf oeq, %780, %783 : vector<8x128xf32>
    %c128_i32_227 = arith.constant 128 : i32
    %785 = vector.broadcast %c128_i32_227 : i32 to vector<8x128xi32>
    %786 = arith.select %784, %8, %785 : vector<8x128xi1>, vector<8x128xi32>
    %cst_228 = arith.constant dense<2147483647> : vector<8xi32>
    %787 = vector.multi_reduction <minsi>, %786, %cst_228 [1] : vector<8x128xi32> to vector<8xi32>
    %788 = vector.shape_cast %787 : vector<8xi32> to vector<8x1xi32>
    %c127_i32_229 = arith.constant 127 : i32
    %789 = vector.broadcast %c127_i32_229 : i32 to vector<8x1xi32>
    %790 = arith.minsi %788, %789 : vector<8x1xi32>
    %791 = vector.broadcast %c13_i32 : i32 to vector<8x16xi32>
    %792 = arith.cmpi eq, %9, %791 : vector<8x16xi32>
    %793 = vector.shape_cast %790 : vector<8x1xi32> to vector<8x1xi32>
    %794 = vector.broadcast %793 : vector<8x1xi32> to vector<8x16xi32>
    %795 = arith.select %792, %794, %739 : vector<8x16xi1>, vector<8x16xi32>
    %c14_i32 = arith.constant 14 : i32
    %796 = arith.truncf %776 : vector<8x128xf32> to vector<8x128xbf16>
    %c0_230 = arith.constant 0 : index
    %c0_231 = arith.constant 0 : index
    %797 = vector.load %arg3[%c0_230, %c0_231] : memref<128x512xbf16, #tpu.memory_space<vmem>>, vector<128x512xbf16>
    %cst_232 = arith.constant dense<0.000000e+00> : vector<8x512xf32>
    %798 = tpu.matmul %796, %797, %cst_232 {dimension_numbers = #tpu.dot_dimension_numbers<[1], [0], [0], [1], [0, 0, 1, 1], [], []>} : vector<8x128xbf16>, vector<128x512xbf16>, vector<8x512xf32> -> vector<8x512xf32>
    %799 = vector.broadcast %790 : vector<8x1xi32> to vector<8x128xi32>
    %800 = arith.cmpi eq, %8, %799 : vector<8x128xi32>
    %801 = arith.extui %800 : vector<8x128xi1> to vector<8x128xi32>
    %802 = arith.sitofp %801 : vector<8x128xi32> to vector<8x128xf32>
    %803 = arith.truncf %802 : vector<8x128xf32> to vector<8x128xbf16>
    %c0_233 = arith.constant 0 : index
    %c0_234 = arith.constant 0 : index
    %804 = vector.load %arg2[%c0_233, %c0_234] : memref<128x512xbf16, #tpu.memory_space<vmem>>, vector<128x512xbf16>
    %cst_235 = arith.constant dense<0.000000e+00> : vector<8x512xf32>
    %805 = tpu.matmul %803, %804, %cst_235 {dimension_numbers = #tpu.dot_dimension_numbers<[1], [0], [0], [1], [0, 0, 1, 1], [], []>} : vector<8x128xbf16>, vector<128x512xbf16>, vector<8x512xf32> -> vector<8x512xf32>
    %806 = arith.addf %798, %805 : vector<8x512xf32>
    %807 = arith.addf %806, %4 : vector<8x512xf32>
    %808 = vector.extract_strided_slice %807 {offsets = [0, 0], sizes = [8, 128], strides = [1, 1]} : vector<8x512xf32> to vector<8x128xf32>
    %809 = arith.negf %808 : vector<8x128xf32>
    %810 = math.exp %809 : vector<8x128xf32>
    %cst_236 = arith.constant 1.000000e+00 : f32
    %811 = vector.broadcast %cst_236 : f32 to vector<8x128xf32>
    %812 = arith.addf %811, %810 : vector<8x128xf32>
    %813 = arith.divf %811, %812 : vector<8x128xf32>
    %814 = vector.extract_strided_slice %807 {offsets = [0, 128], sizes = [8, 128], strides = [1, 1]} : vector<8x512xf32> to vector<8x128xf32>
    %815 = arith.negf %814 : vector<8x128xf32>
    %816 = math.exp %815 : vector<8x128xf32>
    %cst_237 = arith.constant 1.000000e+00 : f32
    %817 = vector.broadcast %cst_237 : f32 to vector<8x128xf32>
    %818 = arith.addf %817, %816 : vector<8x128xf32>
    %819 = arith.divf %817, %818 : vector<8x128xf32>
    %820 = vector.extract_strided_slice %807 {offsets = [0, 256], sizes = [8, 128], strides = [1, 1]} : vector<8x512xf32> to vector<8x128xf32>
    %821 = math.tanh %820 : vector<8x128xf32>
    %822 = vector.extract_strided_slice %807 {offsets = [0, 384], sizes = [8, 128], strides = [1, 1]} : vector<8x512xf32> to vector<8x128xf32>
    %823 = arith.negf %822 : vector<8x128xf32>
    %824 = math.exp %823 : vector<8x128xf32>
    %cst_238 = arith.constant 1.000000e+00 : f32
    %825 = vector.broadcast %cst_238 : f32 to vector<8x128xf32>
    %826 = arith.addf %825, %824 : vector<8x128xf32>
    %827 = arith.divf %825, %826 : vector<8x128xf32>
    %828 = arith.mulf %819, %774 : vector<8x128xf32>
    %829 = arith.mulf %813, %821 : vector<8x128xf32>
    %830 = arith.addf %828, %829 : vector<8x128xf32>
    %831 = math.tanh %830 : vector<8x128xf32>
    %832 = arith.mulf %827, %831 : vector<8x128xf32>
    %833 = arith.truncf %832 : vector<8x128xf32> to vector<8x128xbf16>
    %c0_239 = arith.constant 0 : index
    %c0_240 = arith.constant 0 : index
    %834 = vector.load %arg5[%c0_239, %c0_240] : memref<128x128xbf16, #tpu.memory_space<vmem>>, vector<128x128xbf16>
    %cst_241 = arith.constant dense<0.000000e+00> : vector<8x128xf32>
    %835 = tpu.matmul %833, %834, %cst_241 {dimension_numbers = #tpu.dot_dimension_numbers<[1], [0], [0], [1], [0, 0, 1, 1], [], []>} : vector<8x128xbf16>, vector<128x128xbf16>, vector<8x128xf32> -> vector<8x128xf32>
    %836 = arith.addf %835, %7 : vector<8x128xf32>
    %cst_242 = arith.constant dense<0xFF800000> : vector<8xf32>
    %837 = vector.multi_reduction <maximumf>, %836, %cst_242 [1] : vector<8x128xf32> to vector<8xf32>
    %838 = vector.shape_cast %837 : vector<8xf32> to vector<8x1xf32>
    %839 = vector.broadcast %838 : vector<8x1xf32> to vector<8x128xf32>
    %840 = arith.cmpf oeq, %836, %839 : vector<8x128xf32>
    %c128_i32_243 = arith.constant 128 : i32
    %841 = vector.broadcast %c128_i32_243 : i32 to vector<8x128xi32>
    %842 = arith.select %840, %8, %841 : vector<8x128xi1>, vector<8x128xi32>
    %cst_244 = arith.constant dense<2147483647> : vector<8xi32>
    %843 = vector.multi_reduction <minsi>, %842, %cst_244 [1] : vector<8x128xi32> to vector<8xi32>
    %844 = vector.shape_cast %843 : vector<8xi32> to vector<8x1xi32>
    %c127_i32_245 = arith.constant 127 : i32
    %845 = vector.broadcast %c127_i32_245 : i32 to vector<8x1xi32>
    %846 = arith.minsi %844, %845 : vector<8x1xi32>
    %847 = vector.broadcast %c14_i32 : i32 to vector<8x16xi32>
    %848 = arith.cmpi eq, %9, %847 : vector<8x16xi32>
    %849 = vector.shape_cast %846 : vector<8x1xi32> to vector<8x1xi32>
    %850 = vector.broadcast %849 : vector<8x1xi32> to vector<8x16xi32>
    %851 = arith.select %848, %850, %795 : vector<8x16xi1>, vector<8x16xi32>
    %c15_i32 = arith.constant 15 : i32
    %852 = arith.truncf %832 : vector<8x128xf32> to vector<8x128xbf16>
    %c0_246 = arith.constant 0 : index
    %c0_247 = arith.constant 0 : index
    %853 = vector.load %arg3[%c0_246, %c0_247] : memref<128x512xbf16, #tpu.memory_space<vmem>>, vector<128x512xbf16>
    %cst_248 = arith.constant dense<0.000000e+00> : vector<8x512xf32>
    %854 = tpu.matmul %852, %853, %cst_248 {dimension_numbers = #tpu.dot_dimension_numbers<[1], [0], [0], [1], [0, 0, 1, 1], [], []>} : vector<8x128xbf16>, vector<128x512xbf16>, vector<8x512xf32> -> vector<8x512xf32>
    %855 = vector.broadcast %846 : vector<8x1xi32> to vector<8x128xi32>
    %856 = arith.cmpi eq, %8, %855 : vector<8x128xi32>
    %857 = arith.extui %856 : vector<8x128xi1> to vector<8x128xi32>
    %858 = arith.sitofp %857 : vector<8x128xi32> to vector<8x128xf32>
    %859 = arith.truncf %858 : vector<8x128xf32> to vector<8x128xbf16>
    %c0_249 = arith.constant 0 : index
    %c0_250 = arith.constant 0 : index
    %860 = vector.load %arg2[%c0_249, %c0_250] : memref<128x512xbf16, #tpu.memory_space<vmem>>, vector<128x512xbf16>
    %cst_251 = arith.constant dense<0.000000e+00> : vector<8x512xf32>
    %861 = tpu.matmul %859, %860, %cst_251 {dimension_numbers = #tpu.dot_dimension_numbers<[1], [0], [0], [1], [0, 0, 1, 1], [], []>} : vector<8x128xbf16>, vector<128x512xbf16>, vector<8x512xf32> -> vector<8x512xf32>
    %862 = arith.addf %854, %861 : vector<8x512xf32>
    %863 = arith.addf %862, %4 : vector<8x512xf32>
    %864 = vector.extract_strided_slice %863 {offsets = [0, 0], sizes = [8, 128], strides = [1, 1]} : vector<8x512xf32> to vector<8x128xf32>
    %865 = arith.negf %864 : vector<8x128xf32>
    %866 = math.exp %865 : vector<8x128xf32>
    %cst_252 = arith.constant 1.000000e+00 : f32
    %867 = vector.broadcast %cst_252 : f32 to vector<8x128xf32>
    %868 = arith.addf %867, %866 : vector<8x128xf32>
    %869 = arith.divf %867, %868 : vector<8x128xf32>
    %870 = vector.extract_strided_slice %863 {offsets = [0, 128], sizes = [8, 128], strides = [1, 1]} : vector<8x512xf32> to vector<8x128xf32>
    %871 = arith.negf %870 : vector<8x128xf32>
    %872 = math.exp %871 : vector<8x128xf32>
    %cst_253 = arith.constant 1.000000e+00 : f32
    %873 = vector.broadcast %cst_253 : f32 to vector<8x128xf32>
    %874 = arith.addf %873, %872 : vector<8x128xf32>
    %875 = arith.divf %873, %874 : vector<8x128xf32>
    %876 = vector.extract_strided_slice %863 {offsets = [0, 256], sizes = [8, 128], strides = [1, 1]} : vector<8x512xf32> to vector<8x128xf32>
    %877 = math.tanh %876 : vector<8x128xf32>
    %878 = vector.extract_strided_slice %863 {offsets = [0, 384], sizes = [8, 128], strides = [1, 1]} : vector<8x512xf32> to vector<8x128xf32>
    %879 = arith.negf %878 : vector<8x128xf32>
    %880 = math.exp %879 : vector<8x128xf32>
    %cst_254 = arith.constant 1.000000e+00 : f32
    %881 = vector.broadcast %cst_254 : f32 to vector<8x128xf32>
    %882 = arith.addf %881, %880 : vector<8x128xf32>
    %883 = arith.divf %881, %882 : vector<8x128xf32>
    %884 = arith.mulf %875, %830 : vector<8x128xf32>
    %885 = arith.mulf %869, %877 : vector<8x128xf32>
    %886 = arith.addf %884, %885 : vector<8x128xf32>
    %887 = math.tanh %886 : vector<8x128xf32>
    %888 = arith.mulf %883, %887 : vector<8x128xf32>
    %889 = arith.truncf %888 : vector<8x128xf32> to vector<8x128xbf16>
    %c0_255 = arith.constant 0 : index
    %c0_256 = arith.constant 0 : index
    %890 = vector.load %arg5[%c0_255, %c0_256] : memref<128x128xbf16, #tpu.memory_space<vmem>>, vector<128x128xbf16>
    %cst_257 = arith.constant dense<0.000000e+00> : vector<8x128xf32>
    %891 = tpu.matmul %889, %890, %cst_257 {dimension_numbers = #tpu.dot_dimension_numbers<[1], [0], [0], [1], [0, 0, 1, 1], [], []>} : vector<8x128xbf16>, vector<128x128xbf16>, vector<8x128xf32> -> vector<8x128xf32>
    %892 = arith.addf %891, %7 : vector<8x128xf32>
    %cst_258 = arith.constant dense<0xFF800000> : vector<8xf32>
    %893 = vector.multi_reduction <maximumf>, %892, %cst_258 [1] : vector<8x128xf32> to vector<8xf32>
    %894 = vector.shape_cast %893 : vector<8xf32> to vector<8x1xf32>
    %895 = vector.broadcast %894 : vector<8x1xf32> to vector<8x128xf32>
    %896 = arith.cmpf oeq, %892, %895 : vector<8x128xf32>
    %c128_i32_259 = arith.constant 128 : i32
    %897 = vector.broadcast %c128_i32_259 : i32 to vector<8x128xi32>
    %898 = arith.select %896, %8, %897 : vector<8x128xi1>, vector<8x128xi32>
    %cst_260 = arith.constant dense<2147483647> : vector<8xi32>
    %899 = vector.multi_reduction <minsi>, %898, %cst_260 [1] : vector<8x128xi32> to vector<8xi32>
    %900 = vector.shape_cast %899 : vector<8xi32> to vector<8x1xi32>
    %c127_i32_261 = arith.constant 127 : i32
    %901 = vector.broadcast %c127_i32_261 : i32 to vector<8x1xi32>
    %902 = arith.minsi %900, %901 : vector<8x1xi32>
    %903 = vector.broadcast %c15_i32 : i32 to vector<8x16xi32>
    %904 = arith.cmpi eq, %9, %903 : vector<8x16xi32>
    %905 = vector.shape_cast %902 : vector<8x1xi32> to vector<8x1xi32>
    %906 = vector.broadcast %905 : vector<8x1xi32> to vector<8x16xi32>
    %907 = arith.select %904, %906, %851 : vector<8x16xi1>, vector<8x16xi32>
    %c16_i32 = arith.constant 16 : i32
    %c0_262 = arith.constant 0 : index
    %c0_263 = arith.constant 0 : index
    %908 = vector.load %arg7[%c0_262, %c0_263] : memref<8x16xi32, #tpu.memory_space<vmem>>, vector<8x16xi32>
    tpu.vector_store %arg7[%c0_262, %c0_263], %907 {strides = array<i32>} : memref<8x16xi32, #tpu.memory_space<vmem>>, vector<8x16xi32>,
    return
  }
}

</mosaic_0001>

<llo_original>
// kernel: tpu_custom_call.1
$region0: #{tpu_custom_call.1}
  #allocation0 [shape = 'u32[]', space=smem, size = 0x4, offset = 0x4, fixed_abs, tag = 'smem constant byte address 0x4 - core index']
  #allocation1 [shape = 'u32[144,128]{1,0:T(1,128)}', space=vmem, size = 0x12000, scoped, tag = 'internal scratch']
  %s0 = inlined_call_operand.hbm [shape: f32[8,128], index: 0, kind: input, shape index: {}]
  %s1 = inlined_call_operand.hbm [shape: f32[8,128], index: 1, kind: input, shape index: {}]
  %s2 = inlined_call_operand.hbm [shape: bf16[128,512], index: 2, kind: input, shape index: {}]
  %s3 = inlined_call_operand.hbm [shape: bf16[128,512], index: 3, kind: input, shape index: {}]
  %s4 = inlined_call_operand.vmem [shape: f32[1,512], index: 4, kind: input, shape index: {}]
  %s5 = inlined_call_operand.hbm [shape: bf16[128,128], index: 5, kind: input, shape index: {}]
  %s6 = inlined_call_operand.vmem [shape: f32[1,128], index: 6, kind: input, shape index: {}]
  %s7 = inlined_call_operand.hbm [shape: s32[8,16], index: 7, kind: output, shape index: {}]
  %s8 = sld [smem:[#allocation0]]
  $region58: #{tpu_custom_call.1} parent=0
    _
  %s10 = ssub.s32 1, %s8
  %s11 = scalar_select 0, %s10, %s8
  $region1: #{tpu_custom_call.1} parent=0
    #allocation2 [shape = 'u8[4096]{0}', space=vmem, size = 0x1000, scoped, tag = 'input window, operand 0, single buffered']
    #allocation3 [shape = 's32[1]{0}', space=sflag, size = 0x4, scoped, tag = 'scoped memory for tpu_custom_call.1']
    #allocation4 [shape = 's32[1]{0}', space=sflag, size = 0x4, scoped, tag = 'scoped memory for tpu_custom_call.1']
    #allocation5 [shape = 'u8[4096]{0}', space=vmem, size = 0x1000, scoped, tag = 'input window, operand 1, single buffered']
    #allocation6 [shape = 's32[1]{0}', space=sflag, size = 0x4, scoped, tag = 'scoped memory for tpu_custom_call.1']
    #allocation7 [shape = 'u8[131072]{0}', space=vmem, size = 0x20000, scoped, tag = 'input window, operand 2, single buffered']
    #allocation8 [shape = 'u8[131072]{0}', space=vmem, size = 0x20000, scoped, tag = 'input window, operand 3, single buffered']
    #allocation9 [shape = 's32[1]{0}', space=sflag, size = 0x4, scoped, tag = 'scoped memory for tpu_custom_call.1']
    #allocation10 [shape = 'u8[32768]{0}', space=vmem, size = 0x8000, scoped, tag = 'input window, operand 5, single buffered']
    #allocation11 [shape = 'u8[4096]{0}', space=vmem, size = 0x1000, scoped, tag = 'output window, operand 0, single buffered']
    %12 = vsyncpa [#allocation3], 0
    %13 = vsyncpa [#allocation6], 0
    %14 = vsyncpa [#allocation9], 0
    %15 = vsyncpa [#allocation4], 0
    // Predicated region
    $region2: #{tpu_custom_call.1} parent=1 // pred_check
      _
    $region3: #{tpu_custom_call.1} parent=1 // pred_check_branch
      %17 = sbr.rel (0) target = $region5
    $region4: #{tpu_custom_call.1} parent=1 // pred_region
      %s19 = ssub.s32 128, 128
      %20 = vsyncadd [#allocation3], %s19
      %s22 = sshll.u32 [#allocation2], 4
      %s23 = int_to_ptr.vmem [resolvable:$true] %s22
      %25 = dma.hbm_to_vmem [thread:$0]  %s0, 128, %s23, [#allocation3]
    $region5: #{tpu_custom_call.1} parent=1 // pred_fallthru
      _
    // Predicated region
    $region6: #{tpu_custom_call.1} parent=1 // pred_check
      _
    $region7: #{tpu_custom_call.1} parent=1 // pred_check_branch
      %27 = sbr.rel (0) target = $region9
    $region8: #{tpu_custom_call.1} parent=1 // pred_region
      %s29 = ssub.s32 128, 128
      %30 = vsyncadd [#allocation6], %s29
      %s32 = sshll.u32 [#allocation5], 4
      %s33 = int_to_ptr.vmem [resolvable:$true] %s32
      %35 = dma.hbm_to_vmem [thread:$0]  %s1, 128, %s33, [#allocation6]
    $region9: #{tpu_custom_call.1} parent=1 // pred_fallthru
      _
    // Predicated region
    $region10: #{tpu_custom_call.1} parent=1 // pred_check
      _
    $region11: #{tpu_custom_call.1} parent=1 // pred_check_branch
      %37 = sbr.rel (0) target = $region13
    $region12: #{tpu_custom_call.1} parent=1 // pred_region
      %s39 = ssub.s32 4096, 4096
      %40 = vsyncadd [#allocation6], %s39
      %s41 = sshll.u32 [#allocation7], 4
      %s42 = int_to_ptr.vmem [resolvable:$true] %s41
      %47 = dma.hbm_to_vmem [thread:$0]  %s2, 4096, %s42, [#allocation6], 256, 256, 16
    $region13: #{tpu_custom_call.1} parent=1 // pred_fallthru
      _
    // Predicated region
    $region14: #{tpu_custom_call.1} parent=1 // pred_check
      _
    $region15: #{tpu_custom_call.1} parent=1 // pred_check_branch
      %49 = sbr.rel (0) target = $region17
    $region16: #{tpu_custom_call.1} parent=1 // pred_region
      %s51 = ssub.s32 4096, 4096
      %52 = vsyncadd [#allocation9], %s51
      %s53 = sshll.u32 [#allocation8], 4
      %s54 = int_to_ptr.vmem [resolvable:$true] %s53
      %59 = dma.hbm_to_vmem [thread:$0]  %s3, 4096, %s54, [#allocation9], 256, 256, 16
    $region17: #{tpu_custom_call.1} parent=1 // pred_fallthru
      _
    // Predicated region
    $region18: #{tpu_custom_call.1} parent=1 // pred_check
      _
    $region19: #{tpu_custom_call.1} parent=1 // pred_check_branch
      %61 = sbr.rel (0) target = $region21
    $region20: #{tpu_custom_call.1} parent=1 // pred_region
      _
    $region21: #{tpu_custom_call.1} parent=1 // pred_fallthru
      _
    // Predicated region
    $region22: #{tpu_custom_call.1} parent=1 // pred_check
      _
    $region23: #{tpu_custom_call.1} parent=1 // pred_check_branch
      %63 = sbr.rel (0) target = $region25
    $region24: #{tpu_custom_call.1} parent=1 // pred_region
      %s65 = ssub.s32 1024, 1024
      %66 = vsyncadd [#allocation9], %s65
      %s67 = sshll.u32 [#allocation10], 4
      %s68 = int_to_ptr.vmem [resolvable:$true] %s67
      %73 = dma.hbm_to_vmem [thread:$0]  %s5, 1024, %s68, [#allocation9], 64, 64, 4
    $region25: #{tpu_custom_call.1} parent=1 // pred_fallthru
      _
    // Predicated region
    $region26: #{tpu_custom_call.1} parent=1 // pred_check
      _
    $region27: #{tpu_custom_call.1} parent=1 // pred_check_branch
      %75 = sbr.rel (0) target = $region29
    $region28: #{tpu_custom_call.1} parent=1 // pred_region
      _
    $region29: #{tpu_custom_call.1} parent=1 // pred_fallthru
      _
    // Predicated region
    $region30: #{tpu_custom_call.1} parent=1 // pred_check
      _
    $region31: #{tpu_custom_call.1} parent=1 // pred_check_branch
      %77 = sbr.rel (0) target = $region33
    $region32: #{tpu_custom_call.1} parent=1 // pred_region
      %78 = dma.done [#allocation3], 128
    $region33: #{tpu_custom_call.1} parent=1 // pred_fallthru
      _
    // Predicated region
    $region34: #{tpu_custom_call.1} parent=1 // pred_check
      _
    $region35: #{tpu_custom_call.1} parent=1 // pred_check_branch
      %80 = sbr.rel (0) target = $region37
    $region36: #{tpu_custom_call.1} parent=1 // pred_region
      %81 = dma.done [#allocation6], 128
    $region37: #{tpu_custom_call.1} parent=1 // pred_fallthru
      _
    // Predicated region
    $region38: #{tpu_custom_call.1} parent=1 // pred_check
      _
    $region39: #{tpu_custom_call.1} parent=1 // pred_check_branch
      %83 = sbr.rel (0) target = $region41
    $region40: #{tpu_custom_call.1} parent=1 // pred_region
      %84 = dma.done [#allocation6], 4096
    $region41: #{tpu_custom_call.1} parent=1 // pred_fallthru
      _
    // Predicated region
    $region42: #{tpu_custom_call.1} parent=1 // pred_check
      _
    $region43: #{tpu_custom_call.1} parent=1 // pred_check_branch
      %86 = sbr.rel (0) target = $region45
    $region44: #{tpu_custom_call.1} parent=1 // pred_region
      %87 = dma.done [#allocation9], 4096
    $region45: #{tpu_custom_call.1} parent=1 // pred_fallthru
      _
    // Predicated region
    $region46: #{tpu_custom_call.1} parent=1 // pred_check
      _
    $region47: #{tpu_custom_call.1} parent=1 // pred_check_branch
      %89 = sbr.rel (0) target = $region49
    $region48: #{tpu_custom_call.1} parent=1 // pred_region
      %90 = dma.done [#allocation9], 1024
    $region49: #{tpu_custom_call.1} parent=1 // pred_fallthru
      _
    %v92 = vld [vmem:[#allocation2] sm:$0xff]
    %v93 = vld [vmem:[#allocation5] sm:$0xff]
    %v94 = vld [vmem:[%s4] sm:$0xf]
    %v96 = vlaneseq
    %v97 = vshrl.u32 %v96, 7
    %v98 = vsub.s32 0, %v97
    %v99 = vrot.slane %v94, %v98
    %v100 = vlaneseq
    %v101 = vshrl.u32 %v100, 7
    %v102 = vsub.s32 1, %v101
    %v103 = vrot.slane %v94, %v102
    %v104 = vlaneseq
    %v105 = vshrl.u32 %v104, 7
    %v106 = vsub.s32 2, %v105
    %v107 = vrot.slane %v94, %v106
    %v108 = vlaneseq
    %v109 = vshrl.u32 %v108, 7
    %v110 = vsub.s32 3, %v109
    %v111 = vrot.slane %v94, %v110
    %v116 = vld [vmem:[%s6] sm:$0x1]
    %v118 = vlaneseq
    %v119 = vshrl.u32 %v118, 7
    %v120 = vsub.s32 0, %v119
    %v121 = vrot.slane %v116, %v120
    %v123 = vlaneseq
    %v124 = vand.u32 %v123, 127
    %v125 = vpack.c.bf16 %v92, %v92
    %v126 = vld [vmem:[#allocation8] sm:$0xff]
    %v127 = vld [vmem:[#allocation8 + $0x8] sm:$0xff]
    %v128 = vld [vmem:[#allocation8 + $0x10] sm:$0xff]
    %v129 = vld [vmem:[#allocation8 + $0x18] sm:$0xff]
    %v130 = vld [vmem:[#allocation8 + $0x20] sm:$0xff]
    %v131 = vld [vmem:[#allocation8 + $0x28] sm:$0xff]
    %v132 = vld [vmem:[#allocation8 + $0x30] sm:$0xff]
    %v133 = vld [vmem:[#allocation8 + $0x38] sm:$0xff]
    %v134 = vld [vmem:[#allocation8 + $0x40] sm:$0xff]
    %v135 = vld [vmem:[#allocation8 + $0x48] sm:$0xff]
    %v136 = vld [vmem:[#allocation8 + $0x50] sm:$0xff]
    %v137 = vld [vmem:[#allocation8 + $0x58] sm:$0xff]
    %v138 = vld [vmem:[#allocation8 + $0x60] sm:$0xff]
    %v139 = vld [vmem:[#allocation8 + $0x68] sm:$0xff]
    %v140 = vld [vmem:[#allocation8 + $0x70] sm:$0xff]
    %v141 = vld [vmem:[#allocation8 + $0x78] sm:$0xff]
    %v142 = vld [vmem:[#allocation8 + $0x80] sm:$0xff]
    %v143 = vld [vmem:[#allocation8 + $0x88] sm:$0xff]
    %v144 = vld [vmem:[#allocation8 + $0x90] sm:$0xff]
    %v145 = vld [vmem:[#allocation8 + $0x98] sm:$0xff]
    %v146 = vld [vmem:[#allocation8 + $0xa0] sm:$0xff]
    %v147 = vld [vmem:[#allocation8 + $0xa8] sm:$0xff]
    %v148 = vld [vmem:[#allocation8 + $0xb0] sm:$0xff]
    %v149 = vld [vmem:[#allocation8 + $0xb8] sm:$0xff]
    %v150 = vld [vmem:[#allocation8 + $0xc0] sm:$0xff]
    %v151 = vld [vmem:[#allocation8 + $0xc8] sm:$0xff]
    %v152 = vld [vmem:[#allocation8 + $0xd0] sm:$0xff]
    %v153 = vld [vmem:[#allocation8 + $0xd8] sm:$0xff]
    %v154 = vld [vmem:[#allocation8 + $0xe0] sm:$0xff]
    %v155 = vld [vmem:[#allocation8 + $0xe8] sm:$0xff]
    %v156 = vld [vmem:[#allocation8 + $0xf0] sm:$0xff]
    %v157 = vld [vmem:[#allocation8 + $0xf8] sm:$0xff]
    %vm158 = vcmp.eq.s32.totalorder %v124, 1
    %v159 = vsel %vm158, 1, 0
    %v160 = vcvt.s32.f32 %v159
    %v161 = vpack.c.bf16 %v160, %v160
    %v162 = vld [vmem:[#allocation7] sm:$0xff]
    %v163 = vld [vmem:[#allocation7 + $0x8] sm:$0xff]
    %v164 = vld [vmem:[#allocation7 + $0x10] sm:$0xff]
    %v165 = vld [vmem:[#allocation7 + $0x18] sm:$0xff]
    %v166 = vld [vmem:[#allocation7 + $0x20] sm:$0xff]
    %v167 = vld [vmem:[#allocation7 + $0x28] sm:$0xff]
    %v168 = vld [vmem:[#allocation7 + $0x30] sm:$0xff]
    %v169 = vld [vmem:[#allocation7 + $0x38] sm:$0xff]
    %v170 = vld [vmem:[#allocation7 + $0x40] sm:$0xff]
    %v171 = vld [vmem:[#allocation7 + $0x48] sm:$0xff]
    %v172 = vld [vmem:[#allocation7 + $0x50] sm:$0xff]
    %v173 = vld [vmem:[#allocation7 + $0x58] sm:$0xff]
    %v174 = vld [vmem:[#allocation7 + $0x60] sm:$0xff]
    %v175 = vld [vmem:[#allocation7 + $0x68] sm:$0xff]
    %v176 = vld [vmem:[#allocation7 + $0x70] sm:$0xff]
    %v177 = vld [vmem:[#allocation7 + $0x78] sm:$0xff]
    %v178 = vld [vmem:[#allocation7 + $0x80] sm:$0xff]
    %v179 = vld [vmem:[#allocation7 + $0x88] sm:$0xff]
    %v180 = vld [vmem:[#allocation7 + $0x90] sm:$0xff]
    %v181 = vld [vmem:[#allocation7 + $0x98] sm:$0xff]
    %v182 = vld [vmem:[#allocation7 + $0xa0] sm:$0xff]
    %v183 = vld [vmem:[#allocation7 + $0xa8] sm:$0xff]
    %v184 = vld [vmem:[#allocation7 + $0xb0] sm:$0xff]
    %v185 = vld [vmem:[#allocation7 + $0xb8] sm:$0xff]
    %v186 = vld [vmem:[#allocation7 + $0xc0] sm:$0xff]
    %v187 = vld [vmem:[#allocation7 + $0xc8] sm:$0xff]
    %v188 = vld [vmem:[#allocation7 + $0xd0] sm:$0xff]
    %v189 = vld [vmem:[#allocation7 + $0xd8] sm:$0xff]
    %v190 = vld [vmem:[#allocation7 + $0xe0] sm:$0xff]
    %v191 = vld [vmem:[#allocation7 + $0xe8] sm:$0xff]
    %v192 = vld [vmem:[#allocation7 + $0xf0] sm:$0xff]
    %v193 = vld [vmem:[#allocation7 + $0xf8] sm:$0xff]
    %v226 = vunpack.c.l.b16 %v162
    %v227 = vunpack.c.h.b16 %v162
    %v228 = vunpack.c.l.b16 %v163
    %v229 = vunpack.c.h.b16 %v163
    %v230 = vunpack.c.l.b16 %v164
    %v231 = vunpack.c.h.b16 %v164
    %v232 = vunpack.c.l.b16 %v165
    %v233 = vunpack.c.h.b16 %v165
    %v234 = vunpack.c.l.b16 %v166
    %v235 = vunpack.c.h.b16 %v166
    %v236 = vunpack.c.l.b16 %v167
    %v237 = vunpack.c.h.b16 %v167
    %v238 = vunpack.c.l.b16 %v168
    %v239 = vunpack.c.h.b16 %v168
    %v240 = vunpack.c.l.b16 %v169
    %v241 = vunpack.c.h.b16 %v169
    %v242 = vunpack.c.l.b16 %v170
    %v243 = vunpack.c.h.b16 %v170
    %v244 = vunpack.c.l.b16 %v171
    %v245 = vunpack.c.h.b16 %v171
    %v246 = vunpack.c.l.b16 %v172
    %v247 = vunpack.c.h.b16 %v172
    %v248 = vunpack.c.l.b16 %v173
    %v249 = vunpack.c.h.b16 %v173
    %v250 = vunpack.c.l.b16 %v174
    %v251 = vunpack.c.h.b16 %v174
    %v252 = vunpack.c.l.b16 %v175
    %v253 = vunpack.c.h.b16 %v175
    %v254 = vunpack.c.l.b16 %v176
    %v255 = vunpack.c.h.b16 %v176
    %v256 = vunpack.c.l.b16 %v177
    %v257 = vunpack.c.h.b16 %v177
    %v258 = vunpack.c.l.b16 %v178
    %v259 = vunpack.c.h.b16 %v178
    %v260 = vunpack.c.l.b16 %v179
    %v261 = vunpack.c.h.b16 %v179
    %v262 = vunpack.c.l.b16 %v180
    %v263 = vunpack.c.h.b16 %v180
    %v264 = vunpack.c.l.b16 %v181
    %v265 = vunpack.c.h.b16 %v181
    %v266 = vunpack.c.l.b16 %v182
    %v267 = vunpack.c.h.b16 %v182
    %v268 = vunpack.c.l.b16 %v183
    %v269 = vunpack.c.h.b16 %v183
    %v270 = vunpack.c.l.b16 %v184
    %v271 = vunpack.c.h.b16 %v184
    %v272 = vunpack.c.l.b16 %v185
    %v273 = vunpack.c.h.b16 %v185
    %v274 = vunpack.c.l.b16 %v186
    %v275 = vunpack.c.h.b16 %v186
    %v276 = vunpack.c.l.b16 %v187
    %v277 = vunpack.c.h.b16 %v187
    %v278 = vunpack.c.l.b16 %v188
    %v279 = vunpack.c.h.b16 %v188
    %v280 = vunpack.c.l.b16 %v189
    %v281 = vunpack.c.h.b16 %v189
    %v282 = vunpack.c.l.b16 %v190
    %v283 = vunpack.c.h.b16 %v190
    %v284 = vunpack.c.l.b16 %v191
    %v285 = vunpack.c.h.b16 %v191
    %v286 = vunpack.c.l.b16 %v192
    %v287 = vunpack.c.h.b16 %v192
    %v288 = vunpack.c.l.b16 %v193
    %v289 = vunpack.c.h.b16 %v193
    %v290 = vpack.c.b16 %v230, %v226
    %v291 = vpack.c.b16 %v231, %v227
    %v292 = vpack.c.b16 %v232, %v228
    %v293 = vpack.c.b16 %v233, %v229
    %v294 = vpack.c.b16 %v238, %v234
    %v295 = vpack.c.b16 %v239, %v235
    %v296 = vpack.c.b16 %v240, %v236
    %v297 = vpack.c.b16 %v241, %v237
    %v298 = vpack.c.b16 %v246, %v242
    %v299 = vpack.c.b16 %v247, %v243
    %v300 = vpack.c.b16 %v248, %v244
    %v301 = vpack.c.b16 %v249, %v245
    %v302 = vpack.c.b16 %v254, %v250
    %v303 = vpack.c.b16 %v255, %v251
    %v304 = vpack.c.b16 %v256, %v252
    %v305 = vpack.c.b16 %v257, %v253
    %v306 = vpack.c.b16 %v262, %v258
    %v307 = vpack.c.b16 %v263, %v259
    %v308 = vpack.c.b16 %v264, %v260
    %v309 = vpack.c.b16 %v265, %v261
    %v310 = vpack.c.b16 %v270, %v266
    %v311 = vpack.c.b16 %v271, %v267
    %v312 = vpack.c.b16 %v272, %v268
    %v313 = vpack.c.b16 %v273, %v269
    %v314 = vpack.c.b16 %v278, %v274
    %v315 = vpack.c.b16 %v279, %v275
    %v316 = vpack.c.b16 %v280, %v276
    %v317 = vpack.c.b16 %v281, %v277
    %v318 = vpack.c.b16 %v286, %v282
    %v319 = vpack.c.b16 %v287, %v283
    %v320 = vpack.c.b16 %v288, %v284
    %v321 = vpack.c.b16 %v289, %v285
    %354 = vmatprep.subr.bf16.mxu0 %v291
    %355 = vmatpush1.bf16.msra.mxu0 %v290
    %356 = vmatprep.subr.bf16.mxu0 %v295
    %357 = vmatpush1.bf16.msra.mxu0 %v294
    %358 = vmatprep.subr.bf16.mxu0 %v299
    %359 = vmatpush1.bf16.msra.mxu0 %v298
    %360 = vmatprep.subr.bf16.mxu0 %v303
    %361 = vmatpush1.bf16.msra.mxu0 %v302
    %362 = vmatprep.subr.bf16.mxu0 %v307
    %363 = vmatpush1.bf16.msra.mxu0 %v306
    %364 = vmatprep.subr.bf16.mxu0 %v311
    %365 = vmatpush1.bf16.msra.mxu0 %v310
    %366 = vmatprep.subr.bf16.mxu0 %v315
    %367 = vmatpush1.bf16.msra.mxu0 %v314
    %368 = vmatprep.subr.bf16.mxu0 %v319
    %369 = vmatpush1.bf16.msra.mxu0 %v318
    %370 = vmatprep.subr.bf16.mxu0 0
    %371 = vmatpush1.bf16.msra.mxu0 0
    %372 = vmatprep.subr.bf16.mxu0 0
    %373 = vmatpush1.bf16.msra.mxu0 0
    %374 = vmatprep.subr.bf16.mxu0 0
    %375 = vmatpush1.bf16.msra.mxu0 0
    %376 = vmatprep.subr.bf16.mxu0 0
    %377 = vmatpush1.bf16.msra.mxu0 0
    %378 = vmatprep.subr.bf16.mxu0 0
    %379 = vmatpush1.bf16.msra.mxu0 0
    %380 = vmatprep.subr.bf16.mxu0 0
    %381 = vmatpush1.bf16.msra.mxu0 0
    %382 = vmatprep.subr.bf16.mxu0 0
    %383 = vmatpush1.bf16.msra.mxu0 0
    %384 = vmatprep.subr.bf16.mxu0 0
    %385 = vmatpush1.bf16.msra.mxu0 0
    %386 = vmatprep.mubr.bf16.mxu0 0
    %387 = vmatmul.mubr.bf16.gmra.mrb[0].mxu0 %v161
    %v388 = vpop.f32.mrb[0].mxu0
    %v389 = vadd.f32 0.0, %v388
    %v390 = vpop.f32.mrb[0].mxu0
    %v391 = vadd.f32 0.0, %v390
    %v392 = vpop.f32.mrb[0].mxu0
    %v393 = vpop.f32.mrb[0].mxu0
    %394 = vdwg.mxu0
    %395 = vmatprep.subr.bf16.mxu0 %v293
    %396 = vmatpush1.bf16.msra.mxu0 %v292
    %397 = vmatprep.subr.bf16.mxu0 %v297
    %398 = vmatpush1.bf16.msra.mxu0 %v296
    %399 = vmatprep.subr.bf16.mxu0 %v301
    %400 = vmatpush1.bf16.msra.mxu0 %v300
    %401 = vmatprep.subr.bf16.mxu0 %v305
    %402 = vmatpush1.bf16.msra.mxu0 %v304
    %403 = vmatprep.subr.bf16.mxu0 %v309
    %404 = vmatpush1.bf16.msra.mxu0 %v308
    %405 = vmatprep.subr.bf16.mxu0 %v313
    %406 = vmatpush1.bf16.msra.mxu0 %v312
    %407 = vmatprep.subr.bf16.mxu0 %v317
    %408 = vmatpush1.bf16.msra.mxu0 %v316
    %409 = vmatprep.subr.bf16.mxu0 %v321
    %410 = vmatpush1.bf16.msra.mxu0 %v320
    %411 = vmatprep.subr.bf16.mxu0 0
    %412 = vmatpush1.bf16.msra.mxu0 0
    %413 = vmatprep.subr.bf16.mxu0 0
    %414 = vmatpush1.bf16.msra.mxu0 0
    %415 = vmatprep.subr.bf16.mxu0 0
    %416 = vmatpush1.bf16.msra.mxu0 0
    %417 = vmatprep.subr.bf16.mxu0 0
    %418 = vmatpush1.bf16.msra.mxu0 0
    %419 = vmatprep.subr.bf16.mxu0 0
    %420 = vmatpush1.bf16.msra.mxu0 0
    %421 = vmatprep.subr.bf16.mxu0 0
    %422 = vmatpush1.bf16.msra.mxu0 0
    %423 = vmatprep.subr.bf16.mxu0 0
    %424 = vmatpush1.bf16.msra.mxu0 0
    %425 = vmatprep.subr.bf16.mxu0 0
    %426 = vmatpush1.bf16.msra.mxu0 0
    %427 = vmatprep.mubr.bf16.mxu0 0
    %428 = vmatmul.mubr.bf16.gmra.mrb[0].mxu0 %v161
    %v429 = vpop.f32.mrb[0].mxu0
    %v430 = vadd.f32 0.0, %v429
    %v431 = vpop.f32.mrb[0].mxu0
    %v432 = vadd.f32 0.0, %v431
    %v433 = vpop.f32.mrb[0].mxu0
    %v434 = vpop.f32.mrb[0].mxu0
    %435 = vdwg.mxu0
    %v468 = vunpack.c.l.b16 %v126
    %v469 = vunpack.c.h.b16 %v126
    %v470 = vunpack.c.l.b16 %v127
    %v471 = vunpack.c.h.b16 %v127
    %v472 = vunpack.c.l.b16 %v128
    %v473 = vunpack.c.h.b16 %v128
    %v474 = vunpack.c.l.b16 %v129
    %v475 = vunpack.c.h.b16 %v129
    %v476 = vunpack.c.l.b16 %v130
    %v477 = vunpack.c.h.b16 %v130
    %v478 = vunpack.c.l.b16 %v131
    %v479 = vunpack.c.h.b16 %v131
    %v480 = vunpack.c.l.b16 %v132
    %v481 = vunpack.c.h.b16 %v132
    %v482 = vunpack.c.l.b16 %v133
    %v483 = vunpack.c.h.b16 %v133
    %v484 = vunpack.c.l.b16 %v134
    %v485 = vunpack.c.h.b16 %v134
    %v486 = vunpack.c.l.b16 %v135
    %v487 = vunpack.c.h.b16 %v135
    %v488 = vunpack.c.l.b16 %v136
    %v489 = vunpack.c.h.b16 %v136
    %v490 = vunpack.c.l.b16 %v137
    %v491 = vunpack.c.h.b16 %v137
    %v492 = vunpack.c.l.b16 %v138
    %v493 = vunpack.c.h.b16 %v138
    %v494 = vunpack.c.l.b16 %v139
    %v495 = vunpack.c.h.b16 %v139
    %v496 = vunpack.c.l.b16 %v140
    %v497 = vunpack.c.h.b16 %v140
    %v498 = vunpack.c.l.b16 %v141
    %v499 = vunpack.c.h.b16 %v141
    %v500 = vunpack.c.l.b16 %v142
    %v501 = vunpack.c.h.b16 %v142
    %v502 = vunpack.c.l.b16 %v143
    %v503 = vunpack.c.h.b16 %v143
    %v504 = vunpack.c.l.b16 %v144
    %v505 = vunpack.c.h.b16 %v144
    %v506 = vunpack.c.l.b16 %v145
    %v507 = vunpack.c.h.b16 %v145
    %v508 = vunpack.c.l.b16 %v146
    %v509 = vunpack.c.h.b16 %v146
    %v510 = vunpack.c.l.b16 %v147
    %v511 = vunpack.c.h.b16 %v147
    %v512 = vunpack.c.l.b16 %v148
    %v513 = vunpack.c.h.b16 %v148
    %v514 = vunpack.c.l.b16 %v149
    %v515 = vunpack.c.h.b16 %v149
    %v516 = vunpack.c.l.b16 %v150
    %v517 = vunpack.c.h.b16 %v150
    %v518 = vunpack.c.l.b16 %v151
    %v519 = vunpack.c.h.b16 %v151
    %v520 = vunpack.c.l.b16 %v152
    %v521 = vunpack.c.h.b16 %v152
    %v522 = vunpack.c.l.b16 %v153
    %v523 = vunpack.c.h.b16 %v153
    %v524 = vunpack.c.l.b16 %v154
    %v525 = vunpack.c.h.b16 %v154
    %v526 = vunpack.c.l.b16 %v155
    %v527 = vunpack.c.h.b16 %v155
    %v528 = vunpack.c.l.b16 %v156
    %v529 = vunpack.c.h.b16 %v156
    %v530 = vunpack.c.l.b16 %v157
    %v531 = vunpack.c.h.b16 %v157
    %v532 = vpack.c.b16 %v472, %v468
    %v533 = vpack.c.b16 %v473, %v469
    %v534 = vpack.c.b16 %v474, %v470
    %v535 = vpack.c.b16 %v475, %v471
    %v536 = vpack.c.b16 %v480, %v476
    %v537 = vpack.c.b16 %v481, %v477
    %v538 = vpack.c.b16 %v482, %v478
    %v539 = vpack.c.b16 %v483, %v479
    %v540 = vpack.c.b16 %v488, %v484
    %v541 = vpack.c.b16 %v489, %v485
    %v542 = vpack.c.b16 %v490, %v486
    %v543 = vpack.c.b16 %v491, %v487
    %v544 = vpack.c.b16 %v496, %v492
    %v545 = vpack.c.b16 %v497, %v493
    %v546 = vpack.c.b16 %v498, %v494
    %v547 = vpack.c.b16 %v499, %v495
    %v548 = vpack.c.b16 %v504, %v500
    %v549 = vpack.c.b16 %v505, %v501
    %v550 = vpack.c.b16 %v506, %v502
    %v551 = vpack.c.b16 %v507, %v503
    %v552 = vpack.c.b16 %v512, %v508
    %v553 = vpack.c.b16 %v513, %v509
    %v554 = vpack.c.b16 %v514, %v510
    %v555 = vpack.c.b16 %v515, %v511
    %v556 = vpack.c.b16 %v520, %v516
    %v557 = vpack.c.b16 %v521, %v517
    %v558 = vpack.c.b16 %v522, %v518
    %v559 = vpack.c.b16 %v523, %v519
    %v560 = vpack.c.b16 %v528, %v524
    %v561 = vpack.c.b16 %v529, %v525
    %v562 = vpack.c.b16 %v530, %v526
    %v563 = vpack.c.b16 %v531, %v527
    %596 = vmatprep.subr.bf16.mxu0 %v533
    %597 = vmatpush1.bf16.msra.mxu0 %v532
    %598 = vmatprep.subr.bf16.mxu0 %v537
    %599 = vmatpush1.bf16.msra.mxu0 %v536
    %600 = vmatprep.subr.bf16.mxu0 %v541
    %601 = vmatpush1.bf16.msra.mxu0 %v540
    %602 = vmatprep.subr.bf16.mxu0 %v545
    %603 = vmatpush1.bf16.msra.mxu0 %v544
    %604 = vmatprep.subr.bf16.mxu0 %v549
    %605 = vmatpush1.bf16.msra.mxu0 %v548
    %606 = vmatprep.subr.bf16.mxu0 %v553
    %607 = vmatpush1.bf16.msra.mxu0 %v552
    %608 = vmatprep.subr.bf16.mxu0 %v557
    %609 = vmatpush1.bf16.msra.mxu0 %v556
    %610 = vmatprep.subr.bf16.mxu0 %v561
    %611 = vmatpush1.bf16.msra.mxu0 %v560
    %612 = vmatprep.subr.bf16.mxu0 0
    %613 = vmatpush1.bf16.msra.mxu0 0
    %614 = vmatprep.subr.bf16.mxu0 0
    %615 = vmatpush1.bf16.msra.mxu0 0
    %616 = vmatprep.subr.bf16.mxu0 0
    %617 = vmatpush1.bf16.msra.mxu0 0
    %618 = vmatprep.subr.bf16.mxu0 0
    %619 = vmatpush1.bf16.msra.mxu0 0
    %620 = vmatprep.subr.bf16.mxu0 0
    %621 = vmatpush1.bf16.msra.mxu0 0
    %622 = vmatprep.subr.bf16.mxu0 0
    %623 = vmatpush1.bf16.msra.mxu0 0
    %624 = vmatprep.subr.bf16.mxu0 0
    %625 = vmatpush1.bf16.msra.mxu0 0
    %626 = vmatprep.subr.bf16.mxu0 0
    %627 = vmatpush1.bf16.msra.mxu0 0
    %628 = vmatprep.mubr.bf16.mxu0 0
    %629 = vmatmul.mubr.bf16.gmra.mrb[0].mxu0 %v125
    %v630 = vpop.f32.mrb[0].mxu0
    %v631 = vadd.f32 %v389, %v630
    %v632 = vpop.f32.mrb[0].mxu0
    %v633 = vadd.f32 %v391, %v632
    %v634 = vpop.f32.mrb[0].mxu0
    %v635 = vpop.f32.mrb[0].mxu0
    %636 = vdwg.mxu0
    %637 = vmatprep.subr.bf16.mxu0 %v535
    %638 = vmatpush1.bf16.msra.mxu0 %v534
    %639 = vmatprep.subr.bf16.mxu0 %v539
    %640 = vmatpush1.bf16.msra.mxu0 %v538
    %641 = vmatprep.subr.bf16.mxu0 %v543
    %642 = vmatpush1.bf16.msra.mxu0 %v542
    %643 = vmatprep.subr.bf16.mxu0 %v547
    %644 = vmatpush1.bf16.msra.mxu0 %v546
    %645 = vmatprep.subr.bf16.mxu0 %v551
    %646 = vmatpush1.bf16.msra.mxu0 %v550
    %647 = vmatprep.subr.bf16.mxu0 %v555
    %648 = vmatpush1.bf16.msra.mxu0 %v554
    %649 = vmatprep.subr.bf16.mxu0 %v559
    %650 = vmatpush1.bf16.msra.mxu0 %v558
    %651 = vmatprep.subr.bf16.mxu0 %v563
    %652 = vmatpush1.bf16.msra.mxu0 %v562
    %653 = vmatprep.subr.bf16.mxu0 0
    %654 = vmatpush1.bf16.msra.mxu0 0
    %655 = vmatprep.subr.bf16.mxu0 0
    %656 = vmatpush1.bf16.msra.mxu0 0
    %657 = vmatprep.subr.bf16.mxu0 0
    %658 = vmatpush1.bf16.msra.mxu0 0
    %659 = vmatprep.subr.bf16.mxu0 0
    %660 = vmatpush1.bf16.msra.mxu0 0
    %661 = vmatprep.subr.bf16.mxu0 0
    %662 = vmatpush1.bf16.msra.mxu0 0
    %663 = vmatprep.subr.bf16.mxu0 0
    %664 = vmatpush1.bf16.msra.mxu0 0
    %665 = vmatprep.subr.bf16.mxu0 0
    %666 = vmatpush1.bf16.msra.mxu0 0
    %667 = vmatprep.subr.bf16.mxu0 0
    %668 = vmatpush1.bf16.msra.mxu0 0
    %669 = vmatprep.mubr.bf16.mxu0 0
    %670 = vmatmul.mubr.bf16.gmra.mrb[0].mxu0 %v125
    %v671 = vpop.f32.mrb[0].mxu0
    %v672 = vadd.f32 %v430, %v671
    %v673 = vpop.f32.mrb[0].mxu0
    %v674 = vadd.f32 %v432, %v673
    %v675 = vpop.f32.mrb[0].mxu0
    %v676 = vpop.f32.mrb[0].mxu0
    %677 = vdwg.mxu0
    %v678 = vadd.f32 %v631, %v99
    %v679 = vadd.f32 %v633, %v103
    %v680 = vadd.f32 %v672, %v107
    %v681 = vadd.f32 %v674, %v111
    %v682 = vxor.u32 %v678, 2147483648
    %v683 = vmul.f32 %v682, 1.442695
    %v684 = vpow.pop %v683
    %v685 = vadd.f32 %v684, 1.0
    %v686 = vrcp.pop %v685
    %v687 = vmul.f32 1.0, %v686
    %v688 = vxor.u32 %v679, 2147483648
    %v689 = vmul.f32 %v688, 1.442695
    %v690 = vpow.pop %v689
    %v691 = vadd.f32 %v690, 1.0
    %v692 = vrcp.pop %v691
    %v693 = vmul.f32 1.0, %v692
    %v694 = vtanh.pop %v680
    %v695 = vxor.u32 %v681, 2147483648
    %v696 = vmul.f32 %v695, 1.442695
    %v697 = vpow.pop %v696
    %v698 = vadd.f32 %v697, 1.0
    %v699 = vrcp.pop %v698
    %v700 = vmul.f32 1.0, %v699
    %v701 = vmul.f32 %v693, %v93
    %v702 = vmul.f32 %v687, %v694
    %v703 = vadd.f32 %v701, %v702
    %v704 = vtanh.pop %v703
    %v705 = vmul.f32 %v700, %v704
    %v706 = vpack.c.bf16 %v705, %v705
    %v707 = vld [vmem:[#allocation10] sm:$0xf]
    %v708 = vld [vmem:[#allocation10 + $0x4] sm:$0xf]
    %v709 = vld [vmem:[#allocation10 + $0x8] sm:$0xf]
    %v710 = vld [vmem:[#allocation10 + $0xc] sm:$0xf]
    %v711 = vld [vmem:[#allocation10 + $0x10] sm:$0xf]
    %v712 = vld [vmem:[#allocation10 + $0x14] sm:$0xf]
    %v713 = vld [vmem:[#allocation10 + $0x18] sm:$0xf]
    %v714 = vld [vmem:[#allocation10 + $0x1c] sm:$0xf]
    %v715 = vld [vmem:[#allocation10 + $0x20] sm:$0xf]
    %v716 = vld [vmem:[#allocation10 + $0x24] sm:$0xf]
    %v717 = vld [vmem:[#allocation10 + $0x28] sm:$0xf]
    %v718 = vld [vmem:[#allocation10 + $0x2c] sm:$0xf]
    %v719 = vld [vmem:[#allocation10 + $0x30] sm:$0xf]
    %v720 = vld [vmem:[#allocation10 + $0x34] sm:$0xf]
    %v721 = vld [vmem:[#allocation10 + $0x38] sm:$0xf]
    %v722 = vld [vmem:[#allocation10 + $0x3c] sm:$0xf]
    %v739 = vunpack.c.l.b16 %v707
    %v740 = vunpack.c.l.b16 %v708
    %v741 = vunpack.c.l.b16 %v709
    %v742 = vunpack.c.l.b16 %v710
    %v743 = vunpack.c.l.b16 %v711
    %v744 = vunpack.c.l.b16 %v712
    %v745 = vunpack.c.l.b16 %v713
    %v746 = vunpack.c.l.b16 %v714
    %v747 = vunpack.c.l.b16 %v715
    %v748 = vunpack.c.l.b16 %v716
    %v749 = vunpack.c.l.b16 %v717
    %v750 = vunpack.c.l.b16 %v718
    %v751 = vunpack.c.l.b16 %v719
    %v752 = vunpack.c.l.b16 %v720
    %v753 = vunpack.c.l.b16 %v721
    %v754 = vunpack.c.l.b16 %v722
    %v755 = vpack.c.b16 %v740, %v739
    %v756 = vpack.c.b16 %v742, %v741
    %v757 = vpack.c.b16 %v744, %v743
    %v758 = vpack.c.b16 %v746, %v745
    %v759 = vpack.c.b16 %v748, %v747
    %v760 = vpack.c.b16 %v750, %v749
    %v761 = vpack.c.b16 %v752, %v751
    %v762 = vpack.c.b16 %v754, %v753
    %771 = vmatprep.subr.bf16.mxu0 0
    %772 = vmatpush1.bf16.msra.mxu0 %v755
    %773 = vmatprep.subr.bf16.mxu0 0
    %774 = vmatpush1.bf16.msra.mxu0 %v756
    %775 = vmatprep.subr.bf16.mxu0 0
    %776 = vmatpush1.bf16.msra.mxu0 %v757
    %777 = vmatprep.subr.bf16.mxu0 0
    %778 = vmatpush1.bf16.msra.mxu0 %v758
    %779 = vmatprep.subr.bf16.mxu0 0
    %780 = vmatpush1.bf16.msra.mxu0 %v759
    %781 = vmatprep.subr.bf16.mxu0 0
    %782 = vmatpush1.bf16.msra.mxu0 %v760
    %783 = vmatprep.subr.bf16.mxu0 0
    %784 = vmatpush1.bf16.msra.mxu0 %v761
    %785 = vmatprep.subr.bf16.mxu0 0
    %786 = vmatpush1.bf16.msra.mxu0 %v762
    %787 = vmatprep.subr.bf16.mxu0 0
    %788 = vmatpush1.bf16.msra.mxu0 0
    %789 = vmatprep.subr.bf16.mxu0 0
    %790 = vmatpush1.bf16.msra.mxu0 0
    %791 = vmatprep.subr.bf16.mxu0 0
    %792 = vmatpush1.bf16.msra.mxu0 0
    %793 = vmatprep.subr.bf16.mxu0 0
    %794 = vmatpush1.bf16.msra.mxu0 0
    %795 = vmatprep.subr.bf16.mxu0 0
    %796 = vmatpush1.bf16.msra.mxu0 0
    %797 = vmatprep.subr.bf16.mxu0 0
    %798 = vmatpush1.bf16.msra.mxu0 0
    %799 = vmatprep.subr.bf16.mxu0 0
    %800 = vmatpush1.bf16.msra.mxu0 0
    %801 = vmatprep.subr.bf16.mxu0 0
    %802 = vmatpush1.bf16.msra.mxu0 0
    %803 = vmatprep.mubr.bf16.mxu0 0
    %804 = vmatmul.mubr.bf16.gmra.mrb[0].mxu0 %v706
    %v805 = vpop.f32.mrb[0].mxu0
    %v806 = vadd.f32 %v121, %v805
    %v807 = vpop.f32.mrb[0].mxu0
    %v808 = vpop.f32.mrb[0].mxu0
    %v809 = vpop.f32.mrb[0].mxu0
    %810 = vdwg.mxu0
    %811 = vmax.xlane.f32.xlu0 %v806
    %v812 = vpop.xlane.xlu0 %811
    %vm813 = vcmp.eq.f32.partialorder %v806, %v812
    %v814 = vsel %vm813, %v124, 128
    %v815 = vand.u32 %v814, 65535
    %v816 = vshra.s32 %v814, 16
    %v817 = vcvt.s32.f32 %v815
    %v818 = vcvt.s32.f32 %v816
    %819 = vmin.xlane.f32.xlu0 %v818
    %v820 = vpop.xlane.xlu0 %819
    %vm821 = vcmp.eq.f32.partialorder %v818, %v820
    %v822 = vsel %vm821, %v817, inf
    %823 = vmin.xlane.f32.xlu0 %v822
    %v824 = vpop.xlane.xlu0 %823
    %v825 = vcvt.f32.s32 %v824
    %v826 = vcvt.f32.s32 %v820
    %v827 = vshll.u32 %v826, 16
    %v828 = vadd.s32 %v827, %v825
    %vm829 = vcmp.lt.s32.totalorder %v828, 127
    %v830 = vsel %vm829, %v828, 127
    %vm831 = vcmp.eq.s32.totalorder %v124, 0
    %v832 = vsel %vm831, %v830, 0
    %vm833 = vcmp.eq.s32.totalorder %v124, %v830
    %v834 = vsel %vm833, 1, 0
    %v835 = vcvt.s32.f32 %v834
    %v836 = vpack.c.bf16 %v835, %v835
    %837 = vmatprep.subr.bf16.mxu0 %v291
    %838 = vmatpush1.bf16.msra.mxu0 %v290
    %839 = vmatprep.subr.bf16.mxu0 %v295
    %840 = vmatpush1.bf16.msra.mxu0 %v294
    %841 = vmatprep.subr.bf16.mxu0 %v299
    %842 = vmatpush1.bf16.msra.mxu0 %v298
    %843 = vmatprep.subr.bf16.mxu0 %v303
    %844 = vmatpush1.bf16.msra.mxu0 %v302
    %845 = vmatprep.subr.bf16.mxu0 %v307
    %846 = vmatpush1.bf16.msra.mxu0 %v306
    %847 = vmatprep.subr.bf16.mxu0 %v311
    %848 = vmatpush1.bf16.msra.mxu0 %v310
    %849 = vmatprep.subr.bf16.mxu0 %v315
    %850 = vmatpush1.bf16.msra.mxu0 %v314
    %851 = vmatprep.subr.bf16.mxu0 %v319
    %852 = vmatpush1.bf16.msra.mxu0 %v318
    %853 = vmatprep.subr.bf16.mxu0 0
    %854 = vmatpush1.bf16.msra.mxu0 0
    %855 = vmatprep.subr.bf16.mxu0 0
    %856 = vmatpush1.bf16.msra.mxu0 0
    %857 = vmatprep.subr.bf16.mxu0 0
    %858 = vmatpush1.bf16.msra.mxu0 0
    %859 = vmatprep.subr.bf16.mxu0 0
    %860 = vmatpush1.bf16.msra.mxu0 0
    %861 = vmatprep.subr.bf16.mxu0 0
    %862 = vmatpush1.bf16.msra.mxu0 0
    %863 = vmatprep.subr.bf16.mxu0 0
    %864 = vmatpush1.bf16.msra.mxu0 0
    %865 = vmatprep.subr.bf16.mxu0 0
    %866 = vmatpush1.bf16.msra.mxu0 0
    %867 = vmatprep.subr.bf16.mxu0 0
    %868 = vmatpush1.bf16.msra.mxu0 0
    %869 = vmatprep.mubr.bf16.mxu0 0
    %870 = vmatmul.mubr.bf16.gmra.mrb[0].mxu0 %v836
    %v871 = vpop.f32.mrb[0].mxu0
    %v872 = vadd.f32 0.0, %v871
    %v873 = vpop.f32.mrb[0].mxu0
    %v874 = vadd.f32 0.0, %v873
    %v875 = vpop.f32.mrb[0].mxu0
    %v876 = vpop.f32.mrb[0].mxu0
    %877 = vdwg.mxu0
    %878 = vmatprep.subr.bf16.mxu0 %v293
    %879 = vmatpush1.bf16.msra.mxu0 %v292
    %880 = vmatprep.subr.bf16.mxu0 %v297
    %881 = vmatpush1.bf16.msra.mxu0 %v296
    %882 = vmatprep.subr.bf16.mxu0 %v301
    %883 = vmatpush1.bf16.msra.mxu0 %v300
    %884 = vmatprep.subr.bf16.mxu0 %v305
    %885 = vmatpush1.bf16.msra.mxu0 %v304
    %886 = vmatprep.subr.bf16.mxu0 %v309
    %887 = vmatpush1.bf16.msra.mxu0 %v308
    %888 = vmatprep.subr.bf16.mxu0 %v313
    %889 = vmatpush1.bf16.msra.mxu0 %v312
    %890 = vmatprep.subr.bf16.mxu0 %v317
    %891 = vmatpush1.bf16.msra.mxu0 %v316
    %892 = vmatprep.subr.bf16.mxu0 %v321
    %893 = vmatpush1.bf16.msra.mxu0 %v320
    %894 = vmatprep.subr.bf16.mxu0 0
    %895 = vmatpush1.bf16.msra.mxu0 0
    %896 = vmatprep.subr.bf16.mxu0 0
    %897 = vmatpush1.bf16.msra.mxu0 0
    %898 = vmatprep.subr.bf16.mxu0 0
    %899 = vmatpush1.bf16.msra.mxu0 0
    %900 = vmatprep.subr.bf16.mxu0 0
    %901 = vmatpush1.bf16.msra.mxu0 0
    %902 = vmatprep.subr.bf16.mxu0 0
    %903 = vmatpush1.bf16.msra.mxu0 0
    %904 = vmatprep.subr.bf16.mxu0 0
    %905 = vmatpush1.bf16.msra.mxu0 0
    %906 = vmatprep.subr.bf16.mxu0 0
    %907 = vmatpush1.bf16.msra.mxu0 0
    %908 = vmatprep.subr.bf16.mxu0 0
    %909 = vmatpush1.bf16.msra.mxu0 0
    %910 = vmatprep.mubr.bf16.mxu0 0
    %911 = vmatmul.mubr.bf16.gmra.mrb[0].mxu0 %v836
    %v912 = vpop.f32.mrb[0].mxu0
    %v913 = vadd.f32 0.0, %v912
    %v914 = vpop.f32.mrb[0].mxu0
    %v915 = vadd.f32 0.0, %v914
    %v916 = vpop.f32.mrb[0].mxu0
    %v917 = vpop.f32.mrb[0].mxu0
    %918 = vdwg.mxu0
    %919 = vmatprep.subr.bf16.mxu0 %v533
    %920 = vmatpush1.bf16.msra.mxu0 %v532
    %921 = vmatprep.subr.bf16.mxu0 %v537
    %922 = vmatpush1.bf16.msra.mxu0 %v536
    %923 = vmatprep.subr.bf16.mxu0 %v541
    %924 = vmatpush1.bf16.msra.mxu0 %v540
    %925 = vmatprep.subr.bf16.mxu0 %v545
    %926 = vmatpush1.bf16.msra.mxu0 %v544
    %927 = vmatprep.subr.bf16.mxu0 %v549
    %928 = vmatpush1.bf16.msra.mxu0 %v548
    %929 = vmatprep.subr.bf16.mxu0 %v553
    %930 = vmatpush1.bf16.msra.mxu0 %v552
    %931 = vmatprep.subr.bf16.mxu0 %v557
    %932 = vmatpush1.bf16.msra.mxu0 %v556
    %933 = vmatprep.subr.bf16.mxu0 %v561
    %934 = vmatpush1.bf16.msra.mxu0 %v560
    %935 = vmatprep.subr.bf16.mxu0 0
    %936 = vmatpush1.bf16.msra.mxu0 0
    %937 = vmatprep.subr.bf16.mxu0 0
    %938 = vmatpush1.bf16.msra.mxu0 0
    %939 = vmatprep.subr.bf16.mxu0 0
    %940 = vmatpush1.bf16.msra.mxu0 0
    %941 = vmatprep.subr.bf16.mxu0 0
    %942 = vmatpush1.bf16.msra.mxu0 0
    %943 = vmatprep.subr.bf16.mxu0 0
    %944 = vmatpush1.bf16.msra.mxu0 0
    %945 = vmatprep.subr.bf16.mxu0 0
    %946 = vmatpush1.bf16.msra.mxu0 0
    %947 = vmatprep.subr.bf16.mxu0 0
    %948 = vmatpush1.bf16.msra.mxu0 0
    %949 = vmatprep.subr.bf16.mxu0 0
    %950 = vmatpush1.bf16.msra.mxu0 0
    %951 = vmatprep.mubr.bf16.mxu0 0
    %952 = vmatmul.mubr.bf16.gmra.mrb[0].mxu0 %v706
    %v953 = vpop.f32.mrb[0].mxu0
    %v954 = vadd.f32 %v872, %v953
    %v955 = vpop.f32.mrb[0].mxu0
    %v956 = vadd.f32 %v874, %v955
    %v957 = vpop.f32.mrb[0].mxu0
    %v958 = vpop.f32.mrb[0].mxu0
    %959 = vdwg.mxu0
    %960 = vmatprep.subr.bf16.mxu0 %v535
    %961 = vmatpush1.bf16.msra.mxu0 %v534
    %962 = vmatprep.subr.bf16.mxu0 %v539
    %963 = vmatpush1.bf16.msra.mxu0 %v538
    %964 = vmatprep.subr.bf16.mxu0 %v543
    %965 = vmatpush1.bf16.msra.mxu0 %v542
    %966 = vmatprep.subr.bf16.mxu0 %v547
    %967 = vmatpush1.bf16.msra.mxu0 %v546
    %968 = vmatprep.subr.bf16.mxu0 %v551
    %969 = vmatpush1.bf16.msra.mxu0 %v550
    %970 = vmatprep.subr.bf16.mxu0 %v555
    %971 = vmatpush1.bf16.msra.mxu0 %v554
    %972 = vmatprep.subr.bf16.mxu0 %v559
    %973 = vmatpush1.bf16.msra.mxu0 %v558
    %974 = vmatprep.subr.bf16.mxu0 %v563
    %975 = vmatpush1.bf16.msra.mxu0 %v562
    %976 = vmatprep.subr.bf16.mxu0 0
    %977 = vmatpush1.bf16.msra.mxu0 0
    %978 = vmatprep.subr.bf16.mxu0 0
    %979 = vmatpush1.bf16.msra.mxu0 0
    %980 = vmatprep.subr.bf16.mxu0 0
    %981 = vmatpush1.bf16.msra.mxu0 0
    %982 = vmatprep.subr.bf16.mxu0 0
    %983 = vmatpush1.bf16.msra.mxu0 0
    %984 = vmatprep.subr.bf16.mxu0 0
    %985 = vmatpush1.bf16.msra.mxu0 0
    %986 = vmatprep.subr.bf16.mxu0 0
    %987 = vmatpush1.bf16.msra.mxu0 0
    %988 = vmatprep.subr.bf16.mxu0 0
    %989 = vmatpush1.bf16.msra.mxu0 0
    %990 = vmatprep.subr.bf16.mxu0 0
    %991 = vmatpush1.bf16.msra.mxu0 0
    %992 = vmatprep.mubr.bf16.mxu0 0
    %993 = vmatmul.mubr.bf16.gmra.mrb[0].mxu0 %v706
    %v994 = vpop.f32.mrb[0].mxu0
    %v995 = vadd.f32 %v913, %v994
    %v996 = vpop.f32.mrb[0].mxu0
    %v997 = vadd.f32 %v915, %v996
    %v998 = vpop.f32.mrb[0].mxu0
    %v999 = vpop.f32.mrb[0].mxu0
    %1000 = vdwg.mxu0
    %v1001 = vadd.f32 %v954, %v99
    %v1002 = vadd.f32 %v956, %v103
    %v1003 = vadd.f32 %v995, %v107
    %v1004 = vadd.f32 %v997, %v111
    %v1005 = vxor.u32 %v1001, 2147483648
    %v1006 = vmul.f32 %v1005, 1.442695
    %v1007 = vpow.pop %v1006
    %v1008 = vadd.f32 %v1007, 1.0
    %v1009 = vrcp.pop %v1008
    %v1010 = vmul.f32 1.0, %v1009
    %v1011 = vxor.u32 %v1002, 2147483648
    %v1012 = vmul.f32 %v1011, 1.442695
    %v1013 = vpow.pop %v1012
    %v1014 = vadd.f32 %v1013, 1.0
    %v1015 = vrcp.pop %v1014
    %v1016 = vmul.f32 1.0, %v1015
    %v1017 = vtanh.pop %v1003
    %v1018 = vxor.u32 %v1004, 2147483648
    %v1019 = vmul.f32 %v1018, 1.442695
    %v1020 = vpow.pop %v1019
    %v1021 = vadd.f32 %v1020, 1.0
    %v1022 = vrcp.pop %v1021
    %v1023 = vmul.f32 1.0, %v1022
    %v1024 = vmul.f32 %v1016, %v703
    %v1025 = vmul.f32 %v1010, %v1017
    %v1026 = vadd.f32 %v1024, %v1025
    %v1027 = vtanh.pop %v1026
    %v1028 = vmul.f32 %v1023, %v1027
    %v1029 = vpack.c.bf16 %v1028, %v1028
    %1030 = vmatprep.subr.bf16.mxu0 0
    %1031 = vmatpush1.bf16.msra.mxu0 %v755
    %1032 = vmatprep.subr.bf16.mxu0 0
    %1033 = vmatpush1.bf16.msra.mxu0 %v756
    %1034 = vmatprep.subr.bf16.mxu0 0
    %1035 = vmatpush1.bf16.msra.mxu0 %v757
    %1036 = vmatprep.subr.bf16.mxu0 0
    %1037 = vmatpush1.bf16.msra.mxu0 %v758
    %1038 = vmatprep.subr.bf16.mxu0 0
    %1039 = vmatpush1.bf16.msra.mxu0 %v759
    %1040 = vmatprep.subr.bf16.mxu0 0
    %1041 = vmatpush1.bf16.msra.mxu0 %v760
    %1042 = vmatprep.subr.bf16.mxu0 0
    %1043 = vmatpush1.bf16.msra.mxu0 %v761
    %1044 = vmatprep.subr.bf16.mxu0 0
    %1045 = vmatpush1.bf16.msra.mxu0 %v762
    %1046 = vmatprep.subr.bf16.mxu0 0
    %1047 = vmatpush1.bf16.msra.mxu0 0
    %1048 = vmatprep.subr.bf16.mxu0 0
    %1049 = vmatpush1.bf16.msra.mxu0 0
    %1050 = vmatprep.subr.bf16.mxu0 0
    %1051 = vmatpush1.bf16.msra.mxu0 0
    %1052 = vmatprep.subr.bf16.mxu0 0
    %1053 = vmatpush1.bf16.msra.mxu0 0
    %1054 = vmatprep.subr.bf16.mxu0 0
    %1055 = vmatpush1.bf16.msra.mxu0 0
    %1056 = vmatprep.subr.bf16.mxu0 0
    %1057 = vmatpush1.bf16.msra.mxu0 0
    %1058 = vmatprep.subr.bf16.mxu0 0
    %1059 = vmatpush1.bf16.msra.mxu0 0
    %1060 = vmatprep.subr.bf16.mxu0 0
    %1061 = vmatpush1.bf16.msra.mxu0 0
    %1062 = vmatprep.mubr.bf16.mxu0 0
    %1063 = vmatmul.mubr.bf16.gmra.mrb[0].mxu0 %v1029
    %v1064 = vpop.f32.mrb[0].mxu0
    %v1065 = vadd.f32 %v121, %v1064
    %v1066 = vpop.f32.mrb[0].mxu0
    %v1067 = vpop.f32.mrb[0].mxu0
    %v1068 = vpop.f32.mrb[0].mxu0
    %1069 = vdwg.mxu0
    %1070 = vmax.xlane.f32.xlu0 %v1065
    %v1071 = vpop.xlane.xlu0 %1070
    %vm1072 = vcmp.eq.f32.partialorder %v1065, %v1071
    %v1073 = vsel %vm1072, %v124, 128
    %v1074 = vand.u32 %v1073, 65535
    %v1075 = vshra.s32 %v1073, 16
    %v1076 = vcvt.s32.f32 %v1074
    %v1077 = vcvt.s32.f32 %v1075
    %1078 = vmin.xlane.f32.xlu0 %v1077
    %v1079 = vpop.xlane.xlu0 %1078
    %vm1080 = vcmp.eq.f32.partialorder %v1077, %v1079
    %v1081 = vsel %vm1080, %v1076, inf
    %1082 = vmin.xlane.f32.xlu0 %v1081
    %v1083 = vpop.xlane.xlu0 %1082
    %v1084 = vcvt.f32.s32 %v1083
    %v1085 = vcvt.f32.s32 %v1079
    %v1086 = vshll.u32 %v1085, 16
    %v1087 = vadd.s32 %v1086, %v1084
    %vm1088 = vcmp.lt.s32.totalorder %v1087, 127
    %v1089 = vsel %vm1088, %v1087, 127
    %v1090 = vsel %vm158, %v1089, %v832
    %vm1091 = vcmp.eq.s32.totalorder %v124, %v1089
    %v1092 = vsel %vm1091, 1, 0
    %v1093 = vcvt.s32.f32 %v1092
    %v1094 = vpack.c.bf16 %v1093, %v1093
    %1095 = vmatprep.subr.bf16.mxu0 %v291
    %1096 = vmatpush1.bf16.msra.mxu0 %v290
    %1097 = vmatprep.subr.bf16.mxu0 %v295
    %1098 = vmatpush1.bf16.msra.mxu0 %v294
    %1099 = vmatprep.subr.bf16.mxu0 %v299
    %1100 = vmatpush1.bf16.msra.mxu0 %v298
    %1101 = vmatprep.subr.bf16.mxu0 %v303
    %1102 = vmatpush1.bf16.msra.mxu0 %v302
    %1103 = vmatprep.subr.bf16.mxu0 %v307
    %1104 = vmatpush1.bf16.msra.mxu0 %v306
    %1105 = vmatprep.subr.bf16.mxu0 %v311
    %1106 = vmatpush1.bf16.msra.mxu0 %v310
    %1107 = vmatprep.subr.bf16.mxu0 %v315
    %1108 = vmatpush1.bf16.msra.mxu0 %v314
    %1109 = vmatprep.subr.bf16.mxu0 %v319
    %1110 = vmatpush1.bf16.msra.mxu0 %v318
    %1111 = vmatprep.subr.bf16.mxu0 0
    %1112 = vmatpush1.bf16.msra.mxu0 0
    %1113 = vmatprep.subr.bf16.mxu0 0
    %1114 = vmatpush1.bf16.msra.mxu0 0
    %1115 = vmatprep.subr.bf16.mxu0 0
    %1116 = vmatpush1.bf16.msra.mxu0 0
    %1117 = vmatprep.subr.bf16.mxu0 0
    %1118 = vmatpush1.bf16.msra.mxu0 0
    %1119 = vmatprep.subr.bf16.mxu0 0
    %1120 = vmatpush1.bf16.msra.mxu0 0
    %1121 = vmatprep.subr.bf16.mxu0 0
    %1122 = vmatpush1.bf16.msra.mxu0 0
    %1123 = vmatprep.subr.bf16.mxu0 0
    %1124 = vmatpush1.bf16.msra.mxu0 0
    %1125 = vmatprep.subr.bf16.mxu0 0
    %1126 = vmatpush1.bf16.msra.mxu0 0
    %1127 = vmatprep.mubr.bf16.mxu0 0
    %1128 = vmatmul.mubr.bf16.gmra.mrb[0].mxu0 %v1094
    %v1129 = vpop.f32.mrb[0].mxu0
    %v1130 = vadd.f32 0.0, %v1129
    %v1131 = vpop.f32.mrb[0].mxu0
    %v1132 = vadd.f32 0.0, %v1131
    %v1133 = vpop.f32.mrb[0].mxu0
    %v1134 = vpop.f32.mrb[0].mxu0
    %1135 = vdwg.mxu0
    %1136 = vmatprep.subr.bf16.mxu0 %v293
    %1137 = vmatpush1.bf16.msra.mxu0 %v292
    %1138 = vmatprep.subr.bf16.mxu0 %v297
    %1139 = vmatpush1.bf16.msra.mxu0 %v296
    %1140 = vmatprep.subr.bf16.mxu0 %v301
    %1141 = vmatpush1.bf16.msra.mxu0 %v300
    %1142 = vmatprep.subr.bf16.mxu0 %v305
    %1143 = vmatpush1.bf16.msra.mxu0 %v304
    %1144 = vmatprep.subr.bf16.mxu0 %v309
    %1145 = vmatpush1.bf16.msra.mxu0 %v308
    %1146 = vmatprep.subr.bf16.mxu0 %v313
    %1147 = vmatpush1.bf16.msra.mxu0 %v312
    %1148 = vmatprep.subr.bf16.mxu0 %v317
    %1149 = vmatpush1.bf16.msra.mxu0 %v316
    %1150 = vmatprep.subr.bf16.mxu0 %v321
    %1151 = vmatpush1.bf16.msra.mxu0 %v320
    %1152 = vmatprep.subr.bf16.mxu0 0
    %1153 = vmatpush1.bf16.msra.mxu0 0
    %1154 = vmatprep.subr.bf16.mxu0 0
    %1155 = vmatpush1.bf16.msra.mxu0 0
    %1156 = vmatprep.subr.bf16.mxu0 0
    %1157 = vmatpush1.bf16.msra.mxu0 0
    %1158 = vmatprep.subr.bf16.mxu0 0
    %1159 = vmatpush1.bf16.msra.mxu0 0
    %1160 = vmatprep.subr.bf16.mxu0 0
    %1161 = vmatpush1.bf16.msra.mxu0 0
    %1162 = vmatprep.subr.bf16.mxu0 0
    %1163 = vmatpush1.bf16.msra.mxu0 0
    %1164 = vmatprep.subr.bf16.mxu0 0
    %1165 = vmatpush1.bf16.msra.mxu0 0
    %1166 = vmatprep.subr.bf16.mxu0 0
    %1167 = vmatpush1.bf16.msra.mxu0 0
    %1168 = vmatprep.mubr.bf16.mxu0 0
    %1169 = vmatmul.mubr.bf16.gmra.mrb[0].mxu0 %v1094
    %v1170 = vpop.f32.mrb[0].mxu0
    %v1171 = vadd.f32 0.0, %v1170
    %v1172 = vpop.f32.mrb[0].mxu0
    %v1173 = vadd.f32 0.0, %v1172
    %v1174 = vpop.f32.mrb[0].mxu0
    %v1175 = vpop.f32.mrb[0].mxu0
    %1176 = vdwg.mxu0
    %1177 = vmatprep.subr.bf16.mxu0 %v533
    %1178 = vmatpush1.bf16.msra.mxu0 %v532
    %1179 = vmatprep.subr.bf16.mxu0 %v537
    %1180 = vmatpush1.bf16.msra.mxu0 %v536
    %1181 = vmatprep.subr.bf16.mxu0 %v541
    %1182 = vmatpush1.bf16.msra.mxu0 %v540
    %1183 = vmatprep.subr.bf16.mxu0 %v545
    %1184 = vmatpush1.bf16.msra.mxu0 %v544
    %1185 = vmatprep.subr.bf16.mxu0 %v549
    %1186 = vmatpush1.bf16.msra.mxu0 %v548
    %1187 = vmatprep.subr.bf16.mxu0 %v553
    %1188 = vmatpush1.bf16.msra.mxu0 %v552
    %1189 = vmatprep.subr.bf16.mxu0 %v557
    %1190 = vmatpush1.bf16.msra.mxu0 %v556
    %1191 = vmatprep.subr.bf16.mxu0 %v561
    %1192 = vmatpush1.bf16.msra.mxu0 %v560
    %1193 = vmatprep.subr.bf16.mxu0 0
    %1194 = vmatpush1.bf16.msra.mxu0 0
    %1195 = vmatprep.subr.bf16.mxu0 0
    %1196 = vmatpush1.bf16.msra.mxu0 0
    %1197 = vmatprep.subr.bf16.mxu0 0
    %1198 = vmatpush1.bf16.msra.mxu0 0
    %1199 = vmatprep.subr.bf16.mxu0 0
    %1200 = vmatpush1.bf16.msra.mxu0 0
    %1201 = vmatprep.subr.bf16.mxu0 0
    %1202 = vmatpush1.bf16.msra.mxu0 0
    %1203 = vmatprep.subr.bf16.mxu0 0
    %1204 = vmatpush1.bf16.msra.mxu0 0
    %1205 = vmatprep.subr.bf16.mxu0 0
    %1206 = vmatpush1.bf16.msra.mxu0 0
    %1207 = vmatprep.subr.bf16.mxu0 0
    %1208 = vmatpush1.bf16.msra.mxu0 0
    %1209 = vmatprep.mubr.bf16.mxu0 0
    %1210 = vmatmul.mubr.bf16.gmra.mrb[0].mxu0 %v1029
    %v1211 = vpop.f32.mrb[0].mxu0
    %v1212 = vadd.f32 %v1130, %v1211
    %v1213 = vpop.f32.mrb[0].mxu0
    %v1214 = vadd.f32 %v1132, %v1213
    %v1215 = vpop.f32.mrb[0].mxu0
    %v1216 = vpop.f32.mrb[0].mxu0
    %1217 = vdwg.mxu0
    %1218 = vmatprep.subr.bf16.mxu0 %v535
    %1219 = vmatpush1.bf16.msra.mxu0 %v534
    %1220 = vmatprep.subr.bf16.mxu0 %v539
    %1221 = vmatpush1.bf16.msra.mxu0 %v538
    %1222 = vmatprep.subr.bf16.mxu0 %v543
    %1223 = vmatpush1.bf16.msra.mxu0 %v542
    %1224 = vmatprep.subr.bf16.mxu0 %v547
    %1225 = vmatpush1.bf16.msra.mxu0 %v546
    %1226 = vmatprep.subr.bf16.mxu0 %v551
    %1227 = vmatpush1.bf16.msra.mxu0 %v550
    %1228 = vmatprep.subr.bf16.mxu0 %v555
    %1229 = vmatpush1.bf16.msra.mxu0 %v554
    %1230 = vmatprep.subr.bf16.mxu0 %v559
    %1231 = vmatpush1.bf16.msra.mxu0 %v558
    %1232 = vmatprep.subr.bf16.mxu0 %v563
    %1233 = vmatpush1.bf16.msra.mxu0 %v562
    %1234 = vmatprep.subr.bf16.mxu0 0
    %1235 = vmatpush1.bf16.msra.mxu0 0
    %1236 = vmatprep.subr.bf16.mxu0 0
    %1237 = vmatpush1.bf16.msra.mxu0 0
    %1238 = vmatprep.subr.bf16.mxu0 0
    %1239 = vmatpush1.bf16.msra.mxu0 0
    %1240 = vmatprep.subr.bf16.mxu0 0
    %1241 = vmatpush1.bf16.msra.mxu0 0
    %1242 = vmatprep.subr.bf16.mxu0 0
    %1243 = vmatpush1.bf16.msra.mxu0 0
    %1244 = vmatprep.subr.bf16.mxu0 0
    %1245 = vmatpush1.bf16.msra.mxu0 0
    %1246 = vmatprep.subr.bf16.mxu0 0
    %1247 = vmatpush1.bf16.msra.mxu0 0
    %1248 = vmatprep.subr.bf16.mxu0 0
    %1249 = vmatpush1.bf16.msra.mxu0 0
    %1250 = vmatprep.mubr.bf16.mxu0 0
    %1251 = vmatmul.mubr.bf16.gmra.mrb[0].mxu0 %v1029
    %v1252 = vpop.f32.mrb[0].mxu0
    %v1253 = vadd.f32 %v1171, %v1252
    %v1254 = vpop.f32.mrb[0].mxu0
    %v1255 = vadd.f32 %v1173, %v1254
    %v1256 = vpop.f32.mrb[0].mxu0
    %v1257 = vpop.f32.mrb[0].mxu0
    %1258 = vdwg.mxu0
    %v1259 = vadd.f32 %v1212, %v99
    %v1260 = vadd.f32 %v1214, %v103
    %v1261 = vadd.f32 %v1253, %v107
    %v1262 = vadd.f32 %v1255, %v111
    %v1263 = vxor.u32 %v1259, 2147483648
    %v1264 = vmul.f32 %v1263, 1.442695
    %v1265 = vpow.pop %v1264
    %v1266 = vadd.f32 %v1265, 1.0
    %v1267 = vrcp.pop %v1266
    %v1268 = vmul.f32 1.0, %v1267
    %v1269 = vxor.u32 %v1260, 2147483648
    %v1270 = vmul.f32 %v1269, 1.442695
    %v1271 = vpow.pop %v1270
    %v1272 = vadd.f32 %v1271, 1.0
    %v1273 = vrcp.pop %v1272
    %v1274 = vmul.f32 1.0, %v1273
    %v1275 = vtanh.pop %v1261
    %v1276 = vxor.u32 %v1262, 2147483648
    %v1277 = vmul.f32 %v1276, 1.442695
    %v1278 = vpow.pop %v1277
    %v1279 = vadd.f32 %v1278, 1.0
    %v1280 = vrcp.pop %v1279
    %v1281 = vmul.f32 1.0, %v1280
    %v1282 = vmul.f32 %v1274, %v1026
    %v1283 = vmul.f32 %v1268, %v1275
    %v1284 = vadd.f32 %v1282, %v1283
    %v1285 = vtanh.pop %v1284
    %v1286 = vmul.f32 %v1281, %v1285
    %v1287 = vpack.c.bf16 %v1286, %v1286
    %1288 = vmatprep.subr.bf16.mxu0 0
    %1289 = vmatpush1.bf16.msra.mxu0 %v755
    %1290 = vmatprep.subr.bf16.mxu0 0
    %1291 = vmatpush1.bf16.msra.mxu0 %v756
    %1292 = vmatprep.subr.bf16.mxu0 0
    %1293 = vmatpush1.bf16.msra.mxu0 %v757
    %1294 = vmatprep.subr.bf16.mxu0 0
    %1295 = vmatpush1.bf16.msra.mxu0 %v758
    %1296 = vmatprep.subr.bf16.mxu0 0
    %1297 = vmatpush1.bf16.msra.mxu0 %v759
    %1298 = vmatprep.subr.bf16.mxu0 0
    %1299 = vmatpush1.bf16.msra.mxu0 %v760
    %1300 = vmatprep.subr.bf16.mxu0 0
    %1301 = vmatpush1.bf16.msra.mxu0 %v761
    %1302 = vmatprep.subr.bf16.mxu0 0
    %1303 = vmatpush1.bf16.msra.mxu0 %v762
    %1304 = vmatprep.subr.bf16.mxu0 0
    %1305 = vmatpush1.bf16.msra.mxu0 0
    %1306 = vmatprep.subr.bf16.mxu0 0
    %1307 = vmatpush1.bf16.msra.mxu0 0
    %1308 = vmatprep.subr.bf16.mxu0 0
    %1309 = vmatpush1.bf16.msra.mxu0 0
    %1310 = vmatprep.subr.bf16.mxu0 0
    %1311 = vmatpush1.bf16.msra.mxu0 0
    %1312 = vmatprep.subr.bf16.mxu0 0
    %1313 = vmatpush1.bf16.msra.mxu0 0
    %1314 = vmatprep.subr.bf16.mxu0 0
    %1315 = vmatpush1.bf16.msra.mxu0 0
    %1316 = vmatprep.subr.bf16.mxu0 0
    %1317 = vmatpush1.bf16.msra.mxu0 0
    %1318 = vmatprep.subr.bf16.mxu0 0
    %1319 = vmatpush1.bf16.msra.mxu0 0
    %1320 = vmatprep.mubr.bf16.mxu0 0
    %1321 = vmatmul.mubr.bf16.gmra.mrb[0].mxu0 %v1287
    %v1322 = vpop.f32.mrb[0].mxu0
    %v1323 = vadd.f32 %v121, %v1322
    %v1324 = vpop.f32.mrb[0].mxu0
    %v1325 = vpop.f32.mrb[0].mxu0
    %v1326 = vpop.f32.mrb[0].mxu0
    %1327 = vdwg.mxu0
    %1328 = vmax.xlane.f32.xlu0 %v1323
    %v1329 = vpop.xlane.xlu0 %1328
    %vm1330 = vcmp.eq.f32.partialorder %v1323, %v1329
    %v1331 = vsel %vm1330, %v124, 128
    %v1332 = vand.u32 %v1331, 65535
    %v1333 = vshra.s32 %v1331, 16
    %v1334 = vcvt.s32.f32 %v1332
    %v1335 = vcvt.s32.f32 %v1333
    %1336 = vmin.xlane.f32.xlu0 %v1335
    %v1337 = vpop.xlane.xlu0 %1336
    %vm1338 = vcmp.eq.f32.partialorder %v1335, %v1337
    %v1339 = vsel %vm1338, %v1334, inf
    %1340 = vmin.xlane.f32.xlu0 %v1339
    %v1341 = vpop.xlane.xlu0 %1340
    %v1342 = vcvt.f32.s32 %v1341
    %v1343 = vcvt.f32.s32 %v1337
    %v1344 = vshll.u32 %v1343, 16
    %v1345 = vadd.s32 %v1344, %v1342
    %vm1346 = vcmp.lt.s32.totalorder %v1345, 127
    %v1347 = vsel %vm1346, %v1345, 127
    %vm1348 = vcmp.eq.s32.totalorder %v124, 2
    %v1349 = vsel %vm1348, %v1347, %v1090
    %vm1350 = vcmp.eq.s32.totalorder %v124, %v1347
    %v1351 = vsel %vm1350, 1, 0
    %v1352 = vcvt.s32.f32 %v1351
    %v1353 = vpack.c.bf16 %v1352, %v1352
    %1354 = vmatprep.subr.bf16.mxu0 %v291
    %1355 = vmatpush1.bf16.msra.mxu0 %v290
    %1356 = vmatprep.subr.bf16.mxu0 %v295
    %1357 = vmatpush1.bf16.msra.mxu0 %v294
    %1358 = vmatprep.subr.bf16.mxu0 %v299
    %1359 = vmatpush1.bf16.msra.mxu0 %v298
    %1360 = vmatprep.subr.bf16.mxu0 %v303
    %1361 = vmatpush1.bf16.msra.mxu0 %v302
    %1362 = vmatprep.subr.bf16.mxu0 %v307
    %1363 = vmatpush1.bf16.msra.mxu0 %v306
    %1364 = vmatprep.subr.bf16.mxu0 %v311
    %1365 = vmatpush1.bf16.msra.mxu0 %v310
    %1366 = vmatprep.subr.bf16.mxu0 %v315
    %1367 = vmatpush1.bf16.msra.mxu0 %v314
    %1368 = vmatprep.subr.bf16.mxu0 %v319
    %1369 = vmatpush1.bf16.msra.mxu0 %v318
    %1370 = vmatprep.subr.bf16.mxu0 0
    %1371 = vmatpush1.bf16.msra.mxu0 0
    %1372 = vmatprep.subr.bf16.mxu0 0
    %1373 = vmatpush1.bf16.msra.mxu0 0
    %1374 = vmatprep.subr.bf16.mxu0 0
    %1375 = vmatpush1.bf16.msra.mxu0 0
    %1376 = vmatprep.subr.bf16.mxu0 0
    %1377 = vmatpush1.bf16.msra.mxu0 0
    %1378 = vmatprep.subr.bf16.mxu0 0
    %1379 = vmatpush1.bf16.msra.mxu0 0
    %1380 = vmatprep.subr.bf16.mxu0 0
    %1381 = vmatpush1.bf16.msra.mxu0 0
    %1382 = vmatprep.subr.bf16.mxu0 0
    %1383 = vmatpush1.bf16.msra.mxu0 0
    %1384 = vmatprep.subr.bf16.mxu0 0
    %1385 = vmatpush1.bf16.msra.mxu0 0
    %1386 = vmatprep.mubr.bf16.mxu0 0
    %1387 = vmatmul.mubr.bf16.gmra.mrb[0].mxu0 %v1353
    %v1388 = vpop.f32.mrb[0].mxu0
    %v1389 = vadd.f32 0.0, %v1388
    %v1390 = vpop.f32.mrb[0].mxu0
    %v1391 = vadd.f32 0.0, %v1390
    %v1392 = vpop.f32.mrb[0].mxu0
    %v1393 = vpop.f32.mrb[0].mxu0
    %1394 = vdwg.mxu0
    %1395 = vmatprep.subr.bf16.mxu0 %v293
    %1396 = vmatpush1.bf16.msra.mxu0 %v292
    %1397 = vmatprep.subr.bf16.mxu0 %v297
    %1398 = vmatpush1.bf16.msra.mxu0 %v296
    %1399 = vmatprep.subr.bf16.mxu0 %v301
    %1400 = vmatpush1.bf16.msra.mxu0 %v300
    %1401 = vmatprep.subr.bf16.mxu0 %v305
    %1402 = vmatpush1.bf16.msra.mxu0 %v304
    %1403 = vmatprep.subr.bf16.mxu0 %v309
    %1404 = vmatpush1.bf16.msra.mxu0 %v308
    %1405 = vmatprep.subr.bf16.mxu0 %v313
    %1406 = vmatpush1.bf16.msra.mxu0 %v312
    %1407 = vmatprep.subr.bf16.mxu0 %v317
    %1408 = vmatpush1.bf16.msra.mxu0 %v316
    %1409 = vmatprep.subr.bf16.mxu0 %v321
    %1410 = vmatpush1.bf16.msra.mxu0 %v320
    %1411 = vmatprep.subr.bf16.mxu0 0
    %1412 = vmatpush1.bf16.msra.mxu0 0
    %1413 = vmatprep.subr.bf16.mxu0 0
    %1414 = vmatpush1.bf16.msra.mxu0 0
    %1415 = vmatprep.subr.bf16.mxu0 0
    %1416 = vmatpush1.bf16.msra.mxu0 0
    %1417 = vmatprep.subr.bf16.mxu0 0
    %1418 = vmatpush1.bf16.msra.mxu0 0
    %1419 = vmatprep.subr.bf16.mxu0 0
    %1420 = vmatpush1.bf16.msra.mxu0 0
    %1421 = vmatprep.subr.bf16.mxu0 0
    %1422 = vmatpush1.bf16.msra.mxu0 0
    %1423 = vmatprep.subr.bf16.mxu0 0
    %1424 = vmatpush1.bf16.msra.mxu0 0
    %1425 = vmatprep.subr.bf16.mxu0 0
    %1426 = vmatpush1.bf16.msra.mxu0 0
    %1427 = vmatprep.mubr.bf16.mxu0 0
    %1428 = vmatmul.mubr.bf16.gmra.mrb[0].mxu0 %v1353
    %v1429 = vpop.f32.mrb[0].mxu0
    %v1430 = vadd.f32 0.0, %v1429
    %v1431 = vpop.f32.mrb[0].mxu0
    %v1432 = vadd.f32 0.0, %v1431
    %v1433 = vpop.f32.mrb[0].mxu0
    %v1434 = vpop.f32.mrb[0].mxu0
    %1435 = vdwg.mxu0
    %1436 = vmatprep.subr.bf16.mxu0 %v533
    %1437 = vmatpush1.bf16.msra.mxu0 %v532
    %1438 = vmatprep.subr.bf16.mxu0 %v537
    %1439 = vmatpush1.bf16.msra.mxu0 %v536
    %1440 = vmatprep.subr.bf16.mxu0 %v541
    %1441 = vmatpush1.bf16.msra.mxu0 %v540
    %1442 = vmatprep.subr.bf16.mxu0 %v545
    %1443 = vmatpush1.bf16.msra.mxu0 %v544
    %1444 = vmatprep.subr.bf16.mxu0 %v549
    %1445 = vmatpush1.bf16.msra.mxu0 %v548
    %1446 = vmatprep.subr.bf16.mxu0 %v553
    %1447 = vmatpush1.bf16.msra.mxu0 %v552
    %1448 = vmatprep.subr.bf16.mxu0 %v557
    %1449 = vmatpush1.bf16.msra.mxu0 %v556
    %1450 = vmatprep.subr.bf16.mxu0 %v561
    %1451 = vmatpush1.bf16.msra.mxu0 %v560
    %1452 = vmatprep.subr.bf16.mxu0 0
    %1453 = vmatpush1.bf16.msra.mxu0 0
    %1454 = vmatprep.subr.bf16.mxu0 0
    %1455 = vmatpush1.bf16.msra.mxu0 0
    %1456 = vmatprep.subr.bf16.mxu0 0
    %1457 = vmatpush1.bf16.msra.mxu0 0
    %1458 = vmatprep.subr.bf16.mxu0 0
    %1459 = vmatpush1.bf16.msra.mxu0 0
    %1460 = vmatprep.subr.bf16.mxu0 0
    %1461 = vmatpush1.bf16.msra.mxu0 0
    %1462 = vmatprep.subr.bf16.mxu0 0
    %1463 = vmatpush1.bf16.msra.mxu0 0
    %1464 = vmatprep.subr.bf16.mxu0 0
    %1465 = vmatpush1.bf16.msra.mxu0 0
    %1466 = vmatprep.subr.bf16.mxu0 0
    %1467 = vmatpush1.bf16.msra.mxu0 0
    %1468 = vmatprep.mubr.bf16.mxu0 0
    %1469 = vmatmul.mubr.bf16.gmra.mrb[0].mxu0 %v1287
    %v1470 = vpop.f32.mrb[0].mxu0
    %v1471 = vadd.f32 %v1389, %v1470
    %v1472 = vpop.f32.mrb[0].mxu0
    %v1473 = vadd.f32 %v1391, %v1472
    %v1474 = vpop.f32.mrb[0].mxu0
    %v1475 = vpop.f32.mrb[0].mxu0
    %1476 = vdwg.mxu0
    %1477 = vmatprep.subr.bf16.mxu0 %v535
    %1478 = vmatpush1.bf16.msra.mxu0 %v534
    %1479 = vmatprep.subr.bf16.mxu0 %v539
    %1480 = vmatpush1.bf16.msra.mxu0 %v538
    %1481 = vmatprep.subr.bf16.mxu0 %v543
    %1482 = vmatpush1.bf16.msra.mxu0 %v542
    %1483 = vmatprep.subr.bf16.mxu0 %v547
    %1484 = vmatpush1.bf16.msra.mxu0 %v546
    %1485 = vmatprep.subr.bf16.mxu0 %v551
    %1486 = vmatpush1.bf16.msra.mxu0 %v550
    %1487 = vmatprep.subr.bf16.mxu0 %v555
    %1488 = vmatpush1.bf16.msra.mxu0 %v554
    %1489 = vmatprep.subr.bf16.mxu0 %v559
    %1490 = vmatpush1.bf16.msra.mxu0 %v558
    %1491 = vmatprep.subr.bf16.mxu0 %v563
    %1492 = vmatpush1.bf16.msra.mxu0 %v562
    %1493 = vmatprep.subr.bf16.mxu0 0
    %1494 = vmatpush1.bf16.msra.mxu0 0
    %1495 = vmatprep.subr.bf16.mxu0 0
    %1496 = vmatpush1.bf16.msra.mxu0 0
    %1497 = vmatprep.subr.bf16.mxu0 0
    %1498 = vmatpush1.bf16.msra.mxu0 0
    %1499 = vmatprep.subr.bf16.mxu0 0
    %1500 = vmatpush1.bf16.msra.mxu0 0
    %1501 = vmatprep.subr.bf16.mxu0 0
    %1502 = vmatpush1.bf16.msra.mxu0 0
    %1503 = vmatprep.subr.bf16.mxu0 0
    %1504 = vmatpush1.bf16.msra.mxu0 0
    %1505 = vmatprep.subr.bf16.mxu0 0
    %1506 = vmatpush1.bf16.msra.mxu0 0
    %1507 = vmatprep.subr.bf16.mxu0 0
    %1508 = vmatpush1.bf16.msra.mxu0 0
    %1509 = vmatprep.mubr.bf16.mxu0 0
    %1510 = vmatmul.mubr.bf16.gmra.mrb[0].mxu0 %v1287
    %v1511 = vpop.f32.mrb[0].mxu0
    %v1512 = vadd.f32 %v1430, %v1511
    %v1513 = vpop.f32.mrb[0].mxu0
    %v1514 = vadd.f32 %v1432, %v1513
    %v1515 = vpop.f32.mrb[0].mxu0
    %v1516 = vpop.f32.mrb[0].mxu0
    %1517 = vdwg.mxu0
    %v1518 = vadd.f32 %v1471, %v99
    %v1519 = vadd.f32 %v1473, %v103
    %v1520 = vadd.f32 %v1512, %v107
    %v1521 = vadd.f32 %v1514, %v111
    %v1522 = vxor.u32 %v1518, 2147483648
    %v1523 = vmul.f32 %v1522, 1.442695
    %v1524 = vpow.pop %v1523
    %v1525 = vadd.f32 %v1524, 1.0
    %v1526 = vrcp.pop %v1525
    %v1527 = vmul.f32 1.0, %v1526
    %v1528 = vxor.u32 %v1519, 2147483648
    %v1529 = vmul.f32 %v1528, 1.442695
    %v1530 = vpow.pop %v1529
    %v1531 = vadd.f32 %v1530, 1.0
    %v1532 = vrcp.pop %v1531
    %v1533 = vmul.f32 1.0, %v1532
    %v1534 = vtanh.pop %v1520
    %v1535 = vxor.u32 %v1521, 2147483648
    %v1536 = vmul.f32 %v1535, 1.442695
    %v1537 = vpow.pop %v1536
    %v1538 = vadd.f32 %v1537, 1.0
    %v1539 = vrcp.pop %v1538
    %v1540 = vmul.f32 1.0, %v1539
    %v1541 = vmul.f32 %v1533, %v1284
    %v1542 = vmul.f32 %v1527, %v1534
    %v1543 = vadd.f32 %v1541, %v1542
    %v1544 = vtanh.pop %v1543
    %v1545 = vmul.f32 %v1540, %v1544
    %v1546 = vpack.c.bf16 %v1545, %v1545
    %1547 = vmatprep.subr.bf16.mxu0 0
    %1548 = vmatpush1.bf16.msra.mxu0 %v755
    %1549 = vmatprep.subr.bf16.mxu0 0
    %1550 = vmatpush1.bf16.msra.mxu0 %v756
    %1551 = vmatprep.subr.bf16.mxu0 0
    %1552 = vmatpush1.bf16.msra.mxu0 %v757
    %1553 = vmatprep.subr.bf16.mxu0 0
    %1554 = vmatpush1.bf16.msra.mxu0 %v758
    %1555 = vmatprep.subr.bf16.mxu0 0
    %1556 = vmatpush1.bf16.msra.mxu0 %v759
    %1557 = vmatprep.subr.bf16.mxu0 0
    %1558 = vmatpush1.bf16.msra.mxu0 %v760
    %1559 = vmatprep.subr.bf16.mxu0 0
    %1560 = vmatpush1.bf16.msra.mxu0 %v761
    %1561 = vmatprep.subr.bf16.mxu0 0
    %1562 = vmatpush1.bf16.msra.mxu0 %v762
    %1563 = vmatprep.subr.bf16.mxu0 0
    %1564 = vmatpush1.bf16.msra.mxu0 0
    %1565 = vmatprep.subr.bf16.mxu0 0
    %1566 = vmatpush1.bf16.msra.mxu0 0
    %1567 = vmatprep.subr.bf16.mxu0 0
    %1568 = vmatpush1.bf16.msra.mxu0 0
    %1569 = vmatprep.subr.bf16.mxu0 0
    %1570 = vmatpush1.bf16.msra.mxu0 0
    %1571 = vmatprep.subr.bf16.mxu0 0
    %1572 = vmatpush1.bf16.msra.mxu0 0
    %1573 = vmatprep.subr.bf16.mxu0 0
    %1574 = vmatpush1.bf16.msra.mxu0 0
    %1575 = vmatprep.subr.bf16.mxu0 0
    %1576 = vmatpush1.bf16.msra.mxu0 0
    %1577 = vmatprep.subr.bf16.mxu0 0
    %1578 = vmatpush1.bf16.msra.mxu0 0
    %1579 = vmatprep.mubr.bf16.mxu0 0
    %1580 = vmatmul.mubr.bf16.gmra.mrb[0].mxu0 %v1546
    %v1581 = vpop.f32.mrb[0].mxu0
    %v1582 = vadd.f32 %v121, %v1581
    %v1583 = vpop.f32.mrb[0].mxu0
    %v1584 = vpop.f32.mrb[0].mxu0
    %v1585 = vpop.f32.mrb[0].mxu0
    %1586 = vdwg.mxu0
    %1587 = vmax.xlane.f32.xlu0 %v1582
    %v1588 = vpop.xlane.xlu0 %1587
    %vm1589 = vcmp.eq.f32.partialorder %v1582, %v1588
    %v1590 = vsel %vm1589, %v124, 128
    %v1591 = vand.u32 %v1590, 65535
    %v1592 = vshra.s32 %v1590, 16
    %v1593 = vcvt.s32.f32 %v1591
    %v1594 = vcvt.s32.f32 %v1592
    %1595 = vmin.xlane.f32.xlu0 %v1594
    %v1596 = vpop.xlane.xlu0 %1595
    %vm1597 = vcmp.eq.f32.partialorder %v1594, %v1596
    %v1598 = vsel %vm1597, %v1593, inf
    %1599 = vmin.xlane.f32.xlu0 %v1598
    %v1600 = vpop.xlane.xlu0 %1599
    %v1601 = vcvt.f32.s32 %v1600
    %v1602 = vcvt.f32.s32 %v1596
    %v1603 = vshll.u32 %v1602, 16
    %v1604 = vadd.s32 %v1603, %v1601
    %vm1605 = vcmp.lt.s32.totalorder %v1604, 127
    %v1606 = vsel %vm1605, %v1604, 127
    %vm1607 = vcmp.eq.s32.totalorder %v124, 3
    %v1608 = vsel %vm1607, %v1606, %v1349
    %vm1609 = vcmp.eq.s32.totalorder %v124, %v1606
    %v1610 = vsel %vm1609, 1, 0
    %v1611 = vcvt.s32.f32 %v1610
    %v1612 = vpack.c.bf16 %v1611, %v1611
    %1613 = vmatprep.subr.bf16.mxu0 %v291
    %1614 = vmatpush1.bf16.msra.mxu0 %v290
    %1615 = vmatprep.subr.bf16.mxu0 %v295
    %1616 = vmatpush1.bf16.msra.mxu0 %v294
    %1617 = vmatprep.subr.bf16.mxu0 %v299
    %1618 = vmatpush1.bf16.msra.mxu0 %v298
    %1619 = vmatprep.subr.bf16.mxu0 %v303
    %1620 = vmatpush1.bf16.msra.mxu0 %v302
    %1621 = vmatprep.subr.bf16.mxu0 %v307
    %1622 = vmatpush1.bf16.msra.mxu0 %v306
    %1623 = vmatprep.subr.bf16.mxu0 %v311
    %1624 = vmatpush1.bf16.msra.mxu0 %v310
    %1625 = vmatprep.subr.bf16.mxu0 %v315
    %1626 = vmatpush1.bf16.msra.mxu0 %v314
    %1627 = vmatprep.subr.bf16.mxu0 %v319
    %1628 = vmatpush1.bf16.msra.mxu0 %v318
    %1629 = vmatprep.subr.bf16.mxu0 0
    %1630 = vmatpush1.bf16.msra.mxu0 0
    %1631 = vmatprep.subr.bf16.mxu0 0
    %1632 = vmatpush1.bf16.msra.mxu0 0
    %1633 = vmatprep.subr.bf16.mxu0 0
    %1634 = vmatpush1.bf16.msra.mxu0 0
    %1635 = vmatprep.subr.bf16.mxu0 0
    %1636 = vmatpush1.bf16.msra.mxu0 0
    %1637 = vmatprep.subr.bf16.mxu0 0
    %1638 = vmatpush1.bf16.msra.mxu0 0
    %1639 = vmatprep.subr.bf16.mxu0 0
    %1640 = vmatpush1.bf16.msra.mxu0 0
    %1641 = vmatprep.subr.bf16.mxu0 0
    %1642 = vmatpush1.bf16.msra.mxu0 0
    %1643 = vmatprep.subr.bf16.mxu0 0
    %1644 = vmatpush1.bf16.msra.mxu0 0
    %1645 = vmatprep.mubr.bf16.mxu0 0
    %1646 = vmatmul.mubr.bf16.gmra.mrb[0].mxu0 %v1612
    %v1647 = vpop.f32.mrb[0].mxu0
    %v1648 = vadd.f32 0.0, %v1647
    %v1649 = vpop.f32.mrb[0].mxu0
    %v1650 = vadd.f32 0.0, %v1649
    %v1651 = vpop.f32.mrb[0].mxu0
    %v1652 = vpop.f32.mrb[0].mxu0
    %1653 = vdwg.mxu0
    %1654 = vmatprep.subr.bf16.mxu0 %v293
    %1655 = vmatpush1.bf16.msra.mxu0 %v292
    %1656 = vmatprep.subr.bf16.mxu0 %v297
    %1657 = vmatpush1.bf16.msra.mxu0 %v296
    %1658 = vmatprep.subr.bf16.mxu0 %v301
    %1659 = vmatpush1.bf16.msra.mxu0 %v300
    %1660 = vmatprep.subr.bf16.mxu0 %v305
    %1661 = vmatpush1.bf16.msra.mxu0 %v304
    %1662 = vmatprep.subr.bf16.mxu0 %v309
    %1663 = vmatpush1.bf16.msra.mxu0 %v308
    %1664 = vmatprep.subr.bf16.mxu0 %v313
    %1665 = vmatpush1.bf16.msra.mxu0 %v312
    %1666 = vmatprep.subr.bf16.mxu0 %v317
    %1667 = vmatpush1.bf16.msra.mxu0 %v316
    %1668 = vmatprep.subr.bf16.mxu0 %v321
    %1669 = vmatpush1.bf16.msra.mxu0 %v320
    %1670 = vmatprep.subr.bf16.mxu0 0
    %1671 = vmatpush1.bf16.msra.mxu0 0
    %1672 = vmatprep.subr.bf16.mxu0 0
    %1673 = vmatpush1.bf16.msra.mxu0 0
    %1674 = vmatprep.subr.bf16.mxu0 0
    %1675 = vmatpush1.bf16.msra.mxu0 0
    %1676 = vmatprep.subr.bf16.mxu0 0
    %1677 = vmatpush1.bf16.msra.mxu0 0
    %1678 = vmatprep.subr.bf16.mxu0 0
    %1679 = vmatpush1.bf16.msra.mxu0 0
    %1680 = vmatprep.subr.bf16.mxu0 0
    %1681 = vmatpush1.bf16.msra.mxu0 0
    %1682 = vmatprep.subr.bf16.mxu0 0
    %1683 = vmatpush1.bf16.msra.mxu0 0
    %1684 = vmatprep.subr.bf16.mxu0 0
    %1685 = vmatpush1.bf16.msra.mxu0 0
    %1686 = vmatprep.mubr.bf16.mxu0 0
    %1687 = vmatmul.mubr.bf16.gmra.mrb[0].mxu0 %v1612
    %v1688 = vpop.f32.mrb[0].mxu0
    %v1689 = vadd.f32 0.0, %v1688
    %v1690 = vpop.f32.mrb[0].mxu0
    %v1691 = vadd.f32 0.0, %v1690
    %v1692 = vpop.f32.mrb[0].mxu0
    %v1693 = vpop.f32.mrb[0].mxu0
    %1694 = vdwg.mxu0
    %1695 = vmatprep.subr.bf16.mxu0 %v533
    %1696 = vmatpush1.bf16.msra.mxu0 %v532
    %1697 = vmatprep.subr.bf16.mxu0 %v537
    %1698 = vmatpush1.bf16.msra.mxu0 %v536
    %1699 = vmatprep.subr.bf16.mxu0 %v541
    %1700 = vmatpush1.bf16.msra.mxu0 %v540
    %1701 = vmatprep.subr.bf16.mxu0 %v545
    %1702 = vmatpush1.bf16.msra.mxu0 %v544
    %1703 = vmatprep.subr.bf16.mxu0 %v549
    %1704 = vmatpush1.bf16.msra.mxu0 %v548
    %1705 = vmatprep.subr.bf16.mxu0 %v553
    %1706 = vmatpush1.bf16.msra.mxu0 %v552
    %1707 = vmatprep.subr.bf16.mxu0 %v557
    %1708 = vmatpush1.bf16.msra.mxu0 %v556
    %1709 = vmatprep.subr.bf16.mxu0 %v561
    %1710 = vmatpush1.bf16.msra.mxu0 %v560
    %1711 = vmatprep.subr.bf16.mxu0 0
    %1712 = vmatpush1.bf16.msra.mxu0 0
    %1713 = vmatprep.subr.bf16.mxu0 0
    %1714 = vmatpush1.bf16.msra.mxu0 0
    %1715 = vmatprep.subr.bf16.mxu0 0
    %1716 = vmatpush1.bf16.msra.mxu0 0
    %1717 = vmatprep.subr.bf16.mxu0 0
    %1718 = vmatpush1.bf16.msra.mxu0 0
    %1719 = vmatprep.subr.bf16.mxu0 0
    %1720 = vmatpush1.bf16.msra.mxu0 0
    %1721 = vmatprep.subr.bf16.mxu0 0
    %1722 = vmatpush1.bf16.msra.mxu0 0
    %1723 = vmatprep.subr.bf16.mxu0 0
    %1724 = vmatpush1.bf16.msra.mxu0 0
    %1725 = vmatprep.subr.bf16.mxu0 0
    %1726 = vmatpush1.bf16.msra.mxu0 0
    %1727 = vmatprep.mubr.bf16.mxu0 0
    %1728 = vmatmul.mubr.bf16.gmra.mrb[0].mxu0 %v1546
    %v1729 = vpop.f32.mrb[0].mxu0
    %v1730 = vadd.f32 %v1648, %v1729
    %v1731 = vpop.f32.mrb[0].mxu0
    %v1732 = vadd.f32 %v1650, %v1731
    %v1733 = vpop.f32.mrb[0].mxu0
    %v1734 = vpop.f32.mrb[0].mxu0
    %1735 = vdwg.mxu0
    %1736 = vmatprep.subr.bf16.mxu0 %v535
    %1737 = vmatpush1.bf16.msra.mxu0 %v534
    %1738 = vmatprep.subr.bf16.mxu0 %v539
    %1739 = vmatpush1.bf16.msra.mxu0 %v538
    %1740 = vmatprep.subr.bf16.mxu0 %v543
    %1741 = vmatpush1.bf16.msra.mxu0 %v542
    %1742 = vmatprep.subr.bf16.mxu0 %v547
    %1743 = vmatpush1.bf16.msra.mxu0 %v546
    %1744 = vmatprep.subr.bf16.mxu0 %v551
    %1745 = vmatpush1.bf16.msra.mxu0 %v550
    %1746 = vmatprep.subr.bf16.mxu0 %v555
    %1747 = vmatpush1.bf16.msra.mxu0 %v554
    %1748 = vmatprep.subr.bf16.mxu0 %v559
    %1749 = vmatpush1.bf16.msra.mxu0 %v558
    %1750 = vmatprep.subr.bf16.mxu0 %v563
    %1751 = vmatpush1.bf16.msra.mxu0 %v562
    %1752 = vmatprep.subr.bf16.mxu0 0
    %1753 = vmatpush1.bf16.msra.mxu0 0
    %1754 = vmatprep.subr.bf16.mxu0 0
    %1755 = vmatpush1.bf16.msra.mxu0 0
    %1756 = vmatprep.subr.bf16.mxu0 0
    %1757 = vmatpush1.bf16.msra.mxu0 0
    %1758 = vmatprep.subr.bf16.mxu0 0
    %1759 = vmatpush1.bf16.msra.mxu0 0
    %1760 = vmatprep.subr.bf16.mxu0 0
    %1761 = vmatpush1.bf16.msra.mxu0 0
    %1762 = vmatprep.subr.bf16.mxu0 0
    %1763 = vmatpush1.bf16.msra.mxu0 0
    %1764 = vmatprep.subr.bf16.mxu0 0
    %1765 = vmatpush1.bf16.msra.mxu0 0
    %1766 = vmatprep.subr.bf16.mxu0 0
    %1767 = vmatpush1.bf16.msra.mxu0 0
    %1768 = vmatprep.mubr.bf16.mxu0 0
    %1769 = vmatmul.mubr.bf16.gmra.mrb[0].mxu0 %v1546
    %v1770 = vpop.f32.mrb[0].mxu0
    %v1771 = vadd.f32 %v1689, %v1770
    %v1772 = vpop.f32.mrb[0].mxu0
    %v1773 = vadd.f32 %v1691, %v1772
    %v1774 = vpop.f32.mrb[0].mxu0
    %v1775 = vpop.f32.mrb[0].mxu0
    %1776 = vdwg.mxu0
    %v1777 = vadd.f32 %v1730, %v99
    %v1778 = vadd.f32 %v1732, %v103
    %v1779 = vadd.f32 %v1771, %v107
    %v1780 = vadd.f32 %v1773, %v111
    %v1781 = vxor.u32 %v1777, 2147483648
    %v1782 = vmul.f32 %v1781, 1.442695
    %v1783 = vpow.pop %v1782
    %v1784 = vadd.f32 %v1783, 1.0
    %v1785 = vrcp.pop %v1784
    %v1786 = vmul.f32 1.0, %v1785
    %v1787 = vxor.u32 %v1778, 2147483648
    %v1788 = vmul.f32 %v1787, 1.442695
    %v1789 = vpow.pop %v1788
    %v1790 = vadd.f32 %v1789, 1.0
    %v1791 = vrcp.pop %v1790
    %v1792 = vmul.f32 1.0, %v1791
    %v1793 = vtanh.pop %v1779
    %v1794 = vxor.u32 %v1780, 2147483648
    %v1795 = vmul.f32 %v1794, 1.442695
    %v1796 = vpow.pop %v1795
    %v1797 = vadd.f32 %v1796, 1.0
    %v1798 = vrcp.pop %v1797
    %v1799 = vmul.f32 1.0, %v1798
    %v1800 = vmul.f32 %v1792, %v1543
    %v1801 = vmul.f32 %v1786, %v1793
    %v1802 = vadd.f32 %v1800, %v1801
    %v1803 = vtanh.pop %v1802
    %v1804 = vmul.f32 %v1799, %v1803
    %v1805 = vpack.c.bf16 %v1804, %v1804
    %1806 = vmatprep.subr.bf16.mxu0 0
    %1807 = vmatpush1.bf16.msra.mxu0 %v755
    %1808 = vmatprep.subr.bf16.mxu0 0
    %1809 = vmatpush1.bf16.msra.mxu0 %v756
    %1810 = vmatprep.subr.bf16.mxu0 0
    %1811 = vmatpush1.bf16.msra.mxu0 %v757
    %1812 = vmatprep.subr.bf16.mxu0 0
    %1813 = vmatpush1.bf16.msra.mxu0 %v758
    %1814 = vmatprep.subr.bf16.mxu0 0
    %1815 = vmatpush1.bf16.msra.mxu0 %v759
    %1816 = vmatprep.subr.bf16.mxu0 0
    %1817 = vmatpush1.bf16.msra.mxu0 %v760
    %1818 = vmatprep.subr.bf16.mxu0 0
    %1819 = vmatpush1.bf16.msra.mxu0 %v761
    %1820 = vmatprep.subr.bf16.mxu0 0
    %1821 = vmatpush1.bf16.msra.mxu0 %v762
    %1822 = vmatprep.subr.bf16.mxu0 0
    %1823 = vmatpush1.bf16.msra.mxu0 0
    %1824 = vmatprep.subr.bf16.mxu0 0
    %1825 = vmatpush1.bf16.msra.mxu0 0
    %1826 = vmatprep.subr.bf16.mxu0 0
    %1827 = vmatpush1.bf16.msra.mxu0 0
    %1828 = vmatprep.subr.bf16.mxu0 0
    %1829 = vmatpush1.bf16.msra.mxu0 0
    %1830 = vmatprep.subr.bf16.mxu0 0
    %1831 = vmatpush1.bf16.msra.mxu0 0
    %1832 = vmatprep.subr.bf16.mxu0 0
    %1833 = vmatpush1.bf16.msra.mxu0 0
    %1834 = vmatprep.subr.bf16.mxu0 0
    %1835 = vmatpush1.bf16.msra.mxu0 0
    %1836 = vmatprep.subr.bf16.mxu0 0
    %1837 = vmatpush1.bf16.msra.mxu0 0
    %1838 = vmatprep.mubr.bf16.mxu0 0
    %1839 = vmatmul.mubr.bf16.gmra.mrb[0].mxu0 %v1805
    %v1840 = vpop.f32.mrb[0].mxu0
    %v1841 = vadd.f32 %v121, %v1840
    %v1842 = vpop.f32.mrb[0].mxu0
    %v1843 = vpop.f32.mrb[0].mxu0
    %v1844 = vpop.f32.mrb[0].mxu0
    %1845 = vdwg.mxu0
    %1846 = vmax.xlane.f32.xlu0 %v1841
    %v1847 = vpop.xlane.xlu0 %1846
    %vm1848 = vcmp.eq.f32.partialorder %v1841, %v1847
    %v1849 = vsel %vm1848, %v124, 128
    %v1850 = vand.u32 %v1849, 65535
    %v1851 = vshra.s32 %v1849, 16
    %v1852 = vcvt.s32.f32 %v1850
    %v1853 = vcvt.s32.f32 %v1851
    %1854 = vmin.xlane.f32.xlu0 %v1853
    %v1855 = vpop.xlane.xlu0 %1854
    %vm1856 = vcmp.eq.f32.partialorder %v1853, %v1855
    %v1857 = vsel %vm1856, %v1852, inf
    %1858 = vmin.xlane.f32.xlu0 %v1857
    %v1859 = vpop.xlane.xlu0 %1858
    %v1860 = vcvt.f32.s32 %v1859
    %v1861 = vcvt.f32.s32 %v1855
    %v1862 = vshll.u32 %v1861, 16
    %v1863 = vadd.s32 %v1862, %v1860
    %vm1864 = vcmp.lt.s32.totalorder %v1863, 127
    %v1865 = vsel %vm1864, %v1863, 127
    %vm1866 = vcmp.eq.s32.totalorder %v124, 4
    %v1867 = vsel %vm1866, %v1865, %v1608
    %vm1868 = vcmp.eq.s32.totalorder %v124, %v1865
    %v1869 = vsel %vm1868, 1, 0
    %v1870 = vcvt.s32.f32 %v1869
    %v1871 = vpack.c.bf16 %v1870, %v1870
    %1872 = vmatprep.subr.bf16.mxu0 %v291
    %1873 = vmatpush1.bf16.msra.mxu0 %v290
    %1874 = vmatprep.subr.bf16.mxu0 %v295
    %1875 = vmatpush1.bf16.msra.mxu0 %v294
    %1876 = vmatprep.subr.bf16.mxu0 %v299
    %1877 = vmatpush1.bf16.msra.mxu0 %v298
    %1878 = vmatprep.subr.bf16.mxu0 %v303
    %1879 = vmatpush1.bf16.msra.mxu0 %v302
    %1880 = vmatprep.subr.bf16.mxu0 %v307
    %1881 = vmatpush1.bf16.msra.mxu0 %v306
    %1882 = vmatprep.subr.bf16.mxu0 %v311
    %1883 = vmatpush1.bf16.msra.mxu0 %v310
    %1884 = vmatprep.subr.bf16.mxu0 %v315
    %1885 = vmatpush1.bf16.msra.mxu0 %v314
    %1886 = vmatprep.subr.bf16.mxu0 %v319
    %1887 = vmatpush1.bf16.msra.mxu0 %v318
    %1888 = vmatprep.subr.bf16.mxu0 0
    %1889 = vmatpush1.bf16.msra.mxu0 0
    %1890 = vmatprep.subr.bf16.mxu0 0
    %1891 = vmatpush1.bf16.msra.mxu0 0
    %1892 = vmatprep.subr.bf16.mxu0 0
    %1893 = vmatpush1.bf16.msra.mxu0 0
    %1894 = vmatprep.subr.bf16.mxu0 0
    %1895 = vmatpush1.bf16.msra.mxu0 0
    %1896 = vmatprep.subr.bf16.mxu0 0
    %1897 = vmatpush1.bf16.msra.mxu0 0
    %1898 = vmatprep.subr.bf16.mxu0 0
    %1899 = vmatpush1.bf16.msra.mxu0 0
    %1900 = vmatprep.subr.bf16.mxu0 0
    %1901 = vmatpush1.bf16.msra.mxu0 0
    %1902 = vmatprep.subr.bf16.mxu0 0
    %1903 = vmatpush1.bf16.msra.mxu0 0
    %1904 = vmatprep.mubr.bf16.mxu0 0
    %1905 = vmatmul.mubr.bf16.gmra.mrb[0].mxu0 %v1871
    %v1906 = vpop.f32.mrb[0].mxu0
    %v1907 = vadd.f32 0.0, %v1906
    %v1908 = vpop.f32.mrb[0].mxu0
    %v1909 = vadd.f32 0.0, %v1908
    %v1910 = vpop.f32.mrb[0].mxu0
    %v1911 = vpop.f32.mrb[0].mxu0
    %1912 = vdwg.mxu0
    %1913 = vmatprep.subr.bf16.mxu0 %v293
    %1914 = vmatpush1.bf16.msra.mxu0 %v292
    %1915 = vmatprep.subr.bf16.mxu0 %v297
    %1916 = vmatpush1.bf16.msra.mxu0 %v296
    %1917 = vmatprep.subr.bf16.mxu0 %v301
    %1918 = vmatpush1.bf16.msra.mxu0 %v300
    %1919 = vmatprep.subr.bf16.mxu0 %v305
    %1920 = vmatpush1.bf16.msra.mxu0 %v304
    %1921 = vmatprep.subr.bf16.mxu0 %v309
    %1922 = vmatpush1.bf16.msra.mxu0 %v308
    %1923 = vmatprep.subr.bf16.mxu0 %v313
    %1924 = vmatpush1.bf16.msra.mxu0 %v312
    %1925 = vmatprep.subr.bf16.mxu0 %v317
    %1926 = vmatpush1.bf16.msra.mxu0 %v316
    %1927 = vmatprep.subr.bf16.mxu0 %v321
    %1928 = vmatpush1.bf16.msra.mxu0 %v320
    %1929 = vmatprep.subr.bf16.mxu0 0
    %1930 = vmatpush1.bf16.msra.mxu0 0
    %1931 = vmatprep.subr.bf16.mxu0 0
    %1932 = vmatpush1.bf16.msra.mxu0 0
    %1933 = vmatprep.subr.bf16.mxu0 0
    %1934 = vmatpush1.bf16.msra.mxu0 0
    %1935 = vmatprep.subr.bf16.mxu0 0
    %1936 = vmatpush1.bf16.msra.mxu0 0
    %1937 = vmatprep.subr.bf16.mxu0 0
    %1938 = vmatpush1.bf16.msra.mxu0 0
    %1939 = vmatprep.subr.bf16.mxu0 0
    %1940 = vmatpush1.bf16.msra.mxu0 0
    %1941 = vmatprep.subr.bf16.mxu0 0
    %1942 = vmatpush1.bf16.msra.mxu0 0
    %1943 = vmatprep.subr.bf16.mxu0 0
    %1944 = vmatpush1.bf16.msra.mxu0 0
    %1945 = vmatprep.mubr.bf16.mxu0 0
    %1946 = vmatmul.mubr.bf16.gmra.mrb[0].mxu0 %v1871
    %v1947 = vpop.f32.mrb[0].mxu0
    %v1948 = vadd.f32 0.0, %v1947
    %v1949 = vpop.f32.mrb[0].mxu0
    %v1950 = vadd.f32 0.0, %v1949
    %v1951 = vpop.f32.mrb[0].mxu0
    %v1952 = vpop.f32.mrb[0].mxu0
    %1953 = vdwg.mxu0
    %1954 = vmatprep.subr.bf16.mxu0 %v533
    %1955 = vmatpush1.bf16.msra.mxu0 %v532
    %1956 = vmatprep.subr.bf16.mxu0 %v537
    %1957 = vmatpush1.bf16.msra.mxu0 %v536
    %1958 = vmatprep.subr.bf16.mxu0 %v541
    %1959 = vmatpush1.bf16.msra.mxu0 %v540
    %1960 = vmatprep.subr.bf16.mxu0 %v545
    %1961 = vmatpush1.bf16.msra.mxu0 %v544
    %1962 = vmatprep.subr.bf16.mxu0 %v549
    %1963 = vmatpush1.bf16.msra.mxu0 %v548
    %1964 = vmatprep.subr.bf16.mxu0 %v553
    %1965 = vmatpush1.bf16.msra.mxu0 %v552
    %1966 = vmatprep.subr.bf16.mxu0 %v557
    %1967 = vmatpush1.bf16.msra.mxu0 %v556
    %1968 = vmatprep.subr.bf16.mxu0 %v561
    %1969 = vmatpush1.bf16.msra.mxu0 %v560
    %1970 = vmatprep.subr.bf16.mxu0 0
    %1971 = vmatpush1.bf16.msra.mxu0 0
    %1972 = vmatprep.subr.bf16.mxu0 0
    %1973 = vmatpush1.bf16.msra.mxu0 0
    %1974 = vmatprep.subr.bf16.mxu0 0
    %1975 = vmatpush1.bf16.msra.mxu0 0
    %1976 = vmatprep.subr.bf16.mxu0 0
    %1977 = vmatpush1.bf16.msra.mxu0 0
    %1978 = vmatprep.subr.bf16.mxu0 0
    %1979 = vmatpush1.bf16.msra.mxu0 0
    %1980 = vmatprep.subr.bf16.mxu0 0
    %1981 = vmatpush1.bf16.msra.mxu0 0
    %1982 = vmatprep.subr.bf16.mxu0 0
    %1983 = vmatpush1.bf16.msra.mxu0 0
    %1984 = vmatprep.subr.bf16.mxu0 0
    %1985 = vmatpush1.bf16.msra.mxu0 0
    %1986 = vmatprep.mubr.bf16.mxu0 0
    %1987 = vmatmul.mubr.bf16.gmra.mrb[0].mxu0 %v1805
    %v1988 = vpop.f32.mrb[0].mxu0
    %v1989 = vadd.f32 %v1907, %v1988
    %v1990 = vpop.f32.mrb[0].mxu0
    %v1991 = vadd.f32 %v1909, %v1990
    %v1992 = vpop.f32.mrb[0].mxu0
    %v1993 = vpop.f32.mrb[0].mxu0
    %1994 = vdwg.mxu0
    %1995 = vmatprep.subr.bf16.mxu0 %v535
    %1996 = vmatpush1.bf16.msra.mxu0 %v534
    %1997 = vmatprep.subr.bf16.mxu0 %v539
    %1998 = vmatpush1.bf16.msra.mxu0 %v538
    %1999 = vmatprep.subr.bf16.mxu0 %v543
    %2000 = vmatpush1.bf16.msra.mxu0 %v542
    %2001 = vmatprep.subr.bf16.mxu0 %v547
    %2002 = vmatpush1.bf16.msra.mxu0 %v546
    %2003 = vmatprep.subr.bf16.mxu0 %v551
    %2004 = vmatpush1.bf16.msra.mxu0 %v550
    %2005 = vmatprep.subr.bf16.mxu0 %v555
    %2006 = vmatpush1.bf16.msra.mxu0 %v554
    %2007 = vmatprep.subr.bf16.mxu0 %v559
    %2008 = vmatpush1.bf16.msra.mxu0 %v558
    %2009 = vmatprep.subr.bf16.mxu0 %v563
    %2010 = vmatpush1.bf16.msra.mxu0 %v562
    %2011 = vmatprep.subr.bf16.mxu0 0
    %2012 = vmatpush1.bf16.msra.mxu0 0
    %2013 = vmatprep.subr.bf16.mxu0 0
    %2014 = vmatpush1.bf16.msra.mxu0 0
    %2015 = vmatprep.subr.bf16.mxu0 0
    %2016 = vmatpush1.bf16.msra.mxu0 0
    %2017 = vmatprep.subr.bf16.mxu0 0
    %2018 = vmatpush1.bf16.msra.mxu0 0
    %2019 = vmatprep.subr.bf16.mxu0 0
    %2020 = vmatpush1.bf16.msra.mxu0 0
    %2021 = vmatprep.subr.bf16.mxu0 0
    %2022 = vmatpush1.bf16.msra.mxu0 0
    %2023 = vmatprep.subr.bf16.mxu0 0
    %2024 = vmatpush1.bf16.msra.mxu0 0
    %2025 = vmatprep.subr.bf16.mxu0 0
    %2026 = vmatpush1.bf16.msra.mxu0 0
    %2027 = vmatprep.mubr.bf16.mxu0 0
    %2028 = vmatmul.mubr.bf16.gmra.mrb[0].mxu0 %v1805
    %v2029 = vpop.f32.mrb[0].mxu0
    %v2030 = vadd.f32 %v1948, %v2029
    %v2031 = vpop.f32.mrb[0].mxu0
    %v2032 = vadd.f32 %v1950, %v2031
    %v2033 = vpop.f32.mrb[0].mxu0
    %v2034 = vpop.f32.mrb[0].mxu0
    %2035 = vdwg.mxu0
    %v2036 = vadd.f32 %v1989, %v99
    %v2037 = vadd.f32 %v1991, %v103
    %v2038 = vadd.f32 %v2030, %v107
    %v2039 = vadd.f32 %v2032, %v111
    %v2040 = vxor.u32 %v2036, 2147483648
    %v2041 = vmul.f32 %v2040, 1.442695
    %v2042 = vpow.pop %v2041
    %v2043 = vadd.f32 %v2042, 1.0
    %v2044 = vrcp.pop %v2043
    %v2045 = vmul.f32 1.0, %v2044
    %v2046 = vxor.u32 %v2037, 2147483648
    %v2047 = vmul.f32 %v2046, 1.442695
    %v2048 = vpow.pop %v2047
    %v2049 = vadd.f32 %v2048, 1.0
    %v2050 = vrcp.pop %v2049
    %v2051 = vmul.f32 1.0, %v2050
    %v2052 = vtanh.pop %v2038
    %v2053 = vxor.u32 %v2039, 2147483648
    %v2054 = vmul.f32 %v2053, 1.442695
    %v2055 = vpow.pop %v2054
    %v2056 = vadd.f32 %v2055, 1.0
    %v2057 = vrcp.pop %v2056
    %v2058 = vmul.f32 1.0, %v2057
    %v2059 = vmul.f32 %v2051, %v1802
    %v2060 = vmul.f32 %v2045, %v2052
    %v2061 = vadd.f32 %v2059, %v2060
    %v2062 = vtanh.pop %v2061
    %v2063 = vmul.f32 %v2058, %v2062
    %v2064 = vpack.c.bf16 %v2063, %v2063
    %2065 = vmatprep.subr.bf16.mxu0 0
    %2066 = vmatpush1.bf16.msra.mxu0 %v755
    %2067 = vmatprep.subr.bf16.mxu0 0
    %2068 = vmatpush1.bf16.msra.mxu0 %v756
    %2069 = vmatprep.subr.bf16.mxu0 0
    %2070 = vmatpush1.bf16.msra.mxu0 %v757
    %2071 = vmatprep.subr.bf16.mxu0 0
    %2072 = vmatpush1.bf16.msra.mxu0 %v758
    %2073 = vmatprep.subr.bf16.mxu0 0
    %2074 = vmatpush1.bf16.msra.mxu0 %v759
    %2075 = vmatprep.subr.bf16.mxu0 0
    %2076 = vmatpush1.bf16.msra.mxu0 %v760
    %2077 = vmatprep.subr.bf16.mxu0 0
    %2078 = vmatpush1.bf16.msra.mxu0 %v761
    %2079 = vmatprep.subr.bf16.mxu0 0
    %2080 = vmatpush1.bf16.msra.mxu0 %v762
    %2081 = vmatprep.subr.bf16.mxu0 0
    %2082 = vmatpush1.bf16.msra.mxu0 0
    %2083 = vmatprep.subr.bf16.mxu0 0
    %2084 = vmatpush1.bf16.msra.mxu0 0
    %2085 = vmatprep.subr.bf16.mxu0 0
    %2086 = vmatpush1.bf16.msra.mxu0 0
    %2087 = vmatprep.subr.bf16.mxu0 0
    %2088 = vmatpush1.bf16.msra.mxu0 0
    %2089 = vmatprep.subr.bf16.mxu0 0
    %2090 = vmatpush1.bf16.msra.mxu0 0
    %2091 = vmatprep.subr.bf16.mxu0 0
    %2092 = vmatpush1.bf16.msra.mxu0 0
    %2093 = vmatprep.subr.bf16.mxu0 0
    %2094 = vmatpush1.bf16.msra.mxu0 0
    %2095 = vmatprep.subr.bf16.mxu0 0
    %2096 = vmatpush1.bf16.msra.mxu0 0
    %2097 = vmatprep.mubr.bf16.mxu0 0
    %2098 = vmatmul.mubr.bf16.gmra.mrb[0].mxu0 %v2064
    %v2099 = vpop.f32.mrb[0].mxu0
    %v2100 = vadd.f32 %v121, %v2099
    %v2101 = vpop.f32.mrb[0].mxu0
    %v2102 = vpop.f32.mrb[0].mxu0
    %v2103 = vpop.f32.mrb[0].mxu0
    %2104 = vdwg.mxu0
    %2105 = vmax.xlane.f32.xlu0 %v2100
    %v2106 = vpop.xlane.xlu0 %2105
    %vm2107 = vcmp.eq.f32.partialorder %v2100, %v2106
    %v2108 = vsel %vm2107, %v124, 128
    %v2109 = vand.u32 %v2108, 65535
    %v2110 = vshra.s32 %v2108, 16
    %v2111 = vcvt.s32.f32 %v2109
    %v2112 = vcvt.s32.f32 %v2110
    %2113 = vmin.xlane.f32.xlu0 %v2112
    %v2114 = vpop.xlane.xlu0 %2113
    %vm2115 = vcmp.eq.f32.partialorder %v2112, %v2114
    %v2116 = vsel %vm2115, %v2111, inf
    %2117 = vmin.xlane.f32.xlu0 %v2116
    %v2118 = vpop.xlane.xlu0 %2117
    %v2119 = vcvt.f32.s32 %v2118
    %v2120 = vcvt.f32.s32 %v2114
    %v2121 = vshll.u32 %v2120, 16
    %v2122 = vadd.s32 %v2121, %v2119
    %vm2123 = vcmp.lt.s32.totalorder %v2122, 127
    %v2124 = vsel %vm2123, %v2122, 127
    %vm2125 = vcmp.eq.s32.totalorder %v124, 5
    %v2126 = vsel %vm2125, %v2124, %v1867
    %vm2127 = vcmp.eq.s32.totalorder %v124, %v2124
    %v2128 = vsel %vm2127, 1, 0
    %v2129 = vcvt.s32.f32 %v2128
    %v2130 = vpack.c.bf16 %v2129, %v2129
    %2131 = vmatprep.subr.bf16.mxu0 %v291
    %2132 = vmatpush1.bf16.msra.mxu0 %v290
    %2133 = vmatprep.subr.bf16.mxu0 %v295
    %2134 = vmatpush1.bf16.msra.mxu0 %v294
    %2135 = vmatprep.subr.bf16.mxu0 %v299
    %2136 = vmatpush1.bf16.msra.mxu0 %v298
    %2137 = vmatprep.subr.bf16.mxu0 %v303
    %2138 = vmatpush1.bf16.msra.mxu0 %v302
    %2139 = vmatprep.subr.bf16.mxu0 %v307
    %2140 = vmatpush1.bf16.msra.mxu0 %v306
    %2141 = vmatprep.subr.bf16.mxu0 %v311
    %2142 = vmatpush1.bf16.msra.mxu0 %v310
    %2143 = vmatprep.subr.bf16.mxu0 %v315
    %2144 = vmatpush1.bf16.msra.mxu0 %v314
    %2145 = vmatprep.subr.bf16.mxu0 %v319
    %2146 = vmatpush1.bf16.msra.mxu0 %v318
    %2147 = vmatprep.subr.bf16.mxu0 0
    %2148 = vmatpush1.bf16.msra.mxu0 0
    %2149 = vmatprep.subr.bf16.mxu0 0
    %2150 = vmatpush1.bf16.msra.mxu0 0
    %2151 = vmatprep.subr.bf16.mxu0 0
    %2152 = vmatpush1.bf16.msra.mxu0 0
    %2153 = vmatprep.subr.bf16.mxu0 0
    %2154 = vmatpush1.bf16.msra.mxu0 0
    %2155 = vmatprep.subr.bf16.mxu0 0
    %2156 = vmatpush1.bf16.msra.mxu0 0
    %2157 = vmatprep.subr.bf16.mxu0 0
    %2158 = vmatpush1.bf16.msra.mxu0 0
    %2159 = vmatprep.subr.bf16.mxu0 0
    %2160 = vmatpush1.bf16.msra.mxu0 0
    %2161 = vmatprep.subr.bf16.mxu0 0
    %2162 = vmatpush1.bf16.msra.mxu0 0
    %2163 = vmatprep.mubr.bf16.mxu0 0
    %2164 = vmatmul.mubr.bf16.gmra.mrb[0].mxu0 %v2130
    %v2165 = vpop.f32.mrb[0].mxu0
    %v2166 = vadd.f32 0.0, %v2165
    %v2167 = vpop.f32.mrb[0].mxu0
    %v2168 = vadd.f32 0.0, %v2167
    %v2169 = vpop.f32.mrb[0].mxu0
    %v2170 = vpop.f32.mrb[0].mxu0
    %2171 = vdwg.mxu0
    %2172 = vmatprep.subr.bf16.mxu0 %v293
    %2173 = vmatpush1.bf16.msra.mxu0 %v292
    %2174 = vmatprep.subr.bf16.mxu0 %v297
    %2175 = vmatpush1.bf16.msra.mxu0 %v296
    %2176 = vmatprep.subr.bf16.mxu0 %v301
    %2177 = vmatpush1.bf16.msra.mxu0 %v300
    %2178 = vmatprep.subr.bf16.mxu0 %v305
    %2179 = vmatpush1.bf16.msra.mxu0 %v304
    %2180 = vmatprep.subr.bf16.mxu0 %v309
    %2181 = vmatpush1.bf16.msra.mxu0 %v308
    %2182 = vmatprep.subr.bf16.mxu0 %v313
    %2183 = vmatpush1.bf16.msra.mxu0 %v312
    %2184 = vmatprep.subr.bf16.mxu0 %v317
    %2185 = vmatpush1.bf16.msra.mxu0 %v316
    %2186 = vmatprep.subr.bf16.mxu0 %v321
    %2187 = vmatpush1.bf16.msra.mxu0 %v320
    %2188 = vmatprep.subr.bf16.mxu0 0
    %2189 = vmatpush1.bf16.msra.mxu0 0
    %2190 = vmatprep.subr.bf16.mxu0 0
    %2191 = vmatpush1.bf16.msra.mxu0 0
    %2192 = vmatprep.subr.bf16.mxu0 0
    %2193 = vmatpush1.bf16.msra.mxu0 0
    %2194 = vmatprep.subr.bf16.mxu0 0
    %2195 = vmatpush1.bf16.msra.mxu0 0
    %2196 = vmatprep.subr.bf16.mxu0 0
    %2197 = vmatpush1.bf16.msra.mxu0 0
    %2198 = vmatprep.subr.bf16.mxu0 0
    %2199 = vmatpush1.bf16.msra.mxu0 0
    %2200 = vmatprep.subr.bf16.mxu0 0
    %2201 = vmatpush1.bf16.msra.mxu0 0
    %2202 = vmatprep.subr.bf16.mxu0 0
    %2203 = vmatpush1.bf16.msra.mxu0 0
    %2204 = vmatprep.mubr.bf16.mxu0 0
    %2205 = vmatmul.mubr.bf16.gmra.mrb[0].mxu0 %v2130
    %v2206 = vpop.f32.mrb[0].mxu0
    %v2207 = vadd.f32 0.0, %v2206
    %v2208 = vpop.f32.mrb[0].mxu0
    %v2209 = vadd.f32 0.0, %v2208
    %v2210 = vpop.f32.mrb[0].mxu0
    %v2211 = vpop.f32.mrb[0].mxu0
    %2212 = vdwg.mxu0
    %2213 = vmatprep.subr.bf16.mxu0 %v533
    %2214 = vmatpush1.bf16.msra.mxu0 %v532
    %2215 = vmatprep.subr.bf16.mxu0 %v537
    %2216 = vmatpush1.bf16.msra.mxu0 %v536
    %2217 = vmatprep.subr.bf16.mxu0 %v541
    %2218 = vmatpush1.bf16.msra.mxu0 %v540
    %2219 = vmatprep.subr.bf16.mxu0 %v545
    %2220 = vmatpush1.bf16.msra.mxu0 %v544
    %2221 = vmatprep.subr.bf16.mxu0 %v549
    %2222 = vmatpush1.bf16.msra.mxu0 %v548
    %2223 = vmatprep.subr.bf16.mxu0 %v553
    %2224 = vmatpush1.bf16.msra.mxu0 %v552
    %2225 = vmatprep.subr.bf16.mxu0 %v557
    %2226 = vmatpush1.bf16.msra.mxu0 %v556
    %2227 = vmatprep.subr.bf16.mxu0 %v561
    %2228 = vmatpush1.bf16.msra.mxu0 %v560
    %2229 = vmatprep.subr.bf16.mxu0 0
    %2230 = vmatpush1.bf16.msra.mxu0 0
    %2231 = vmatprep.subr.bf16.mxu0 0
    %2232 = vmatpush1.bf16.msra.mxu0 0
    %2233 = vmatprep.subr.bf16.mxu0 0
    %2234 = vmatpush1.bf16.msra.mxu0 0
    %2235 = vmatprep.subr.bf16.mxu0 0
    %2236 = vmatpush1.bf16.msra.mxu0 0
    %2237 = vmatprep.subr.bf16.mxu0 0
    %2238 = vmatpush1.bf16.msra.mxu0 0
    %2239 = vmatprep.subr.bf16.mxu0 0
    %2240 = vmatpush1.bf16.msra.mxu0 0
    %2241 = vmatprep.subr.bf16.mxu0 0
    %2242 = vmatpush1.bf16.msra.mxu0 0
    %2243 = vmatprep.subr.bf16.mxu0 0
    %2244 = vmatpush1.bf16.msra.mxu0 0
    %2245 = vmatprep.mubr.bf16.mxu0 0
    %2246 = vmatmul.mubr.bf16.gmra.mrb[0].mxu0 %v2064
    %v2247 = vpop.f32.mrb[0].mxu0
    %v2248 = vadd.f32 %v2166, %v2247
    %v2249 = vpop.f32.mrb[0].mxu0
    %v2250 = vadd.f32 %v2168, %v2249
    %v2251 = vpop.f32.mrb[0].mxu0
    %v2252 = vpop.f32.mrb[0].mxu0
    %2253 = vdwg.mxu0
    %2254 = vmatprep.subr.bf16.mxu0 %v535
    %2255 = vmatpush1.bf16.msra.mxu0 %v534
    %2256 = vmatprep.subr.bf16.mxu0 %v539
    %2257 = vmatpush1.bf16.msra.mxu0 %v538
    %2258 = vmatprep.subr.bf16.mxu0 %v543
    %2259 = vmatpush1.bf16.msra.mxu0 %v542
    %2260 = vmatprep.subr.bf16.mxu0 %v547
    %2261 = vmatpush1.bf16.msra.mxu0 %v546
    %2262 = vmatprep.subr.bf16.mxu0 %v551
    %2263 = vmatpush1.bf16.msra.mxu0 %v550
    %2264 = vmatprep.subr.bf16.mxu0 %v555
    %2265 = vmatpush1.bf16.msra.mxu0 %v554
    %2266 = vmatprep.subr.bf16.mxu0 %v559
    %2267 = vmatpush1.bf16.msra.mxu0 %v558
    %2268 = vmatprep.subr.bf16.mxu0 %v563
    %2269 = vmatpush1.bf16.msra.mxu0 %v562
    %2270 = vmatprep.subr.bf16.mxu0 0
    %2271 = vmatpush1.bf16.msra.mxu0 0
    %2272 = vmatprep.subr.bf16.mxu0 0
    %2273 = vmatpush1.bf16.msra.mxu0 0
    %2274 = vmatprep.subr.bf16.mxu0 0
    %2275 = vmatpush1.bf16.msra.mxu0 0
    %2276 = vmatprep.subr.bf16.mxu0 0
    %2277 = vmatpush1.bf16.msra.mxu0 0
    %2278 = vmatprep.subr.bf16.mxu0 0
    %2279 = vmatpush1.bf16.msra.mxu0 0
    %2280 = vmatprep.subr.bf16.mxu0 0
    %2281 = vmatpush1.bf16.msra.mxu0 0
    %2282 = vmatprep.subr.bf16.mxu0 0
    %2283 = vmatpush1.bf16.msra.mxu0 0
    %2284 = vmatprep.subr.bf16.mxu0 0
    %2285 = vmatpush1.bf16.msra.mxu0 0
    %2286 = vmatprep.mubr.bf16.mxu0 0
    %2287 = vmatmul.mubr.bf16.gmra.mrb[0].mxu0 %v2064
    %v2288 = vpop.f32.mrb[0].mxu0
    %v2289 = vadd.f32 %v2207, %v2288
    %v2290 = vpop.f32.mrb[0].mxu0
    %v2291 = vadd.f32 %v2209, %v2290
    %v2292 = vpop.f32.mrb[0].mxu0
    %v2293 = vpop.f32.mrb[0].mxu0
    %2294 = vdwg.mxu0
    %v2295 = vadd.f32 %v2248, %v99
    %v2296 = vadd.f32 %v2250, %v103
    %v2297 = vadd.f32 %v2289, %v107
    %v2298 = vadd.f32 %v2291, %v111
    %v2299 = vxor.u32 %v2295, 2147483648
    %v2300 = vmul.f32 %v2299, 1.442695
    %v2301 = vpow.pop %v2300
    %v2302 = vadd.f32 %v2301, 1.0
    %v2303 = vrcp.pop %v2302
    %v2304 = vmul.f32 1.0, %v2303
    %v2305 = vxor.u32 %v2296, 2147483648
    %v2306 = vmul.f32 %v2305, 1.442695
    %v2307 = vpow.pop %v2306
    %v2308 = vadd.f32 %v2307, 1.0
    %v2309 = vrcp.pop %v2308
    %v2310 = vmul.f32 1.0, %v2309
    %v2311 = vtanh.pop %v2297
    %v2312 = vxor.u32 %v2298, 2147483648
    %v2313 = vmul.f32 %v2312, 1.442695
    %v2314 = vpow.pop %v2313
    %v2315 = vadd.f32 %v2314, 1.0
    %v2316 = vrcp.pop %v2315
    %v2317 = vmul.f32 1.0, %v2316
    %v2318 = vmul.f32 %v2310, %v2061
    %v2319 = vmul.f32 %v2304, %v2311
    %v2320 = vadd.f32 %v2318, %v2319
    %v2321 = vtanh.pop %v2320
    %v2322 = vmul.f32 %v2317, %v2321
    %v2323 = vpack.c.bf16 %v2322, %v2322
    %2324 = vmatprep.subr.bf16.mxu0 0
    %2325 = vmatpush1.bf16.msra.mxu0 %v755
    %2326 = vmatprep.subr.bf16.mxu0 0
    %2327 = vmatpush1.bf16.msra.mxu0 %v756
    %2328 = vmatprep.subr.bf16.mxu0 0
    %2329 = vmatpush1.bf16.msra.mxu0 %v757
    %2330 = vmatprep.subr.bf16.mxu0 0
    %2331 = vmatpush1.bf16.msra.mxu0 %v758
    %2332 = vmatprep.subr.bf16.mxu0 0
    %2333 = vmatpush1.bf16.msra.mxu0 %v759
    %2334 = vmatprep.subr.bf16.mxu0 0
    %2335 = vmatpush1.bf16.msra.mxu0 %v760
    %2336 = vmatprep.subr.bf16.mxu0 0
    %2337 = vmatpush1.bf16.msra.mxu0 %v761
    %2338 = vmatprep.subr.bf16.mxu0 0
    %2339 = vmatpush1.bf16.msra.mxu0 %v762
    %2340 = vmatprep.subr.bf16.mxu0 0
    %2341 = vmatpush1.bf16.msra.mxu0 0
    %2342 = vmatprep.subr.bf16.mxu0 0
    %2343 = vmatpush1.bf16.msra.mxu0 0
    %2344 = vmatprep.subr.bf16.mxu0 0
    %2345 = vmatpush1.bf16.msra.mxu0 0
    %2346 = vmatprep.subr.bf16.mxu0 0
    %2347 = vmatpush1.bf16.msra.mxu0 0
    %2348 = vmatprep.subr.bf16.mxu0 0
    %2349 = vmatpush1.bf16.msra.mxu0 0
    %2350 = vmatprep.subr.bf16.mxu0 0
    %2351 = vmatpush1.bf16.msra.mxu0 0
    %2352 = vmatprep.subr.bf16.mxu0 0
    %2353 = vmatpush1.bf16.msra.mxu0 0
    %2354 = vmatprep.subr.bf16.mxu0 0
    %2355 = vmatpush1.bf16.msra.mxu0 0
    %2356 = vmatprep.mubr.bf16.mxu0 0
    %2357 = vmatmul.mubr.bf16.gmra.mrb[0].mxu0 %v2323
    %v2358 = vpop.f32.mrb[0].mxu0
    %v2359 = vadd.f32 %v121, %v2358
    %v2360 = vpop.f32.mrb[0].mxu0
    %v2361 = vpop.f32.mrb[0].mxu0
    %v2362 = vpop.f32.mrb[0].mxu0
    %2363 = vdwg.mxu0
    %2364 = vmax.xlane.f32.xlu0 %v2359
    %v2365 = vpop.xlane.xlu0 %2364
    %vm2366 = vcmp.eq.f32.partialorder %v2359, %v2365
    %v2367 = vsel %vm2366, %v124, 128
    %v2368 = vand.u32 %v2367, 65535
    %v2369 = vshra.s32 %v2367, 16
    %v2370 = vcvt.s32.f32 %v2368
    %v2371 = vcvt.s32.f32 %v2369
    %2372 = vmin.xlane.f32.xlu0 %v2371
    %v2373 = vpop.xlane.xlu0 %2372
    %vm2374 = vcmp.eq.f32.partialorder %v2371, %v2373
    %v2375 = vsel %vm2374, %v2370, inf
    %2376 = vmin.xlane.f32.xlu0 %v2375
    %v2377 = vpop.xlane.xlu0 %2376
    %v2378 = vcvt.f32.s32 %v2377
    %v2379 = vcvt.f32.s32 %v2373
    %v2380 = vshll.u32 %v2379, 16
    %v2381 = vadd.s32 %v2380, %v2378
    %vm2382 = vcmp.lt.s32.totalorder %v2381, 127
    %v2383 = vsel %vm2382, %v2381, 127
    %vm2384 = vcmp.eq.s32.totalorder %v124, 6
    %v2385 = vsel %vm2384, %v2383, %v2126
    %vm2386 = vcmp.eq.s32.totalorder %v124, %v2383
    %v2387 = vsel %vm2386, 1, 0
    %v2388 = vcvt.s32.f32 %v2387
    %v2389 = vpack.c.bf16 %v2388, %v2388
    %2390 = vmatprep.subr.bf16.mxu0 %v291
    %2391 = vmatpush1.bf16.msra.mxu0 %v290
    %2392 = vmatprep.subr.bf16.mxu0 %v295
    %2393 = vmatpush1.bf16.msra.mxu0 %v294
    %2394 = vmatprep.subr.bf16.mxu0 %v299
    %2395 = vmatpush1.bf16.msra.mxu0 %v298
    %2396 = vmatprep.subr.bf16.mxu0 %v303
    %2397 = vmatpush1.bf16.msra.mxu0 %v302
    %2398 = vmatprep.subr.bf16.mxu0 %v307
    %2399 = vmatpush1.bf16.msra.mxu0 %v306
    %2400 = vmatprep.subr.bf16.mxu0 %v311
    %2401 = vmatpush1.bf16.msra.mxu0 %v310
    %2402 = vmatprep.subr.bf16.mxu0 %v315
    %2403 = vmatpush1.bf16.msra.mxu0 %v314
    %2404 = vmatprep.subr.bf16.mxu0 %v319
    %2405 = vmatpush1.bf16.msra.mxu0 %v318
    %2406 = vmatprep.subr.bf16.mxu0 0
    %2407 = vmatpush1.bf16.msra.mxu0 0
    %2408 = vmatprep.subr.bf16.mxu0 0
    %2409 = vmatpush1.bf16.msra.mxu0 0
    %2410 = vmatprep.subr.bf16.mxu0 0
    %2411 = vmatpush1.bf16.msra.mxu0 0
    %2412 = vmatprep.subr.bf16.mxu0 0
    %2413 = vmatpush1.bf16.msra.mxu0 0
    %2414 = vmatprep.subr.bf16.mxu0 0
    %2415 = vmatpush1.bf16.msra.mxu0 0
    %2416 = vmatprep.subr.bf16.mxu0 0
    %2417 = vmatpush1.bf16.msra.mxu0 0
    %2418 = vmatprep.subr.bf16.mxu0 0
    %2419 = vmatpush1.bf16.msra.mxu0 0
    %2420 = vmatprep.subr.bf16.mxu0 0
    %2421 = vmatpush1.bf16.msra.mxu0 0
    %2422 = vmatprep.mubr.bf16.mxu0 0
    %2423 = vmatmul.mubr.bf16.gmra.mrb[0].mxu0 %v2389
    %v2424 = vpop.f32.mrb[0].mxu0
    %v2425 = vadd.f32 0.0, %v2424
    %v2426 = vpop.f32.mrb[0].mxu0
    %v2427 = vadd.f32 0.0, %v2426
    %v2428 = vpop.f32.mrb[0].mxu0
    %v2429 = vpop.f32.mrb[0].mxu0
    %2430 = vdwg.mxu0
    %2431 = vmatprep.subr.bf16.mxu0 %v293
    %2432 = vmatpush1.bf16.msra.mxu0 %v292
    %2433 = vmatprep.subr.bf16.mxu0 %v297
    %2434 = vmatpush1.bf16.msra.mxu0 %v296
    %2435 = vmatprep.subr.bf16.mxu0 %v301
    %2436 = vmatpush1.bf16.msra.mxu0 %v300
    %2437 = vmatprep.subr.bf16.mxu0 %v305
    %2438 = vmatpush1.bf16.msra.mxu0 %v304
    %2439 = vmatprep.subr.bf16.mxu0 %v309
    %2440 = vmatpush1.bf16.msra.mxu0 %v308
    %2441 = vmatprep.subr.bf16.mxu0 %v313
    %2442 = vmatpush1.bf16.msra.mxu0 %v312
    %2443 = vmatprep.subr.bf16.mxu0 %v317
    %2444 = vmatpush1.bf16.msra.mxu0 %v316
    %2445 = vmatprep.subr.bf16.mxu0 %v321
    %2446 = vmatpush1.bf16.msra.mxu0 %v320
    %2447 = vmatprep.subr.bf16.mxu0 0
    %2448 = vmatpush1.bf16.msra.mxu0 0
    %2449 = vmatprep.subr.bf16.mxu0 0
    %2450 = vmatpush1.bf16.msra.mxu0 0
    %2451 = vmatprep.subr.bf16.mxu0 0
    %2452 = vmatpush1.bf16.msra.mxu0 0
    %2453 = vmatprep.subr.bf16.mxu0 0
    %2454 = vmatpush1.bf16.msra.mxu0 0
    %2455 = vmatprep.subr.bf16.mxu0 0
    %2456 = vmatpush1.bf16.msra.mxu0 0
    %2457 = vmatprep.subr.bf16.mxu0 0
    %2458 = vmatpush1.bf16.msra.mxu0 0
    %2459 = vmatprep.subr.bf16.mxu0 0
    %2460 = vmatpush1.bf16.msra.mxu0 0
    %2461 = vmatprep.subr.bf16.mxu0 0
    %2462 = vmatpush1.bf16.msra.mxu0 0
    %2463 = vmatprep.mubr.bf16.mxu0 0
    %2464 = vmatmul.mubr.bf16.gmra.mrb[0].mxu0 %v2389
    %v2465 = vpop.f32.mrb[0].mxu0
    %v2466 = vadd.f32 0.0, %v2465
    %v2467 = vpop.f32.mrb[0].mxu0
    %v2468 = vadd.f32 0.0, %v2467
    %v2469 = vpop.f32.mrb[0].mxu0
    %v2470 = vpop.f32.mrb[0].mxu0
    %2471 = vdwg.mxu0
    %2472 = vmatprep.subr.bf16.mxu0 %v533
    %2473 = vmatpush1.bf16.msra.mxu0 %v532
    %2474 = vmatprep.subr.bf16.mxu0 %v537
    %2475 = vmatpush1.bf16.msra.mxu0 %v536
    %2476 = vmatprep.subr.bf16.mxu0 %v541
    %2477 = vmatpush1.bf16.msra.mxu0 %v540
    %2478 = vmatprep.subr.bf16.mxu0 %v545
    %2479 = vmatpush1.bf16.msra.mxu0 %v544
    %2480 = vmatprep.subr.bf16.mxu0 %v549
    %2481 = vmatpush1.bf16.msra.mxu0 %v548
    %2482 = vmatprep.subr.bf16.mxu0 %v553
    %2483 = vmatpush1.bf16.msra.mxu0 %v552
    %2484 = vmatprep.subr.bf16.mxu0 %v557
    %2485 = vmatpush1.bf16.msra.mxu0 %v556
    %2486 = vmatprep.subr.bf16.mxu0 %v561
    %2487 = vmatpush1.bf16.msra.mxu0 %v560
    %2488 = vmatprep.subr.bf16.mxu0 0
    %2489 = vmatpush1.bf16.msra.mxu0 0
    %2490 = vmatprep.subr.bf16.mxu0 0
    %2491 = vmatpush1.bf16.msra.mxu0 0
    %2492 = vmatprep.subr.bf16.mxu0 0
    %2493 = vmatpush1.bf16.msra.mxu0 0
    %2494 = vmatprep.subr.bf16.mxu0 0
    %2495 = vmatpush1.bf16.msra.mxu0 0
    %2496 = vmatprep.subr.bf16.mxu0 0
    %2497 = vmatpush1.bf16.msra.mxu0 0
    %2498 = vmatprep.subr.bf16.mxu0 0
    %2499 = vmatpush1.bf16.msra.mxu0 0
    %2500 = vmatprep.subr.bf16.mxu0 0
    %2501 = vmatpush1.bf16.msra.mxu0 0
    %2502 = vmatprep.subr.bf16.mxu0 0
    %2503 = vmatpush1.bf16.msra.mxu0 0
    %2504 = vmatprep.mubr.bf16.mxu0 0
    %2505 = vmatmul.mubr.bf16.gmra.mrb[0].mxu0 %v2323
    %v2506 = vpop.f32.mrb[0].mxu0
    %v2507 = vadd.f32 %v2425, %v2506
    %v2508 = vpop.f32.mrb[0].mxu0
    %v2509 = vadd.f32 %v2427, %v2508
    %v2510 = vpop.f32.mrb[0].mxu0
    %v2511 = vpop.f32.mrb[0].mxu0
    %2512 = vdwg.mxu0
    %2513 = vmatprep.subr.bf16.mxu0 %v535
    %2514 = vmatpush1.bf16.msra.mxu0 %v534
    %2515 = vmatprep.subr.bf16.mxu0 %v539
    %2516 = vmatpush1.bf16.msra.mxu0 %v538
    %2517 = vmatprep.subr.bf16.mxu0 %v543
    %2518 = vmatpush1.bf16.msra.mxu0 %v542
    %2519 = vmatprep.subr.bf16.mxu0 %v547
    %2520 = vmatpush1.bf16.msra.mxu0 %v546
    %2521 = vmatprep.subr.bf16.mxu0 %v551
    %2522 = vmatpush1.bf16.msra.mxu0 %v550
    %2523 = vmatprep.subr.bf16.mxu0 %v555
    %2524 = vmatpush1.bf16.msra.mxu0 %v554
    %2525 = vmatprep.subr.bf16.mxu0 %v559
    %2526 = vmatpush1.bf16.msra.mxu0 %v558
    %2527 = vmatprep.subr.bf16.mxu0 %v563
    %2528 = vmatpush1.bf16.msra.mxu0 %v562
    %2529 = vmatprep.subr.bf16.mxu0 0
    %2530 = vmatpush1.bf16.msra.mxu0 0
    %2531 = vmatprep.subr.bf16.mxu0 0
    %2532 = vmatpush1.bf16.msra.mxu0 0
    %2533 = vmatprep.subr.bf16.mxu0 0
    %2534 = vmatpush1.bf16.msra.mxu0 0
    %2535 = vmatprep.subr.bf16.mxu0 0
    %2536 = vmatpush1.bf16.msra.mxu0 0
    %2537 = vmatprep.subr.bf16.mxu0 0
    %2538 = vmatpush1.bf16.msra.mxu0 0
    %2539 = vmatprep.subr.bf16.mxu0 0
    %2540 = vmatpush1.bf16.msra.mxu0 0
    %2541 = vmatprep.subr.bf16.mxu0 0
    %2542 = vmatpush1.bf16.msra.mxu0 0
    %2543 = vmatprep.subr.bf16.mxu0 0
    %2544 = vmatpush1.bf16.msra.mxu0 0
    %2545 = vmatprep.mubr.bf16.mxu0 0
    %2546 = vmatmul.mubr.bf16.gmra.mrb[0].mxu0 %v2323
    %v2547 = vpop.f32.mrb[0].mxu0
    %v2548 = vadd.f32 %v2466, %v2547
    %v2549 = vpop.f32.mrb[0].mxu0
    %v2550 = vadd.f32 %v2468, %v2549
    %v2551 = vpop.f32.mrb[0].mxu0
    %v2552 = vpop.f32.mrb[0].mxu0
    %2553 = vdwg.mxu0
    %v2554 = vadd.f32 %v2507, %v99
    %v2555 = vadd.f32 %v2509, %v103
    %v2556 = vadd.f32 %v2548, %v107
    %v2557 = vadd.f32 %v2550, %v111
    %v2558 = vxor.u32 %v2554, 2147483648
    %v2559 = vmul.f32 %v2558, 1.442695
    %v2560 = vpow.pop %v2559
    %v2561 = vadd.f32 %v2560, 1.0
    %v2562 = vrcp.pop %v2561
    %v2563 = vmul.f32 1.0, %v2562
    %v2564 = vxor.u32 %v2555, 2147483648
    %v2565 = vmul.f32 %v2564, 1.442695
    %v2566 = vpow.pop %v2565
    %v2567 = vadd.f32 %v2566, 1.0
    %v2568 = vrcp.pop %v2567
    %v2569 = vmul.f32 1.0, %v2568
    %v2570 = vtanh.pop %v2556
    %v2571 = vxor.u32 %v2557, 2147483648
    %v2572 = vmul.f32 %v2571, 1.442695
    %v2573 = vpow.pop %v2572
    %v2574 = vadd.f32 %v2573, 1.0
    %v2575 = vrcp.pop %v2574
    %v2576 = vmul.f32 1.0, %v2575
    %v2577 = vmul.f32 %v2569, %v2320
    %v2578 = vmul.f32 %v2563, %v2570
    %v2579 = vadd.f32 %v2577, %v2578
    %v2580 = vtanh.pop %v2579
    %v2581 = vmul.f32 %v2576, %v2580
    %v2582 = vpack.c.bf16 %v2581, %v2581
    %2583 = vmatprep.subr.bf16.mxu0 0
    %2584 = vmatpush1.bf16.msra.mxu0 %v755
    %2585 = vmatprep.subr.bf16.mxu0 0
    %2586 = vmatpush1.bf16.msra.mxu0 %v756
    %2587 = vmatprep.subr.bf16.mxu0 0
    %2588 = vmatpush1.bf16.msra.mxu0 %v757
    %2589 = vmatprep.subr.bf16.mxu0 0
    %2590 = vmatpush1.bf16.msra.mxu0 %v758
    %2591 = vmatprep.subr.bf16.mxu0 0
    %2592 = vmatpush1.bf16.msra.mxu0 %v759
    %2593 = vmatprep.subr.bf16.mxu0 0
    %2594 = vmatpush1.bf16.msra.mxu0 %v760
    %2595 = vmatprep.subr.bf16.mxu0 0
    %2596 = vmatpush1.bf16.msra.mxu0 %v761
    %2597 = vmatprep.subr.bf16.mxu0 0
    %2598 = vmatpush1.bf16.msra.mxu0 %v762
    %2599 = vmatprep.subr.bf16.mxu0 0
    %2600 = vmatpush1.bf16.msra.mxu0 0
    %2601 = vmatprep.subr.bf16.mxu0 0
    %2602 = vmatpush1.bf16.msra.mxu0 0
    %2603 = vmatprep.subr.bf16.mxu0 0
    %2604 = vmatpush1.bf16.msra.mxu0 0
    %2605 = vmatprep.subr.bf16.mxu0 0
    %2606 = vmatpush1.bf16.msra.mxu0 0
    %2607 = vmatprep.subr.bf16.mxu0 0
    %2608 = vmatpush1.bf16.msra.mxu0 0
    %2609 = vmatprep.subr.bf16.mxu0 0
    %2610 = vmatpush1.bf16.msra.mxu0 0
    %2611 = vmatprep.subr.bf16.mxu0 0
    %2612 = vmatpush1.bf16.msra.mxu0 0
    %2613 = vmatprep.subr.bf16.mxu0 0
    %2614 = vmatpush1.bf16.msra.mxu0 0
    %2615 = vmatprep.mubr.bf16.mxu0 0
    %2616 = vmatmul.mubr.bf16.gmra.mrb[0].mxu0 %v2582
    %v2617 = vpop.f32.mrb[0].mxu0
    %v2618 = vadd.f32 %v121, %v2617
    %v2619 = vpop.f32.mrb[0].mxu0
    %v2620 = vpop.f32.mrb[0].mxu0
    %v2621 = vpop.f32.mrb[0].mxu0
    %2622 = vdwg.mxu0
    %2623 = vmax.xlane.f32.xlu0 %v2618
    %v2624 = vpop.xlane.xlu0 %2623
    %vm2625 = vcmp.eq.f32.partialorder %v2618, %v2624
    %v2626 = vsel %vm2625, %v124, 128
    %v2627 = vand.u32 %v2626, 65535
    %v2628 = vshra.s32 %v2626, 16
    %v2629 = vcvt.s32.f32 %v2627
    %v2630 = vcvt.s32.f32 %v2628
    %2631 = vmin.xlane.f32.xlu0 %v2630
    %v2632 = vpop.xlane.xlu0 %2631
    %vm2633 = vcmp.eq.f32.partialorder %v2630, %v2632
    %v2634 = vsel %vm2633, %v2629, inf
    %2635 = vmin.xlane.f32.xlu0 %v2634
    %v2636 = vpop.xlane.xlu0 %2635
    %v2637 = vcvt.f32.s32 %v2636
    %v2638 = vcvt.f32.s32 %v2632
    %v2639 = vshll.u32 %v2638, 16
    %v2640 = vadd.s32 %v2639, %v2637
    %vm2641 = vcmp.lt.s32.totalorder %v2640, 127
    %v2642 = vsel %vm2641, %v2640, 127
    %vm2643 = vcmp.eq.s32.totalorder %v124, 7
    %v2644 = vsel %vm2643, %v2642, %v2385
    %vm2645 = vcmp.eq.s32.totalorder %v124, %v2642
    %v2646 = vsel %vm2645, 1, 0
    %v2647 = vcvt.s32.f32 %v2646
    %v2648 = vpack.c.bf16 %v2647, %v2647
    %2649 = vmatprep.subr.bf16.mxu0 %v291
    %2650 = vmatpush1.bf16.msra.mxu0 %v290
    %2651 = vmatprep.subr.bf16.mxu0 %v295
    %2652 = vmatpush1.bf16.msra.mxu0 %v294
    %2653 = vmatprep.subr.bf16.mxu0 %v299
    %2654 = vmatpush1.bf16.msra.mxu0 %v298
    %2655 = vmatprep.subr.bf16.mxu0 %v303
    %2656 = vmatpush1.bf16.msra.mxu0 %v302
    %2657 = vmatprep.subr.bf16.mxu0 %v307
    %2658 = vmatpush1.bf16.msra.mxu0 %v306
    %2659 = vmatprep.subr.bf16.mxu0 %v311
    %2660 = vmatpush1.bf16.msra.mxu0 %v310
    %2661 = vmatprep.subr.bf16.mxu0 %v315
    %2662 = vmatpush1.bf16.msra.mxu0 %v314
    %2663 = vmatprep.subr.bf16.mxu0 %v319
    %2664 = vmatpush1.bf16.msra.mxu0 %v318
    %2665 = vmatprep.subr.bf16.mxu0 0
    %2666 = vmatpush1.bf16.msra.mxu0 0
    %2667 = vmatprep.subr.bf16.mxu0 0
    %2668 = vmatpush1.bf16.msra.mxu0 0
    %2669 = vmatprep.subr.bf16.mxu0 0
    %2670 = vmatpush1.bf16.msra.mxu0 0
    %2671 = vmatprep.subr.bf16.mxu0 0
    %2672 = vmatpush1.bf16.msra.mxu0 0
    %2673 = vmatprep.subr.bf16.mxu0 0
    %2674 = vmatpush1.bf16.msra.mxu0 0
    %2675 = vmatprep.subr.bf16.mxu0 0
    %2676 = vmatpush1.bf16.msra.mxu0 0
    %2677 = vmatprep.subr.bf16.mxu0 0
    %2678 = vmatpush1.bf16.msra.mxu0 0
    %2679 = vmatprep.subr.bf16.mxu0 0
    %2680 = vmatpush1.bf16.msra.mxu0 0
    %2681 = vmatprep.mubr.bf16.mxu0 0
    %2682 = vmatmul.mubr.bf16.gmra.mrb[0].mxu0 %v2648
    %v2683 = vpop.f32.mrb[0].mxu0
    %v2684 = vadd.f32 0.0, %v2683
    %v2685 = vpop.f32.mrb[0].mxu0
    %v2686 = vadd.f32 0.0, %v2685
    %v2687 = vpop.f32.mrb[0].mxu0
    %v2688 = vpop.f32.mrb[0].mxu0
    %2689 = vdwg.mxu0
    %2690 = vmatprep.subr.bf16.mxu0 %v293
    %2691 = vmatpush1.bf16.msra.mxu0 %v292
    %2692 = vmatprep.subr.bf16.mxu0 %v297
    %2693 = vmatpush1.bf16.msra.mxu0 %v296
    %2694 = vmatprep.subr.bf16.mxu0 %v301
    %2695 = vmatpush1.bf16.msra.mxu0 %v300
    %2696 = vmatprep.subr.bf16.mxu0 %v305
    %2697 = vmatpush1.bf16.msra.mxu0 %v304
    %2698 = vmatprep.subr.bf16.mxu0 %v309
    %2699 = vmatpush1.bf16.msra.mxu0 %v308
    %2700 = vmatprep.subr.bf16.mxu0 %v313
    %2701 = vmatpush1.bf16.msra.mxu0 %v312
    %2702 = vmatprep.subr.bf16.mxu0 %v317
    %2703 = vmatpush1.bf16.msra.mxu0 %v316
    %2704 = vmatprep.subr.bf16.mxu0 %v321
    %2705 = vmatpush1.bf16.msra.mxu0 %v320
    %2706 = vmatprep.subr.bf16.mxu0 0
    %2707 = vmatpush1.bf16.msra.mxu0 0
    %2708 = vmatprep.subr.bf16.mxu0 0
    %2709 = vmatpush1.bf16.msra.mxu0 0
    %2710 = vmatprep.subr.bf16.mxu0 0
    %2711 = vmatpush1.bf16.msra.mxu0 0
    %2712 = vmatprep.subr.bf16.mxu0 0
    %2713 = vmatpush1.bf16.msra.mxu0 0
    %2714 = vmatprep.subr.bf16.mxu0 0
    %2715 = vmatpush1.bf16.msra.mxu0 0
    %2716 = vmatprep.subr.bf16.mxu0 0
    %2717 = vmatpush1.bf16.msra.mxu0 0
    %2718 = vmatprep.subr.bf16.mxu0 0
    %2719 = vmatpush1.bf16.msra.mxu0 0
    %2720 = vmatprep.subr.bf16.mxu0 0
    %2721 = vmatpush1.bf16.msra.mxu0 0
    %2722 = vmatprep.mubr.bf16.mxu0 0
    %2723 = vmatmul.mubr.bf16.gmra.mrb[0].mxu0 %v2648
    %v2724 = vpop.f32.mrb[0].mxu0
    %v2725 = vadd.f32 0.0, %v2724
    %v2726 = vpop.f32.mrb[0].mxu0
    %v2727 = vadd.f32 0.0, %v2726
    %v2728 = vpop.f32.mrb[0].mxu0
    %v2729 = vpop.f32.mrb[0].mxu0
    %2730 = vdwg.mxu0
    %2731 = vmatprep.subr.bf16.mxu0 %v533
    %2732 = vmatpush1.bf16.msra.mxu0 %v532
    %2733 = vmatprep.subr.bf16.mxu0 %v537
    %2734 = vmatpush1.bf16.msra.mxu0 %v536
    %2735 = vmatprep.subr.bf16.mxu0 %v541
    %2736 = vmatpush1.bf16.msra.mxu0 %v540
    %2737 = vmatprep.subr.bf16.mxu0 %v545
    %2738 = vmatpush1.bf16.msra.mxu0 %v544
    %2739 = vmatprep.subr.bf16.mxu0 %v549
    %2740 = vmatpush1.bf16.msra.mxu0 %v548
    %2741 = vmatprep.subr.bf16.mxu0 %v553
    %2742 = vmatpush1.bf16.msra.mxu0 %v552
    %2743 = vmatprep.subr.bf16.mxu0 %v557
    %2744 = vmatpush1.bf16.msra.mxu0 %v556
    %2745 = vmatprep.subr.bf16.mxu0 %v561
    %2746 = vmatpush1.bf16.msra.mxu0 %v560
    %2747 = vmatprep.subr.bf16.mxu0 0
    %2748 = vmatpush1.bf16.msra.mxu0 0
    %2749 = vmatprep.subr.bf16.mxu0 0
    %2750 = vmatpush1.bf16.msra.mxu0 0
    %2751 = vmatprep.subr.bf16.mxu0 0
    %2752 = vmatpush1.bf16.msra.mxu0 0
    %2753 = vmatprep.subr.bf16.mxu0 0
    %2754 = vmatpush1.bf16.msra.mxu0 0
    %2755 = vmatprep.subr.bf16.mxu0 0
    %2756 = vmatpush1.bf16.msra.mxu0 0
    %2757 = vmatprep.subr.bf16.mxu0 0
    %2758 = vmatpush1.bf16.msra.mxu0 0
    %2759 = vmatprep.subr.bf16.mxu0 0
    %2760 = vmatpush1.bf16.msra.mxu0 0
    %2761 = vmatprep.subr.bf16.mxu0 0
    %2762 = vmatpush1.bf16.msra.mxu0 0
    %2763 = vmatprep.mubr.bf16.mxu0 0
    %2764 = vmatmul.mubr.bf16.gmra.mrb[0].mxu0 %v2582
    %v2765 = vpop.f32.mrb[0].mxu0
    %v2766 = vadd.f32 %v2684, %v2765
    %v2767 = vpop.f32.mrb[0].mxu0
    %v2768 = vadd.f32 %v2686, %v2767
    %v2769 = vpop.f32.mrb[0].mxu0
    %v2770 = vpop.f32.mrb[0].mxu0
    %2771 = vdwg.mxu0
    %2772 = vmatprep.subr.bf16.mxu0 %v535
    %2773 = vmatpush1.bf16.msra.mxu0 %v534
    %2774 = vmatprep.subr.bf16.mxu0 %v539
    %2775 = vmatpush1.bf16.msra.mxu0 %v538
    %2776 = vmatprep.subr.bf16.mxu0 %v543
    %2777 = vmatpush1.bf16.msra.mxu0 %v542
    %2778 = vmatprep.subr.bf16.mxu0 %v547
    %2779 = vmatpush1.bf16.msra.mxu0 %v546
    %2780 = vmatprep.subr.bf16.mxu0 %v551
    %2781 = vmatpush1.bf16.msra.mxu0 %v550
    %2782 = vmatprep.subr.bf16.mxu0 %v555
    %2783 = vmatpush1.bf16.msra.mxu0 %v554
    %2784 = vmatprep.subr.bf16.mxu0 %v559
    %2785 = vmatpush1.bf16.msra.mxu0 %v558
    %2786 = vmatprep.subr.bf16.mxu0 %v563
    %2787 = vmatpush1.bf16.msra.mxu0 %v562
    %2788 = vmatprep.subr.bf16.mxu0 0
    %2789 = vmatpush1.bf16.msra.mxu0 0
    %2790 = vmatprep.subr.bf16.mxu0 0
    %2791 = vmatpush1.bf16.msra.mxu0 0
    %2792 = vmatprep.subr.bf16.mxu0 0
    %2793 = vmatpush1.bf16.msra.mxu0 0
    %2794 = vmatprep.subr.bf16.mxu0 0
    %2795 = vmatpush1.bf16.msra.mxu0 0
    %2796 = vmatprep.subr.bf16.mxu0 0
    %2797 = vmatpush1.bf16.msra.mxu0 0
    %2798 = vmatprep.subr.bf16.mxu0 0
    %2799 = vmatpush1.bf16.msra.mxu0 0
    %2800 = vmatprep.subr.bf16.mxu0 0
    %2801 = vmatpush1.bf16.msra.mxu0 0
    %2802 = vmatprep.subr.bf16.mxu0 0
    %2803 = vmatpush1.bf16.msra.mxu0 0
    %2804 = vmatprep.mubr.bf16.mxu0 0
    %2805 = vmatmul.mubr.bf16.gmra.mrb[0].mxu0 %v2582
    %v2806 = vpop.f32.mrb[0].mxu0
    %v2807 = vadd.f32 %v2725, %v2806
    %v2808 = vpop.f32.mrb[0].mxu0
    %v2809 = vadd.f32 %v2727, %v2808
    %v2810 = vpop.f32.mrb[0].mxu0
    %v2811 = vpop.f32.mrb[0].mxu0
    %2812 = vdwg.mxu0
    %v2813 = vadd.f32 %v2766, %v99
    %v2814 = vadd.f32 %v2768, %v103
    %v2815 = vadd.f32 %v2807, %v107
    %v2816 = vadd.f32 %v2809, %v111
    %v2817 = vxor.u32 %v2813, 2147483648
    %v2818 = vmul.f32 %v2817, 1.442695
    %v2819 = vpow.pop %v2818
    %v2820 = vadd.f32 %v2819, 1.0
    %v2821 = vrcp.pop %v2820
    %v2822 = vmul.f32 1.0, %v2821
    %v2823 = vxor.u32 %v2814, 2147483648
    %v2824 = vmul.f32 %v2823, 1.442695
    %v2825 = vpow.pop %v2824
    %v2826 = vadd.f32 %v2825, 1.0
    %v2827 = vrcp.pop %v2826
    %v2828 = vmul.f32 1.0, %v2827
    %v2829 = vtanh.pop %v2815
    %v2830 = vxor.u32 %v2816, 2147483648
    %v2831 = vmul.f32 %v2830, 1.442695
    %v2832 = vpow.pop %v2831
    %v2833 = vadd.f32 %v2832, 1.0
    %v2834 = vrcp.pop %v2833
    %v2835 = vmul.f32 1.0, %v2834
    %v2836 = vmul.f32 %v2828, %v2579
    %v2837 = vmul.f32 %v2822, %v2829
    %v2838 = vadd.f32 %v2836, %v2837
    %v2839 = vtanh.pop %v2838
    %v2840 = vmul.f32 %v2835, %v2839
    %v2841 = vpack.c.bf16 %v2840, %v2840
    %2842 = vmatprep.subr.bf16.mxu0 0
    %2843 = vmatpush1.bf16.msra.mxu0 %v755
    %2844 = vmatprep.subr.bf16.mxu0 0
    %2845 = vmatpush1.bf16.msra.mxu0 %v756
    %2846 = vmatprep.subr.bf16.mxu0 0
    %2847 = vmatpush1.bf16.msra.mxu0 %v757
    %2848 = vmatprep.subr.bf16.mxu0 0
    %2849 = vmatpush1.bf16.msra.mxu0 %v758
    %2850 = vmatprep.subr.bf16.mxu0 0
    %2851 = vmatpush1.bf16.msra.mxu0 %v759
    %2852 = vmatprep.subr.bf16.mxu0 0
    %2853 = vmatpush1.bf16.msra.mxu0 %v760
    %2854 = vmatprep.subr.bf16.mxu0 0
    %2855 = vmatpush1.bf16.msra.mxu0 %v761
    %2856 = vmatprep.subr.bf16.mxu0 0
    %2857 = vmatpush1.bf16.msra.mxu0 %v762
    %2858 = vmatprep.subr.bf16.mxu0 0
    %2859 = vmatpush1.bf16.msra.mxu0 0
    %2860 = vmatprep.subr.bf16.mxu0 0
    %2861 = vmatpush1.bf16.msra.mxu0 0
    %2862 = vmatprep.subr.bf16.mxu0 0
    %2863 = vmatpush1.bf16.msra.mxu0 0
    %2864 = vmatprep.subr.bf16.mxu0 0
    %2865 = vmatpush1.bf16.msra.mxu0 0
    %2866 = vmatprep.subr.bf16.mxu0 0
    %2867 = vmatpush1.bf16.msra.mxu0 0
    %2868 = vmatprep.subr.bf16.mxu0 0
    %2869 = vmatpush1.bf16.msra.mxu0 0
    %2870 = vmatprep.subr.bf16.mxu0 0
    %2871 = vmatpush1.bf16.msra.mxu0 0
    %2872 = vmatprep.subr.bf16.mxu0 0
    %2873 = vmatpush1.bf16.msra.mxu0 0
    %2874 = vmatprep.mubr.bf16.mxu0 0
    %2875 = vmatmul.mubr.bf16.gmra.mrb[0].mxu0 %v2841
    %v2876 = vpop.f32.mrb[0].mxu0
    %v2877 = vadd.f32 %v121, %v2876
    %v2878 = vpop.f32.mrb[0].mxu0
    %v2879 = vpop.f32.mrb[0].mxu0
    %v2880 = vpop.f32.mrb[0].mxu0
    %2881 = vdwg.mxu0
    %2882 = vmax.xlane.f32.xlu0 %v2877
    %v2883 = vpop.xlane.xlu0 %2882
    %vm2884 = vcmp.eq.f32.partialorder %v2877, %v2883
    %v2885 = vsel %vm2884, %v124, 128
    %v2886 = vand.u32 %v2885, 65535
    %v2887 = vshra.s32 %v2885, 16
    %v2888 = vcvt.s32.f32 %v2886
    %v2889 = vcvt.s32.f32 %v2887
    %2890 = vmin.xlane.f32.xlu0 %v2889
    %v2891 = vpop.xlane.xlu0 %2890
    %vm2892 = vcmp.eq.f32.partialorder %v2889, %v2891
    %v2893 = vsel %vm2892, %v2888, inf
    %2894 = vmin.xlane.f32.xlu0 %v2893
    %v2895 = vpop.xlane.xlu0 %2894
    %v2896 = vcvt.f32.s32 %v2895
    %v2897 = vcvt.f32.s32 %v2891
    %v2898 = vshll.u32 %v2897, 16
    %v2899 = vadd.s32 %v2898, %v2896
    %vm2900 = vcmp.lt.s32.totalorder %v2899, 127
    %v2901 = vsel %vm2900, %v2899, 127
    %vm2902 = vcmp.eq.s32.totalorder %v124, 8
    %v2903 = vsel %vm2902, %v2901, %v2644
    %vm2904 = vcmp.eq.s32.totalorder %v124, %v2901
    %v2905 = vsel %vm2904, 1, 0
    %v2906 = vcvt.s32.f32 %v2905
    %v2907 = vpack.c.bf16 %v2906, %v2906
    %2908 = vmatprep.subr.bf16.mxu0 %v291
    %2909 = vmatpush1.bf16.msra.mxu0 %v290
    %2910 = vmatprep.subr.bf16.mxu0 %v295
    %2911 = vmatpush1.bf16.msra.mxu0 %v294
    %2912 = vmatprep.subr.bf16.mxu0 %v299
    %2913 = vmatpush1.bf16.msra.mxu0 %v298
    %2914 = vmatprep.subr.bf16.mxu0 %v303
    %2915 = vmatpush1.bf16.msra.mxu0 %v302
    %2916 = vmatprep.subr.bf16.mxu0 %v307
    %2917 = vmatpush1.bf16.msra.mxu0 %v306
    %2918 = vmatprep.subr.bf16.mxu0 %v311
    %2919 = vmatpush1.bf16.msra.mxu0 %v310
    %2920 = vmatprep.subr.bf16.mxu0 %v315
    %2921 = vmatpush1.bf16.msra.mxu0 %v314
    %2922 = vmatprep.subr.bf16.mxu0 %v319
    %2923 = vmatpush1.bf16.msra.mxu0 %v318
    %2924 = vmatprep.subr.bf16.mxu0 0
    %2925 = vmatpush1.bf16.msra.mxu0 0
    %2926 = vmatprep.subr.bf16.mxu0 0
    %2927 = vmatpush1.bf16.msra.mxu0 0
    %2928 = vmatprep.subr.bf16.mxu0 0
    %2929 = vmatpush1.bf16.msra.mxu0 0
    %2930 = vmatprep.subr.bf16.mxu0 0
    %2931 = vmatpush1.bf16.msra.mxu0 0
    %2932 = vmatprep.subr.bf16.mxu0 0
    %2933 = vmatpush1.bf16.msra.mxu0 0
    %2934 = vmatprep.subr.bf16.mxu0 0
    %2935 = vmatpush1.bf16.msra.mxu0 0
    %2936 = vmatprep.subr.bf16.mxu0 0
    %2937 = vmatpush1.bf16.msra.mxu0 0
    %2938 = vmatprep.subr.bf16.mxu0 0
    %2939 = vmatpush1.bf16.msra.mxu0 0
    %2940 = vmatprep.mubr.bf16.mxu0 0
    %2941 = vmatmul.mubr.bf16.gmra.mrb[0].mxu0 %v2907
    %v2942 = vpop.f32.mrb[0].mxu0
    %v2943 = vadd.f32 0.0, %v2942
    %v2944 = vpop.f32.mrb[0].mxu0
    %v2945 = vadd.f32 0.0, %v2944
    %v2946 = vpop.f32.mrb[0].mxu0
    %v2947 = vpop.f32.mrb[0].mxu0
    %2948 = vdwg.mxu0
    %2949 = vmatprep.subr.bf16.mxu0 %v293
    %2950 = vmatpush1.bf16.msra.mxu0 %v292
    %2951 = vmatprep.subr.bf16.mxu0 %v297
    %2952 = vmatpush1.bf16.msra.mxu0 %v296
    %2953 = vmatprep.subr.bf16.mxu0 %v301
    %2954 = vmatpush1.bf16.msra.mxu0 %v300
    %2955 = vmatprep.subr.bf16.mxu0 %v305
    %2956 = vmatpush1.bf16.msra.mxu0 %v304
    %2957 = vmatprep.subr.bf16.mxu0 %v309
    %2958 = vmatpush1.bf16.msra.mxu0 %v308
    %2959 = vmatprep.subr.bf16.mxu0 %v313
    %2960 = vmatpush1.bf16.msra.mxu0 %v312
    %2961 = vmatprep.subr.bf16.mxu0 %v317
    %2962 = vmatpush1.bf16.msra.mxu0 %v316
    %2963 = vmatprep.subr.bf16.mxu0 %v321
    %2964 = vmatpush1.bf16.msra.mxu0 %v320
    %2965 = vmatprep.subr.bf16.mxu0 0
    %2966 = vmatpush1.bf16.msra.mxu0 0
    %2967 = vmatprep.subr.bf16.mxu0 0
    %2968 = vmatpush1.bf16.msra.mxu0 0
    %2969 = vmatprep.subr.bf16.mxu0 0
    %2970 = vmatpush1.bf16.msra.mxu0 0
    %2971 = vmatprep.subr.bf16.mxu0 0
    %2972 = vmatpush1.bf16.msra.mxu0 0
    %2973 = vmatprep.subr.bf16.mxu0 0
    %2974 = vmatpush1.bf16.msra.mxu0 0
    %2975 = vmatprep.subr.bf16.mxu0 0
    %2976 = vmatpush1.bf16.msra.mxu0 0
    %2977 = vmatprep.subr.bf16.mxu0 0
    %2978 = vmatpush1.bf16.msra.mxu0 0
    %2979 = vmatprep.subr.bf16.mxu0 0
    %2980 = vmatpush1.bf16.msra.mxu0 0
    %2981 = vmatprep.mubr.bf16.mxu0 0
    %2982 = vmatmul.mubr.bf16.gmra.mrb[0].mxu0 %v2907
    %v2983 = vpop.f32.mrb[0].mxu0
    %v2984 = vadd.f32 0.0, %v2983
    %v2985 = vpop.f32.mrb[0].mxu0
    %v2986 = vadd.f32 0.0, %v2985
    %v2987 = vpop.f32.mrb[0].mxu0
    %v2988 = vpop.f32.mrb[0].mxu0
    %2989 = vdwg.mxu0
    %2990 = vmatprep.subr.bf16.mxu0 %v533
    %2991 = vmatpush1.bf16.msra.mxu0 %v532
    %2992 = vmatprep.subr.bf16.mxu0 %v537
    %2993 = vmatpush1.bf16.msra.mxu0 %v536
    %2994 = vmatprep.subr.bf16.mxu0 %v541
    %2995 = vmatpush1.bf16.msra.mxu0 %v540
    %2996 = vmatprep.subr.bf16.mxu0 %v545
    %2997 = vmatpush1.bf16.msra.mxu0 %v544
    %2998 = vmatprep.subr.bf16.mxu0 %v549
    %2999 = vmatpush1.bf16.msra.mxu0 %v548
    %3000 = vmatprep.subr.bf16.mxu0 %v553
    %3001 = vmatpush1.bf16.msra.mxu0 %v552
    %3002 = vmatprep.subr.bf16.mxu0 %v557
    %3003 = vmatpush1.bf16.msra.mxu0 %v556
    %3004 = vmatprep.subr.bf16.mxu0 %v561
    %3005 = vmatpush1.bf16.msra.mxu0 %v560
    %3006 = vmatprep.subr.bf16.mxu0 0
    %3007 = vmatpush1.bf16.msra.mxu0 0
    %3008 = vmatprep.subr.bf16.mxu0 0
    %3009 = vmatpush1.bf16.msra.mxu0 0
    %3010 = vmatprep.subr.bf16.mxu0 0
    %3011 = vmatpush1.bf16.msra.mxu0 0
    %3012 = vmatprep.subr.bf16.mxu0 0
    %3013 = vmatpush1.bf16.msra.mxu0 0
    %3014 = vmatprep.subr.bf16.mxu0 0
    %3015 = vmatpush1.bf16.msra.mxu0 0
    %3016 = vmatprep.subr.bf16.mxu0 0
    %3017 = vmatpush1.bf16.msra.mxu0 0
    %3018 = vmatprep.subr.bf16.mxu0 0
    %3019 = vmatpush1.bf16.msra.mxu0 0
    %3020 = vmatprep.subr.bf16.mxu0 0
    %3021 = vmatpush1.bf16.msra.mxu0 0
    %3022 = vmatprep.mubr.bf16.mxu0 0
    %3023 = vmatmul.mubr.bf16.gmra.mrb[0].mxu0 %v2841
    %v3024 = vpop.f32.mrb[0].mxu0
    %v3025 = vadd.f32 %v2943, %v3024
    %v3026 = vpop.f32.mrb[0].mxu0
    %v3027 = vadd.f32 %v2945, %v3026
    %v3028 = vpop.f32.mrb[0].mxu0
    %v3029 = vpop.f32.mrb[0].mxu0
    %3030 = vdwg.mxu0
    %3031 = vmatprep.subr.bf16.mxu0 %v535
    %3032 = vmatpush1.bf16.msra.mxu0 %v534
    %3033 = vmatprep.subr.bf16.mxu0 %v539
    %3034 = vmatpush1.bf16.msra.mxu0 %v538
    %3035 = vmatprep.subr.bf16.mxu0 %v543
    %3036 = vmatpush1.bf16.msra.mxu0 %v542
    %3037 = vmatprep.subr.bf16.mxu0 %v547
    %3038 = vmatpush1.bf16.msra.mxu0 %v546
    %3039 = vmatprep.subr.bf16.mxu0 %v551
    %3040 = vmatpush1.bf16.msra.mxu0 %v550
    %3041 = vmatprep.subr.bf16.mxu0 %v555
    %3042 = vmatpush1.bf16.msra.mxu0 %v554
    %3043 = vmatprep.subr.bf16.mxu0 %v559
    %3044 = vmatpush1.bf16.msra.mxu0 %v558
    %3045 = vmatprep.subr.bf16.mxu0 %v563
    %3046 = vmatpush1.bf16.msra.mxu0 %v562
    %3047 = vmatprep.subr.bf16.mxu0 0
    %3048 = vmatpush1.bf16.msra.mxu0 0
    %3049 = vmatprep.subr.bf16.mxu0 0
    %3050 = vmatpush1.bf16.msra.mxu0 0
    %3051 = vmatprep.subr.bf16.mxu0 0
    %3052 = vmatpush1.bf16.msra.mxu0 0
    %3053 = vmatprep.subr.bf16.mxu0 0
    %3054 = vmatpush1.bf16.msra.mxu0 0
    %3055 = vmatprep.subr.bf16.mxu0 0
    %3056 = vmatpush1.bf16.msra.mxu0 0
    %3057 = vmatprep.subr.bf16.mxu0 0
    %3058 = vmatpush1.bf16.msra.mxu0 0
    %3059 = vmatprep.subr.bf16.mxu0 0
    %3060 = vmatpush1.bf16.msra.mxu0 0
    %3061 = vmatprep.subr.bf16.mxu0 0
    %3062 = vmatpush1.bf16.msra.mxu0 0
    %3063 = vmatprep.mubr.bf16.mxu0 0
    %3064 = vmatmul.mubr.bf16.gmra.mrb[0].mxu0 %v2841
    %v3065 = vpop.f32.mrb[0].mxu0
    %v3066 = vadd.f32 %v2984, %v3065
    %v3067 = vpop.f32.mrb[0].mxu0
    %v3068 = vadd.f32 %v2986, %v3067
    %v3069 = vpop.f32.mrb[0].mxu0
    %v3070 = vpop.f32.mrb[0].mxu0
    %3071 = vdwg.mxu0
    %v3072 = vadd.f32 %v3025, %v99
    %v3073 = vadd.f32 %v3027, %v103
    %v3074 = vadd.f32 %v3066, %v107
    %v3075 = vadd.f32 %v3068, %v111
    %v3076 = vxor.u32 %v3072, 2147483648
    %v3077 = vmul.f32 %v3076, 1.442695
    %v3078 = vpow.pop %v3077
    %v3079 = vadd.f32 %v3078, 1.0
    %v3080 = vrcp.pop %v3079
    %v3081 = vmul.f32 1.0, %v3080
    %v3082 = vxor.u32 %v3073, 2147483648
    %v3083 = vmul.f32 %v3082, 1.442695
    %v3084 = vpow.pop %v3083
    %v3085 = vadd.f32 %v3084, 1.0
    %v3086 = vrcp.pop %v3085
    %v3087 = vmul.f32 1.0, %v3086
    %v3088 = vtanh.pop %v3074
    %v3089 = vxor.u32 %v3075, 2147483648
    %v3090 = vmul.f32 %v3089, 1.442695
    %v3091 = vpow.pop %v3090
    %v3092 = vadd.f32 %v3091, 1.0
    %v3093 = vrcp.pop %v3092
    %v3094 = vmul.f32 1.0, %v3093
    %v3095 = vmul.f32 %v3087, %v2838
    %v3096 = vmul.f32 %v3081, %v3088
    %v3097 = vadd.f32 %v3095, %v3096
    %v3098 = vtanh.pop %v3097
    %v3099 = vmul.f32 %v3094, %v3098
    %v3100 = vpack.c.bf16 %v3099, %v3099
    %3101 = vmatprep.subr.bf16.mxu0 0
    %3102 = vmatpush1.bf16.msra.mxu0 %v755
    %3103 = vmatprep.subr.bf16.mxu0 0
    %3104 = vmatpush1.bf16.msra.mxu0 %v756
    %3105 = vmatprep.subr.bf16.mxu0 0
    %3106 = vmatpush1.bf16.msra.mxu0 %v757
    %3107 = vmatprep.subr.bf16.mxu0 0
    %3108 = vmatpush1.bf16.msra.mxu0 %v758
    %3109 = vmatprep.subr.bf16.mxu0 0
    %3110 = vmatpush1.bf16.msra.mxu0 %v759
    %3111 = vmatprep.subr.bf16.mxu0 0
    %3112 = vmatpush1.bf16.msra.mxu0 %v760
    %3113 = vmatprep.subr.bf16.mxu0 0
    %3114 = vmatpush1.bf16.msra.mxu0 %v761
    %3115 = vmatprep.subr.bf16.mxu0 0
    %3116 = vmatpush1.bf16.msra.mxu0 %v762
    %3117 = vmatprep.subr.bf16.mxu0 0
    %3118 = vmatpush1.bf16.msra.mxu0 0
    %3119 = vmatprep.subr.bf16.mxu0 0
    %3120 = vmatpush1.bf16.msra.mxu0 0
    %3121 = vmatprep.subr.bf16.mxu0 0
    %3122 = vmatpush1.bf16.msra.mxu0 0
    %3123 = vmatprep.subr.bf16.mxu0 0
    %3124 = vmatpush1.bf16.msra.mxu0 0
    %3125 = vmatprep.subr.bf16.mxu0 0
    %3126 = vmatpush1.bf16.msra.mxu0 0
    %3127 = vmatprep.subr.bf16.mxu0 0
    %3128 = vmatpush1.bf16.msra.mxu0 0
    %3129 = vmatprep.subr.bf16.mxu0 0
    %3130 = vmatpush1.bf16.msra.mxu0 0
    %3131 = vmatprep.subr.bf16.mxu0 0
    %3132 = vmatpush1.bf16.msra.mxu0 0
    %3133 = vmatprep.mubr.bf16.mxu0 0
    %3134 = vmatmul.mubr.bf16.gmra.mrb[0].mxu0 %v3100
    %v3135 = vpop.f32.mrb[0].mxu0
    %v3136 = vadd.f32 %v121, %v3135
    %v3137 = vpop.f32.mrb[0].mxu0
    %v3138 = vpop.f32.mrb[0].mxu0
    %v3139 = vpop.f32.mrb[0].mxu0
    %3140 = vdwg.mxu0
    %3141 = vmax.xlane.f32.xlu0 %v3136
    %v3142 = vpop.xlane.xlu0 %3141
    %vm3143 = vcmp.eq.f32.partialorder %v3136, %v3142
    %v3144 = vsel %vm3143, %v124, 128
    %v3145 = vand.u32 %v3144, 65535
    %v3146 = vshra.s32 %v3144, 16
    %v3147 = vcvt.s32.f32 %v3145
    %v3148 = vcvt.s32.f32 %v3146
    %3149 = vmin.xlane.f32.xlu0 %v3148
    %v3150 = vpop.xlane.xlu0 %3149
    %vm3151 = vcmp.eq.f32.partialorder %v3148, %v3150
    %v3152 = vsel %vm3151, %v3147, inf
    %3153 = vmin.xlane.f32.xlu0 %v3152
    %v3154 = vpop.xlane.xlu0 %3153
    %v3155 = vcvt.f32.s32 %v3154
    %v3156 = vcvt.f32.s32 %v3150
    %v3157 = vshll.u32 %v3156, 16
    %v3158 = vadd.s32 %v3157, %v3155
    %vm3159 = vcmp.lt.s32.totalorder %v3158, 127
    %v3160 = vsel %vm3159, %v3158, 127
    %vm3161 = vcmp.eq.s32.totalorder %v124, 9
    %v3162 = vsel %vm3161, %v3160, %v2903
    %vm3163 = vcmp.eq.s32.totalorder %v124, %v3160
    %v3164 = vsel %vm3163, 1, 0
    %v3165 = vcvt.s32.f32 %v3164
    %v3166 = vpack.c.bf16 %v3165, %v3165
    %3167 = vmatprep.subr.bf16.mxu0 %v291
    %3168 = vmatpush1.bf16.msra.mxu0 %v290
    %3169 = vmatprep.subr.bf16.mxu0 %v295
    %3170 = vmatpush1.bf16.msra.mxu0 %v294
    %3171 = vmatprep.subr.bf16.mxu0 %v299
    %3172 = vmatpush1.bf16.msra.mxu0 %v298
    %3173 = vmatprep.subr.bf16.mxu0 %v303
    %3174 = vmatpush1.bf16.msra.mxu0 %v302
    %3175 = vmatprep.subr.bf16.mxu0 %v307
    %3176 = vmatpush1.bf16.msra.mxu0 %v306
    %3177 = vmatprep.subr.bf16.mxu0 %v311
    %3178 = vmatpush1.bf16.msra.mxu0 %v310
    %3179 = vmatprep.subr.bf16.mxu0 %v315
    %3180 = vmatpush1.bf16.msra.mxu0 %v314
    %3181 = vmatprep.subr.bf16.mxu0 %v319
    %3182 = vmatpush1.bf16.msra.mxu0 %v318
    %3183 = vmatprep.subr.bf16.mxu0 0
    %3184 = vmatpush1.bf16.msra.mxu0 0
    %3185 = vmatprep.subr.bf16.mxu0 0
    %3186 = vmatpush1.bf16.msra.mxu0 0
    %3187 = vmatprep.subr.bf16.mxu0 0
    %3188 = vmatpush1.bf16.msra.mxu0 0
    %3189 = vmatprep.subr.bf16.mxu0 0
    %3190 = vmatpush1.bf16.msra.mxu0 0
    %3191 = vmatprep.subr.bf16.mxu0 0
    %3192 = vmatpush1.bf16.msra.mxu0 0
    %3193 = vmatprep.subr.bf16.mxu0 0
    %3194 = vmatpush1.bf16.msra.mxu0 0
    %3195 = vmatprep.subr.bf16.mxu0 0
    %3196 = vmatpush1.bf16.msra.mxu0 0
    %3197 = vmatprep.subr.bf16.mxu0 0
    %3198 = vmatpush1.bf16.msra.mxu0 0
    %3199 = vmatprep.mubr.bf16.mxu0 0
    %3200 = vmatmul.mubr.bf16.gmra.mrb[0].mxu0 %v3166
    %v3201 = vpop.f32.mrb[0].mxu0
    %v3202 = vadd.f32 0.0, %v3201
    %v3203 = vpop.f32.mrb[0].mxu0
    %v3204 = vadd.f32 0.0, %v3203
    %v3205 = vpop.f32.mrb[0].mxu0
    %v3206 = vpop.f32.mrb[0].mxu0
    %3207 = vdwg.mxu0
    %3208 = vmatprep.subr.bf16.mxu0 %v293
    %3209 = vmatpush1.bf16.msra.mxu0 %v292
    %3210 = vmatprep.subr.bf16.mxu0 %v297
    %3211 = vmatpush1.bf16.msra.mxu0 %v296
    %3212 = vmatprep.subr.bf16.mxu0 %v301
    %3213 = vmatpush1.bf16.msra.mxu0 %v300
    %3214 = vmatprep.subr.bf16.mxu0 %v305
    %3215 = vmatpush1.bf16.msra.mxu0 %v304
    %3216 = vmatprep.subr.bf16.mxu0 %v309
    %3217 = vmatpush1.bf16.msra.mxu0 %v308
    %3218 = vmatprep.subr.bf16.mxu0 %v313
    %3219 = vmatpush1.bf16.msra.mxu0 %v312
    %3220 = vmatprep.subr.bf16.mxu0 %v317
    %3221 = vmatpush1.bf16.msra.mxu0 %v316
    %3222 = vmatprep.subr.bf16.mxu0 %v321
    %3223 = vmatpush1.bf16.msra.mxu0 %v320
    %3224 = vmatprep.subr.bf16.mxu0 0
    %3225 = vmatpush1.bf16.msra.mxu0 0
    %3226 = vmatprep.subr.bf16.mxu0 0
    %3227 = vmatpush1.bf16.msra.mxu0 0
    %3228 = vmatprep.subr.bf16.mxu0 0
    %3229 = vmatpush1.bf16.msra.mxu0 0
    %3230 = vmatprep.subr.bf16.mxu0 0
    %3231 = vmatpush1.bf16.msra.mxu0 0
    %3232 = vmatprep.subr.bf16.mxu0 0
    %3233 = vmatpush1.bf16.msra.mxu0 0
    %3234 = vmatprep.subr.bf16.mxu0 0
    %3235 = vmatpush1.bf16.msra.mxu0 0
    %3236 = vmatprep.subr.bf16.mxu0 0
    %3237 = vmatpush1.bf16.msra.mxu0 0
    %3238 = vmatprep.subr.bf16.mxu0 0
    %3239 = vmatpush1.bf16.msra.mxu0 0
    %3240 = vmatprep.mubr.bf16.mxu0 0
    %3241 = vmatmul.mubr.bf16.gmra.mrb[0].mxu0 %v3166
    %v3242 = vpop.f32.mrb[0].mxu0
    %v3243 = vadd.f32 0.0, %v3242
    %v3244 = vpop.f32.mrb[0].mxu0
    %v3245 = vadd.f32 0.0, %v3244
    %v3246 = vpop.f32.mrb[0].mxu0
    %v3247 = vpop.f32.mrb[0].mxu0
    %3248 = vdwg.mxu0
    %3249 = vmatprep.subr.bf16.mxu0 %v533
    %3250 = vmatpush1.bf16.msra.mxu0 %v532
    %3251 = vmatprep.subr.bf16.mxu0 %v537
    %3252 = vmatpush1.bf16.msra.mxu0 %v536
    %3253 = vmatprep.subr.bf16.mxu0 %v541
    %3254 = vmatpush1.bf16.msra.mxu0 %v540
    %3255 = vmatprep.subr.bf16.mxu0 %v545
    %3256 = vmatpush1.bf16.msra.mxu0 %v544
    %3257 = vmatprep.subr.bf16.mxu0 %v549
    %3258 = vmatpush1.bf16.msra.mxu0 %v548
    %3259 = vmatprep.subr.bf16.mxu0 %v553
    %3260 = vmatpush1.bf16.msra.mxu0 %v552
    %3261 = vmatprep.subr.bf16.mxu0 %v557
    %3262 = vmatpush1.bf16.msra.mxu0 %v556
    %3263 = vmatprep.subr.bf16.mxu0 %v561
    %3264 = vmatpush1.bf16.msra.mxu0 %v560
    %3265 = vmatprep.subr.bf16.mxu0 0
    %3266 = vmatpush1.bf16.msra.mxu0 0
    %3267 = vmatprep.subr.bf16.mxu0 0
    %3268 = vmatpush1.bf16.msra.mxu0 0
    %3269 = vmatprep.subr.bf16.mxu0 0
    %3270 = vmatpush1.bf16.msra.mxu0 0
    %3271 = vmatprep.subr.bf16.mxu0 0
    %3272 = vmatpush1.bf16.msra.mxu0 0
    %3273 = vmatprep.subr.bf16.mxu0 0
    %3274 = vmatpush1.bf16.msra.mxu0 0
    %3275 = vmatprep.subr.bf16.mxu0 0
    %3276 = vmatpush1.bf16.msra.mxu0 0
    %3277 = vmatprep.subr.bf16.mxu0 0
    %3278 = vmatpush1.bf16.msra.mxu0 0
    %3279 = vmatprep.subr.bf16.mxu0 0
    %3280 = vmatpush1.bf16.msra.mxu0 0
    %3281 = vmatprep.mubr.bf16.mxu0 0
    %3282 = vmatmul.mubr.bf16.gmra.mrb[0].mxu0 %v3100
    %v3283 = vpop.f32.mrb[0].mxu0
    %v3284 = vadd.f32 %v3202, %v3283
    %v3285 = vpop.f32.mrb[0].mxu0
    %v3286 = vadd.f32 %v3204, %v3285
    %v3287 = vpop.f32.mrb[0].mxu0
    %v3288 = vpop.f32.mrb[0].mxu0
    %3289 = vdwg.mxu0
    %3290 = vmatprep.subr.bf16.mxu0 %v535
    %3291 = vmatpush1.bf16.msra.mxu0 %v534
    %3292 = vmatprep.subr.bf16.mxu0 %v539
    %3293 = vmatpush1.bf16.msra.mxu0 %v538
    %3294 = vmatprep.subr.bf16.mxu0 %v543
    %3295 = vmatpush1.bf16.msra.mxu0 %v542
    %3296 = vmatprep.subr.bf16.mxu0 %v547
    %3297 = vmatpush1.bf16.msra.mxu0 %v546
    %3298 = vmatprep.subr.bf16.mxu0 %v551
    %3299 = vmatpush1.bf16.msra.mxu0 %v550
    %3300 = vmatprep.subr.bf16.mxu0 %v555
    %3301 = vmatpush1.bf16.msra.mxu0 %v554
    %3302 = vmatprep.subr.bf16.mxu0 %v559
    %3303 = vmatpush1.bf16.msra.mxu0 %v558
    %3304 = vmatprep.subr.bf16.mxu0 %v563
    %3305 = vmatpush1.bf16.msra.mxu0 %v562
    %3306 = vmatprep.subr.bf16.mxu0 0
    %3307 = vmatpush1.bf16.msra.mxu0 0
    %3308 = vmatprep.subr.bf16.mxu0 0
    %3309 = vmatpush1.bf16.msra.mxu0 0
    %3310 = vmatprep.subr.bf16.mxu0 0
    %3311 = vmatpush1.bf16.msra.mxu0 0
    %3312 = vmatprep.subr.bf16.mxu0 0
    %3313 = vmatpush1.bf16.msra.mxu0 0
    %3314 = vmatprep.subr.bf16.mxu0 0
    %3315 = vmatpush1.bf16.msra.mxu0 0
    %3316 = vmatprep.subr.bf16.mxu0 0
    %3317 = vmatpush1.bf16.msra.mxu0 0
    %3318 = vmatprep.subr.bf16.mxu0 0
    %3319 = vmatpush1.bf16.msra.mxu0 0
    %3320 = vmatprep.subr.bf16.mxu0 0
    %3321 = vmatpush1.bf16.msra.mxu0 0
    %3322 = vmatprep.mubr.bf16.mxu0 0
    %3323 = vmatmul.mubr.bf16.gmra.mrb[0].mxu0 %v3100
    %v3324 = vpop.f32.mrb[0].mxu0
    %v3325 = vadd.f32 %v3243, %v3324
    %v3326 = vpop.f32.mrb[0].mxu0
    %v3327 = vadd.f32 %v3245, %v3326
    %v3328 = vpop.f32.mrb[0].mxu0
    %v3329 = vpop.f32.mrb[0].mxu0
    %3330 = vdwg.mxu0
    %v3331 = vadd.f32 %v3284, %v99
    %v3332 = vadd.f32 %v3286, %v103
    %v3333 = vadd.f32 %v3325, %v107
    %v3334 = vadd.f32 %v3327, %v111
    %v3335 = vxor.u32 %v3331, 2147483648
    %v3336 = vmul.f32 %v3335, 1.442695
    %v3337 = vpow.pop %v3336
    %v3338 = vadd.f32 %v3337, 1.0
    %v3339 = vrcp.pop %v3338
    %v3340 = vmul.f32 1.0, %v3339
    %v3341 = vxor.u32 %v3332, 2147483648
    %v3342 = vmul.f32 %v3341, 1.442695
    %v3343 = vpow.pop %v3342
    %v3344 = vadd.f32 %v3343, 1.0
    %v3345 = vrcp.pop %v3344
    %v3346 = vmul.f32 1.0, %v3345
    %v3347 = vtanh.pop %v3333
    %v3348 = vxor.u32 %v3334, 2147483648
    %v3349 = vmul.f32 %v3348, 1.442695
    %v3350 = vpow.pop %v3349
    %v3351 = vadd.f32 %v3350, 1.0
    %v3352 = vrcp.pop %v3351
    %v3353 = vmul.f32 1.0, %v3352
    %v3354 = vmul.f32 %v3346, %v3097
    %v3355 = vmul.f32 %v3340, %v3347
    %v3356 = vadd.f32 %v3354, %v3355
    %v3357 = vtanh.pop %v3356
    %v3358 = vmul.f32 %v3353, %v3357
    %v3359 = vpack.c.bf16 %v3358, %v3358
    %3360 = vmatprep.subr.bf16.mxu0 0
    %3361 = vmatpush1.bf16.msra.mxu0 %v755
    %3362 = vmatprep.subr.bf16.mxu0 0
    %3363 = vmatpush1.bf16.msra.mxu0 %v756
    %3364 = vmatprep.subr.bf16.mxu0 0
    %3365 = vmatpush1.bf16.msra.mxu0 %v757
    %3366 = vmatprep.subr.bf16.mxu0 0
    %3367 = vmatpush1.bf16.msra.mxu0 %v758
    %3368 = vmatprep.subr.bf16.mxu0 0
    %3369 = vmatpush1.bf16.msra.mxu0 %v759
    %3370 = vmatprep.subr.bf16.mxu0 0
    %3371 = vmatpush1.bf16.msra.mxu0 %v760
    %3372 = vmatprep.subr.bf16.mxu0 0
    %3373 = vmatpush1.bf16.msra.mxu0 %v761
    %3374 = vmatprep.subr.bf16.mxu0 0
    %3375 = vmatpush1.bf16.msra.mxu0 %v762
    %3376 = vmatprep.subr.bf16.mxu0 0
    %3377 = vmatpush1.bf16.msra.mxu0 0
    %3378 = vmatprep.subr.bf16.mxu0 0
    %3379 = vmatpush1.bf16.msra.mxu0 0
    %3380 = vmatprep.subr.bf16.mxu0 0
    %3381 = vmatpush1.bf16.msra.mxu0 0
    %3382 = vmatprep.subr.bf16.mxu0 0
    %3383 = vmatpush1.bf16.msra.mxu0 0
    %3384 = vmatprep.subr.bf16.mxu0 0
    %3385 = vmatpush1.bf16.msra.mxu0 0
    %3386 = vmatprep.subr.bf16.mxu0 0
    %3387 = vmatpush1.bf16.msra.mxu0 0
    %3388 = vmatprep.subr.bf16.mxu0 0
    %3389 = vmatpush1.bf16.msra.mxu0 0
    %3390 = vmatprep.subr.bf16.mxu0 0
    %3391 = vmatpush1.bf16.msra.mxu0 0
    %3392 = vmatprep.mubr.bf16.mxu0 0
    %3393 = vmatmul.mubr.bf16.gmra.mrb[0].mxu0 %v3359
    %v3394 = vpop.f32.mrb[0].mxu0
    %v3395 = vadd.f32 %v121, %v3394
    %v3396 = vpop.f32.mrb[0].mxu0
    %v3397 = vpop.f32.mrb[0].mxu0
    %v3398 = vpop.f32.mrb[0].mxu0
    %3399 = vdwg.mxu0
    %3400 = vmax.xlane.f32.xlu0 %v3395
    %v3401 = vpop.xlane.xlu0 %3400
    %vm3402 = vcmp.eq.f32.partialorder %v3395, %v3401
    %v3403 = vsel %vm3402, %v124, 128
    %v3404 = vand.u32 %v3403, 65535
    %v3405 = vshra.s32 %v3403, 16
    %v3406 = vcvt.s32.f32 %v3404
    %v3407 = vcvt.s32.f32 %v3405
    %3408 = vmin.xlane.f32.xlu0 %v3407
    %v3409 = vpop.xlane.xlu0 %3408
    %vm3410 = vcmp.eq.f32.partialorder %v3407, %v3409
    %v3411 = vsel %vm3410, %v3406, inf
    %3412 = vmin.xlane.f32.xlu0 %v3411
    %v3413 = vpop.xlane.xlu0 %3412
    %v3414 = vcvt.f32.s32 %v3413
    %v3415 = vcvt.f32.s32 %v3409
    %v3416 = vshll.u32 %v3415, 16
    %v3417 = vadd.s32 %v3416, %v3414
    %vm3418 = vcmp.lt.s32.totalorder %v3417, 127
    %v3419 = vsel %vm3418, %v3417, 127
    %vm3420 = vcmp.eq.s32.totalorder %v124, 10
    %v3421 = vsel %vm3420, %v3419, %v3162
    %vm3422 = vcmp.eq.s32.totalorder %v124, %v3419
    %v3423 = vsel %vm3422, 1, 0
    %v3424 = vcvt.s32.f32 %v3423
    %v3425 = vpack.c.bf16 %v3424, %v3424
    %3426 = vmatprep.subr.bf16.mxu0 %v291
    %3427 = vmatpush1.bf16.msra.mxu0 %v290
    %3428 = vmatprep.subr.bf16.mxu0 %v295
    %3429 = vmatpush1.bf16.msra.mxu0 %v294
    %3430 = vmatprep.subr.bf16.mxu0 %v299
    %3431 = vmatpush1.bf16.msra.mxu0 %v298
    %3432 = vmatprep.subr.bf16.mxu0 %v303
    %3433 = vmatpush1.bf16.msra.mxu0 %v302
    %3434 = vmatprep.subr.bf16.mxu0 %v307
    %3435 = vmatpush1.bf16.msra.mxu0 %v306
    %3436 = vmatprep.subr.bf16.mxu0 %v311
    %3437 = vmatpush1.bf16.msra.mxu0 %v310
    %3438 = vmatprep.subr.bf16.mxu0 %v315
    %3439 = vmatpush1.bf16.msra.mxu0 %v314
    %3440 = vmatprep.subr.bf16.mxu0 %v319
    %3441 = vmatpush1.bf16.msra.mxu0 %v318
    %3442 = vmatprep.subr.bf16.mxu0 0
    %3443 = vmatpush1.bf16.msra.mxu0 0
    %3444 = vmatprep.subr.bf16.mxu0 0
    %3445 = vmatpush1.bf16.msra.mxu0 0
    %3446 = vmatprep.subr.bf16.mxu0 0
    %3447 = vmatpush1.bf16.msra.mxu0 0
    %3448 = vmatprep.subr.bf16.mxu0 0
    %3449 = vmatpush1.bf16.msra.mxu0 0
    %3450 = vmatprep.subr.bf16.mxu0 0
    %3451 = vmatpush1.bf16.msra.mxu0 0
    %3452 = vmatprep.subr.bf16.mxu0 0
    %3453 = vmatpush1.bf16.msra.mxu0 0
    %3454 = vmatprep.subr.bf16.mxu0 0
    %3455 = vmatpush1.bf16.msra.mxu0 0
    %3456 = vmatprep.subr.bf16.mxu0 0
    %3457 = vmatpush1.bf16.msra.mxu0 0
    %3458 = vmatprep.mubr.bf16.mxu0 0
    %3459 = vmatmul.mubr.bf16.gmra.mrb[0].mxu0 %v3425
    %v3460 = vpop.f32.mrb[0].mxu0
    %v3461 = vadd.f32 0.0, %v3460
    %v3462 = vpop.f32.mrb[0].mxu0
    %v3463 = vadd.f32 0.0, %v3462
    %v3464 = vpop.f32.mrb[0].mxu0
    %v3465 = vpop.f32.mrb[0].mxu0
    %3466 = vdwg.mxu0
    %3467 = vmatprep.subr.bf16.mxu0 %v293
    %3468 = vmatpush1.bf16.msra.mxu0 %v292
    %3469 = vmatprep.subr.bf16.mxu0 %v297
    %3470 = vmatpush1.bf16.msra.mxu0 %v296
    %3471 = vmatprep.subr.bf16.mxu0 %v301
    %3472 = vmatpush1.bf16.msra.mxu0 %v300
    %3473 = vmatprep.subr.bf16.mxu0 %v305
    %3474 = vmatpush1.bf16.msra.mxu0 %v304
    %3475 = vmatprep.subr.bf16.mxu0 %v309
    %3476 = vmatpush1.bf16.msra.mxu0 %v308
    %3477 = vmatprep.subr.bf16.mxu0 %v313
    %3478 = vmatpush1.bf16.msra.mxu0 %v312
    %3479 = vmatprep.subr.bf16.mxu0 %v317
    %3480 = vmatpush1.bf16.msra.mxu0 %v316
    %3481 = vmatprep.subr.bf16.mxu0 %v321
    %3482 = vmatpush1.bf16.msra.mxu0 %v320
    %3483 = vmatprep.subr.bf16.mxu0 0
    %3484 = vmatpush1.bf16.msra.mxu0 0
    %3485 = vmatprep.subr.bf16.mxu0 0
    %3486 = vmatpush1.bf16.msra.mxu0 0
    %3487 = vmatprep.subr.bf16.mxu0 0
    %3488 = vmatpush1.bf16.msra.mxu0 0
    %3489 = vmatprep.subr.bf16.mxu0 0
    %3490 = vmatpush1.bf16.msra.mxu0 0
    %3491 = vmatprep.subr.bf16.mxu0 0
    %3492 = vmatpush1.bf16.msra.mxu0 0
    %3493 = vmatprep.subr.bf16.mxu0 0
    %3494 = vmatpush1.bf16.msra.mxu0 0
    %3495 = vmatprep.subr.bf16.mxu0 0
    %3496 = vmatpush1.bf16.msra.mxu0 0
    %3497 = vmatprep.subr.bf16.mxu0 0
    %3498 = vmatpush1.bf16.msra.mxu0 0
    %3499 = vmatprep.mubr.bf16.mxu0 0
    %3500 = vmatmul.mubr.bf16.gmra.mrb[0].mxu0 %v3425
    %v3501 = vpop.f32.mrb[0].mxu0
    %v3502 = vadd.f32 0.0, %v3501
    %v3503 = vpop.f32.mrb[0].mxu0
    %v3504 = vadd.f32 0.0, %v3503
    %v3505 = vpop.f32.mrb[0].mxu0
    %v3506 = vpop.f32.mrb[0].mxu0
    %3507 = vdwg.mxu0
    %3508 = vmatprep.subr.bf16.mxu0 %v533
    %3509 = vmatpush1.bf16.msra.mxu0 %v532
    %3510 = vmatprep.subr.bf16.mxu0 %v537
    %3511 = vmatpush1.bf16.msra.mxu0 %v536
    %3512 = vmatprep.subr.bf16.mxu0 %v541
    %3513 = vmatpush1.bf16.msra.mxu0 %v540
    %3514 = vmatprep.subr.bf16.mxu0 %v545
    %3515 = vmatpush1.bf16.msra.mxu0 %v544
    %3516 = vmatprep.subr.bf16.mxu0 %v549
    %3517 = vmatpush1.bf16.msra.mxu0 %v548
    %3518 = vmatprep.subr.bf16.mxu0 %v553
    %3519 = vmatpush1.bf16.msra.mxu0 %v552
    %3520 = vmatprep.subr.bf16.mxu0 %v557
    %3521 = vmatpush1.bf16.msra.mxu0 %v556
    %3522 = vmatprep.subr.bf16.mxu0 %v561
    %3523 = vmatpush1.bf16.msra.mxu0 %v560
    %3524 = vmatprep.subr.bf16.mxu0 0
    %3525 = vmatpush1.bf16.msra.mxu0 0
    %3526 = vmatprep.subr.bf16.mxu0 0
    %3527 = vmatpush1.bf16.msra.mxu0 0
    %3528 = vmatprep.subr.bf16.mxu0 0
    %3529 = vmatpush1.bf16.msra.mxu0 0
    %3530 = vmatprep.subr.bf16.mxu0 0
    %3531 = vmatpush1.bf16.msra.mxu0 0
    %3532 = vmatprep.subr.bf16.mxu0 0
    %3533 = vmatpush1.bf16.msra.mxu0 0
    %3534 = vmatprep.subr.bf16.mxu0 0
    %3535 = vmatpush1.bf16.msra.mxu0 0
    %3536 = vmatprep.subr.bf16.mxu0 0
    %3537 = vmatpush1.bf16.msra.mxu0 0
    %3538 = vmatprep.subr.bf16.mxu0 0
    %3539 = vmatpush1.bf16.msra.mxu0 0
    %3540 = vmatprep.mubr.bf16.mxu0 0
    %3541 = vmatmul.mubr.bf16.gmra.mrb[0].mxu0 %v3359
    %v3542 = vpop.f32.mrb[0].mxu0
    %v3543 = vadd.f32 %v3461, %v3542
    %v3544 = vpop.f32.mrb[0].mxu0
    %v3545 = vadd.f32 %v3463, %v3544
    %v3546 = vpop.f32.mrb[0].mxu0
    %v3547 = vpop.f32.mrb[0].mxu0
    %3548 = vdwg.mxu0
    %3549 = vmatprep.subr.bf16.mxu0 %v535
    %3550 = vmatpush1.bf16.msra.mxu0 %v534
    %3551 = vmatprep.subr.bf16.mxu0 %v539
    %3552 = vmatpush1.bf16.msra.mxu0 %v538
    %3553 = vmatprep.subr.bf16.mxu0 %v543
    %3554 = vmatpush1.bf16.msra.mxu0 %v542
    %3555 = vmatprep.subr.bf16.mxu0 %v547
    %3556 = vmatpush1.bf16.msra.mxu0 %v546
    %3557 = vmatprep.subr.bf16.mxu0 %v551
    %3558 = vmatpush1.bf16.msra.mxu0 %v550
    %3559 = vmatprep.subr.bf16.mxu0 %v555
    %3560 = vmatpush1.bf16.msra.mxu0 %v554
    %3561 = vmatprep.subr.bf16.mxu0 %v559
    %3562 = vmatpush1.bf16.msra.mxu0 %v558
    %3563 = vmatprep.subr.bf16.mxu0 %v563
    %3564 = vmatpush1.bf16.msra.mxu0 %v562
    %3565 = vmatprep.subr.bf16.mxu0 0
    %3566 = vmatpush1.bf16.msra.mxu0 0
    %3567 = vmatprep.subr.bf16.mxu0 0
    %3568 = vmatpush1.bf16.msra.mxu0 0
    %3569 = vmatprep.subr.bf16.mxu0 0
    %3570 = vmatpush1.bf16.msra.mxu0 0
    %3571 = vmatprep.subr.bf16.mxu0 0
    %3572 = vmatpush1.bf16.msra.mxu0 0
    %3573 = vmatprep.subr.bf16.mxu0 0
    %3574 = vmatpush1.bf16.msra.mxu0 0
    %3575 = vmatprep.subr.bf16.mxu0 0
    %3576 = vmatpush1.bf16.msra.mxu0 0
    %3577 = vmatprep.subr.bf16.mxu0 0
    %3578 = vmatpush1.bf16.msra.mxu0 0
    %3579 = vmatprep.subr.bf16.mxu0 0
    %3580 = vmatpush1.bf16.msra.mxu0 0
    %3581 = vmatprep.mubr.bf16.mxu0 0
    %3582 = vmatmul.mubr.bf16.gmra.mrb[0].mxu0 %v3359
    %v3583 = vpop.f32.mrb[0].mxu0
    %v3584 = vadd.f32 %v3502, %v3583
    %v3585 = vpop.f32.mrb[0].mxu0
    %v3586 = vadd.f32 %v3504, %v3585
    %v3587 = vpop.f32.mrb[0].mxu0
    %v3588 = vpop.f32.mrb[0].mxu0
    %3589 = vdwg.mxu0
    %v3590 = vadd.f32 %v3543, %v99
    %v3591 = vadd.f32 %v3545, %v103
    %v3592 = vadd.f32 %v3584, %v107
    %v3593 = vadd.f32 %v3586, %v111
    %v3594 = vxor.u32 %v3590, 2147483648
    %v3595 = vmul.f32 %v3594, 1.442695
    %v3596 = vpow.pop %v3595
    %v3597 = vadd.f32 %v3596, 1.0
    %v3598 = vrcp.pop %v3597
    %v3599 = vmul.f32 1.0, %v3598
    %v3600 = vxor.u32 %v3591, 2147483648
    %v3601 = vmul.f32 %v3600, 1.442695
    %v3602 = vpow.pop %v3601
    %v3603 = vadd.f32 %v3602, 1.0
    %v3604 = vrcp.pop %v3603
    %v3605 = vmul.f32 1.0, %v3604
    %v3606 = vtanh.pop %v3592
    %v3607 = vxor.u32 %v3593, 2147483648
    %v3608 = vmul.f32 %v3607, 1.442695
    %v3609 = vpow.pop %v3608
    %v3610 = vadd.f32 %v3609, 1.0
    %v3611 = vrcp.pop %v3610
    %v3612 = vmul.f32 1.0, %v3611
    %v3613 = vmul.f32 %v3605, %v3356
    %v3614 = vmul.f32 %v3599, %v3606
    %v3615 = vadd.f32 %v3613, %v3614
    %v3616 = vtanh.pop %v3615
    %v3617 = vmul.f32 %v3612, %v3616
    %v3618 = vpack.c.bf16 %v3617, %v3617
    %3619 = vmatprep.subr.bf16.mxu0 0
    %3620 = vmatpush1.bf16.msra.mxu0 %v755
    %3621 = vmatprep.subr.bf16.mxu0 0
    %3622 = vmatpush1.bf16.msra.mxu0 %v756
    %3623 = vmatprep.subr.bf16.mxu0 0
    %3624 = vmatpush1.bf16.msra.mxu0 %v757
    %3625 = vmatprep.subr.bf16.mxu0 0
    %3626 = vmatpush1.bf16.msra.mxu0 %v758
    %3627 = vmatprep.subr.bf16.mxu0 0
    %3628 = vmatpush1.bf16.msra.mxu0 %v759
    %3629 = vmatprep.subr.bf16.mxu0 0
    %3630 = vmatpush1.bf16.msra.mxu0 %v760
    %3631 = vmatprep.subr.bf16.mxu0 0
    %3632 = vmatpush1.bf16.msra.mxu0 %v761
    %3633 = vmatprep.subr.bf16.mxu0 0
    %3634 = vmatpush1.bf16.msra.mxu0 %v762
    %3635 = vmatprep.subr.bf16.mxu0 0
    %3636 = vmatpush1.bf16.msra.mxu0 0
    %3637 = vmatprep.subr.bf16.mxu0 0
    %3638 = vmatpush1.bf16.msra.mxu0 0
    %3639 = vmatprep.subr.bf16.mxu0 0
    %3640 = vmatpush1.bf16.msra.mxu0 0
    %3641 = vmatprep.subr.bf16.mxu0 0
    %3642 = vmatpush1.bf16.msra.mxu0 0
    %3643 = vmatprep.subr.bf16.mxu0 0
    %3644 = vmatpush1.bf16.msra.mxu0 0
    %3645 = vmatprep.subr.bf16.mxu0 0
    %3646 = vmatpush1.bf16.msra.mxu0 0
    %3647 = vmatprep.subr.bf16.mxu0 0
    %3648 = vmatpush1.bf16.msra.mxu0 0
    %3649 = vmatprep.subr.bf16.mxu0 0
    %3650 = vmatpush1.bf16.msra.mxu0 0
    %3651 = vmatprep.mubr.bf16.mxu0 0
    %3652 = vmatmul.mubr.bf16.gmra.mrb[0].mxu0 %v3618
    %v3653 = vpop.f32.mrb[0].mxu0
    %v3654 = vadd.f32 %v121, %v3653
    %v3655 = vpop.f32.mrb[0].mxu0
    %v3656 = vpop.f32.mrb[0].mxu0
    %v3657 = vpop.f32.mrb[0].mxu0
    %3658 = vdwg.mxu0
    %3659 = vmax.xlane.f32.xlu0 %v3654
    %v3660 = vpop.xlane.xlu0 %3659
    %vm3661 = vcmp.eq.f32.partialorder %v3654, %v3660
    %v3662 = vsel %vm3661, %v124, 128
    %v3663 = vand.u32 %v3662, 65535
    %v3664 = vshra.s32 %v3662, 16
    %v3665 = vcvt.s32.f32 %v3663
    %v3666 = vcvt.s32.f32 %v3664
    %3667 = vmin.xlane.f32.xlu0 %v3666
    %v3668 = vpop.xlane.xlu0 %3667
    %vm3669 = vcmp.eq.f32.partialorder %v3666, %v3668
    %v3670 = vsel %vm3669, %v3665, inf
    %3671 = vmin.xlane.f32.xlu0 %v3670
    %v3672 = vpop.xlane.xlu0 %3671
    %v3673 = vcvt.f32.s32 %v3672
    %v3674 = vcvt.f32.s32 %v3668
    %v3675 = vshll.u32 %v3674, 16
    %v3676 = vadd.s32 %v3675, %v3673
    %vm3677 = vcmp.lt.s32.totalorder %v3676, 127
    %v3678 = vsel %vm3677, %v3676, 127
    %vm3679 = vcmp.eq.s32.totalorder %v124, 11
    %v3680 = vsel %vm3679, %v3678, %v3421
    %vm3681 = vcmp.eq.s32.totalorder %v124, %v3678
    %v3682 = vsel %vm3681, 1, 0
    %v3683 = vcvt.s32.f32 %v3682
    %v3684 = vpack.c.bf16 %v3683, %v3683
    %3685 = vmatprep.subr.bf16.mxu0 %v291
    %3686 = vmatpush1.bf16.msra.mxu0 %v290
    %3687 = vmatprep.subr.bf16.mxu0 %v295
    %3688 = vmatpush1.bf16.msra.mxu0 %v294
    %3689 = vmatprep.subr.bf16.mxu0 %v299
    %3690 = vmatpush1.bf16.msra.mxu0 %v298
    %3691 = vmatprep.subr.bf16.mxu0 %v303
    %3692 = vmatpush1.bf16.msra.mxu0 %v302
    %3693 = vmatprep.subr.bf16.mxu0 %v307
    %3694 = vmatpush1.bf16.msra.mxu0 %v306
    %3695 = vmatprep.subr.bf16.mxu0 %v311
    %3696 = vmatpush1.bf16.msra.mxu0 %v310
    %3697 = vmatprep.subr.bf16.mxu0 %v315
    %3698 = vmatpush1.bf16.msra.mxu0 %v314
    %3699 = vmatprep.subr.bf16.mxu0 %v319
    %3700 = vmatpush1.bf16.msra.mxu0 %v318
    %3701 = vmatprep.subr.bf16.mxu0 0
    %3702 = vmatpush1.bf16.msra.mxu0 0
    %3703 = vmatprep.subr.bf16.mxu0 0
    %3704 = vmatpush1.bf16.msra.mxu0 0
    %3705 = vmatprep.subr.bf16.mxu0 0
    %3706 = vmatpush1.bf16.msra.mxu0 0
    %3707 = vmatprep.subr.bf16.mxu0 0
    %3708 = vmatpush1.bf16.msra.mxu0 0
    %3709 = vmatprep.subr.bf16.mxu0 0
    %3710 = vmatpush1.bf16.msra.mxu0 0
    %3711 = vmatprep.subr.bf16.mxu0 0
    %3712 = vmatpush1.bf16.msra.mxu0 0
    %3713 = vmatprep.subr.bf16.mxu0 0
    %3714 = vmatpush1.bf16.msra.mxu0 0
    %3715 = vmatprep.subr.bf16.mxu0 0
    %3716 = vmatpush1.bf16.msra.mxu0 0
    %3717 = vmatprep.mubr.bf16.mxu0 0
    %3718 = vmatmul.mubr.bf16.gmra.mrb[0].mxu0 %v3684
    %v3719 = vpop.f32.mrb[0].mxu0
    %v3720 = vadd.f32 0.0, %v3719
    %v3721 = vpop.f32.mrb[0].mxu0
    %v3722 = vadd.f32 0.0, %v3721
    %v3723 = vpop.f32.mrb[0].mxu0
    %v3724 = vpop.f32.mrb[0].mxu0
    %3725 = vdwg.mxu0
    %3726 = vmatprep.subr.bf16.mxu0 %v293
    %3727 = vmatpush1.bf16.msra.mxu0 %v292
    %3728 = vmatprep.subr.bf16.mxu0 %v297
    %3729 = vmatpush1.bf16.msra.mxu0 %v296
    %3730 = vmatprep.subr.bf16.mxu0 %v301
    %3731 = vmatpush1.bf16.msra.mxu0 %v300
    %3732 = vmatprep.subr.bf16.mxu0 %v305
    %3733 = vmatpush1.bf16.msra.mxu0 %v304
    %3734 = vmatprep.subr.bf16.mxu0 %v309
    %3735 = vmatpush1.bf16.msra.mxu0 %v308
    %3736 = vmatprep.subr.bf16.mxu0 %v313
    %3737 = vmatpush1.bf16.msra.mxu0 %v312
    %3738 = vmatprep.subr.bf16.mxu0 %v317
    %3739 = vmatpush1.bf16.msra.mxu0 %v316
    %3740 = vmatprep.subr.bf16.mxu0 %v321
    %3741 = vmatpush1.bf16.msra.mxu0 %v320
    %3742 = vmatprep.subr.bf16.mxu0 0
    %3743 = vmatpush1.bf16.msra.mxu0 0
    %3744 = vmatprep.subr.bf16.mxu0 0
    %3745 = vmatpush1.bf16.msra.mxu0 0
    %3746 = vmatprep.subr.bf16.mxu0 0
    %3747 = vmatpush1.bf16.msra.mxu0 0
    %3748 = vmatprep.subr.bf16.mxu0 0
    %3749 = vmatpush1.bf16.msra.mxu0 0
    %3750 = vmatprep.subr.bf16.mxu0 0
    %3751 = vmatpush1.bf16.msra.mxu0 0
    %3752 = vmatprep.subr.bf16.mxu0 0
    %3753 = vmatpush1.bf16.msra.mxu0 0
    %3754 = vmatprep.subr.bf16.mxu0 0
    %3755 = vmatpush1.bf16.msra.mxu0 0
    %3756 = vmatprep.subr.bf16.mxu0 0
    %3757 = vmatpush1.bf16.msra.mxu0 0
    %3758 = vmatprep.mubr.bf16.mxu0 0
    %3759 = vmatmul.mubr.bf16.gmra.mrb[0].mxu0 %v3684
    %v3760 = vpop.f32.mrb[0].mxu0
    %v3761 = vadd.f32 0.0, %v3760
    %v3762 = vpop.f32.mrb[0].mxu0
    %v3763 = vadd.f32 0.0, %v3762
    %v3764 = vpop.f32.mrb[0].mxu0
    %v3765 = vpop.f32.mrb[0].mxu0
    %3766 = vdwg.mxu0
    %3767 = vmatprep.subr.bf16.mxu0 %v533
    %3768 = vmatpush1.bf16.msra.mxu0 %v532
    %3769 = vmatprep.subr.bf16.mxu0 %v537
    %3770 = vmatpush1.bf16.msra.mxu0 %v536
    %3771 = vmatprep.subr.bf16.mxu0 %v541
    %3772 = vmatpush1.bf16.msra.mxu0 %v540
    %3773 = vmatprep.subr.bf16.mxu0 %v545
    %3774 = vmatpush1.bf16.msra.mxu0 %v544
    %3775 = vmatprep.subr.bf16.mxu0 %v549
    %3776 = vmatpush1.bf16.msra.mxu0 %v548
    %3777 = vmatprep.subr.bf16.mxu0 %v553
    %3778 = vmatpush1.bf16.msra.mxu0 %v552
    %3779 = vmatprep.subr.bf16.mxu0 %v557
    %3780 = vmatpush1.bf16.msra.mxu0 %v556
    %3781 = vmatprep.subr.bf16.mxu0 %v561
    %3782 = vmatpush1.bf16.msra.mxu0 %v560
    %3783 = vmatprep.subr.bf16.mxu0 0
    %3784 = vmatpush1.bf16.msra.mxu0 0
    %3785 = vmatprep.subr.bf16.mxu0 0
    %3786 = vmatpush1.bf16.msra.mxu0 0
    %3787 = vmatprep.subr.bf16.mxu0 0
    %3788 = vmatpush1.bf16.msra.mxu0 0
    %3789 = vmatprep.subr.bf16.mxu0 0
    %3790 = vmatpush1.bf16.msra.mxu0 0
    %3791 = vmatprep.subr.bf16.mxu0 0
    %3792 = vmatpush1.bf16.msra.mxu0 0
    %3793 = vmatprep.subr.bf16.mxu0 0
    %3794 = vmatpush1.bf16.msra.mxu0 0
    %3795 = vmatprep.subr.bf16.mxu0 0
    %3796 = vmatpush1.bf16.msra.mxu0 0
    %3797 = vmatprep.subr.bf16.mxu0 0
    %3798 = vmatpush1.bf16.msra.mxu0 0
    %3799 = vmatprep.mubr.bf16.mxu0 0
    %3800 = vmatmul.mubr.bf16.gmra.mrb[0].mxu0 %v3618
    %v3801 = vpop.f32.mrb[0].mxu0
    %v3802 = vadd.f32 %v3720, %v3801
    %v3803 = vpop.f32.mrb[0].mxu0
    %v3804 = vadd.f32 %v3722, %v3803
    %v3805 = vpop.f32.mrb[0].mxu0
    %v3806 = vpop.f32.mrb[0].mxu0
    %3807 = vdwg.mxu0
    %3808 = vmatprep.subr.bf16.mxu0 %v535
    %3809 = vmatpush1.bf16.msra.mxu0 %v534
    %3810 = vmatprep.subr.bf16.mxu0 %v539
    %3811 = vmatpush1.bf16.msra.mxu0 %v538
    %3812 = vmatprep.subr.bf16.mxu0 %v543
    %3813 = vmatpush1.bf16.msra.mxu0 %v542
    %3814 = vmatprep.subr.bf16.mxu0 %v547
    %3815 = vmatpush1.bf16.msra.mxu0 %v546
    %3816 = vmatprep.subr.bf16.mxu0 %v551
    %3817 = vmatpush1.bf16.msra.mxu0 %v550
    %3818 = vmatprep.subr.bf16.mxu0 %v555
    %3819 = vmatpush1.bf16.msra.mxu0 %v554
    %3820 = vmatprep.subr.bf16.mxu0 %v559
    %3821 = vmatpush1.bf16.msra.mxu0 %v558
    %3822 = vmatprep.subr.bf16.mxu0 %v563
    %3823 = vmatpush1.bf16.msra.mxu0 %v562
    %3824 = vmatprep.subr.bf16.mxu0 0
    %3825 = vmatpush1.bf16.msra.mxu0 0
    %3826 = vmatprep.subr.bf16.mxu0 0
    %3827 = vmatpush1.bf16.msra.mxu0 0
    %3828 = vmatprep.subr.bf16.mxu0 0
    %3829 = vmatpush1.bf16.msra.mxu0 0
    %3830 = vmatprep.subr.bf16.mxu0 0
    %3831 = vmatpush1.bf16.msra.mxu0 0
    %3832 = vmatprep.subr.bf16.mxu0 0
    %3833 = vmatpush1.bf16.msra.mxu0 0
    %3834 = vmatprep.subr.bf16.mxu0 0
    %3835 = vmatpush1.bf16.msra.mxu0 0
    %3836 = vmatprep.subr.bf16.mxu0 0
    %3837 = vmatpush1.bf16.msra.mxu0 0
    %3838 = vmatprep.subr.bf16.mxu0 0
    %3839 = vmatpush1.bf16.msra.mxu0 0
    %3840 = vmatprep.mubr.bf16.mxu0 0
    %3841 = vmatmul.mubr.bf16.gmra.mrb[0].mxu0 %v3618
    %v3842 = vpop.f32.mrb[0].mxu0
    %v3843 = vadd.f32 %v3761, %v3842
    %v3844 = vpop.f32.mrb[0].mxu0
    %v3845 = vadd.f32 %v3763, %v3844
    %v3846 = vpop.f32.mrb[0].mxu0
    %v3847 = vpop.f32.mrb[0].mxu0
    %3848 = vdwg.mxu0
    %v3849 = vadd.f32 %v3802, %v99
    %v3850 = vadd.f32 %v3804, %v103
    %v3851 = vadd.f32 %v3843, %v107
    %v3852 = vadd.f32 %v3845, %v111
    %v3853 = vxor.u32 %v3849, 2147483648
    %v3854 = vmul.f32 %v3853, 1.442695
    %v3855 = vpow.pop %v3854
    %v3856 = vadd.f32 %v3855, 1.0
    %v3857 = vrcp.pop %v3856
    %v3858 = vmul.f32 1.0, %v3857
    %v3859 = vxor.u32 %v3850, 2147483648
    %v3860 = vmul.f32 %v3859, 1.442695
    %v3861 = vpow.pop %v3860
    %v3862 = vadd.f32 %v3861, 1.0
    %v3863 = vrcp.pop %v3862
    %v3864 = vmul.f32 1.0, %v3863
    %v3865 = vtanh.pop %v3851
    %v3866 = vxor.u32 %v3852, 2147483648
    %v3867 = vmul.f32 %v3866, 1.442695
    %v3868 = vpow.pop %v3867
    %v3869 = vadd.f32 %v3868, 1.0
    %v3870 = vrcp.pop %v3869
    %v3871 = vmul.f32 1.0, %v3870
    %v3872 = vmul.f32 %v3864, %v3615
    %v3873 = vmul.f32 %v3858, %v3865
    %v3874 = vadd.f32 %v3872, %v3873
    %v3875 = vtanh.pop %v3874
    %v3876 = vmul.f32 %v3871, %v3875
    %v3877 = vpack.c.bf16 %v3876, %v3876
    %3878 = vmatprep.subr.bf16.mxu0 0
    %3879 = vmatpush1.bf16.msra.mxu0 %v755
    %3880 = vmatprep.subr.bf16.mxu0 0
    %3881 = vmatpush1.bf16.msra.mxu0 %v756
    %3882 = vmatprep.subr.bf16.mxu0 0
    %3883 = vmatpush1.bf16.msra.mxu0 %v757
    %3884 = vmatprep.subr.bf16.mxu0 0
    %3885 = vmatpush1.bf16.msra.mxu0 %v758
    %3886 = vmatprep.subr.bf16.mxu0 0
    %3887 = vmatpush1.bf16.msra.mxu0 %v759
    %3888 = vmatprep.subr.bf16.mxu0 0
    %3889 = vmatpush1.bf16.msra.mxu0 %v760
    %3890 = vmatprep.subr.bf16.mxu0 0
    %3891 = vmatpush1.bf16.msra.mxu0 %v761
    %3892 = vmatprep.subr.bf16.mxu0 0
    %3893 = vmatpush1.bf16.msra.mxu0 %v762
    %3894 = vmatprep.subr.bf16.mxu0 0
    %3895 = vmatpush1.bf16.msra.mxu0 0
    %3896 = vmatprep.subr.bf16.mxu0 0
    %3897 = vmatpush1.bf16.msra.mxu0 0
    %3898 = vmatprep.subr.bf16.mxu0 0
    %3899 = vmatpush1.bf16.msra.mxu0 0
    %3900 = vmatprep.subr.bf16.mxu0 0
    %3901 = vmatpush1.bf16.msra.mxu0 0
    %3902 = vmatprep.subr.bf16.mxu0 0
    %3903 = vmatpush1.bf16.msra.mxu0 0
    %3904 = vmatprep.subr.bf16.mxu0 0
    %3905 = vmatpush1.bf16.msra.mxu0 0
    %3906 = vmatprep.subr.bf16.mxu0 0
    %3907 = vmatpush1.bf16.msra.mxu0 0
    %3908 = vmatprep.subr.bf16.mxu0 0
    %3909 = vmatpush1.bf16.msra.mxu0 0
    %3910 = vmatprep.mubr.bf16.mxu0 0
    %3911 = vmatmul.mubr.bf16.gmra.mrb[0].mxu0 %v3877
    %v3912 = vpop.f32.mrb[0].mxu0
    %v3913 = vadd.f32 %v121, %v3912
    %v3914 = vpop.f32.mrb[0].mxu0
    %v3915 = vpop.f32.mrb[0].mxu0
    %v3916 = vpop.f32.mrb[0].mxu0
    %3917 = vdwg.mxu0
    %3918 = vmax.xlane.f32.xlu0 %v3913
    %v3919 = vpop.xlane.xlu0 %3918
    %vm3920 = vcmp.eq.f32.partialorder %v3913, %v3919
    %v3921 = vsel %vm3920, %v124, 128
    %v3922 = vand.u32 %v3921, 65535
    %v3923 = vshra.s32 %v3921, 16
    %v3924 = vcvt.s32.f32 %v3922
    %v3925 = vcvt.s32.f32 %v3923
    %3926 = vmin.xlane.f32.xlu0 %v3925
    %v3927 = vpop.xlane.xlu0 %3926
    %vm3928 = vcmp.eq.f32.partialorder %v3925, %v3927
    %v3929 = vsel %vm3928, %v3924, inf
    %3930 = vmin.xlane.f32.xlu0 %v3929
    %v3931 = vpop.xlane.xlu0 %3930
    %v3932 = vcvt.f32.s32 %v3931
    %v3933 = vcvt.f32.s32 %v3927
    %v3934 = vshll.u32 %v3933, 16
    %v3935 = vadd.s32 %v3934, %v3932
    %vm3936 = vcmp.lt.s32.totalorder %v3935, 127
    %v3937 = vsel %vm3936, %v3935, 127
    %vm3938 = vcmp.eq.s32.totalorder %v124, 12
    %v3939 = vsel %vm3938, %v3937, %v3680
    %vm3940 = vcmp.eq.s32.totalorder %v124, %v3937
    %v3941 = vsel %vm3940, 1, 0
    %v3942 = vcvt.s32.f32 %v3941
    %v3943 = vpack.c.bf16 %v3942, %v3942
    %3944 = vmatprep.subr.bf16.mxu0 %v291
    %3945 = vmatpush1.bf16.msra.mxu0 %v290
    %3946 = vmatprep.subr.bf16.mxu0 %v295
    %3947 = vmatpush1.bf16.msra.mxu0 %v294
    %3948 = vmatprep.subr.bf16.mxu0 %v299
    %3949 = vmatpush1.bf16.msra.mxu0 %v298
    %3950 = vmatprep.subr.bf16.mxu0 %v303
    %3951 = vmatpush1.bf16.msra.mxu0 %v302
    %3952 = vmatprep.subr.bf16.mxu0 %v307
    %3953 = vmatpush1.bf16.msra.mxu0 %v306
    %3954 = vmatprep.subr.bf16.mxu0 %v311
    %3955 = vmatpush1.bf16.msra.mxu0 %v310
    %3956 = vmatprep.subr.bf16.mxu0 %v315
    %3957 = vmatpush1.bf16.msra.mxu0 %v314
    %3958 = vmatprep.subr.bf16.mxu0 %v319
    %3959 = vmatpush1.bf16.msra.mxu0 %v318
    %3960 = vmatprep.subr.bf16.mxu0 0
    %3961 = vmatpush1.bf16.msra.mxu0 0
    %3962 = vmatprep.subr.bf16.mxu0 0
    %3963 = vmatpush1.bf16.msra.mxu0 0
    %3964 = vmatprep.subr.bf16.mxu0 0
    %3965 = vmatpush1.bf16.msra.mxu0 0
    %3966 = vmatprep.subr.bf16.mxu0 0
    %3967 = vmatpush1.bf16.msra.mxu0 0
    %3968 = vmatprep.subr.bf16.mxu0 0
    %3969 = vmatpush1.bf16.msra.mxu0 0
    %3970 = vmatprep.subr.bf16.mxu0 0
    %3971 = vmatpush1.bf16.msra.mxu0 0
    %3972 = vmatprep.subr.bf16.mxu0 0
    %3973 = vmatpush1.bf16.msra.mxu0 0
    %3974 = vmatprep.subr.bf16.mxu0 0
    %3975 = vmatpush1.bf16.msra.mxu0 0
    %3976 = vmatprep.mubr.bf16.mxu0 0
    %3977 = vmatmul.mubr.bf16.gmra.mrb[0].mxu0 %v3943
    %v3978 = vpop.f32.mrb[0].mxu0
    %v3979 = vadd.f32 0.0, %v3978
    %v3980 = vpop.f32.mrb[0].mxu0
    %v3981 = vadd.f32 0.0, %v3980
    %v3982 = vpop.f32.mrb[0].mxu0
    %v3983 = vpop.f32.mrb[0].mxu0
    %3984 = vdwg.mxu0
    %3985 = vmatprep.subr.bf16.mxu0 %v293
    %3986 = vmatpush1.bf16.msra.mxu0 %v292
    %3987 = vmatprep.subr.bf16.mxu0 %v297
    %3988 = vmatpush1.bf16.msra.mxu0 %v296
    %3989 = vmatprep.subr.bf16.mxu0 %v301
    %3990 = vmatpush1.bf16.msra.mxu0 %v300
    %3991 = vmatprep.subr.bf16.mxu0 %v305
    %3992 = vmatpush1.bf16.msra.mxu0 %v304
    %3993 = vmatprep.subr.bf16.mxu0 %v309
    %3994 = vmatpush1.bf16.msra.mxu0 %v308
    %3995 = vmatprep.subr.bf16.mxu0 %v313
    %3996 = vmatpush1.bf16.msra.mxu0 %v312
    %3997 = vmatprep.subr.bf16.mxu0 %v317
    %3998 = vmatpush1.bf16.msra.mxu0 %v316
    %3999 = vmatprep.subr.bf16.mxu0 %v321
    %4000 = vmatpush1.bf16.msra.mxu0 %v320
    %4001 = vmatprep.subr.bf16.mxu0 0
    %4002 = vmatpush1.bf16.msra.mxu0 0
    %4003 = vmatprep.subr.bf16.mxu0 0
    %4004 = vmatpush1.bf16.msra.mxu0 0
    %4005 = vmatprep.subr.bf16.mxu0 0
    %4006 = vmatpush1.bf16.msra.mxu0 0
    %4007 = vmatprep.subr.bf16.mxu0 0
    %4008 = vmatpush1.bf16.msra.mxu0 0
    %4009 = vmatprep.subr.bf16.mxu0 0
    %4010 = vmatpush1.bf16.msra.mxu0 0
    %4011 = vmatprep.subr.bf16.mxu0 0
    %4012 = vmatpush1.bf16.msra.mxu0 0
    %4013 = vmatprep.subr.bf16.mxu0 0
    %4014 = vmatpush1.bf16.msra.mxu0 0
    %4015 = vmatprep.subr.bf16.mxu0 0
    %4016 = vmatpush1.bf16.msra.mxu0 0
    %4017 = vmatprep.mubr.bf16.mxu0 0
    %4018 = vmatmul.mubr.bf16.gmra.mrb[0].mxu0 %v3943
    %v4019 = vpop.f32.mrb[0].mxu0
    %v4020 = vadd.f32 0.0, %v4019
    %v4021 = vpop.f32.mrb[0].mxu0
    %v4022 = vadd.f32 0.0, %v4021
    %v4023 = vpop.f32.mrb[0].mxu0
    %v4024 = vpop.f32.mrb[0].mxu0
    %4025 = vdwg.mxu0
    %4026 = vmatprep.subr.bf16.mxu0 %v533
    %4027 = vmatpush1.bf16.msra.mxu0 %v532
    %4028 = vmatprep.subr.bf16.mxu0 %v537
    %4029 = vmatpush1.bf16.msra.mxu0 %v536
    %4030 = vmatprep.subr.bf16.mxu0 %v541
    %4031 = vmatpush1.bf16.msra.mxu0 %v540
    %4032 = vmatprep.subr.bf16.mxu0 %v545
    %4033 = vmatpush1.bf16.msra.mxu0 %v544
    %4034 = vmatprep.subr.bf16.mxu0 %v549
    %4035 = vmatpush1.bf16.msra.mxu0 %v548
    %4036 = vmatprep.subr.bf16.mxu0 %v553
    %4037 = vmatpush1.bf16.msra.mxu0 %v552
    %4038 = vmatprep.subr.bf16.mxu0 %v557
    %4039 = vmatpush1.bf16.msra.mxu0 %v556
    %4040 = vmatprep.subr.bf16.mxu0 %v561
    %4041 = vmatpush1.bf16.msra.mxu0 %v560
    %4042 = vmatprep.subr.bf16.mxu0 0
    %4043 = vmatpush1.bf16.msra.mxu0 0
    %4044 = vmatprep.subr.bf16.mxu0 0
    %4045 = vmatpush1.bf16.msra.mxu0 0
    %4046 = vmatprep.subr.bf16.mxu0 0
    %4047 = vmatpush1.bf16.msra.mxu0 0
    %4048 = vmatprep.subr.bf16.mxu0 0
    %4049 = vmatpush1.bf16.msra.mxu0 0
    %4050 = vmatprep.subr.bf16.mxu0 0
    %4051 = vmatpush1.bf16.msra.mxu0 0
    %4052 = vmatprep.subr.bf16.mxu0 0
    %4053 = vmatpush1.bf16.msra.mxu0 0
    %4054 = vmatprep.subr.bf16.mxu0 0
    %4055 = vmatpush1.bf16.msra.mxu0 0
    %4056 = vmatprep.subr.bf16.mxu0 0
    %4057 = vmatpush1.bf16.msra.mxu0 0
    %4058 = vmatprep.mubr.bf16.mxu0 0
    %4059 = vmatmul.mubr.bf16.gmra.mrb[0].mxu0 %v3877
    %v4060 = vpop.f32.mrb[0].mxu0
    %v4061 = vadd.f32 %v3979, %v4060
    %v4062 = vpop.f32.mrb[0].mxu0
    %v4063 = vadd.f32 %v3981, %v4062
    %v4064 = vpop.f32.mrb[0].mxu0
    %v4065 = vpop.f32.mrb[0].mxu0
    %4066 = vdwg.mxu0
    %4067 = vmatprep.subr.bf16.mxu0 %v535
    %4068 = vmatpush1.bf16.msra.mxu0 %v534
    %4069 = vmatprep.subr.bf16.mxu0 %v539
    %4070 = vmatpush1.bf16.msra.mxu0 %v538
    %4071 = vmatprep.subr.bf16.mxu0 %v543
    %4072 = vmatpush1.bf16.msra.mxu0 %v542
    %4073 = vmatprep.subr.bf16.mxu0 %v547
    %4074 = vmatpush1.bf16.msra.mxu0 %v546
    %4075 = vmatprep.subr.bf16.mxu0 %v551
    %4076 = vmatpush1.bf16.msra.mxu0 %v550
    %4077 = vmatprep.subr.bf16.mxu0 %v555
    %4078 = vmatpush1.bf16.msra.mxu0 %v554
    %4079 = vmatprep.subr.bf16.mxu0 %v559
    %4080 = vmatpush1.bf16.msra.mxu0 %v558
    %4081 = vmatprep.subr.bf16.mxu0 %v563
    %4082 = vmatpush1.bf16.msra.mxu0 %v562
    %4083 = vmatprep.subr.bf16.mxu0 0
    %4084 = vmatpush1.bf16.msra.mxu0 0
    %4085 = vmatprep.subr.bf16.mxu0 0
    %4086 = vmatpush1.bf16.msra.mxu0 0
    %4087 = vmatprep.subr.bf16.mxu0 0
    %4088 = vmatpush1.bf16.msra.mxu0 0
    %4089 = vmatprep.subr.bf16.mxu0 0
    %4090 = vmatpush1.bf16.msra.mxu0 0
    %4091 = vmatprep.subr.bf16.mxu0 0
    %4092 = vmatpush1.bf16.msra.mxu0 0
    %4093 = vmatprep.subr.bf16.mxu0 0
    %4094 = vmatpush1.bf16.msra.mxu0 0
    %4095 = vmatprep.subr.bf16.mxu0 0
    %4096 = vmatpush1.bf16.msra.mxu0 0
    %4097 = vmatprep.subr.bf16.mxu0 0
    %4098 = vmatpush1.bf16.msra.mxu0 0
    %4099 = vmatprep.mubr.bf16.mxu0 0
    %4100 = vmatmul.mubr.bf16.gmra.mrb[0].mxu0 %v3877
    %v4101 = vpop.f32.mrb[0].mxu0
    %v4102 = vadd.f32 %v4020, %v4101
    %v4103 = vpop.f32.mrb[0].mxu0
    %v4104 = vadd.f32 %v4022, %v4103
    %v4105 = vpop.f32.mrb[0].mxu0
    %v4106 = vpop.f32.mrb[0].mxu0
    %4107 = vdwg.mxu0
    %v4108 = vadd.f32 %v4061, %v99
    %v4109 = vadd.f32 %v4063, %v103
    %v4110 = vadd.f32 %v4102, %v107
    %v4111 = vadd.f32 %v4104, %v111
    %v4112 = vxor.u32 %v4108, 2147483648
    %v4113 = vmul.f32 %v4112, 1.442695
    %v4114 = vpow.pop %v4113
    %v4115 = vadd.f32 %v4114, 1.0
    %v4116 = vrcp.pop %v4115
    %v4117 = vmul.f32 1.0, %v4116
    %v4118 = vxor.u32 %v4109, 2147483648
    %v4119 = vmul.f32 %v4118, 1.442695
    %v4120 = vpow.pop %v4119
    %v4121 = vadd.f32 %v4120, 1.0
    %v4122 = vrcp.pop %v4121
    %v4123 = vmul.f32 1.0, %v4122
    %v4124 = vtanh.pop %v4110
    %v4125 = vxor.u32 %v4111, 2147483648
    %v4126 = vmul.f32 %v4125, 1.442695
    %v4127 = vpow.pop %v4126
    %v4128 = vadd.f32 %v4127, 1.0
    %v4129 = vrcp.pop %v4128
    %v4130 = vmul.f32 1.0, %v4129
    %v4131 = vmul.f32 %v4123, %v3874
    %v4132 = vmul.f32 %v4117, %v4124
    %v4133 = vadd.f32 %v4131, %v4132
    %v4134 = vtanh.pop %v4133
    %v4135 = vmul.f32 %v4130, %v4134
    %v4136 = vpack.c.bf16 %v4135, %v4135
    %4137 = vmatprep.subr.bf16.mxu0 0
    %4138 = vmatpush1.bf16.msra.mxu0 %v755
    %4139 = vmatprep.subr.bf16.mxu0 0
    %4140 = vmatpush1.bf16.msra.mxu0 %v756
    %4141 = vmatprep.subr.bf16.mxu0 0
    %4142 = vmatpush1.bf16.msra.mxu0 %v757
    %4143 = vmatprep.subr.bf16.mxu0 0
    %4144 = vmatpush1.bf16.msra.mxu0 %v758
    %4145 = vmatprep.subr.bf16.mxu0 0
    %4146 = vmatpush1.bf16.msra.mxu0 %v759
    %4147 = vmatprep.subr.bf16.mxu0 0
    %4148 = vmatpush1.bf16.msra.mxu0 %v760
    %4149 = vmatprep.subr.bf16.mxu0 0
    %4150 = vmatpush1.bf16.msra.mxu0 %v761
    %4151 = vmatprep.subr.bf16.mxu0 0
    %4152 = vmatpush1.bf16.msra.mxu0 %v762
    %4153 = vmatprep.subr.bf16.mxu0 0
    %4154 = vmatpush1.bf16.msra.mxu0 0
    %4155 = vmatprep.subr.bf16.mxu0 0
    %4156 = vmatpush1.bf16.msra.mxu0 0
    %4157 = vmatprep.subr.bf16.mxu0 0
    %4158 = vmatpush1.bf16.msra.mxu0 0
    %4159 = vmatprep.subr.bf16.mxu0 0
    %4160 = vmatpush1.bf16.msra.mxu0 0
    %4161 = vmatprep.subr.bf16.mxu0 0
    %4162 = vmatpush1.bf16.msra.mxu0 0
    %4163 = vmatprep.subr.bf16.mxu0 0
    %4164 = vmatpush1.bf16.msra.mxu0 0
    %4165 = vmatprep.subr.bf16.mxu0 0
    %4166 = vmatpush1.bf16.msra.mxu0 0
    %4167 = vmatprep.subr.bf16.mxu0 0
    %4168 = vmatpush1.bf16.msra.mxu0 0
    %4169 = vmatprep.mubr.bf16.mxu0 0
    %4170 = vmatmul.mubr.bf16.gmra.mrb[0].mxu0 %v4136
    %v4171 = vpop.f32.mrb[0].mxu0
    %v4172 = vadd.f32 %v121, %v4171
    %v4173 = vpop.f32.mrb[0].mxu0
    %v4174 = vpop.f32.mrb[0].mxu0
    %v4175 = vpop.f32.mrb[0].mxu0
    %4176 = vdwg.mxu0
    %4177 = vmax.xlane.f32.xlu0 %v4172
    %v4178 = vpop.xlane.xlu0 %4177
    %vm4179 = vcmp.eq.f32.partialorder %v4172, %v4178
    %v4180 = vsel %vm4179, %v124, 128
    %v4181 = vand.u32 %v4180, 65535
    %v4182 = vshra.s32 %v4180, 16
    %v4183 = vcvt.s32.f32 %v4181
    %v4184 = vcvt.s32.f32 %v4182
    %4185 = vmin.xlane.f32.xlu0 %v4184
    %v4186 = vpop.xlane.xlu0 %4185
    %vm4187 = vcmp.eq.f32.partialorder %v4184, %v4186
    %v4188 = vsel %vm4187, %v4183, inf
    %4189 = vmin.xlane.f32.xlu0 %v4188
    %v4190 = vpop.xlane.xlu0 %4189
    %v4191 = vcvt.f32.s32 %v4190
    %v4192 = vcvt.f32.s32 %v4186
    %v4193 = vshll.u32 %v4192, 16
    %v4194 = vadd.s32 %v4193, %v4191
    %vm4195 = vcmp.lt.s32.totalorder %v4194, 127
    %v4196 = vsel %vm4195, %v4194, 127
    %vm4197 = vcmp.eq.s32.totalorder %v124, 13
    %v4198 = vsel %vm4197, %v4196, %v3939
    %vm4199 = vcmp.eq.s32.totalorder %v124, %v4196
    %v4200 = vsel %vm4199, 1, 0
    %v4201 = vcvt.s32.f32 %v4200
    %v4202 = vpack.c.bf16 %v4201, %v4201
    %4203 = vmatprep.subr.bf16.mxu0 %v291
    %4204 = vmatpush1.bf16.msra.mxu0 %v290
    %4205 = vmatprep.subr.bf16.mxu0 %v295
    %4206 = vmatpush1.bf16.msra.mxu0 %v294
    %4207 = vmatprep.subr.bf16.mxu0 %v299
    %4208 = vmatpush1.bf16.msra.mxu0 %v298
    %4209 = vmatprep.subr.bf16.mxu0 %v303
    %4210 = vmatpush1.bf16.msra.mxu0 %v302
    %4211 = vmatprep.subr.bf16.mxu0 %v307
    %4212 = vmatpush1.bf16.msra.mxu0 %v306
    %4213 = vmatprep.subr.bf16.mxu0 %v311
    %4214 = vmatpush1.bf16.msra.mxu0 %v310
    %4215 = vmatprep.subr.bf16.mxu0 %v315
    %4216 = vmatpush1.bf16.msra.mxu0 %v314
    %4217 = vmatprep.subr.bf16.mxu0 %v319
    %4218 = vmatpush1.bf16.msra.mxu0 %v318
    %4219 = vmatprep.subr.bf16.mxu0 0
    %4220 = vmatpush1.bf16.msra.mxu0 0
    %4221 = vmatprep.subr.bf16.mxu0 0
    %4222 = vmatpush1.bf16.msra.mxu0 0
    %4223 = vmatprep.subr.bf16.mxu0 0
    %4224 = vmatpush1.bf16.msra.mxu0 0
    %4225 = vmatprep.subr.bf16.mxu0 0
    %4226 = vmatpush1.bf16.msra.mxu0 0
    %4227 = vmatprep.subr.bf16.mxu0 0
    %4228 = vmatpush1.bf16.msra.mxu0 0
    %4229 = vmatprep.subr.bf16.mxu0 0
    %4230 = vmatpush1.bf16.msra.mxu0 0
    %4231 = vmatprep.subr.bf16.mxu0 0
    %4232 = vmatpush1.bf16.msra.mxu0 0
    %4233 = vmatprep.subr.bf16.mxu0 0
    %4234 = vmatpush1.bf16.msra.mxu0 0
    %4235 = vmatprep.mubr.bf16.mxu0 0
    %4236 = vmatmul.mubr.bf16.gmra.mrb[0].mxu0 %v4202
    %v4237 = vpop.f32.mrb[0].mxu0
    %v4238 = vadd.f32 0.0, %v4237
    %v4239 = vpop.f32.mrb[0].mxu0
    %v4240 = vadd.f32 0.0, %v4239
    %v4241 = vpop.f32.mrb[0].mxu0
    %v4242 = vpop.f32.mrb[0].mxu0
    %4243 = vdwg.mxu0
    %4244 = vmatprep.subr.bf16.mxu0 %v293
    %4245 = vmatpush1.bf16.msra.mxu0 %v292
    %4246 = vmatprep.subr.bf16.mxu0 %v297
    %4247 = vmatpush1.bf16.msra.mxu0 %v296
    %4248 = vmatprep.subr.bf16.mxu0 %v301
    %4249 = vmatpush1.bf16.msra.mxu0 %v300
    %4250 = vmatprep.subr.bf16.mxu0 %v305
    %4251 = vmatpush1.bf16.msra.mxu0 %v304
    %4252 = vmatprep.subr.bf16.mxu0 %v309
    %4253 = vmatpush1.bf16.msra.mxu0 %v308
    %4254 = vmatprep.subr.bf16.mxu0 %v313
    %4255 = vmatpush1.bf16.msra.mxu0 %v312
    %4256 = vmatprep.subr.bf16.mxu0 %v317
    %4257 = vmatpush1.bf16.msra.mxu0 %v316
    %4258 = vmatprep.subr.bf16.mxu0 %v321
    %4259 = vmatpush1.bf16.msra.mxu0 %v320
    %4260 = vmatprep.subr.bf16.mxu0 0
    %4261 = vmatpush1.bf16.msra.mxu0 0
    %4262 = vmatprep.subr.bf16.mxu0 0
    %4263 = vmatpush1.bf16.msra.mxu0 0
    %4264 = vmatprep.subr.bf16.mxu0 0
    %4265 = vmatpush1.bf16.msra.mxu0 0
    %4266 = vmatprep.subr.bf16.mxu0 0
    %4267 = vmatpush1.bf16.msra.mxu0 0
    %4268 = vmatprep.subr.bf16.mxu0 0
    %4269 = vmatpush1.bf16.msra.mxu0 0
    %4270 = vmatprep.subr.bf16.mxu0 0
    %4271 = vmatpush1.bf16.msra.mxu0 0
    %4272 = vmatprep.subr.bf16.mxu0 0
    %4273 = vmatpush1.bf16.msra.mxu0 0
    %4274 = vmatprep.subr.bf16.mxu0 0
    %4275 = vmatpush1.bf16.msra.mxu0 0
    %4276 = vmatprep.mubr.bf16.mxu0 0
    %4277 = vmatmul.mubr.bf16.gmra.mrb[0].mxu0 %v4202
    %v4278 = vpop.f32.mrb[0].mxu0
    %v4279 = vadd.f32 0.0, %v4278
    %v4280 = vpop.f32.mrb[0].mxu0
    %v4281 = vadd.f32 0.0, %v4280
    %v4282 = vpop.f32.mrb[0].mxu0
    %v4283 = vpop.f32.mrb[0].mxu0
    %4284 = vdwg.mxu0
    %4285 = vmatprep.subr.bf16.mxu0 %v533
    %4286 = vmatpush1.bf16.msra.mxu0 %v532
    %4287 = vmatprep.subr.bf16.mxu0 %v537
    %4288 = vmatpush1.bf16.msra.mxu0 %v536
    %4289 = vmatprep.subr.bf16.mxu0 %v541
    %4290 = vmatpush1.bf16.msra.mxu0 %v540
    %4291 = vmatprep.subr.bf16.mxu0 %v545
    %4292 = vmatpush1.bf16.msra.mxu0 %v544
    %4293 = vmatprep.subr.bf16.mxu0 %v549
    %4294 = vmatpush1.bf16.msra.mxu0 %v548
    %4295 = vmatprep.subr.bf16.mxu0 %v553
    %4296 = vmatpush1.bf16.msra.mxu0 %v552
    %4297 = vmatprep.subr.bf16.mxu0 %v557
    %4298 = vmatpush1.bf16.msra.mxu0 %v556
    %4299 = vmatprep.subr.bf16.mxu0 %v561
    %4300 = vmatpush1.bf16.msra.mxu0 %v560
    %4301 = vmatprep.subr.bf16.mxu0 0
    %4302 = vmatpush1.bf16.msra.mxu0 0
    %4303 = vmatprep.subr.bf16.mxu0 0
    %4304 = vmatpush1.bf16.msra.mxu0 0
    %4305 = vmatprep.subr.bf16.mxu0 0
    %4306 = vmatpush1.bf16.msra.mxu0 0
    %4307 = vmatprep.subr.bf16.mxu0 0
    %4308 = vmatpush1.bf16.msra.mxu0 0
    %4309 = vmatprep.subr.bf16.mxu0 0
    %4310 = vmatpush1.bf16.msra.mxu0 0
    %4311 = vmatprep.subr.bf16.mxu0 0
    %4312 = vmatpush1.bf16.msra.mxu0 0
    %4313 = vmatprep.subr.bf16.mxu0 0
    %4314 = vmatpush1.bf16.msra.mxu0 0
    %4315 = vmatprep.subr.bf16.mxu0 0
    %4316 = vmatpush1.bf16.msra.mxu0 0
    %4317 = vmatprep.mubr.bf16.mxu0 0
    %4318 = vmatmul.mubr.bf16.gmra.mrb[0].mxu0 %v4136
    %v4319 = vpop.f32.mrb[0].mxu0
    %v4320 = vadd.f32 %v4238, %v4319
    %v4321 = vpop.f32.mrb[0].mxu0
    %v4322 = vadd.f32 %v4240, %v4321
    %v4323 = vpop.f32.mrb[0].mxu0
    %v4324 = vpop.f32.mrb[0].mxu0
    %4325 = vdwg.mxu0
    %4326 = vmatprep.subr.bf16.mxu0 %v535
    %4327 = vmatpush1.bf16.msra.mxu0 %v534
    %4328 = vmatprep.subr.bf16.mxu0 %v539
    %4329 = vmatpush1.bf16.msra.mxu0 %v538
    %4330 = vmatprep.subr.bf16.mxu0 %v543
    %4331 = vmatpush1.bf16.msra.mxu0 %v542
    %4332 = vmatprep.subr.bf16.mxu0 %v547
    %4333 = vmatpush1.bf16.msra.mxu0 %v546
    %4334 = vmatprep.subr.bf16.mxu0 %v551
    %4335 = vmatpush1.bf16.msra.mxu0 %v550
    %4336 = vmatprep.subr.bf16.mxu0 %v555
    %4337 = vmatpush1.bf16.msra.mxu0 %v554
    %4338 = vmatprep.subr.bf16.mxu0 %v559
    %4339 = vmatpush1.bf16.msra.mxu0 %v558
    %4340 = vmatprep.subr.bf16.mxu0 %v563
    %4341 = vmatpush1.bf16.msra.mxu0 %v562
    %4342 = vmatprep.subr.bf16.mxu0 0
    %4343 = vmatpush1.bf16.msra.mxu0 0
    %4344 = vmatprep.subr.bf16.mxu0 0
    %4345 = vmatpush1.bf16.msra.mxu0 0
    %4346 = vmatprep.subr.bf16.mxu0 0
    %4347 = vmatpush1.bf16.msra.mxu0 0
    %4348 = vmatprep.subr.bf16.mxu0 0
    %4349 = vmatpush1.bf16.msra.mxu0 0
    %4350 = vmatprep.subr.bf16.mxu0 0
    %4351 = vmatpush1.bf16.msra.mxu0 0
    %4352 = vmatprep.subr.bf16.mxu0 0
    %4353 = vmatpush1.bf16.msra.mxu0 0
    %4354 = vmatprep.subr.bf16.mxu0 0
    %4355 = vmatpush1.bf16.msra.mxu0 0
    %4356 = vmatprep.subr.bf16.mxu0 0
    %4357 = vmatpush1.bf16.msra.mxu0 0
    %4358 = vmatprep.mubr.bf16.mxu0 0
    %4359 = vmatmul.mubr.bf16.gmra.mrb[0].mxu0 %v4136
    %v4360 = vpop.f32.mrb[0].mxu0
    %v4361 = vadd.f32 %v4279, %v4360
    %v4362 = vpop.f32.mrb[0].mxu0
    %v4363 = vadd.f32 %v4281, %v4362
    %v4364 = vpop.f32.mrb[0].mxu0
    %v4365 = vpop.f32.mrb[0].mxu0
    %4366 = vdwg.mxu0
    %v4367 = vadd.f32 %v4320, %v99
    %v4368 = vadd.f32 %v4322, %v103
    %v4369 = vadd.f32 %v4361, %v107
    %v4370 = vadd.f32 %v4363, %v111
    %v4371 = vxor.u32 %v4367, 2147483648
    %v4372 = vmul.f32 %v4371, 1.442695
    %v4373 = vpow.pop %v4372
    %v4374 = vadd.f32 %v4373, 1.0
    %v4375 = vrcp.pop %v4374
    %v4376 = vmul.f32 1.0, %v4375
    %v4377 = vxor.u32 %v4368, 2147483648
    %v4378 = vmul.f32 %v4377, 1.442695
    %v4379 = vpow.pop %v4378
    %v4380 = vadd.f32 %v4379, 1.0
    %v4381 = vrcp.pop %v4380
    %v4382 = vmul.f32 1.0, %v4381
    %v4383 = vtanh.pop %v4369
    %v4384 = vxor.u32 %v4370, 2147483648
    %v4385 = vmul.f32 %v4384, 1.442695
    %v4386 = vpow.pop %v4385
    %v4387 = vadd.f32 %v4386, 1.0
    %v4388 = vrcp.pop %v4387
    %v4389 = vmul.f32 1.0, %v4388
    %v4390 = vmul.f32 %v4382, %v4133
    %v4391 = vmul.f32 %v4376, %v4383
    %v4392 = vadd.f32 %v4390, %v4391
    %v4393 = vtanh.pop %v4392
    %v4394 = vmul.f32 %v4389, %v4393
    %v4395 = vpack.c.bf16 %v4394, %v4394
    %4396 = vmatprep.subr.bf16.mxu0 0
    %4397 = vmatpush1.bf16.msra.mxu0 %v755
    %4398 = vmatprep.subr.bf16.mxu0 0
    %4399 = vmatpush1.bf16.msra.mxu0 %v756
    %4400 = vmatprep.subr.bf16.mxu0 0
    %4401 = vmatpush1.bf16.msra.mxu0 %v757
    %4402 = vmatprep.subr.bf16.mxu0 0
    %4403 = vmatpush1.bf16.msra.mxu0 %v758
    %4404 = vmatprep.subr.bf16.mxu0 0
    %4405 = vmatpush1.bf16.msra.mxu0 %v759
    %4406 = vmatprep.subr.bf16.mxu0 0
    %4407 = vmatpush1.bf16.msra.mxu0 %v760
    %4408 = vmatprep.subr.bf16.mxu0 0
    %4409 = vmatpush1.bf16.msra.mxu0 %v761
    %4410 = vmatprep.subr.bf16.mxu0 0
    %4411 = vmatpush1.bf16.msra.mxu0 %v762
    %4412 = vmatprep.subr.bf16.mxu0 0
    %4413 = vmatpush1.bf16.msra.mxu0 0
    %4414 = vmatprep.subr.bf16.mxu0 0
    %4415 = vmatpush1.bf16.msra.mxu0 0
    %4416 = vmatprep.subr.bf16.mxu0 0
    %4417 = vmatpush1.bf16.msra.mxu0 0
    %4418 = vmatprep.subr.bf16.mxu0 0
    %4419 = vmatpush1.bf16.msra.mxu0 0
    %4420 = vmatprep.subr.bf16.mxu0 0
    %4421 = vmatpush1.bf16.msra.mxu0 0
    %4422 = vmatprep.subr.bf16.mxu0 0
    %4423 = vmatpush1.bf16.msra.mxu0 0
    %4424 = vmatprep.subr.bf16.mxu0 0
    %4425 = vmatpush1.bf16.msra.mxu0 0
    %4426 = vmatprep.subr.bf16.mxu0 0
    %4427 = vmatpush1.bf16.msra.mxu0 0
    %4428 = vmatprep.mubr.bf16.mxu0 0
    %4429 = vmatmul.mubr.bf16.gmra.mrb[0].mxu0 %v4395
    %v4430 = vpop.f32.mrb[0].mxu0
    %v4431 = vadd.f32 %v121, %v4430
    %v4432 = vpop.f32.mrb[0].mxu0
    %v4433 = vpop.f32.mrb[0].mxu0
    %v4434 = vpop.f32.mrb[0].mxu0
    %4435 = vdwg.mxu0
    %4436 = vmax.xlane.f32.xlu0 %v4431
    %v4437 = vpop.xlane.xlu0 %4436
    %vm4438 = vcmp.eq.f32.partialorder %v4431, %v4437
    %v4439 = vsel %vm4438, %v124, 128
    %v4440 = vand.u32 %v4439, 65535
    %v4441 = vshra.s32 %v4439, 16
    %v4442 = vcvt.s32.f32 %v4440
    %v4443 = vcvt.s32.f32 %v4441
    %4444 = vmin.xlane.f32.xlu0 %v4443
    %v4445 = vpop.xlane.xlu0 %4444
    %vm4446 = vcmp.eq.f32.partialorder %v4443, %v4445
    %v4447 = vsel %vm4446, %v4442, inf
    %4448 = vmin.xlane.f32.xlu0 %v4447
    %v4449 = vpop.xlane.xlu0 %4448
    %v4450 = vcvt.f32.s32 %v4449
    %v4451 = vcvt.f32.s32 %v4445
    %v4452 = vshll.u32 %v4451, 16
    %v4453 = vadd.s32 %v4452, %v4450
    %vm4454 = vcmp.lt.s32.totalorder %v4453, 127
    %v4455 = vsel %vm4454, %v4453, 127
    %vm4456 = vcmp.eq.s32.totalorder %v124, 14
    %v4457 = vsel %vm4456, %v4455, %v4198
    %vm4458 = vcmp.eq.s32.totalorder %v124, %v4455
    %v4459 = vsel %vm4458, 1, 0
    %v4460 = vcvt.s32.f32 %v4459
    %v4461 = vpack.c.bf16 %v4460, %v4460
    %4462 = vmatprep.subr.bf16.mxu0 %v291
    %4463 = vmatpush1.bf16.msra.mxu0 %v290
    %4464 = vmatprep.subr.bf16.mxu0 %v295
    %4465 = vmatpush1.bf16.msra.mxu0 %v294
    %4466 = vmatprep.subr.bf16.mxu0 %v299
    %4467 = vmatpush1.bf16.msra.mxu0 %v298
    %4468 = vmatprep.subr.bf16.mxu0 %v303
    %4469 = vmatpush1.bf16.msra.mxu0 %v302
    %4470 = vmatprep.subr.bf16.mxu0 %v307
    %4471 = vmatpush1.bf16.msra.mxu0 %v306
    %4472 = vmatprep.subr.bf16.mxu0 %v311
    %4473 = vmatpush1.bf16.msra.mxu0 %v310
    %4474 = vmatprep.subr.bf16.mxu0 %v315
    %4475 = vmatpush1.bf16.msra.mxu0 %v314
    %4476 = vmatprep.subr.bf16.mxu0 %v319
    %4477 = vmatpush1.bf16.msra.mxu0 %v318
    %4478 = vmatprep.subr.bf16.mxu0 0
    %4479 = vmatpush1.bf16.msra.mxu0 0
    %4480 = vmatprep.subr.bf16.mxu0 0
    %4481 = vmatpush1.bf16.msra.mxu0 0
    %4482 = vmatprep.subr.bf16.mxu0 0
    %4483 = vmatpush1.bf16.msra.mxu0 0
    %4484 = vmatprep.subr.bf16.mxu0 0
    %4485 = vmatpush1.bf16.msra.mxu0 0
    %4486 = vmatprep.subr.bf16.mxu0 0
    %4487 = vmatpush1.bf16.msra.mxu0 0
    %4488 = vmatprep.subr.bf16.mxu0 0
    %4489 = vmatpush1.bf16.msra.mxu0 0
    %4490 = vmatprep.subr.bf16.mxu0 0
    %4491 = vmatpush1.bf16.msra.mxu0 0
    %4492 = vmatprep.subr.bf16.mxu0 0
    %4493 = vmatpush1.bf16.msra.mxu0 0
    %4494 = vmatprep.mubr.bf16.mxu0 0
    %4495 = vmatmul.mubr.bf16.gmra.mrb[0].mxu0 %v4461
    %v4496 = vpop.f32.mrb[0].mxu0
    %v4497 = vadd.f32 0.0, %v4496
    %v4498 = vpop.f32.mrb[0].mxu0
    %v4499 = vadd.f32 0.0, %v4498
    %v4500 = vpop.f32.mrb[0].mxu0
    %v4501 = vpop.f32.mrb[0].mxu0
    %4502 = vdwg.mxu0
    %4503 = vmatprep.subr.bf16.mxu0 %v293
    %4504 = vmatpush1.bf16.msra.mxu0 %v292
    %4505 = vmatprep.subr.bf16.mxu0 %v297
    %4506 = vmatpush1.bf16.msra.mxu0 %v296
    %4507 = vmatprep.subr.bf16.mxu0 %v301
    %4508 = vmatpush1.bf16.msra.mxu0 %v300
    %4509 = vmatprep.subr.bf16.mxu0 %v305
    %4510 = vmatpush1.bf16.msra.mxu0 %v304
    %4511 = vmatprep.subr.bf16.mxu0 %v309
    %4512 = vmatpush1.bf16.msra.mxu0 %v308
    %4513 = vmatprep.subr.bf16.mxu0 %v313
    %4514 = vmatpush1.bf16.msra.mxu0 %v312
    %4515 = vmatprep.subr.bf16.mxu0 %v317
    %4516 = vmatpush1.bf16.msra.mxu0 %v316
    %4517 = vmatprep.subr.bf16.mxu0 %v321
    %4518 = vmatpush1.bf16.msra.mxu0 %v320
    %4519 = vmatprep.subr.bf16.mxu0 0
    %4520 = vmatpush1.bf16.msra.mxu0 0
    %4521 = vmatprep.subr.bf16.mxu0 0
    %4522 = vmatpush1.bf16.msra.mxu0 0
    %4523 = vmatprep.subr.bf16.mxu0 0
    %4524 = vmatpush1.bf16.msra.mxu0 0
    %4525 = vmatprep.subr.bf16.mxu0 0
    %4526 = vmatpush1.bf16.msra.mxu0 0
    %4527 = vmatprep.subr.bf16.mxu0 0
    %4528 = vmatpush1.bf16.msra.mxu0 0
    %4529 = vmatprep.subr.bf16.mxu0 0
    %4530 = vmatpush1.bf16.msra.mxu0 0
    %4531 = vmatprep.subr.bf16.mxu0 0
    %4532 = vmatpush1.bf16.msra.mxu0 0
    %4533 = vmatprep.subr.bf16.mxu0 0
    %4534 = vmatpush1.bf16.msra.mxu0 0
    %4535 = vmatprep.mubr.bf16.mxu0 0
    %4536 = vmatmul.mubr.bf16.gmra.mrb[0].mxu0 %v4461
    %v4537 = vpop.f32.mrb[0].mxu0
    %v4538 = vadd.f32 0.0, %v4537
    %v4539 = vpop.f32.mrb[0].mxu0
    %v4540 = vadd.f32 0.0, %v4539
    %v4541 = vpop.f32.mrb[0].mxu0
    %v4542 = vpop.f32.mrb[0].mxu0
    %4543 = vdwg.mxu0
    %4544 = vmatprep.subr.bf16.mxu0 %v533
    %4545 = vmatpush1.bf16.msra.mxu0 %v532
    %4546 = vmatprep.subr.bf16.mxu0 %v537
    %4547 = vmatpush1.bf16.msra.mxu0 %v536
    %4548 = vmatprep.subr.bf16.mxu0 %v541
    %4549 = vmatpush1.bf16.msra.mxu0 %v540
    %4550 = vmatprep.subr.bf16.mxu0 %v545
    %4551 = vmatpush1.bf16.msra.mxu0 %v544
    %4552 = vmatprep.subr.bf16.mxu0 %v549
    %4553 = vmatpush1.bf16.msra.mxu0 %v548
    %4554 = vmatprep.subr.bf16.mxu0 %v553
    %4555 = vmatpush1.bf16.msra.mxu0 %v552
    %4556 = vmatprep.subr.bf16.mxu0 %v557
    %4557 = vmatpush1.bf16.msra.mxu0 %v556
    %4558 = vmatprep.subr.bf16.mxu0 %v561
    %4559 = vmatpush1.bf16.msra.mxu0 %v560
    %4560 = vmatprep.subr.bf16.mxu0 0
    %4561 = vmatpush1.bf16.msra.mxu0 0
    %4562 = vmatprep.subr.bf16.mxu0 0
    %4563 = vmatpush1.bf16.msra.mxu0 0
    %4564 = vmatprep.subr.bf16.mxu0 0
    %4565 = vmatpush1.bf16.msra.mxu0 0
    %4566 = vmatprep.subr.bf16.mxu0 0
    %4567 = vmatpush1.bf16.msra.mxu0 0
    %4568 = vmatprep.subr.bf16.mxu0 0
    %4569 = vmatpush1.bf16.msra.mxu0 0
    %4570 = vmatprep.subr.bf16.mxu0 0
    %4571 = vmatpush1.bf16.msra.mxu0 0
    %4572 = vmatprep.subr.bf16.mxu0 0
    %4573 = vmatpush1.bf16.msra.mxu0 0
    %4574 = vmatprep.subr.bf16.mxu0 0
    %4575 = vmatpush1.bf16.msra.mxu0 0
    %4576 = vmatprep.mubr.bf16.mxu0 0
    %4577 = vmatmul.mubr.bf16.gmra.mrb[0].mxu0 %v4395
    %v4578 = vpop.f32.mrb[0].mxu0
    %v4579 = vadd.f32 %v4497, %v4578
    %v4580 = vpop.f32.mrb[0].mxu0
    %v4581 = vadd.f32 %v4499, %v4580
    %v4582 = vpop.f32.mrb[0].mxu0
    %v4583 = vpop.f32.mrb[0].mxu0
    %4584 = vdwg.mxu0
    %4585 = vmatprep.subr.bf16.mxu0 %v535
    %4586 = vmatpush1.bf16.msra.mxu0 %v534
    %4587 = vmatprep.subr.bf16.mxu0 %v539
    %4588 = vmatpush1.bf16.msra.mxu0 %v538
    %4589 = vmatprep.subr.bf16.mxu0 %v543
    %4590 = vmatpush1.bf16.msra.mxu0 %v542
    %4591 = vmatprep.subr.bf16.mxu0 %v547
    %4592 = vmatpush1.bf16.msra.mxu0 %v546
    %4593 = vmatprep.subr.bf16.mxu0 %v551
    %4594 = vmatpush1.bf16.msra.mxu0 %v550
    %4595 = vmatprep.subr.bf16.mxu0 %v555
    %4596 = vmatpush1.bf16.msra.mxu0 %v554
    %4597 = vmatprep.subr.bf16.mxu0 %v559
    %4598 = vmatpush1.bf16.msra.mxu0 %v558
    %4599 = vmatprep.subr.bf16.mxu0 %v563
    %4600 = vmatpush1.bf16.msra.mxu0 %v562
    %4601 = vmatprep.subr.bf16.mxu0 0
    %4602 = vmatpush1.bf16.msra.mxu0 0
    %4603 = vmatprep.subr.bf16.mxu0 0
    %4604 = vmatpush1.bf16.msra.mxu0 0
    %4605 = vmatprep.subr.bf16.mxu0 0
    %4606 = vmatpush1.bf16.msra.mxu0 0
    %4607 = vmatprep.subr.bf16.mxu0 0
    %4608 = vmatpush1.bf16.msra.mxu0 0
    %4609 = vmatprep.subr.bf16.mxu0 0
    %4610 = vmatpush1.bf16.msra.mxu0 0
    %4611 = vmatprep.subr.bf16.mxu0 0
    %4612 = vmatpush1.bf16.msra.mxu0 0
    %4613 = vmatprep.subr.bf16.mxu0 0
    %4614 = vmatpush1.bf16.msra.mxu0 0
    %4615 = vmatprep.subr.bf16.mxu0 0
    %4616 = vmatpush1.bf16.msra.mxu0 0
    %4617 = vmatprep.mubr.bf16.mxu0 0
    %4618 = vmatmul.mubr.bf16.gmra.mrb[0].mxu0 %v4395
    %v4619 = vpop.f32.mrb[0].mxu0
    %v4620 = vadd.f32 %v4538, %v4619
    %v4621 = vpop.f32.mrb[0].mxu0
    %v4622 = vadd.f32 %v4540, %v4621
    %v4623 = vpop.f32.mrb[0].mxu0
    %v4624 = vpop.f32.mrb[0].mxu0
    %4625 = vdwg.mxu0
    %v4626 = vadd.f32 %v4579, %v99
    %v4627 = vadd.f32 %v4581, %v103
    %v4628 = vadd.f32 %v4620, %v107
    %v4629 = vadd.f32 %v4622, %v111
    %v4630 = vxor.u32 %v4626, 2147483648
    %v4631 = vmul.f32 %v4630, 1.442695
    %v4632 = vpow.pop %v4631
    %v4633 = vadd.f32 %v4632, 1.0
    %v4634 = vrcp.pop %v4633
    %v4635 = vmul.f32 1.0, %v4634
    %v4636 = vxor.u32 %v4627, 2147483648
    %v4637 = vmul.f32 %v4636, 1.442695
    %v4638 = vpow.pop %v4637
    %v4639 = vadd.f32 %v4638, 1.0
    %v4640 = vrcp.pop %v4639
    %v4641 = vmul.f32 1.0, %v4640
    %v4642 = vtanh.pop %v4628
    %v4643 = vxor.u32 %v4629, 2147483648
    %v4644 = vmul.f32 %v4643, 1.442695
    %v4645 = vpow.pop %v4644
    %v4646 = vadd.f32 %v4645, 1.0
    %v4647 = vrcp.pop %v4646
    %v4648 = vmul.f32 1.0, %v4647
    %v4649 = vmul.f32 %v4641, %v4392
    %v4650 = vmul.f32 %v4635, %v4642
    %v4651 = vadd.f32 %v4649, %v4650
    %v4652 = vtanh.pop %v4651
    %v4653 = vmul.f32 %v4648, %v4652
    %v4654 = vpack.c.bf16 %v4653, %v4653
    %4655 = vmatprep.subr.bf16.mxu0 0
    %4656 = vmatpush1.bf16.msra.mxu0 %v755
    %4657 = vmatprep.subr.bf16.mxu0 0
    %4658 = vmatpush1.bf16.msra.mxu0 %v756
    %4659 = vmatprep.subr.bf16.mxu0 0
    %4660 = vmatpush1.bf16.msra.mxu0 %v757
    %4661 = vmatprep.subr.bf16.mxu0 0
    %4662 = vmatpush1.bf16.msra.mxu0 %v758
    %4663 = vmatprep.subr.bf16.mxu0 0
    %4664 = vmatpush1.bf16.msra.mxu0 %v759
    %4665 = vmatprep.subr.bf16.mxu0 0
    %4666 = vmatpush1.bf16.msra.mxu0 %v760
    %4667 = vmatprep.subr.bf16.mxu0 0
    %4668 = vmatpush1.bf16.msra.mxu0 %v761
    %4669 = vmatprep.subr.bf16.mxu0 0
    %4670 = vmatpush1.bf16.msra.mxu0 %v762
    %4671 = vmatprep.subr.bf16.mxu0 0
    %4672 = vmatpush1.bf16.msra.mxu0 0
    %4673 = vmatprep.subr.bf16.mxu0 0
    %4674 = vmatpush1.bf16.msra.mxu0 0
    %4675 = vmatprep.subr.bf16.mxu0 0
    %4676 = vmatpush1.bf16.msra.mxu0 0
    %4677 = vmatprep.subr.bf16.mxu0 0
    %4678 = vmatpush1.bf16.msra.mxu0 0
    %4679 = vmatprep.subr.bf16.mxu0 0
    %4680 = vmatpush1.bf16.msra.mxu0 0
    %4681 = vmatprep.subr.bf16.mxu0 0
    %4682 = vmatpush1.bf16.msra.mxu0 0
    %4683 = vmatprep.subr.bf16.mxu0 0
    %4684 = vmatpush1.bf16.msra.mxu0 0
    %4685 = vmatprep.subr.bf16.mxu0 0
    %4686 = vmatpush1.bf16.msra.mxu0 0
    %4687 = vmatprep.mubr.bf16.mxu0 0
    %4688 = vmatmul.mubr.bf16.gmra.mrb[0].mxu0 %v4654
    %v4689 = vpop.f32.mrb[0].mxu0
    %v4690 = vadd.f32 %v121, %v4689
    %v4691 = vpop.f32.mrb[0].mxu0
    %v4692 = vpop.f32.mrb[0].mxu0
    %v4693 = vpop.f32.mrb[0].mxu0
    %4694 = vdwg.mxu0
    %4695 = vmax.xlane.f32.xlu0 %v4690
    %v4696 = vpop.xlane.xlu0 %4695
    %vm4697 = vcmp.eq.f32.partialorder %v4690, %v4696
    %v4698 = vsel %vm4697, %v124, 128
    %v4699 = vand.u32 %v4698, 65535
    %v4700 = vshra.s32 %v4698, 16
    %v4701 = vcvt.s32.f32 %v4699
    %v4702 = vcvt.s32.f32 %v4700
    %4703 = vmin.xlane.f32.xlu0 %v4702
    %v4704 = vpop.xlane.xlu0 %4703
    %vm4705 = vcmp.eq.f32.partialorder %v4702, %v4704
    %v4706 = vsel %vm4705, %v4701, inf
    %4707 = vmin.xlane.f32.xlu0 %v4706
    %v4708 = vpop.xlane.xlu0 %4707
    %v4709 = vcvt.f32.s32 %v4708
    %v4710 = vcvt.f32.s32 %v4704
    %v4711 = vshll.u32 %v4710, 16
    %v4712 = vadd.s32 %v4711, %v4709
    %vm4713 = vcmp.lt.s32.totalorder %v4712, 127
    %v4714 = vsel %vm4713, %v4712, 127
    %vm4715 = vcmp.eq.s32.totalorder %v124, 15
    %v4716 = vsel %vm4715, %v4714, %v4457
    %vm4717 = vcmask 130048
    %4718 = vst.msk [vmem:[#allocation11] sm:$0xff] %vm4717, %v4716
    // Predicated region
    $region50: #{tpu_custom_call.1} parent=1 // pred_check
      _
    $region51: #{tpu_custom_call.1} parent=1 // pred_check_branch
      %4720 = sbr.rel (0) target = $region53
    $region52: #{tpu_custom_call.1} parent=1 // pred_region
      %s4722 = ssub.s32 128, 128
      %4723 = vsyncadd [#allocation4], %s4722
      %s4725 = sshll.u32 [#allocation11], 4
      %s4726 = int_to_ptr.vmem [resolvable:$true] %s4725
      %4728 = dma.vmem_to_hbm [thread:$0]  %s4726, 128, %s7, [#allocation4]
    $region53: #{tpu_custom_call.1} parent=1 // pred_fallthru
      _
    // Predicated region
    $region54: #{tpu_custom_call.1} parent=1 // pred_check
      _
    $region55: #{tpu_custom_call.1} parent=1 // pred_check_branch
      %4730 = sbr.rel (0) target = $region57
    $region56: #{tpu_custom_call.1} parent=1 // pred_region
      %4731 = dma.done [#allocation4], 128
    $region57: #{tpu_custom_call.1} parent=1 // pred_fallthru
      _
    %4732 = vsyncpa [#allocation3], 1
    %4733 = vsyncpa [#allocation6], 1
    %4734 = vsyncpa [#allocation9], 1
    %4735 = vsyncpa [#allocation4], 1

</llo_original>
